<compile_context>
chip_gen: v5e
topology: v5e:2x2
jax: 0.10.0
libtpu: 0.0.40
codegen_flags: <defaults>
</compile_context>

<pallas_src>
import functools

import jax
import jax.numpy as jnp
from jax.experimental import pallas as pl
from jax.experimental.pallas import tpu as pltpu


# ---------------------------------------------------------------------------
# Pallas kernels
# ---------------------------------------------------------------------------

def _avgpool_conv_bn_relu_kernel(x_ref, w_ref, b_ref, o_ref, *, bins, rh, rw):
    """AdaptiveAvgPool2d(bins) + 1x1 conv (BN folded) + bias + ReLU, fused.

    x: (N, H, W, Cin) f32   w: (Cin, Cout) bf16   b: (1, Cout) f32
    o: (bins*bins*N, Cout) f32, rows ordered (bi, bj, n).
    """
    n = x_ref.shape[0]
    inv = 1.0 / float(rh * rw)
    for bi in range(bins):
        for bj in range(bins):
            blk = x_ref[:, bi * rh:(bi + 1) * rh, bj * rw:(bj + 1) * rw, :]
            s = jnp.sum(jnp.sum(blk, axis=1), axis=1) * inv          # (N, Cin) f32
            y = jnp.dot(s.astype(jnp.bfloat16), w_ref[...],
                        preferred_element_type=jnp.float32)          # (N, Cout) f32
            r0 = (bi * bins + bj) * n
            o_ref[r0:r0 + n, :] = jnp.maximum(y + b_ref[...], 0.0)


def _conv3x3_bn_relu_kernel(xp_ref, w_ref, b_ref, o_ref, *, ho, wo):
    """3x3 conv (input pre-padded) + BN(folded) + ReLU; im2col fused in VMEM.

    One grid program = one batch image x one output-channel block.
    xp: (Hp, Wp, Cin) bf16   w: (3, 3, Cin, Cb) bf16   b: (1, Cb) f32
    o : (ho*wo, Cb), rows ordered (i, j).
    """
    cin = xp_ref.shape[-1]
    w = w_ref[...]
    acc = jnp.zeros((ho * wo, w.shape[-1]), jnp.float32)
    for kh in range(3):
        for kw in range(3):
            patch = xp_ref[kh:kh + ho, kw:kw + wo, :].reshape(ho * wo, cin)
            acc = acc + jnp.dot(patch, w[kh, kw],
                                preferred_element_type=jnp.float32)
    o_ref[...] = jnp.maximum(acc + b_ref[...], 0.0).astype(o_ref.dtype)


def _maxpool2_conv3x3_bn_relu_kernel(x_ref, w_ref, b_ref, o_ref, *, ho, wo):
    """MaxPool2d(2, stride=1) + 3x3 valid conv + BN(folded) + ReLU, fully fused.

    One grid program = one batch image.
    x: (H, W, C) bf16   w: (3, 3, C, Cout) bf16   b: (1, Cout) f32
    o: (ho*wo, Cout) f32, rows ordered (i, j).
    """
    x = x_ref[...]
    h, wd, c = x.shape
    hm, wm = h - 1, wd - 1
    mp = jnp.maximum(jnp.maximum(x[:hm, :wm, :], x[1:, :wm, :]),
                     jnp.maximum(x[:hm, 1:, :], x[1:, 1:, :]))
    w = w_ref[...]
    acc = jnp.zeros((ho * wo, w.shape[-1]), jnp.float32)
    for kh in range(3):
        for kw in range(3):
            patch = mp[kh:kh + ho, kw:kw + wo, :].reshape(ho * wo, c)
            acc = acc + jnp.dot(patch, w[kh, kw],
                                preferred_element_type=jnp.float32)
    o_ref[...] = jnp.maximum(acc + b_ref[...], 0.0)


def _bilinear_matmul_kernel(x_ref, w_ref, o_ref):
    """Merged bilinear resize (both branches) as one lane-dense matmul."""
    o_ref[...] = jnp.dot(x_ref[...], w_ref[...],
                         preferred_element_type=jnp.float32)


# ---------------------------------------------------------------------------
# Pallas wrappers
# ---------------------------------------------------------------------------

def avgpool_conv_bn_relu(x, w, b, bins):
    n, h, wd, cin = x.shape
    cout = w.shape[1]
    rh, rw = h // bins, wd // bins
    kern = functools.partial(_avgpool_conv_bn_relu_kernel, bins=bins, rh=rh, rw=rw)
    return pl.pallas_call(
        kern,
        out_shape=jax.ShapeDtypeStruct((bins * bins * n, cout), jnp.float32),
        grid=(1,),
        in_specs=[
            pl.BlockSpec((n, h, wd, cin), lambda i: (0, 0, 0, 0)),
            pl.BlockSpec((cin, cout), lambda i: (0, 0)),
            pl.BlockSpec((1, cout), lambda i: (0, 0)),
        ],
        out_specs=pl.BlockSpec((bins * bins * n, cout), lambda i: (0, 0)),
        compiler_params=pltpu.CompilerParams(
            dimension_semantics=("arbitrary",)),
    )(x, w, b)


def conv3x3_bn_relu(xp, w, b, *, ho, wo, cout_block=256, out_dtype=jnp.bfloat16):
    """Grid = (batch, cout blocks); output shape (N, ho*wo, Cout)."""
    n, hp, wp, cin = xp.shape
    cfull = w.shape[-1]
    cb = min(cout_block, cfull)
    assert cfull % cb == 0
    kern = functools.partial(_conv3x3_bn_relu_kernel, ho=ho, wo=wo)
    return pl.pallas_call(
        kern,
        out_shape=jax.ShapeDtypeStruct((n, ho * wo, cfull), out_dtype),
        grid=(n, cfull // cb),
        in_specs=[
            pl.BlockSpec((None, hp, wp, cin), lambda bi, j: (bi, 0, 0, 0)),
            pl.BlockSpec((3, 3, cin, cb), lambda bi, j: (0, 0, 0, j)),
            pl.BlockSpec((1, cb), lambda bi, j: (0, j)),
        ],
        out_specs=pl.BlockSpec((None, ho * wo, cb), lambda bi, j: (bi, 0, j)),
        compiler_params=pltpu.CompilerParams(
            dimension_semantics=("parallel", "parallel")),
    )(xp, w, b)


def maxpool2_conv3x3_bn_relu(x, w, b, *, ho, wo):
    """Grid = (batch,); output shape (N, ho*wo, Cout)."""
    n, h, wd, c = x.shape
    cout = w.shape[-1]
    kern = functools.partial(_maxpool2_conv3x3_bn_relu_kernel, ho=ho, wo=wo)
    return pl.pallas_call(
        kern,
        out_shape=jax.ShapeDtypeStruct((n, ho * wo, cout), jnp.float32),
        grid=(n,),
        in_specs=[
            pl.BlockSpec((None, h, wd, c), lambda bi: (bi, 0, 0, 0)),
            pl.BlockSpec((3, 3, c, cout), lambda bi: (0, 0, 0, 0)),
            pl.BlockSpec((1, cout), lambda bi: (0, 0)),
        ],
        out_specs=pl.BlockSpec((None, ho * wo, cout), lambda bi: (bi, 0, 0)),
        compiler_params=pltpu.CompilerParams(
            dimension_semantics=("parallel",)),
    )(x, w, b)


def bilinear_matmul(xc, wt):
    m, k = xc.shape
    hw = wt.shape[1]
    return pl.pallas_call(
        _bilinear_matmul_kernel,
        out_shape=jax.ShapeDtypeStruct((m, hw), jnp.float32),
        grid=(1,),
        in_specs=[pl.BlockSpec((m, k), lambda i: (0, 0)),
                  pl.BlockSpec((k, hw), lambda i: (0, 0))],
        out_specs=pl.BlockSpec((m, hw), lambda i: (0, 0)),
        compiler_params=pltpu.CompilerParams(
            dimension_semantics=("arbitrary",)),
    )(xc, wt)


# ---------------------------------------------------------------------------
# Plain-JAX glue
# ---------------------------------------------------------------------------

def bilinear_weight_matrix(out_size, in_size):
    """Row-stochastic (out_size, in_size) matrix for align_corners=True bilinear."""
    if in_size == 1:
        return jnp.ones((out_size, 1), jnp.float32)
    src = jnp.arange(out_size, dtype=jnp.float32) * ((in_size - 1) / (out_size - 1))
    i0 = jnp.clip(jnp.floor(src).astype(jnp.int32), 0, in_size - 2)
    w1 = src - i0.astype(jnp.float32)
    w0 = 1.0 - w1
    rows = jnp.arange(out_size)
    m = jnp.zeros((out_size, in_size), jnp.float32)
    return m.at[rows, i0].add(w0).at[rows, i0 + 1].add(w1)


def fold_bn(gamma, beta, mean, var, eps=1e-5):
    scale = gamma / jnp.sqrt(var + eps)
    bias = beta - mean * scale
    return scale, bias


def init_params(key, in_channels, out_channels):
    """Deterministic synthetic params; BN scale folded into weights (bf16)."""
    mid = 512  # hard-coded in maxp_block(3, 2, in_channels, 512, 1)
    ks = jax.random.split(key, 15)

    def bn(k0, k1, k2, k3, c):
        gamma = 0.5 + jax.random.uniform(k0, (c,), jnp.float32)
        beta = 0.1 * jax.random.normal(k1, (c,), jnp.float32)
        rmean = 0.1 * jax.random.normal(k2, (c,), jnp.float32)
        rvar = 0.5 + jax.random.uniform(k3, (c,), jnp.float32)
        return fold_bn(gamma, beta, rmean, rvar)

    p = {}
    # avgp: Conv2d(in, out, 1, bias=False) -> (Cin, Cout)
    w_avg = 0.1 * jax.random.normal(ks[0], (in_channels, out_channels), jnp.float32)
    s, b = bn(ks[1], ks[2], ks[3], ks[4], out_channels)
    p["w_avg"] = (w_avg * s[None, :]).astype(jnp.bfloat16)
    p["b_avg"] = b.reshape(1, -1).astype(jnp.float32)
    # maxp1: Conv2d(in, 512, 3, padding=1, bias=False) -> (3, 3, Cin, 512)
    w1 = 0.1 * jax.random.normal(ks[5], (3, 3, in_channels, mid), jnp.float32)
    s, b = bn(ks[6], ks[7], ks[8], ks[9], mid)
    p["w_mp1"] = (w1 * s[None, None, None, :]).astype(jnp.bfloat16)
    p["b_mp1"] = b.reshape(1, -1).astype(jnp.float32)
    # maxp2: Conv2d(512, out, 3, padding=0, bias=False) -> (3, 3, 512, Cout)
    w2 = 0.05 * jax.random.normal(ks[10], (3, 3, mid, out_channels), jnp.float32)
    s, b = bn(ks[11], ks[12], ks[13], ks[14], out_channels)
    p["w_mp2"] = (w2 * s[None, None, None, :]).astype(jnp.bfloat16)
    p["b_mp2"] = b.reshape(1, -1).astype(jnp.float32)
    return p


# ---------------------------------------------------------------------------
# Full forward pass
# ---------------------------------------------------------------------------

@functools.partial(jax.jit, static_argnames=("out_bin",))
def pool_layer_stu(x_nchw, params, out_bin):
    n, cin, h, w = x_nchw.shape
    # TODO(synk): adaptive pool assumes H % bin == 0 and W % bin == 0 (as in the
    # common use of this module); non-divisible sizes are not handled.
    assert h % out_bin == 0 and w % out_bin == 0
    x = jnp.transpose(x_nchw, (0, 2, 3, 1)).astype(jnp.float32)        # NHWC

    cout = params["w_avg"].shape[1]
    mid = params["w_mp1"].shape[-1]

    # ---- avg branch: fused AdaptiveAvgPool2d(bin) + 1x1 conv + BN + ReLU
    y1 = avgpool_conv_bn_relu(x, params["w_avg"], params["b_avg"], out_bin)
    x1 = jnp.transpose(y1.reshape(out_bin, out_bin, n, cout),
                       (2, 3, 0, 1)).reshape(n * cout, out_bin * out_bin)

    # ---- maxp branch stage 1: MaxPool(3,2) -> fused conv3x3(pad=1)+BN+ReLU
    # (stride-2 pooling kept as one XLA reduce_window: no k*k window stacking in
    #  HBM, and avoids sublane-strided slicing inside the kernel)
    mp1 = jax.lax.reduce_window(x, jnp.array(-jnp.inf, x.dtype), jax.lax.max,
                                (1, 3, 3, 1), (1, 2, 2, 1), "VALID")   # (N,7,7,Cin)
    ho1 = (h - 3) // 2 + 1
    wo1 = (w - 3) // 2 + 1
    mp1p = jnp.pad(mp1, ((0, 0), (1, 1), (1, 1), (0, 0))).astype(jnp.bfloat16)
    y2 = conv3x3_bn_relu(mp1p, params["w_mp1"], params["b_mp1"],
                         ho=ho1, wo=wo1)                               # (N, 7*7, 512) bf16
    y2 = y2.reshape(n, ho1, wo1, mid)

    # ---- maxp branch stage 2: fused MaxPool(2,1) + conv3x3(valid) + BN + ReLU
    ho2, wo2 = ho1 - 3, wo1 - 3
    y3 = maxpool2_conv3x3_bn_relu(y2, params["w_mp2"], params["b_mp2"],
                                  ho=ho2, wo=wo2)                      # (N, 4*4, Cout) f32
    x2 = jnp.transpose(y3.reshape(n, ho2, wo2, cout),
                       (0, 3, 1, 2)).reshape(n * cout, ho2 * wo2)

    # ---- merged bilinear (align_corners=True) upsample of BOTH branches as one
    #      lane-dense matmul: block-diagonal inputs x horizontally stacked kron weights.
    wk1 = jnp.kron(bilinear_weight_matrix(h, out_bin),
                   bilinear_weight_matrix(w, out_bin))                 # (H*W, bin*bin)
    wk2 = jnp.kron(bilinear_weight_matrix(h, ho2),
                   bilinear_weight_matrix(w, wo2))                     # (H*W, ho2*wo2)
    k1 = out_bin * out_bin
    k2 = ho2 * wo2
    xc = jnp.concatenate([jnp.pad(x1, ((0, 0), (0, k2))),
                          jnp.pad(x2, ((0, 0), (k1, 0)))], axis=0)     # (2*N*Cout, k1+k2)
    wt = jnp.concatenate([wk1, wk2], axis=1).T                         # (k1+k2, H*W)
    up = bilinear_matmul(xc.astype(jnp.bfloat16), wt.astype(jnp.bfloat16))
    up1 = up[:n * cout].reshape(n, cout, h, w)
    up2 = up[n * cout:].reshape(n, cout, h, w)

    # ---- concat along channels: [x, avgp-branch, maxp-branch]
    return jnp.concatenate([x_nchw.astype(jnp.float32), up1, up2], axis=1)


# ---------------------------------------------------------------------------
# Main
# ---------------------------------------------------------------------------

if __name__ == "__main__":
    in_channels, out_channels, out_bin = 4, 8, 2
    key = jax.random.PRNGKey(0)
    k_x, k_p = jax.random.split(key)

    x = jax.random.normal(k_x, (2, in_channels, 16, 16), jnp.float32)  # NCHW
    params = init_params(k_p, in_channels, out_channels)

    out = pool_layer_stu(x, params, out_bin)
    out = jax.block_until_ready(out)

    expected_shape = (2, in_channels + 2 * out_channels, 16, 16)
    assert out.shape == expected_shape, (out.shape, expected_shape)
    assert bool(jnp.all(jnp.isfinite(out)))
    print("KERNEL_OK")
</pallas_src>

<mosaic_0001>
module attributes {stable_mosaic.version = 11 : i64} {
  func.func @_conv3x3_bn_relu_kernel(%arg0: i32, %arg1: i32, %arg2: memref<1x9x9x4xbf16, #tpu.memory_space<vmem>>, %arg3: memref<3x3x4x256xbf16, #tpu.memory_space<vmem>>, %arg4: memref<1x256xf32, #tpu.memory_space<vmem>>, %arg5: memref<1x49x256xbf16, #tpu.memory_space<vmem>>) attributes {dimension_semantics = [#tpu.dimension_semantics<parallel>, #tpu.dimension_semantics<parallel>], iteration_bounds = array<i64: 2, 2>, scalar_prefetch = 0 : i64, scratch_operands = 0 : i64, tpu.core_type = #tpu.core_type<tc>, window_params = [{transform_indices = @transform_0, window_bounds = array<i64: 1, 9, 9, 4>}, {transform_indices = @transform_1, window_bounds = array<i64: 3, 3, 4, 256>}, {transform_indices = @transform_2, window_bounds = array<i64: 1, 256>}, {transform_indices = @transform_3, window_bounds = array<i64: 1, 49, 256>}]} {
    %c0 = arith.constant 0 : index
    %c0_0 = arith.constant 0 : index
    %c0_1 = arith.constant 0 : index
    %c0_2 = arith.constant 0 : index
    %0 = vector.load %arg3[%c0, %c0_0, %c0_1, %c0_2] : memref<3x3x4x256xbf16, #tpu.memory_space<vmem>>, vector<3x3x4x256xbf16>
    %cst = arith.constant 0.000000e+00 : f32
    %1 = vector.broadcast %cst : f32 to vector<49x256xf32>
    %c0_3 = arith.constant 0 : index
    %c0_4 = arith.constant 0 : index
    %c0_5 = arith.constant 0 : index
    %c0_6 = arith.constant 0 : index
    %2 = vector.load %arg2[%c0_3, %c0_4, %c0_5, %c0_6] : memref<1x9x9x4xbf16, #tpu.memory_space<vmem>>, vector<1x7x7x4xbf16>
    %3 = vector.shape_cast %2 : vector<1x7x7x4xbf16> to vector<7x7x4xbf16>
    %4 = vector.shape_cast %3 : vector<7x7x4xbf16> to vector<49x4xbf16>
    %5 = vector.extract_strided_slice %0 {offsets = [0, 0, 0, 0], sizes = [1, 1, 4, 256], strides = [1, 1, 1, 1]} : vector<3x3x4x256xbf16> to vector<1x1x4x256xbf16>
    %6 = vector.shape_cast %5 : vector<1x1x4x256xbf16> to vector<4x256xbf16>
    %cst_7 = arith.constant dense<0.000000e+00> : vector<49x256xf32>
    %7 = tpu.matmul %4, %6, %cst_7 {dimension_numbers = #tpu.dot_dimension_numbers<[1], [0], [0], [1], [0, 0, 1, 1], [], []>} : vector<49x4xbf16>, vector<4x256xbf16>, vector<49x256xf32> -> vector<49x256xf32>
    %8 = arith.addf %1, %7 : vector<49x256xf32>
    %c0_8 = arith.constant 0 : index
    %c0_9 = arith.constant 0 : index
    %c1 = arith.constant 1 : index
    %c0_10 = arith.constant 0 : index
    %9 = vector.load %arg2[%c0_8, %c0_9, %c1, %c0_10] : memref<1x9x9x4xbf16, #tpu.memory_space<vmem>>, vector<1x7x7x4xbf16>
    %10 = vector.shape_cast %9 : vector<1x7x7x4xbf16> to vector<7x7x4xbf16>
    %11 = vector.shape_cast %10 : vector<7x7x4xbf16> to vector<49x4xbf16>
    %12 = vector.extract_strided_slice %0 {offsets = [0, 1, 0, 0], sizes = [1, 1, 4, 256], strides = [1, 1, 1, 1]} : vector<3x3x4x256xbf16> to vector<1x1x4x256xbf16>
    %13 = vector.shape_cast %12 : vector<1x1x4x256xbf16> to vector<4x256xbf16>
    %cst_11 = arith.constant dense<0.000000e+00> : vector<49x256xf32>
    %14 = tpu.matmul %11, %13, %cst_11 {dimension_numbers = #tpu.dot_dimension_numbers<[1], [0], [0], [1], [0, 0, 1, 1], [], []>} : vector<49x4xbf16>, vector<4x256xbf16>, vector<49x256xf32> -> vector<49x256xf32>
    %15 = arith.addf %8, %14 : vector<49x256xf32>
    %c0_12 = arith.constant 0 : index
    %c0_13 = arith.constant 0 : index
    %c2 = arith.constant 2 : index
    %c0_14 = arith.constant 0 : index
    %16 = vector.load %arg2[%c0_12, %c0_13, %c2, %c0_14] : memref<1x9x9x4xbf16, #tpu.memory_space<vmem>>, vector<1x7x7x4xbf16>
    %17 = vector.shape_cast %16 : vector<1x7x7x4xbf16> to vector<7x7x4xbf16>
    %18 = vector.shape_cast %17 : vector<7x7x4xbf16> to vector<49x4xbf16>
    %19 = vector.extract_strided_slice %0 {offsets = [0, 2, 0, 0], sizes = [1, 1, 4, 256], strides = [1, 1, 1, 1]} : vector<3x3x4x256xbf16> to vector<1x1x4x256xbf16>
    %20 = vector.shape_cast %19 : vector<1x1x4x256xbf16> to vector<4x256xbf16>
    %cst_15 = arith.constant dense<0.000000e+00> : vector<49x256xf32>
    %21 = tpu.matmul %18, %20, %cst_15 {dimension_numbers = #tpu.dot_dimension_numbers<[1], [0], [0], [1], [0, 0, 1, 1], [], []>} : vector<49x4xbf16>, vector<4x256xbf16>, vector<49x256xf32> -> vector<49x256xf32>
    %22 = arith.addf %15, %21 : vector<49x256xf32>
    %c0_16 = arith.constant 0 : index
    %c1_17 = arith.constant 1 : index
    %c0_18 = arith.constant 0 : index
    %c0_19 = arith.constant 0 : index
    %23 = vector.load %arg2[%c0_16, %c1_17, %c0_18, %c0_19] : memref<1x9x9x4xbf16, #tpu.memory_space<vmem>>, vector<1x7x7x4xbf16>
    %24 = vector.shape_cast %23 : vector<1x7x7x4xbf16> to vector<7x7x4xbf16>
    %25 = vector.shape_cast %24 : vector<7x7x4xbf16> to vector<49x4xbf16>
    %26 = vector.extract_strided_slice %0 {offsets = [1, 0, 0, 0], sizes = [1, 1, 4, 256], strides = [1, 1, 1, 1]} : vector<3x3x4x256xbf16> to vector<1x1x4x256xbf16>
    %27 = vector.shape_cast %26 : vector<1x1x4x256xbf16> to vector<4x256xbf16>
    %cst_20 = arith.constant dense<0.000000e+00> : vector<49x256xf32>
    %28 = tpu.matmul %25, %27, %cst_20 {dimension_numbers = #tpu.dot_dimension_numbers<[1], [0], [0], [1], [0, 0, 1, 1], [], []>} : vector<49x4xbf16>, vector<4x256xbf16>, vector<49x256xf32> -> vector<49x256xf32>
    %29 = arith.addf %22, %28 : vector<49x256xf32>
    %c0_21 = arith.constant 0 : index
    %c1_22 = arith.constant 1 : index
    %c1_23 = arith.constant 1 : index
    %c0_24 = arith.constant 0 : index
    %30 = vector.load %arg2[%c0_21, %c1_22, %c1_23, %c0_24] : memref<1x9x9x4xbf16, #tpu.memory_space<vmem>>, vector<1x7x7x4xbf16>
    %31 = vector.shape_cast %30 : vector<1x7x7x4xbf16> to vector<7x7x4xbf16>
    %32 = vector.shape_cast %31 : vector<7x7x4xbf16> to vector<49x4xbf16>
    %33 = vector.extract_strided_slice %0 {offsets = [1, 1, 0, 0], sizes = [1, 1, 4, 256], strides = [1, 1, 1, 1]} : vector<3x3x4x256xbf16> to vector<1x1x4x256xbf16>
    %34 = vector.shape_cast %33 : vector<1x1x4x256xbf16> to vector<4x256xbf16>
    %cst_25 = arith.constant dense<0.000000e+00> : vector<49x256xf32>
    %35 = tpu.matmul %32, %34, %cst_25 {dimension_numbers = #tpu.dot_dimension_numbers<[1], [0], [0], [1], [0, 0, 1, 1], [], []>} : vector<49x4xbf16>, vector<4x256xbf16>, vector<49x256xf32> -> vector<49x256xf32>
    %36 = arith.addf %29, %35 : vector<49x256xf32>
    %c0_26 = arith.constant 0 : index
    %c1_27 = arith.constant 1 : index
    %c2_28 = arith.constant 2 : index
    %c0_29 = arith.constant 0 : index
    %37 = vector.load %arg2[%c0_26, %c1_27, %c2_28, %c0_29] : memref<1x9x9x4xbf16, #tpu.memory_space<vmem>>, vector<1x7x7x4xbf16>
    %38 = vector.shape_cast %37 : vector<1x7x7x4xbf16> to vector<7x7x4xbf16>
    %39 = vector.shape_cast %38 : vector<7x7x4xbf16> to vector<49x4xbf16>
    %40 = vector.extract_strided_slice %0 {offsets = [1, 2, 0, 0], sizes = [1, 1, 4, 256], strides = [1, 1, 1, 1]} : vector<3x3x4x256xbf16> to vector<1x1x4x256xbf16>
    %41 = vector.shape_cast %40 : vector<1x1x4x256xbf16> to vector<4x256xbf16>
    %cst_30 = arith.constant dense<0.000000e+00> : vector<49x256xf32>
    %42 = tpu.matmul %39, %41, %cst_30 {dimension_numbers = #tpu.dot_dimension_numbers<[1], [0], [0], [1], [0, 0, 1, 1], [], []>} : vector<49x4xbf16>, vector<4x256xbf16>, vector<49x256xf32> -> vector<49x256xf32>
    %43 = arith.addf %36, %42 : vector<49x256xf32>
    %c0_31 = arith.constant 0 : index
    %c2_32 = arith.constant 2 : index
    %c0_33 = arith.constant 0 : index
    %c0_34 = arith.constant 0 : index
    %44 = vector.load %arg2[%c0_31, %c2_32, %c0_33, %c0_34] : memref<1x9x9x4xbf16, #tpu.memory_space<vmem>>, vector<1x7x7x4xbf16>
    %45 = vector.shape_cast %44 : vector<1x7x7x4xbf16> to vector<7x7x4xbf16>
    %46 = vector.shape_cast %45 : vector<7x7x4xbf16> to vector<49x4xbf16>
    %47 = vector.extract_strided_slice %0 {offsets = [2, 0, 0, 0], sizes = [1, 1, 4, 256], strides = [1, 1, 1, 1]} : vector<3x3x4x256xbf16> to vector<1x1x4x256xbf16>
    %48 = vector.shape_cast %47 : vector<1x1x4x256xbf16> to vector<4x256xbf16>
    %cst_35 = arith.constant dense<0.000000e+00> : vector<49x256xf32>
    %49 = tpu.matmul %46, %48, %cst_35 {dimension_numbers = #tpu.dot_dimension_numbers<[1], [0], [0], [1], [0, 0, 1, 1], [], []>} : vector<49x4xbf16>, vector<4x256xbf16>, vector<49x256xf32> -> vector<49x256xf32>
    %50 = arith.addf %43, %49 : vector<49x256xf32>
    %c0_36 = arith.constant 0 : index
    %c2_37 = arith.constant 2 : index
    %c1_38 = arith.constant 1 : index
    %c0_39 = arith.constant 0 : index
    %51 = vector.load %arg2[%c0_36, %c2_37, %c1_38, %c0_39] : memref<1x9x9x4xbf16, #tpu.memory_space<vmem>>, vector<1x7x7x4xbf16>
    %52 = vector.shape_cast %51 : vector<1x7x7x4xbf16> to vector<7x7x4xbf16>
    %53 = vector.shape_cast %52 : vector<7x7x4xbf16> to vector<49x4xbf16>
    %54 = vector.extract_strided_slice %0 {offsets = [2, 1, 0, 0], sizes = [1, 1, 4, 256], strides = [1, 1, 1, 1]} : vector<3x3x4x256xbf16> to vector<1x1x4x256xbf16>
    %55 = vector.shape_cast %54 : vector<1x1x4x256xbf16> to vector<4x256xbf16>
    %cst_40 = arith.constant dense<0.000000e+00> : vector<49x256xf32>
    %56 = tpu.matmul %53, %55, %cst_40 {dimension_numbers = #tpu.dot_dimension_numbers<[1], [0], [0], [1], [0, 0, 1, 1], [], []>} : vector<49x4xbf16>, vector<4x256xbf16>, vector<49x256xf32> -> vector<49x256xf32>
    %57 = arith.addf %50, %56 : vector<49x256xf32>
    %c0_41 = arith.constant 0 : index
    %c2_42 = arith.constant 2 : index
    %c2_43 = arith.constant 2 : index
    %c0_44 = arith.constant 0 : index
    %58 = vector.load %arg2[%c0_41, %c2_42, %c2_43, %c0_44] : memref<1x9x9x4xbf16, #tpu.memory_space<vmem>>, vector<1x7x7x4xbf16>
    %59 = vector.shape_cast %58 : vector<1x7x7x4xbf16> to vector<7x7x4xbf16>
    %60 = vector.shape_cast %59 : vector<7x7x4xbf16> to vector<49x4xbf16>
    %61 = vector.extract_strided_slice %0 {offsets = [2, 2, 0, 0], sizes = [1, 1, 4, 256], strides = [1, 1, 1, 1]} : vector<3x3x4x256xbf16> to vector<1x1x4x256xbf16>
    %62 = vector.shape_cast %61 : vector<1x1x4x256xbf16> to vector<4x256xbf16>
    %cst_45 = arith.constant dense<0.000000e+00> : vector<49x256xf32>
    %63 = tpu.matmul %60, %62, %cst_45 {dimension_numbers = #tpu.dot_dimension_numbers<[1], [0], [0], [1], [0, 0, 1, 1], [], []>} : vector<49x4xbf16>, vector<4x256xbf16>, vector<49x256xf32> -> vector<49x256xf32>
    %64 = arith.addf %57, %63 : vector<49x256xf32>
    %c0_46 = arith.constant 0 : index
    %c0_47 = arith.constant 0 : index
    %65 = vector.load %arg4[%c0_46, %c0_47] : memref<1x256xf32, #tpu.memory_space<vmem>>, vector<1x256xf32>
    %66 = vector.broadcast %65 : vector<1x256xf32> to vector<49x256xf32>
    %67 = arith.addf %64, %66 : vector<49x256xf32>
    %cst_48 = arith.constant 0.000000e+00 : f32
    %68 = vector.broadcast %cst_48 : f32 to vector<49x256xf32>
    %69 = arith.maximumf %67, %68 : vector<49x256xf32>
    %70 = arith.truncf %69 : vector<49x256xf32> to vector<49x256xbf16>
    %c0_49 = arith.constant 0 : index
    %c0_50 = arith.constant 0 : index
    %c0_51 = arith.constant 0 : index
    %71 = vector.load %arg5[%c0_49, %c0_50, %c0_51] : memref<1x49x256xbf16, #tpu.memory_space<vmem>>, vector<1x49x256xbf16>
    %72 = vector.shape_cast %71 : vector<1x49x256xbf16> to vector<49x256xbf16>
    %73 = vector.shape_cast %70 : vector<49x256xbf16> to vector<1x49x256xbf16>
    tpu.vector_store %arg5[%c0_49, %c0_50, %c0_51], %73 {strides = array<i32>} : memref<1x49x256xbf16, #tpu.memory_space<vmem>>, vector<1x49x256xbf16>,
    return
  }
  func.func @transform_0(%arg0: i32, %arg1: i32) -> (i32, i32, i32, i32) {
    %c0_i32 = arith.constant 0 : i32
    %c0_i32_0 = arith.constant 0 : i32
    %c0_i32_1 = arith.constant 0 : i32
    %c0_i32_2 = arith.constant 0 : i32
    return %arg0, %c0_i32, %c0_i32_0, %c0_i32_1 : i32, i32, i32, i32
  }
  func.func @transform_1(%arg0: i32, %arg1: i32) -> (i32, i32, i32, i32) {
    %c0_i32 = arith.constant 0 : i32
    %c0_i32_0 = arith.constant 0 : i32
    %c0_i32_1 = arith.constant 0 : i32
    %c0_i32_2 = arith.constant 0 : i32
    return %c0_i32, %c0_i32_0, %c0_i32_1, %arg1 : i32, i32, i32, i32
  }
  func.func @transform_2(%arg0: i32, %arg1: i32) -> (i32, i32) {
    %c0_i32 = arith.constant 0 : i32
    %c0_i32_0 = arith.constant 0 : i32
    return %c0_i32, %arg1 : i32, i32
  }
  func.func @transform_3(%arg0: i32, %arg1: i32) -> (i32, i32, i32) {
    %c0_i32 = arith.constant 0 : i32
    %c0_i32_0 = arith.constant 0 : i32
    return %arg0, %c0_i32, %arg1 : i32, i32, i32
  }
}

module attributes {stable_mosaic.version = 11 : i64} {
  func.func @_maxpool2_conv3x3_bn_relu_kernel(%arg0: i32, %arg1: memref<1x7x7x512xbf16, #tpu.memory_space<vmem>>, %arg2: memref<3x3x512x8xbf16, #tpu.memory_space<vmem>>, %arg3: memref<1x8xf32, #tpu.memory_space<vmem>>, %arg4: memref<1x16x8xf32, #tpu.memory_space<vmem>>) attributes {dimension_semantics = [#tpu.dimension_semantics<parallel>], iteration_bounds = array<i64: 2>, scalar_prefetch = 0 : i64, scratch_operands = 0 : i64, tpu.core_type = #tpu.core_type<tc>, window_params = [{transform_indices = @transform_0, window_bounds = array<i64: 1, 7, 7, 512>}, {pipeline_mode = #tpu.pipeline_mode<synchronous>, transform_indices = @transform_1, window_bounds = array<i64: 3, 3, 512, 8>}, {pipeline_mode = #tpu.pipeline_mode<synchronous>, transform_indices = @transform_2, window_bounds = array<i64: 1, 8>}, {transform_indices = @transform_3, window_bounds = array<i64: 1, 16, 8>}]} {
    %c0 = arith.constant 0 : index
    %c0_0 = arith.constant 0 : index
    %c0_1 = arith.constant 0 : index
    %c0_2 = arith.constant 0 : index
    %0 = vector.load %arg1[%c0, %c0_0, %c0_1, %c0_2] : memref<1x7x7x512xbf16, #tpu.memory_space<vmem>>, vector<1x7x7x512xbf16>
    %1 = vector.shape_cast %0 : vector<1x7x7x512xbf16> to vector<7x7x512xbf16>
    %2 = vector.extract_strided_slice %1 {offsets = [0, 0, 0], sizes = [6, 6, 512], strides = [1, 1, 1]} : vector<7x7x512xbf16> to vector<6x6x512xbf16>
    %3 = vector.extract_strided_slice %1 {offsets = [1, 0, 0], sizes = [6, 6, 512], strides = [1, 1, 1]} : vector<7x7x512xbf16> to vector<6x6x512xbf16>
    %4 = arith.maximumf %2, %3 : vector<6x6x512xbf16>
    %5 = vector.extract_strided_slice %1 {offsets = [0, 1, 0], sizes = [6, 6, 512], strides = [1, 1, 1]} : vector<7x7x512xbf16> to vector<6x6x512xbf16>
    %6 = vector.extract_strided_slice %1 {offsets = [1, 1, 0], sizes = [6, 6, 512], strides = [1, 1, 1]} : vector<7x7x512xbf16> to vector<6x6x512xbf16>
    %7 = arith.maximumf %5, %6 : vector<6x6x512xbf16>
    %8 = arith.maximumf %4, %7 : vector<6x6x512xbf16>
    %c0_3 = arith.constant 0 : index
    %c0_4 = arith.constant 0 : index
    %c0_5 = arith.constant 0 : index
    %c0_6 = arith.constant 0 : index
    %9 = vector.load %arg2[%c0_3, %c0_4, %c0_5, %c0_6] : memref<3x3x512x8xbf16, #tpu.memory_space<vmem>>, vector<3x3x512x8xbf16>
    %cst = arith.constant 0.000000e+00 : f32
    %10 = vector.broadcast %cst : f32 to vector<16x8xf32>
    %11 = vector.extract_strided_slice %8 {offsets = [0, 0, 0], sizes = [4, 4, 512], strides = [1, 1, 1]} : vector<6x6x512xbf16> to vector<4x4x512xbf16>
    %12 = vector.shape_cast %11 : vector<4x4x512xbf16> to vector<16x512xbf16>
    %13 = vector.extract_strided_slice %9 {offsets = [0, 0, 0, 0], sizes = [1, 1, 512, 8], strides = [1, 1, 1, 1]} : vector<3x3x512x8xbf16> to vector<1x1x512x8xbf16>
    %14 = vector.shape_cast %13 : vector<1x1x512x8xbf16> to vector<512x8xbf16>
    %cst_7 = arith.constant dense<0.000000e+00> : vector<16x8xf32>
    %15 = tpu.matmul %12, %14, %cst_7 {dimension_numbers = #tpu.dot_dimension_numbers<[1], [0], [0], [1], [0, 0, 1, 1], [], []>} : vector<16x512xbf16>, vector<512x8xbf16>, vector<16x8xf32> -> vector<16x8xf32>
    %16 = arith.addf %10, %15 : vector<16x8xf32>
    %17 = vector.extract_strided_slice %8 {offsets = [0, 1, 0], sizes = [4, 4, 512], strides = [1, 1, 1]} : vector<6x6x512xbf16> to vector<4x4x512xbf16>
    %18 = vector.shape_cast %17 : vector<4x4x512xbf16> to vector<16x512xbf16>
    %19 = vector.extract_strided_slice %9 {offsets = [0, 1, 0, 0], sizes = [1, 1, 512, 8], strides = [1, 1, 1, 1]} : vector<3x3x512x8xbf16> to vector<1x1x512x8xbf16>
    %20 = vector.shape_cast %19 : vector<1x1x512x8xbf16> to vector<512x8xbf16>
    %cst_8 = arith.constant dense<0.000000e+00> : vector<16x8xf32>
    %21 = tpu.matmul %18, %20, %cst_8 {dimension_numbers = #tpu.dot_dimension_numbers<[1], [0], [0], [1], [0, 0, 1, 1], [], []>} : vector<16x512xbf16>, vector<512x8xbf16>, vector<16x8xf32> -> vector<16x8xf32>
    %22 = arith.addf %16, %21 : vector<16x8xf32>
    %23 = vector.extract_strided_slice %8 {offsets = [0, 2, 0], sizes = [4, 4, 512], strides = [1, 1, 1]} : vector<6x6x512xbf16> to vector<4x4x512xbf16>
    %24 = vector.shape_cast %23 : vector<4x4x512xbf16> to vector<16x512xbf16>
    %25 = vector.extract_strided_slice %9 {offsets = [0, 2, 0, 0], sizes = [1, 1, 512, 8], strides = [1, 1, 1, 1]} : vector<3x3x512x8xbf16> to vector<1x1x512x8xbf16>
    %26 = vector.shape_cast %25 : vector<1x1x512x8xbf16> to vector<512x8xbf16>
    %cst_9 = arith.constant dense<0.000000e+00> : vector<16x8xf32>
    %27 = tpu.matmul %24, %26, %cst_9 {dimension_numbers = #tpu.dot_dimension_numbers<[1], [0], [0], [1], [0, 0, 1, 1], [], []>} : vector<16x512xbf16>, vector<512x8xbf16>, vector<16x8xf32> -> vector<16x8xf32>
    %28 = arith.addf %22, %27 : vector<16x8xf32>
    %29 = vector.extract_strided_slice %8 {offsets = [1, 0, 0], sizes = [4, 4, 512], strides = [1, 1, 1]} : vector<6x6x512xbf16> to vector<4x4x512xbf16>
    %30 = vector.shape_cast %29 : vector<4x4x512xbf16> to vector<16x512xbf16>
    %31 = vector.extract_strided_slice %9 {offsets = [1, 0, 0, 0], sizes = [1, 1, 512, 8], strides = [1, 1, 1, 1]} : vector<3x3x512x8xbf16> to vector<1x1x512x8xbf16>
    %32 = vector.shape_cast %31 : vector<1x1x512x8xbf16> to vector<512x8xbf16>
    %cst_10 = arith.constant dense<0.000000e+00> : vector<16x8xf32>
    %33 = tpu.matmul %30, %32, %cst_10 {dimension_numbers = #tpu.dot_dimension_numbers<[1], [0], [0], [1], [0, 0, 1, 1], [], []>} : vector<16x512xbf16>, vector<512x8xbf16>, vector<16x8xf32> -> vector<16x8xf32>
    %34 = arith.addf %28, %33 : vector<16x8xf32>
    %35 = vector.extract_strided_slice %8 {offsets = [1, 1, 0], sizes = [4, 4, 512], strides = [1, 1, 1]} : vector<6x6x512xbf16> to vector<4x4x512xbf16>
    %36 = vector.shape_cast %35 : vector<4x4x512xbf16> to vector<16x512xbf16>
    %37 = vector.extract_strided_slice %9 {offsets = [1, 1, 0, 0], sizes = [1, 1, 512, 8], strides = [1, 1, 1, 1]} : vector<3x3x512x8xbf16> to vector<1x1x512x8xbf16>
    %38 = vector.shape_cast %37 : vector<1x1x512x8xbf16> to vector<512x8xbf16>
    %cst_11 = arith.constant dense<0.000000e+00> : vector<16x8xf32>
    %39 = tpu.matmul %36, %38, %cst_11 {dimension_numbers = #tpu.dot_dimension_numbers<[1], [0], [0], [1], [0, 0, 1, 1], [], []>} : vector<16x512xbf16>, vector<512x8xbf16>, vector<16x8xf32> -> vector<16x8xf32>
    %40 = arith.addf %34, %39 : vector<16x8xf32>
    %41 = vector.extract_strided_slice %8 {offsets = [1, 2, 0], sizes = [4, 4, 512], strides = [1, 1, 1]} : vector<6x6x512xbf16> to vector<4x4x512xbf16>
    %42 = vector.shape_cast %41 : vector<4x4x512xbf16> to vector<16x512xbf16>
    %43 = vector.extract_strided_slice %9 {offsets = [1, 2, 0, 0], sizes = [1, 1, 512, 8], strides = [1, 1, 1, 1]} : vector<3x3x512x8xbf16> to vector<1x1x512x8xbf16>
    %44 = vector.shape_cast %43 : vector<1x1x512x8xbf16> to vector<512x8xbf16>
    %cst_12 = arith.constant dense<0.000000e+00> : vector<16x8xf32>
    %45 = tpu.matmul %42, %44, %cst_12 {dimension_numbers = #tpu.dot_dimension_numbers<[1], [0], [0], [1], [0, 0, 1, 1], [], []>} : vector<16x512xbf16>, vector<512x8xbf16>, vector<16x8xf32> -> vector<16x8xf32>
    %46 = arith.addf %40, %45 : vector<16x8xf32>
    %47 = vector.extract_strided_slice %8 {offsets = [2, 0, 0], sizes = [4, 4, 512], strides = [1, 1, 1]} : vector<6x6x512xbf16> to vector<4x4x512xbf16>
    %48 = vector.shape_cast %47 : vector<4x4x512xbf16> to vector<16x512xbf16>
    %49 = vector.extract_strided_slice %9 {offsets = [2, 0, 0, 0], sizes = [1, 1, 512, 8], strides = [1, 1, 1, 1]} : vector<3x3x512x8xbf16> to vector<1x1x512x8xbf16>
    %50 = vector.shape_cast %49 : vector<1x1x512x8xbf16> to vector<512x8xbf16>
    %cst_13 = arith.constant dense<0.000000e+00> : vector<16x8xf32>
    %51 = tpu.matmul %48, %50, %cst_13 {dimension_numbers = #tpu.dot_dimension_numbers<[1], [0], [0], [1], [0, 0, 1, 1], [], []>} : vector<16x512xbf16>, vector<512x8xbf16>, vector<16x8xf32> -> vector<16x8xf32>
    %52 = arith.addf %46, %51 : vector<16x8xf32>
    %53 = vector.extract_strided_slice %8 {offsets = [2, 1, 0], sizes = [4, 4, 512], strides = [1, 1, 1]} : vector<6x6x512xbf16> to vector<4x4x512xbf16>
    %54 = vector.shape_cast %53 : vector<4x4x512xbf16> to vector<16x512xbf16>
    %55 = vector.extract_strided_slice %9 {offsets = [2, 1, 0, 0], sizes = [1, 1, 512, 8], strides = [1, 1, 1, 1]} : vector<3x3x512x8xbf16> to vector<1x1x512x8xbf16>
    %56 = vector.shape_cast %55 : vector<1x1x512x8xbf16> to vector<512x8xbf16>
    %cst_14 = arith.constant dense<0.000000e+00> : vector<16x8xf32>
    %57 = tpu.matmul %54, %56, %cst_14 {dimension_numbers = #tpu.dot_dimension_numbers<[1], [0], [0], [1], [0, 0, 1, 1], [], []>} : vector<16x512xbf16>, vector<512x8xbf16>, vector<16x8xf32> -> vector<16x8xf32>
    %58 = arith.addf %52, %57 : vector<16x8xf32>
    %59 = vector.extract_strided_slice %8 {offsets = [2, 2, 0], sizes = [4, 4, 512], strides = [1, 1, 1]} : vector<6x6x512xbf16> to vector<4x4x512xbf16>
    %60 = vector.shape_cast %59 : vector<4x4x512xbf16> to vector<16x512xbf16>
    %61 = vector.extract_strided_slice %9 {offsets = [2, 2, 0, 0], sizes = [1, 1, 512, 8], strides = [1, 1, 1, 1]} : vector<3x3x512x8xbf16> to vector<1x1x512x8xbf16>
    %62 = vector.shape_cast %61 : vector<1x1x512x8xbf16> to vector<512x8xbf16>
    %cst_15 = arith.constant dense<0.000000e+00> : vector<16x8xf32>
    %63 = tpu.matmul %60, %62, %cst_15 {dimension_numbers = #tpu.dot_dimension_numbers<[1], [0], [0], [1], [0, 0, 1, 1], [], []>} : vector<16x512xbf16>, vector<512x8xbf16>, vector<16x8xf32> -> vector<16x8xf32>
    %64 = arith.addf %58, %63 : vector<16x8xf32>
    %c0_16 = arith.constant 0 : index
    %c0_17 = arith.constant 0 : index
    %65 = vector.load %arg3[%c0_16, %c0_17] : memref<1x8xf32, #tpu.memory_space<vmem>>, vector<1x8xf32>
    %66 = vector.broadcast %65 : vector<1x8xf32> to vector<16x8xf32>
    %67 = arith.addf %64, %66 : vector<16x8xf32>
    %cst_18 = arith.constant 0.000000e+00 : f32
    %68 = vector.broadcast %cst_18 : f32 to vector<16x8xf32>
    %69 = arith.maximumf %67, %68 : vector<16x8xf32>
    %c0_19 = arith.constant 0 : index
    %c0_20 = arith.constant 0 : index
    %c0_21 = arith.constant 0 : index
    %70 = vector.load %arg4[%c0_19, %c0_20, %c0_21] : memref<1x16x8xf32, #tpu.memory_space<vmem>>, vector<1x16x8xf32>
    %71 = vector.shape_cast %70 : vector<1x16x8xf32> to vector<16x8xf32>
    %72 = vector.shape_cast %69 : vector<16x8xf32> to vector<1x16x8xf32>
    tpu.vector_store %arg4[%c0_19, %c0_20, %c0_21], %72 {strides = array<i32>} : memref<1x16x8xf32, #tpu.memory_space<vmem>>, vector<1x16x8xf32>,
    return
  }
  func.func @transform_0(%arg0: i32) -> (i32, i32, i32, i32) {
    %c0_i32 = arith.constant 0 : i32
    %c0_i32_0 = arith.constant 0 : i32
    %c0_i32_1 = arith.constant 0 : i32
    %c0_i32_2 = arith.constant 0 : i32
    return %arg0, %c0_i32, %c0_i32_0, %c0_i32_1 : i32, i32, i32, i32
  }
  func.func @transform_1(%arg0: i32) -> (i32, i32, i32, i32) {
    %c0_i32 = arith.constant 0 : i32
    %c0_i32_0 = arith.constant 0 : i32
    %c0_i32_1 = arith.constant 0 : i32
    %c0_i32_2 = arith.constant 0 : i32
    %c0_i32_3 = arith.constant 0 : i32
    return %c0_i32, %c0_i32_0, %c0_i32_1, %c0_i32_2 : i32, i32, i32, i32
  }
  func.func @transform_2(%arg0: i32) -> (i32, i32) {
    %c0_i32 = arith.constant 0 : i32
    %c0_i32_0 = arith.constant 0 : i32
    %c0_i32_1 = arith.constant 0 : i32
    return %c0_i32, %c0_i32_0 : i32, i32
  }
  func.func @transform_3(%arg0: i32) -> (i32, i32, i32) {
    %c0_i32 = arith.constant 0 : i32
    %c0_i32_0 = arith.constant 0 : i32
    %c0_i32_1 = arith.constant 0 : i32
    return %arg0, %c0_i32, %c0_i32_0 : i32, i32, i32
  }
}

module attributes {stable_mosaic.version = 11 : i64} {
  func.func @_avgpool_conv_bn_relu_kernel(%arg0: i32, %arg1: memref<2x16x16x4xf32, #tpu.memory_space<vmem>>, %arg2: memref<4x8xbf16, #tpu.memory_space<vmem>>, %arg3: memref<1x8xf32, #tpu.memory_space<vmem>>, %arg4: memref<8x8xf32, #tpu.memory_space<vmem>>) attributes {dimension_semantics = [#tpu.dimension_semantics<arbitrary>], iteration_bounds = array<i64: 1>, scalar_prefetch = 0 : i64, scratch_operands = 0 : i64, tpu.core_type = #tpu.core_type<tc>, window_params = [{pipeline_mode = #tpu.pipeline_mode<synchronous>, transform_indices = @transform_0, window_bounds = array<i64: 2, 16, 16, 4>}, {pipeline_mode = #tpu.pipeline_mode<synchronous>, transform_indices = @transform_1, window_bounds = array<i64: 4, 8>}, {pipeline_mode = #tpu.pipeline_mode<synchronous>, transform_indices = @transform_2, window_bounds = array<i64: 1, 8>}, {pipeline_mode = #tpu.pipeline_mode<synchronous>, transform_indices = @transform_3, window_bounds = array<i64: 8, 8>}]} {
    %c0 = arith.constant 0 : index
    %c0_0 = arith.constant 0 : index
    %c0_1 = arith.constant 0 : index
    %c0_2 = arith.constant 0 : index
    %0 = vector.load %arg1[%c0, %c0_0, %c0_1, %c0_2] : memref<2x16x16x4xf32, #tpu.memory_space<vmem>>, vector<2x8x8x4xf32>
    %cst = arith.constant dense<0.000000e+00> : vector<2x8x4xf32>
    %1 = vector.multi_reduction <add>, %0, %cst [1] : vector<2x8x8x4xf32> to vector<2x8x4xf32>
    %cst_3 = arith.constant dense<0.000000e+00> : vector<2x4xf32>
    %2 = vector.multi_reduction <add>, %1, %cst_3 [1] : vector<2x8x4xf32> to vector<2x4xf32>
    %cst_4 = arith.constant 1.562500e-02 : f32
    %3 = vector.broadcast %cst_4 : f32 to vector<2x4xf32>
    %4 = arith.mulf %2, %3 : vector<2x4xf32>
    %5 = arith.truncf %4 : vector<2x4xf32> to vector<2x4xbf16>
    %c0_5 = arith.constant 0 : index
    %c0_6 = arith.constant 0 : index
    %6 = vector.load %arg2[%c0_5, %c0_6] : memref<4x8xbf16, #tpu.memory_space<vmem>>, vector<4x8xbf16>
    %cst_7 = arith.constant dense<0.000000e+00> : vector<2x8xf32>
    %7 = tpu.matmul %5, %6, %cst_7 {dimension_numbers = #tpu.dot_dimension_numbers<[1], [0], [0], [1], [0, 0, 1, 1], [], []>} : vector<2x4xbf16>, vector<4x8xbf16>, vector<2x8xf32> -> vector<2x8xf32>
    %c0_8 = arith.constant 0 : index
    %c0_9 = arith.constant 0 : index
    %8 = vector.load %arg3[%c0_8, %c0_9] : memref<1x8xf32, #tpu.memory_space<vmem>>, vector<1x8xf32>
    %9 = vector.broadcast %8 : vector<1x8xf32> to vector<2x8xf32>
    %10 = arith.addf %7, %9 : vector<2x8xf32>
    %cst_10 = arith.constant 0.000000e+00 : f32
    %11 = vector.broadcast %cst_10 : f32 to vector<2x8xf32>
    %12 = arith.maximumf %10, %11 : vector<2x8xf32>
    %c0_11 = arith.constant 0 : index
    %c0_12 = arith.constant 0 : index
    %13 = vector.load %arg4[%c0_11, %c0_12] : memref<8x8xf32, #tpu.memory_space<vmem>>, vector<2x8xf32>
    tpu.vector_store %arg4[%c0_11, %c0_12], %12 {strides = array<i32>} : memref<8x8xf32, #tpu.memory_space<vmem>>, vector<2x8xf32>,
    %c0_13 = arith.constant 0 : index
    %c0_14 = arith.constant 0 : index
    %c8 = arith.constant 8 : index
    %c0_15 = arith.constant 0 : index
    %14 = vector.load %arg1[%c0_13, %c0_14, %c8, %c0_15] : memref<2x16x16x4xf32, #tpu.memory_space<vmem>>, vector<2x8x8x4xf32>
    %cst_16 = arith.constant dense<0.000000e+00> : vector<2x8x4xf32>
    %15 = vector.multi_reduction <add>, %14, %cst_16 [1] : vector<2x8x8x4xf32> to vector<2x8x4xf32>
    %cst_17 = arith.constant dense<0.000000e+00> : vector<2x4xf32>
    %16 = vector.multi_reduction <add>, %15, %cst_17 [1] : vector<2x8x4xf32> to vector<2x4xf32>
    %cst_18 = arith.constant 1.562500e-02 : f32
    %17 = vector.broadcast %cst_18 : f32 to vector<2x4xf32>
    %18 = arith.mulf %16, %17 : vector<2x4xf32>
    %19 = arith.truncf %18 : vector<2x4xf32> to vector<2x4xbf16>
    %c0_19 = arith.constant 0 : index
    %c0_20 = arith.constant 0 : index
    %20 = vector.load %arg2[%c0_19, %c0_20] : memref<4x8xbf16, #tpu.memory_space<vmem>>, vector<4x8xbf16>
    %cst_21 = arith.constant dense<0.000000e+00> : vector<2x8xf32>
    %21 = tpu.matmul %19, %20, %cst_21 {dimension_numbers = #tpu.dot_dimension_numbers<[1], [0], [0], [1], [0, 0, 1, 1], [], []>} : vector<2x4xbf16>, vector<4x8xbf16>, vector<2x8xf32> -> vector<2x8xf32>
    %c0_22 = arith.constant 0 : index
    %c0_23 = arith.constant 0 : index
    %22 = vector.load %arg3[%c0_22, %c0_23] : memref<1x8xf32, #tpu.memory_space<vmem>>, vector<1x8xf32>
    %23 = vector.broadcast %22 : vector<1x8xf32> to vector<2x8xf32>
    %24 = arith.addf %21, %23 : vector<2x8xf32>
    %cst_24 = arith.constant 0.000000e+00 : f32
    %25 = vector.broadcast %cst_24 : f32 to vector<2x8xf32>
    %26 = arith.maximumf %24, %25 : vector<2x8xf32>
    %c2 = arith.constant 2 : index
    %c0_25 = arith.constant 0 : index
    %27 = vector.load %arg4[%c2, %c0_25] : memref<8x8xf32, #tpu.memory_space<vmem>>, vector<2x8xf32>
    tpu.vector_store %arg4[%c2, %c0_25], %26 {strides = array<i32>} : memref<8x8xf32, #tpu.memory_space<vmem>>, vector<2x8xf32>,
    %c0_26 = arith.constant 0 : index
    %c8_27 = arith.constant 8 : index
    %c0_28 = arith.constant 0 : index
    %c0_29 = arith.constant 0 : index
    %28 = vector.load %arg1[%c0_26, %c8_27, %c0_28, %c0_29] : memref<2x16x16x4xf32, #tpu.memory_space<vmem>>, vector<2x8x8x4xf32>
    %cst_30 = arith.constant dense<0.000000e+00> : vector<2x8x4xf32>
    %29 = vector.multi_reduction <add>, %28, %cst_30 [1] : vector<2x8x8x4xf32> to vector<2x8x4xf32>
    %cst_31 = arith.constant dense<0.000000e+00> : vector<2x4xf32>
    %30 = vector.multi_reduction <add>, %29, %cst_31 [1] : vector<2x8x4xf32> to vector<2x4xf32>
    %cst_32 = arith.constant 1.562500e-02 : f32
    %31 = vector.broadcast %cst_32 : f32 to vector<2x4xf32>
    %32 = arith.mulf %30, %31 : vector<2x4xf32>
    %33 = arith.truncf %32 : vector<2x4xf32> to vector<2x4xbf16>
    %c0_33 = arith.constant 0 : index
    %c0_34 = arith.constant 0 : index
    %34 = vector.load %arg2[%c0_33, %c0_34] : memref<4x8xbf16, #tpu.memory_space<vmem>>, vector<4x8xbf16>
    %cst_35 = arith.constant dense<0.000000e+00> : vector<2x8xf32>
    %35 = tpu.matmul %33, %34, %cst_35 {dimension_numbers = #tpu.dot_dimension_numbers<[1], [0], [0], [1], [0, 0, 1, 1], [], []>} : vector<2x4xbf16>, vector<4x8xbf16>, vector<2x8xf32> -> vector<2x8xf32>
    %c0_36 = arith.constant 0 : index
    %c0_37 = arith.constant 0 : index
    %36 = vector.load %arg3[%c0_36, %c0_37] : memref<1x8xf32, #tpu.memory_space<vmem>>, vector<1x8xf32>
    %37 = vector.broadcast %36 : vector<1x8xf32> to vector<2x8xf32>
    %38 = arith.addf %35, %37 : vector<2x8xf32>
    %cst_38 = arith.constant 0.000000e+00 : f32
    %39 = vector.broadcast %cst_38 : f32 to vector<2x8xf32>
    %40 = arith.maximumf %38, %39 : vector<2x8xf32>
    %c4 = arith.constant 4 : index
    %c0_39 = arith.constant 0 : index
    %41 = vector.load %arg4[%c4, %c0_39] : memref<8x8xf32, #tpu.memory_space<vmem>>, vector<2x8xf32>
    tpu.vector_store %arg4[%c4, %c0_39], %40 {strides = array<i32>} : memref<8x8xf32, #tpu.memory_space<vmem>>, vector<2x8xf32>,
    %c0_40 = arith.constant 0 : index
    %c8_41 = arith.constant 8 : index
    %c8_42 = arith.constant 8 : index
    %c0_43 = arith.constant 0 : index
    %42 = vector.load %arg1[%c0_40, %c8_41, %c8_42, %c0_43] : memref<2x16x16x4xf32, #tpu.memory_space<vmem>>, vector<2x8x8x4xf32>
    %cst_44 = arith.constant dense<0.000000e+00> : vector<2x8x4xf32>
    %43 = vector.multi_reduction <add>, %42, %cst_44 [1] : vector<2x8x8x4xf32> to vector<2x8x4xf32>
    %cst_45 = arith.constant dense<0.000000e+00> : vector<2x4xf32>
    %44 = vector.multi_reduction <add>, %43, %cst_45 [1] : vector<2x8x4xf32> to vector<2x4xf32>
    %cst_46 = arith.constant 1.562500e-02 : f32
    %45 = vector.broadcast %cst_46 : f32 to vector<2x4xf32>
    %46 = arith.mulf %44, %45 : vector<2x4xf32>
    %47 = arith.truncf %46 : vector<2x4xf32> to vector<2x4xbf16>
    %c0_47 = arith.constant 0 : index
    %c0_48 = arith.constant 0 : index
    %48 = vector.load %arg2[%c0_47, %c0_48] : memref<4x8xbf16, #tpu.memory_space<vmem>>, vector<4x8xbf16>
    %cst_49 = arith.constant dense<0.000000e+00> : vector<2x8xf32>
    %49 = tpu.matmul %47, %48, %cst_49 {dimension_numbers = #tpu.dot_dimension_numbers<[1], [0], [0], [1], [0, 0, 1, 1], [], []>} : vector<2x4xbf16>, vector<4x8xbf16>, vector<2x8xf32> -> vector<2x8xf32>
    %c0_50 = arith.constant 0 : index
    %c0_51 = arith.constant 0 : index
    %50 = vector.load %arg3[%c0_50, %c0_51] : memref<1x8xf32, #tpu.memory_space<vmem>>, vector<1x8xf32>
    %51 = vector.broadcast %50 : vector<1x8xf32> to vector<2x8xf32>
    %52 = arith.addf %49, %51 : vector<2x8xf32>
    %cst_52 = arith.constant 0.000000e+00 : f32
    %53 = vector.broadcast %cst_52 : f32 to vector<2x8xf32>
    %54 = arith.maximumf %52, %53 : vector<2x8xf32>
    %c6 = arith.constant 6 : index
    %c0_53 = arith.constant 0 : index
    %55 = vector.load %arg4[%c6, %c0_53] : memref<8x8xf32, #tpu.memory_space<vmem>>, vector<2x8xf32>
    tpu.vector_store %arg4[%c6, %c0_53], %54 {strides = array<i32>} : memref<8x8xf32, #tpu.memory_space<vmem>>, vector<2x8xf32>,
    return
  }
  func.func @transform_0(%arg0: i32) -> (i32, i32, i32, i32) {
    %c0_i32 = arith.constant 0 : i32
    %c0_i32_0 = arith.constant 0 : i32
    %c0_i32_1 = arith.constant 0 : i32
    %c0_i32_2 = arith.constant 0 : i32
    %c0_i32_3 = arith.constant 0 : i32
    return %c0_i32, %c0_i32_0, %c0_i32_1, %c0_i32_2 : i32, i32, i32, i32
  }
  func.func @transform_1(%arg0: i32) -> (i32, i32) {
    %c0_i32 = arith.constant 0 : i32
    %c0_i32_0 = arith.constant 0 : i32
    %c0_i32_1 = arith.constant 0 : i32
    return %c0_i32, %c0_i32_0 : i32, i32
  }
  func.func @transform_2(%arg0: i32) -> (i32, i32) {
    %c0_i32 = arith.constant 0 : i32
    %c0_i32_0 = arith.constant 0 : i32
    %c0_i32_1 = arith.constant 0 : i32
    return %c0_i32, %c0_i32_0 : i32, i32
  }
  func.func @transform_3(%arg0: i32) -> (i32, i32) {
    %c0_i32 = arith.constant 0 : i32
    %c0_i32_0 = arith.constant 0 : i32
    %c0_i32_1 = arith.constant 0 : i32
    return %c0_i32, %c0_i32_0 : i32, i32
  }
}

module attributes {stable_mosaic.version = 11 : i64} {
  func.func @_bilinear_matmul_kernel(%arg0: i32, %arg1: memref<32x20xbf16, #tpu.memory_space<vmem>>, %arg2: memref<20x256xbf16, #tpu.memory_space<vmem>>, %arg3: memref<32x256xf32, #tpu.memory_space<vmem>>) attributes {dimension_semantics = [#tpu.dimension_semantics<arbitrary>], iteration_bounds = array<i64: 1>, scalar_prefetch = 0 : i64, scratch_operands = 0 : i64, tpu.core_type = #tpu.core_type<tc>, window_params = [{pipeline_mode = #tpu.pipeline_mode<synchronous>, transform_indices = @transform_0, window_bounds = array<i64: 32, 20>}, {pipeline_mode = #tpu.pipeline_mode<synchronous>, transform_indices = @transform_1, window_bounds = array<i64: 20, 256>}, {pipeline_mode = #tpu.pipeline_mode<synchronous>, transform_indices = @transform_2, window_bounds = array<i64: 32, 256>}]} {
    %c0 = arith.constant 0 : index
    %c0_0 = arith.constant 0 : index
    %0 = vector.load %arg1[%c0, %c0_0] : memref<32x20xbf16, #tpu.memory_space<vmem>>, vector<32x20xbf16>
    %c0_1 = arith.constant 0 : index
    %c0_2 = arith.constant 0 : index
    %1 = vector.load %arg2[%c0_1, %c0_2] : memref<20x256xbf16, #tpu.memory_space<vmem>>, vector<20x256xbf16>
    %cst = arith.constant dense<0.000000e+00> : vector<32x256xf32>
    %2 = tpu.matmul %0, %1, %cst {dimension_numbers = #tpu.dot_dimension_numbers<[1], [0], [0], [1], [0, 0, 1, 1], [], []>} : vector<32x20xbf16>, vector<20x256xbf16>, vector<32x256xf32> -> vector<32x256xf32>
    %c0_3 = arith.constant 0 : index
    %c0_4 = arith.constant 0 : index
    %3 = vector.load %arg3[%c0_3, %c0_4] : memref<32x256xf32, #tpu.memory_space<vmem>>, vector<32x256xf32>
    tpu.vector_store %arg3[%c0_3, %c0_4], %2 {strides = array<i32>} : memref<32x256xf32, #tpu.memory_space<vmem>>, vector<32x256xf32>,
    return
  }
  func.func @transform_0(%arg0: i32) -> (i32, i32) {
    %c0_i32 = arith.constant 0 : i32
    %c0_i32_0 = arith.constant 0 : i32
    %c0_i32_1 = arith.constant 0 : i32
    return %c0_i32, %c0_i32_0 : i32, i32
  }
  func.func @transform_1(%arg0: i32) -> (i32, i32) {
    %c0_i32 = arith.constant 0 : i32
    %c0_i32_0 = arith.constant 0 : i32
    %c0_i32_1 = arith.constant 0 : i32
    return %c0_i32, %c0_i32_0 : i32, i32
  }
  func.func @transform_2(%arg0: i32) -> (i32, i32) {
    %c0_i32 = arith.constant 0 : i32
    %c0_i32_0 = arith.constant 0 : i32
    %c0_i32_1 = arith.constant 0 : i32
    return %c0_i32, %c0_i32_0 : i32, i32
  }
}

</mosaic_0001>

<llo_original>
// kernel: pool_layer_stu.4
$region0: #{pool_layer_stu.4}
  #allocation0 [shape = 'u32[]', space=smem, size = 0x4, offset = 0x4, fixed_abs, tag = 'smem constant byte address 0x4 - core index']
  #allocation1 [shape = 'u32[72,128]{1,0:T(1,128)}', space=vmem, size = 0x9000, scoped, tag = 'internal scratch']
  %s0 = inlined_call_operand.vmem [shape: f32[2,16,16,4], index: 0, kind: input, shape index: {}]
  %s1 = inlined_call_operand.vmem [shape: bf16[4,8], index: 1, kind: input, shape index: {}]
  %s2 = inlined_call_operand.vmem [shape: f32[1,8], index: 2, kind: input, shape index: {}]
  %s3 = inlined_call_operand.vmem [shape: f32[8,8], index: 3, kind: output, shape index: {}]
  %s4 = sld [smem:[#allocation0]]
  $region22: #{pool_layer_stu.4} parent=0
    _
  %s6 = ssub.s32 1, %s4
  %s7 = scalar_select 0, %s6, %s4
  // Predicated region
  $region2: #{pool_layer_stu.4} parent=0 // pred_check
    _
  $region3: #{pool_layer_stu.4} parent=0 // pred_check_branch
    %9 = sbr.rel (0) target = $region5
  $region4: #{pool_layer_stu.4} parent=0 // pred_region
    _
  $region5: #{pool_layer_stu.4} parent=0 // pred_fallthru
    _
  // Predicated region
  $region6: #{pool_layer_stu.4} parent=0 // pred_check
    _
  $region7: #{pool_layer_stu.4} parent=0 // pred_check_branch
    %11 = sbr.rel (0) target = $region9
  $region8: #{pool_layer_stu.4} parent=0 // pred_region
    _
  $region9: #{pool_layer_stu.4} parent=0 // pred_fallthru
    _
  // Predicated region
  $region10: #{pool_layer_stu.4} parent=0 // pred_check
    _
  $region11: #{pool_layer_stu.4} parent=0 // pred_check_branch
    %13 = sbr.rel (0) target = $region13
  $region12: #{pool_layer_stu.4} parent=0 // pred_region
    _
  $region13: #{pool_layer_stu.4} parent=0 // pred_fallthru
    _
  %v15 = vld [vmem:[%s0] sm:$0xff]
  %v16 = vld [vmem:[%s0 + $0x10] sm:$0xff]
  %v17 = vld [vmem:[%s0 + $0x20] sm:$0xff]
  %v18 = vld [vmem:[%s0 + $0x30] sm:$0xff]
  %v19 = vld [vmem:[%s0 + $0x40] sm:$0xff]
  %v20 = vld [vmem:[%s0 + $0x50] sm:$0xff]
  %v21 = vld [vmem:[%s0 + $0x60] sm:$0xff]
  %v22 = vld [vmem:[%s0 + $0x70] sm:$0xff]
  %v23 = vld [vmem:[%s0 + $0x100] sm:$0xff]
  %v24 = vld [vmem:[%s0 + $0x110] sm:$0xff]
  %v25 = vld [vmem:[%s0 + $0x120] sm:$0xff]
  %v26 = vld [vmem:[%s0 + $0x130] sm:$0xff]
  %v27 = vld [vmem:[%s0 + $0x140] sm:$0xff]
  %v28 = vld [vmem:[%s0 + $0x150] sm:$0xff]
  %v29 = vld [vmem:[%s0 + $0x160] sm:$0xff]
  %v30 = vld [vmem:[%s0 + $0x170] sm:$0xff]
  %vm31 = vcmask 31744
  %v32 = vsel %vm31, %v15, 0.0
  %v33 = vsel %vm31, %v16, 0.0
  %v34 = vadd.f32 %v32, %v33
  %v35 = vsel %vm31, %v17, 0.0
  %v36 = vadd.f32 %v34, %v35
  %v37 = vsel %vm31, %v18, 0.0
  %v38 = vadd.f32 %v36, %v37
  %v39 = vsel %vm31, %v19, 0.0
  %v40 = vadd.f32 %v38, %v39
  %v41 = vsel %vm31, %v20, 0.0
  %v42 = vadd.f32 %v40, %v41
  %v43 = vsel %vm31, %v21, 0.0
  %v44 = vadd.f32 %v42, %v43
  %v45 = vsel %vm31, %v22, 0.0
  %v46 = vadd.f32 %v44, %v45
  %v47 = vsel %vm31, %v23, 0.0
  %v48 = vsel %vm31, %v24, 0.0
  %v49 = vadd.f32 %v47, %v48
  %v50 = vsel %vm31, %v25, 0.0
  %v51 = vadd.f32 %v49, %v50
  %v52 = vsel %vm31, %v26, 0.0
  %v53 = vadd.f32 %v51, %v52
  %v54 = vsel %vm31, %v27, 0.0
  %v55 = vadd.f32 %v53, %v54
  %v56 = vsel %vm31, %v28, 0.0
  %v57 = vadd.f32 %v55, %v56
  %v58 = vsel %vm31, %v29, 0.0
  %v59 = vadd.f32 %v57, %v58
  %v60 = vsel %vm31, %v30, 0.0
  %v61 = vadd.f32 %v59, %v60
  %v62 = vsel %vm31, %v46, 0.0
  %v63 = vrot.slane %v62, 4
  %v64 = vadd.f32 %v62, %v63
  %v65 = vrot.slane %v64, 2
  %v66 = vadd.f32 %v64, %v65
  %v67 = vrot.slane %v66, 1
  %v68 = vadd.f32 %v66, %v67
  %v69 = vsel %vm31, %v61, 0.0
  %v70 = vrot.slane %v69, 4
  %v71 = vadd.f32 %v69, %v70
  %v72 = vrot.slane %v71, 2
  %v73 = vadd.f32 %v71, %v72
  %v74 = vrot.slane %v73, 1
  %v75 = vadd.f32 %v73, %v74
  %v76 = vmul.f32 %v68, 0.015625
  %v77 = vmul.f32 %v75, 0.015625
  %v78 = vpack.c.bf16 %v76, %v76
  %v79 = vpack.c.bf16 %v77, %v77
  %v80 = vld [vmem:[%s1] sm:$0x3]
  %v81 = vld [vmem:[%s2] sm:$0x1]
  %v83 = vperm.slane %v81, 0
  %v87 = vunpack.c.l.b16 %v78
  %v88 = vunpack.c.l.b16 %v79
  %vm89 = vcmask 1041409
  %v90 = vsel %vm89, %v88, %v87
  %v91 = vpack.c.b16 %v90, %v90
  %v93 = vsel %vm31, %v91, 0
  %vm95 = vcmask 1041408
  %v97 = vsel %vm95, %v80, 0
  %99 = vmatpush.bf16.msra.mxu0 0
  %100 = vmatpush.bf16.msra.mxu0 0
  %101 = vmatpush.bf16.msra.mxu0 0
  %102 = vmatpush.bf16.msra.mxu0 0
  %103 = vmatpush.bf16.msra.mxu0 0
  %104 = vmatpush.bf16.msra.mxu0 0
  %105 = vmatpush.bf16.msra.mxu0 0
  %106 = vmatpush.bf16.msra.mxu0 %v97
  %107 = vmatmul.bf16.gmra.mxu0 %v93
  %v108 = vpop.f32.mrf.mxu0
  %v109 = vadd.f32 %v83, %v108
  %v110 = vpop.f32.mrf.mxu0
  %111 = vdwg.mxu0
  %v112 = vmax.f32 %v109, 0.0
  %vm113 = vcmask 58368
  %114 = vst.msk [vmem:[%s3] sm:$0x3] %vm113, %v112
  %v115 = vld [vmem:[%s0 + $0x8] sm:$0xff]
  %v116 = vld [vmem:[%s0 + $0x18] sm:$0xff]
  %v117 = vld [vmem:[%s0 + $0x28] sm:$0xff]
  %v118 = vld [vmem:[%s0 + $0x38] sm:$0xff]
  %v119 = vld [vmem:[%s0 + $0x48] sm:$0xff]
  %v120 = vld [vmem:[%s0 + $0x58] sm:$0xff]
  %v121 = vld [vmem:[%s0 + $0x68] sm:$0xff]
  %v122 = vld [vmem:[%s0 + $0x78] sm:$0xff]
  %v123 = vld [vmem:[%s0 + $0x108] sm:$0xff]
  %v124 = vld [vmem:[%s0 + $0x118] sm:$0xff]
  %v125 = vld [vmem:[%s0 + $0x128] sm:$0xff]
  %v126 = vld [vmem:[%s0 + $0x138] sm:$0xff]
  %v127 = vld [vmem:[%s0 + $0x148] sm:$0xff]
  %v128 = vld [vmem:[%s0 + $0x158] sm:$0xff]
  %v129 = vld [vmem:[%s0 + $0x168] sm:$0xff]
  %v130 = vld [vmem:[%s0 + $0x178] sm:$0xff]
  %v131 = vsel %vm31, %v115, 0.0
  %v132 = vsel %vm31, %v116, 0.0
  %v133 = vadd.f32 %v131, %v132
  %v134 = vsel %vm31, %v117, 0.0
  %v135 = vadd.f32 %v133, %v134
  %v136 = vsel %vm31, %v118, 0.0
  %v137 = vadd.f32 %v135, %v136
  %v138 = vsel %vm31, %v119, 0.0
  %v139 = vadd.f32 %v137, %v138
  %v140 = vsel %vm31, %v120, 0.0
  %v141 = vadd.f32 %v139, %v140
  %v142 = vsel %vm31, %v121, 0.0
  %v143 = vadd.f32 %v141, %v142
  %v144 = vsel %vm31, %v122, 0.0
  %v145 = vadd.f32 %v143, %v144
  %v146 = vsel %vm31, %v123, 0.0
  %v147 = vsel %vm31, %v124, 0.0
  %v148 = vadd.f32 %v146, %v147
  %v149 = vsel %vm31, %v125, 0.0
  %v150 = vadd.f32 %v148, %v149
  %v151 = vsel %vm31, %v126, 0.0
  %v152 = vadd.f32 %v150, %v151
  %v153 = vsel %vm31, %v127, 0.0
  %v154 = vadd.f32 %v152, %v153
  %v155 = vsel %vm31, %v128, 0.0
  %v156 = vadd.f32 %v154, %v155
  %v157 = vsel %vm31, %v129, 0.0
  %v158 = vadd.f32 %v156, %v157
  %v159 = vsel %vm31, %v130, 0.0
  %v160 = vadd.f32 %v158, %v159
  %v161 = vsel %vm31, %v145, 0.0
  %v162 = vrot.slane %v161, 4
  %v163 = vadd.f32 %v161, %v162
  %v164 = vrot.slane %v163, 2
  %v165 = vadd.f32 %v163, %v164
  %v166 = vrot.slane %v165, 1
  %v167 = vadd.f32 %v165, %v166
  %v168 = vsel %vm31, %v160, 0.0
  %v169 = vrot.slane %v168, 4
  %v170 = vadd.f32 %v168, %v169
  %v171 = vrot.slane %v170, 2
  %v172 = vadd.f32 %v170, %v171
  %v173 = vrot.slane %v172, 1
  %v174 = vadd.f32 %v172, %v173
  %v175 = vmul.f32 %v167, 0.015625
  %v176 = vmul.f32 %v174, 0.015625
  %v177 = vpack.c.bf16 %v175, %v175
  %v178 = vpack.c.bf16 %v176, %v176
  %v179 = vld [vmem:[%s1] sm:$0x3]
  %v180 = vld [vmem:[%s2] sm:$0x1]
  %v182 = vperm.slane %v180, 0
  %v186 = vunpack.c.l.b16 %v177
  %v187 = vunpack.c.l.b16 %v178
  %v188 = vsel %vm89, %v187, %v186
  %v189 = vpack.c.b16 %v188, %v188
  %v191 = vsel %vm31, %v189, 0
  %v194 = vsel %vm95, %v179, 0
  %196 = vmatpush.bf16.msra.mxu0 0
  %197 = vmatpush.bf16.msra.mxu0 0
  %198 = vmatpush.bf16.msra.mxu0 0
  %199 = vmatpush.bf16.msra.mxu0 0
  %200 = vmatpush.bf16.msra.mxu0 0
  %201 = vmatpush.bf16.msra.mxu0 0
  %202 = vmatpush.bf16.msra.mxu0 0
  %203 = vmatpush.bf16.msra.mxu0 %v194
  %204 = vmatmul.bf16.gmra.mxu0 %v191
  %v205 = vpop.f32.mrf.mxu0
  %v206 = vadd.f32 %v182, %v205
  %v207 = vpop.f32.mrf.mxu0
  %208 = vdwg.mxu0
  %v209 = vmax.f32 %v206, 0.0
  %210 = vst.msk [vmem:[%s3 + $0x2] sm:$0x3] %vm113, %v209
  %s211 = scalar_lea.vmem %s0, 128
  %v212 = vld [vmem:[%s211] sm:$0xff]
  %v213 = vld [vmem:[%s211 + $0x10] sm:$0xff]
  %v214 = vld [vmem:[%s211 + $0x20] sm:$0xff]
  %v215 = vld [vmem:[%s211 + $0x30] sm:$0xff]
  %v216 = vld [vmem:[%s211 + $0x40] sm:$0xff]
  %v217 = vld [vmem:[%s211 + $0x50] sm:$0xff]
  %v218 = vld [vmem:[%s211 + $0x60] sm:$0xff]
  %v219 = vld [vmem:[%s211 + $0x70] sm:$0xff]
  %v220 = vld [vmem:[%s211 + $0x100] sm:$0xff]
  %v221 = vld [vmem:[%s211 + $0x110] sm:$0xff]
  %v222 = vld [vmem:[%s211 + $0x120] sm:$0xff]
  %v223 = vld [vmem:[%s211 + $0x130] sm:$0xff]
  %v224 = vld [vmem:[%s211 + $0x140] sm:$0xff]
  %v225 = vld [vmem:[%s211 + $0x150] sm:$0xff]
  %v226 = vld [vmem:[%s211 + $0x160] sm:$0xff]
  %v227 = vld [vmem:[%s211 + $0x170] sm:$0xff]
  %v228 = vsel %vm31, %v212, 0.0
  %v229 = vsel %vm31, %v213, 0.0
  %v230 = vadd.f32 %v228, %v229
  %v231 = vsel %vm31, %v214, 0.0
  %v232 = vadd.f32 %v230, %v231
  %v233 = vsel %vm31, %v215, 0.0
  %v234 = vadd.f32 %v232, %v233
  %v235 = vsel %vm31, %v216, 0.0
  %v236 = vadd.f32 %v234, %v235
  %v237 = vsel %vm31, %v217, 0.0
  %v238 = vadd.f32 %v236, %v237
  %v239 = vsel %vm31, %v218, 0.0
  %v240 = vadd.f32 %v238, %v239
  %v241 = vsel %vm31, %v219, 0.0
  %v242 = vadd.f32 %v240, %v241
  %v243 = vsel %vm31, %v220, 0.0
  %v244 = vsel %vm31, %v221, 0.0
  %v245 = vadd.f32 %v243, %v244
  %v246 = vsel %vm31, %v222, 0.0
  %v247 = vadd.f32 %v245, %v246
  %v248 = vsel %vm31, %v223, 0.0
  %v249 = vadd.f32 %v247, %v248
  %v250 = vsel %vm31, %v224, 0.0
  %v251 = vadd.f32 %v249, %v250
  %v252 = vsel %vm31, %v225, 0.0
  %v253 = vadd.f32 %v251, %v252
  %v254 = vsel %vm31, %v226, 0.0
  %v255 = vadd.f32 %v253, %v254
  %v256 = vsel %vm31, %v227, 0.0
  %v257 = vadd.f32 %v255, %v256
  %v258 = vsel %vm31, %v242, 0.0
  %v259 = vrot.slane %v258, 4
  %v260 = vadd.f32 %v258, %v259
  %v261 = vrot.slane %v260, 2
  %v262 = vadd.f32 %v260, %v261
  %v263 = vrot.slane %v262, 1
  %v264 = vadd.f32 %v262, %v263
  %v265 = vsel %vm31, %v257, 0.0
  %v266 = vrot.slane %v265, 4
  %v267 = vadd.f32 %v265, %v266
  %v268 = vrot.slane %v267, 2
  %v269 = vadd.f32 %v267, %v268
  %v270 = vrot.slane %v269, 1
  %v271 = vadd.f32 %v269, %v270
  %v272 = vmul.f32 %v264, 0.015625
  %v273 = vmul.f32 %v271, 0.015625
  %v274 = vpack.c.bf16 %v272, %v272
  %v275 = vpack.c.bf16 %v273, %v273
  %v276 = vld [vmem:[%s1] sm:$0x3]
  %v277 = vld [vmem:[%s2] sm:$0x1]
  %v279 = vperm.slane %v277, 0
  %v283 = vunpack.c.l.b16 %v274
  %v284 = vunpack.c.l.b16 %v275
  %v285 = vsel %vm89, %v284, %v283
  %v286 = vpack.c.b16 %v285, %v285
  %v288 = vsel %vm31, %v286, 0
  %v291 = vsel %vm95, %v276, 0
  %293 = vmatpush.bf16.msra.mxu0 0
  %294 = vmatpush.bf16.msra.mxu0 0
  %295 = vmatpush.bf16.msra.mxu0 0
  %296 = vmatpush.bf16.msra.mxu0 0
  %297 = vmatpush.bf16.msra.mxu0 0
  %298 = vmatpush.bf16.msra.mxu0 0
  %299 = vmatpush.bf16.msra.mxu0 0
  %300 = vmatpush.bf16.msra.mxu0 %v291
  %301 = vmatmul.bf16.gmra.mxu0 %v288
  %v302 = vpop.f32.mrf.mxu0
  %v303 = vadd.f32 %v279, %v302
  %v304 = vpop.f32.mrf.mxu0
  %305 = vdwg.mxu0
  %v306 = vmax.f32 %v303, 0.0
  %307 = vst.msk [vmem:[%s3 + $0x4] sm:$0x3] %vm113, %v306
  %v308 = vld [vmem:[%s211 + $0x8] sm:$0xff]
  %v309 = vld [vmem:[%s211 + $0x18] sm:$0xff]
  %v310 = vld [vmem:[%s211 + $0x28] sm:$0xff]
  %v311 = vld [vmem:[%s211 + $0x38] sm:$0xff]
  %v312 = vld [vmem:[%s211 + $0x48] sm:$0xff]
  %v313 = vld [vmem:[%s211 + $0x58] sm:$0xff]
  %v314 = vld [vmem:[%s211 + $0x68] sm:$0xff]
  %v315 = vld [vmem:[%s211 + $0x78] sm:$0xff]
  %v316 = vld [vmem:[%s211 + $0x108] sm:$0xff]
  %v317 = vld [vmem:[%s211 + $0x118] sm:$0xff]
  %v318 = vld [vmem:[%s211 + $0x128] sm:$0xff]
  %v319 = vld [vmem:[%s211 + $0x138] sm:$0xff]
  %v320 = vld [vmem:[%s211 + $0x148] sm:$0xff]
  %v321 = vld [vmem:[%s211 + $0x158] sm:$0xff]
  %v322 = vld [vmem:[%s211 + $0x168] sm:$0xff]
  %v323 = vld [vmem:[%s211 + $0x178] sm:$0xff]
  %v324 = vsel %vm31, %v308, 0.0
  %v325 = vsel %vm31, %v309, 0.0
  %v326 = vadd.f32 %v324, %v325
  %v327 = vsel %vm31, %v310, 0.0
  %v328 = vadd.f32 %v326, %v327
  %v329 = vsel %vm31, %v311, 0.0
  %v330 = vadd.f32 %v328, %v329
  %v331 = vsel %vm31, %v312, 0.0
  %v332 = vadd.f32 %v330, %v331
  %v333 = vsel %vm31, %v313, 0.0
  %v334 = vadd.f32 %v332, %v333
  %v335 = vsel %vm31, %v314, 0.0
  %v336 = vadd.f32 %v334, %v335
  %v337 = vsel %vm31, %v315, 0.0
  %v338 = vadd.f32 %v336, %v337
  %v339 = vsel %vm31, %v316, 0.0
  %v340 = vsel %vm31, %v317, 0.0
  %v341 = vadd.f32 %v339, %v340
  %v342 = vsel %vm31, %v318, 0.0
  %v343 = vadd.f32 %v341, %v342
  %v344 = vsel %vm31, %v319, 0.0
  %v345 = vadd.f32 %v343, %v344
  %v346 = vsel %vm31, %v320, 0.0
  %v347 = vadd.f32 %v345, %v346
  %v348 = vsel %vm31, %v321, 0.0
  %v349 = vadd.f32 %v347, %v348
  %v350 = vsel %vm31, %v322, 0.0
  %v351 = vadd.f32 %v349, %v350
  %v352 = vsel %vm31, %v323, 0.0
  %v353 = vadd.f32 %v351, %v352
  %v354 = vsel %vm31, %v338, 0.0
  %v355 = vrot.slane %v354, 4
  %v356 = vadd.f32 %v354, %v355
  %v357 = vrot.slane %v356, 2
  %v358 = vadd.f32 %v356, %v357
  %v359 = vrot.slane %v358, 1
  %v360 = vadd.f32 %v358, %v359
  %v361 = vsel %vm31, %v353, 0.0
  %v362 = vrot.slane %v361, 4
  %v363 = vadd.f32 %v361, %v362
  %v364 = vrot.slane %v363, 2
  %v365 = vadd.f32 %v363, %v364
  %v366 = vrot.slane %v365, 1
  %v367 = vadd.f32 %v365, %v366
  %v368 = vmul.f32 %v360, 0.015625
  %v369 = vmul.f32 %v367, 0.015625
  %v370 = vpack.c.bf16 %v368, %v368
  %v371 = vpack.c.bf16 %v369, %v369
  %v372 = vld [vmem:[%s1] sm:$0x3]
  %v373 = vld [vmem:[%s2] sm:$0x1]
  %v375 = vperm.slane %v373, 0
  %v379 = vunpack.c.l.b16 %v370
  %v380 = vunpack.c.l.b16 %v371
  %v381 = vsel %vm89, %v380, %v379
  %v382 = vpack.c.b16 %v381, %v381
  %v384 = vsel %vm31, %v382, 0
  %v387 = vsel %vm95, %v372, 0
  %389 = vmatpush.bf16.msra.mxu0 0
  %390 = vmatpush.bf16.msra.mxu0 0
  %391 = vmatpush.bf16.msra.mxu0 0
  %392 = vmatpush.bf16.msra.mxu0 0
  %393 = vmatpush.bf16.msra.mxu0 0
  %394 = vmatpush.bf16.msra.mxu0 0
  %395 = vmatpush.bf16.msra.mxu0 0
  %396 = vmatpush.bf16.msra.mxu0 %v387
  %397 = vmatmul.bf16.gmra.mxu0 %v384
  %v398 = vpop.f32.mrf.mxu0
  %v399 = vadd.f32 %v375, %v398
  %v400 = vpop.f32.mrf.mxu0
  %401 = vdwg.mxu0
  %v402 = vmax.f32 %v399, 0.0
  %403 = vst.msk [vmem:[%s3 + $0x6] sm:$0x3] %vm113, %v402
  // Predicated region
  $region14: #{pool_layer_stu.4} parent=0 // pred_check
    _
  $region15: #{pool_layer_stu.4} parent=0 // pred_check_branch
    %405 = sbr.rel (0) target = $region17
  $region16: #{pool_layer_stu.4} parent=0 // pred_region
    _
  $region17: #{pool_layer_stu.4} parent=0 // pred_fallthru
    _
  // Predicated region
  $region18: #{pool_layer_stu.4} parent=0 // pred_check
    _
  $region19: #{pool_layer_stu.4} parent=0 // pred_check_branch
    %407 = sbr.rel (0) target = $region21
  $region20: #{pool_layer_stu.4} parent=0 // pred_region
    _
  $region21: #{pool_layer_stu.4} parent=0 // pred_fallthru
    _

// kernel: pool_layer_stu.5
$region0: #{pool_layer_stu.5}
  #allocation0 [shape = 'u32[]', space=smem, size = 0x4, offset = 0x4, fixed_abs, tag = 'smem constant byte address 0x4 - core index']
  #allocation1 [shape = 'u32[72,128]{1,0:T(1,128)}', space=vmem, size = 0x9000, scoped, tag = 'internal scratch']
  %s0 = inlined_call_operand.vmem [shape: bf16[2,9,9,4], index: 0, kind: input, shape index: {}]
  %s1 = inlined_call_operand.hbm [shape: bf16[3,3,4,512], index: 1, kind: input, shape index: {}]
  %s2 = inlined_call_operand.hbm [shape: f32[1,512], index: 2, kind: input, shape index: {}]
  %s3 = inlined_call_operand.vmem [shape: bf16[2,49,512], index: 3, kind: output, shape index: {}]
  %s4 = sld [smem:[#allocation0]]
  $region87: #{pool_layer_stu.5} parent=0
    _
  %s6 = ssub.s32 1, %s4
  %s7 = scalar_select 0, %s6, %s4
  $region1: #{pool_layer_stu.5} parent=0
    #allocation2 [shape = 'u8[36864]{0}', space=vmem, size = 0x9000, scoped, tag = 'input window, operand 1']
    #allocation3 [shape = 's32[2]{0}', space=sflag, size = 0x8, scoped, tag = 'scoped memory for pool_layer_stu.5']
    #allocation4 [shape = 'u8[2048]{0}', space=vmem, size = 0x800, scoped, tag = 'input window, operand 2']
    #allocation5 [shape = 's32[2]{0}', space=sflag, size = 0x8, scoped, tag = 'scoped memory for pool_layer_stu.5']
    #allocation6 [shape = 'u8[57344]{0}', space=vmem, size = 0xe000, scoped, tag = 'output window, operand 0']
    %8 = vsyncpa [#allocation3], 0
    %s9 = scalar_lea.sflag [#allocation3], 1
    %10 = vsyncpa %s9, 0
    %11 = vsyncpa [#allocation5], 0
    %s12 = scalar_lea.sflag [#allocation5], 1
    %13 = vsyncpa %s12, 0
    loop: start=0, step=1, limit=6
    $region2: #{pool_layer_stu.5} parent=1 // loop_pre_header
      _
    $region3: #{pool_layer_stu.5} parent=1 // loop_header
      %s15 = sphi 0, %s19
      %p16 = scmp.ge.s32.totalorder %s15, 6
      %s22 = sphi 0, %s34
      %s23 = sphi 0, %s30
      %s24 = sphi 0, %s22
      %s25 = sphi 0, %s23
      %s26 = sphi 0, %s24
      %s27 = sphi 0, %s25
      %s37 = sphi 0, %s39
      %s40 = sphi 0, %s37
      %s41 = sphi 0, %s40
      %s57 = sphi 0, %s41
      %s63 = sphi 0, %s65
      %s66 = sphi 0, %s63
      %s67 = sphi 0, %s66
      %s83 = sphi 0, %s67
      %s89 = sphi 0, %s91
      %s92 = sphi 0, %s89
      %s93 = sphi 0, %s92
      %s109 = sphi 0, %s93
      %s117 = sphi 0, %s119
      %s120 = sphi 0, %s117
      %s121 = sphi 0, %s120
      %s137 = sphi 0, %s121
    $region4: #{pool_layer_stu.5} parent=1 // loop_header_branch
      %18 = sbr.rel (%p16) target = $region8
    $region5: #{pool_layer_stu.5} parent=1 // loop_body
      %s20 = ssub.s32 %s15, 1
      %s21 = ssub.s32 %s15, 2
      %s28 = sadd.s32 1, %s23
      %p29 = scmp.ge.s32.totalorder %s28, 2
      %s30 = scalar_select %p29, 0, %s28
      %s31 = sadd.s32 1, %s22
      %s32 = scalar_select %p29, %s31, %s22
      %p33 = scmp.ge.s32.totalorder %s32, 2
      %s34 = scalar_select %p33, 0, %s32
      %s35 = ssub.s32 %s22, %s34
      %p36 = scmp.eq.s32.totalorder %s35, 0
      %s38 = sadd.s32 %s37, 1
      %s39 = scalar_select %p36, %s37, %s38
      %p42 = pneg %p36
      %p43 = scmp.eq.s32.totalorder %s15, 3
      %p44 = por %p42, %p43
      %p45 = scmp.ne.s32.totalorder %s37, %s40
      %p46 = scmp.eq.s32.totalorder %s15, 0
      %p47 = por %p45, %p46
      %p48 = scmp.ne.s32.totalorder %s37, %s40
      %p49 = scmp.eq.s32.totalorder %s20, 3
      %p50 = por %p48, %p49
      %p51 = scmp.ne.s32.totalorder %s40, %s41
      %p52 = scmp.eq.s32.totalorder %s20, 0
      %p53 = por %p51, %p52
      %p54 = scmp.ne.s32.totalorder %s40, %s41
      %p55 = scmp.eq.s32.totalorder %s21, 3
      %p56 = por %p54, %p55
      %p58 = scmp.ne.s32.totalorder %s41, %s57
      %p59 = scmp.eq.s32.totalorder %s21, 0
      %p60 = por %p58, %p59
      %s61 = ssub.s32 %s23, %s30
      %p62 = scmp.eq.s32.totalorder %s61, 0
      %s64 = sadd.s32 %s63, 1
      %s65 = scalar_select %p62, %s63, %s64
      %p68 = pneg %p62
      %p69 = scmp.eq.s32.totalorder %s15, 3
      %p70 = por %p68, %p69
      %p71 = scmp.ne.s32.totalorder %s63, %s66
      %p72 = scmp.eq.s32.totalorder %s15, 0
      %p73 = por %p71, %p72
      %p74 = scmp.ne.s32.totalorder %s63, %s66
      %p75 = scmp.eq.s32.totalorder %s20, 3
      %p76 = por %p74, %p75
      %p77 = scmp.ne.s32.totalorder %s66, %s67
      %p78 = scmp.eq.s32.totalorder %s20, 0
      %p79 = por %p77, %p78
      %p80 = scmp.ne.s32.totalorder %s66, %s67
      %p81 = scmp.eq.s32.totalorder %s21, 3
      %p82 = por %p80, %p81
      %p84 = scmp.ne.s32.totalorder %s67, %s83
      %p85 = scmp.eq.s32.totalorder %s21, 0
      %p86 = por %p84, %p85
      %s87 = ssub.s32 %s23, %s30
      %p88 = scmp.eq.s32.totalorder %s87, 0
      %s90 = sadd.s32 %s89, 1
      %s91 = scalar_select %p88, %s89, %s90
      %p94 = pneg %p88
      %p95 = scmp.eq.s32.totalorder %s15, 3
      %p96 = por %p94, %p95
      %p97 = scmp.ne.s32.totalorder %s89, %s92
      %p98 = scmp.eq.s32.totalorder %s15, 0
      %p99 = por %p97, %p98
      %p100 = scmp.ne.s32.totalorder %s89, %s92
      %p101 = scmp.eq.s32.totalorder %s20, 3
      %p102 = por %p100, %p101
      %p103 = scmp.ne.s32.totalorder %s92, %s93
      %p104 = scmp.eq.s32.totalorder %s20, 0
      %p105 = por %p103, %p104
      %p106 = scmp.ne.s32.totalorder %s92, %s93
      %p107 = scmp.eq.s32.totalorder %s21, 3
      %p108 = por %p106, %p107
      %p110 = scmp.ne.s32.totalorder %s93, %s109
      %p111 = scmp.eq.s32.totalorder %s21, 0
      %p112 = por %p110, %p111
      %s113 = ssub.s32 %s22, %s34
      %s114 = ssub.s32 %s23, %s30
      %s115 = sor.u32 %s113, %s114
      %p116 = scmp.eq.s32.totalorder %s115, 0
      %s118 = sadd.s32 %s117, 1
      %s119 = scalar_select %p116, %s117, %s118
      %p122 = pneg %p116
      %p123 = scmp.eq.s32.totalorder %s15, 3
      %p124 = por %p122, %p123
      %p125 = scmp.ne.s32.totalorder %s117, %s120
      %p126 = scmp.eq.s32.totalorder %s15, 0
      %p127 = por %p125, %p126
      %p128 = scmp.ne.s32.totalorder %s117, %s120
      %p129 = scmp.eq.s32.totalorder %s20, 3
      %p130 = por %p128, %p129
      %p131 = scmp.ne.s32.totalorder %s120, %s121
      %p132 = scmp.eq.s32.totalorder %s20, 0
      %p133 = por %p131, %p132
      %p134 = scmp.ne.s32.totalorder %s120, %s121
      %p135 = scmp.eq.s32.totalorder %s21, 3
      %p136 = por %p134, %p135
      %p138 = scmp.ne.s32.totalorder %s121, %s137
      %p139 = scmp.eq.s32.totalorder %s21, 0
      %p140 = por %p138, %p139
      %p141 = scmp.le.s32.totalorder 1, %s15
      %p142 = scmp.lt.s32.totalorder %s15, 5
      %p143 = pnand %p141, %p142
      %p144 = pneg %p143
      // Predicated region
      $region9: #{pool_layer_stu.5} parent=5 // pred_check
        _
      $region10: #{pool_layer_stu.5} parent=5 // pred_check_branch
        %146 = sbr.rel (%p143) target = $region12
      $region11: #{pool_layer_stu.5} parent=5 // pred_region
        %s147 = ssub.s32 %s15, 1
      $region12: #{pool_layer_stu.5} parent=5 // pred_fallthru
        _
      %p148 = scmp.lt.s32.totalorder %s15, 4
      // Predicated region
      $region13: #{pool_layer_stu.5} parent=5 // pred_check
        %p149 = pneg %p148
      $region14: #{pool_layer_stu.5} parent=5 // pred_check_branch
        %151 = sbr.rel (%p149) target = $region16
      $region15: #{pool_layer_stu.5} parent=5 // pred_region
        // Predicated region
        $region17: #{pool_layer_stu.5} parent=15 // pred_check
          %p152 = pneg %p47
        $region18: #{pool_layer_stu.5} parent=15 // pred_check_branch
          %154 = sbr.rel (%p152) target = $region20
        $region19: #{pool_layer_stu.5} parent=15 // pred_region
          %p155 = scmp.lt.s32.totalorder %s22, 1
          %s156 = scalar_select %p155, %s22, 1
          %s157 = smul.addr %s156, 18
          %s158 = smul.addr %s157, 4
          %s159 = scalar_lea.vmem %s0, %s158
        $region20: #{pool_layer_stu.5} parent=15 // pred_fallthru
          _
        // Predicated region
        $region21: #{pool_layer_stu.5} parent=15 // pred_check
          %p160 = pneg %p73
        $region22: #{pool_layer_stu.5} parent=15 // pred_check_branch
          %162 = sbr.rel (%p160) target = $region24
        $region23: #{pool_layer_stu.5} parent=15 // pred_region
          %s163 = sand.u32 %s63, 1
          %s164 = scalar_lea.sflag [#allocation3], %s163
          %s165 = sand.u32 %s63, 1
          %s166 = smul.addr %s165, 36
          %s167 = scalar_lea.vmem [#allocation2], %s166
          %s168 = smul.u32 2, %s23
          %170 = vsyncadd %s164, 0
          %s171 = smul.addr %s168, 2
          %s172 = scalar_lea.hbm %s1, %s171
          %s173 = sshll.u32 %s172, 4
          %s174 = int_to_ptr.hbm [resolvable:$true] %s173
          %s175 = sshll.u32 %s167, 4
          %s176 = int_to_ptr.vmem [resolvable:$true] %s175
          %181 = dma.hbm_to_vmem [thread:$0]  %s174, 576, %s176, %s164, 128, 64, 4
        $region24: #{pool_layer_stu.5} parent=15 // pred_fallthru
          _
        // Predicated region
        $region25: #{pool_layer_stu.5} parent=15 // pred_check
          %p182 = pneg %p99
        $region26: #{pool_layer_stu.5} parent=15 // pred_check_branch
          %184 = sbr.rel (%p182) target = $region28
        $region27: #{pool_layer_stu.5} parent=15 // pred_region
          %s185 = sand.u32 %s89, 1
          %s186 = scalar_lea.sflag [#allocation5], %s185
          %s187 = sand.u32 %s89, 1
          %s188 = smul.addr %s187, 2
          %s189 = scalar_lea.vmem [#allocation4], %s188
          %s190 = smul.u32 2, %s23
          %192 = vsyncadd %s186, 0
          %s193 = scalar_lea.hbm %s2, %s190
          %s195 = sshll.u32 %s193, 4
          %s196 = int_to_ptr.hbm [resolvable:$true] %s195
          %s197 = sshll.u32 %s189, 4
          %s198 = int_to_ptr.vmem [resolvable:$true] %s197
          %200 = dma.hbm_to_vmem [thread:$0]  %s196, 32, %s198, %s186
        $region28: #{pool_layer_stu.5} parent=15 // pred_fallthru
          _
      $region16: #{pool_layer_stu.5} parent=5 // pred_fallthru
        _
      %p201 = scmp.le.s32.totalorder 1, %s15
      %p202 = scmp.lt.s32.totalorder %s15, 5
      %p203 = pnand %p201, %p202
      %p204 = pneg %p203
      // Predicated region
      $region29: #{pool_layer_stu.5} parent=5 // pred_check
        _
      $region30: #{pool_layer_stu.5} parent=5 // pred_check_branch
        %206 = sbr.rel (%p203) target = $region32
      $region31: #{pool_layer_stu.5} parent=5 // pred_region
        %s207 = ssub.s32 %s15, 1
        %s208 = sand.u32 %s66, 1
        %s209 = scalar_lea.sflag [#allocation3], %s208
        %s210 = sand.u32 %s66, 1
        %s211 = smul.addr %s210, 36
        %s212 = scalar_lea.vmem [#allocation2], %s211
        // Predicated region
        $region33: #{pool_layer_stu.5} parent=31 // pred_check
          %p213 = pneg %p79
        $region34: #{pool_layer_stu.5} parent=31 // pred_check_branch
          %215 = sbr.rel (%p213) target = $region36
        $region35: #{pool_layer_stu.5} parent=31 // pred_region
          %217 = dma.done %s209, 576
        $region36: #{pool_layer_stu.5} parent=31 // pred_fallthru
          _
        %s218 = sand.u32 %s92, 1
        %s219 = scalar_lea.sflag [#allocation5], %s218
        %s220 = sand.u32 %s92, 1
        %s221 = smul.addr %s220, 2
        %s222 = scalar_lea.vmem [#allocation4], %s221
        // Predicated region
        $region37: #{pool_layer_stu.5} parent=31 // pred_check
          %p223 = pneg %p105
        $region38: #{pool_layer_stu.5} parent=31 // pred_check_branch
          %225 = sbr.rel (%p223) target = $region40
        $region39: #{pool_layer_stu.5} parent=31 // pred_region
          %227 = dma.done %s219, 32
        $region40: #{pool_layer_stu.5} parent=31 // pred_fallthru
          _
        %p228 = scmp.lt.s32.totalorder %s24, 1
        %s229 = scalar_select %p228, %s24, 1
        %s230 = smul.addr %s229, 18
        %s231 = smul.addr %s230, 4
        %s232 = scalar_lea.vmem %s0, %s231
        %p233 = pneg %p53
        %p234 = pneg %p50
        %s235 = sand.u32 %s66, 1
        %s236 = scalar_lea.sflag [#allocation3], %s235
        %s237 = sand.u32 %s66, 1
        %s238 = smul.addr %s237, 36
        %s239 = scalar_lea.vmem [#allocation2], %s238
        %p240 = pneg %p79
        %p241 = pneg %p76
        %s242 = sand.u32 %s92, 1
        %s243 = scalar_lea.sflag [#allocation5], %s242
        %s244 = sand.u32 %s92, 1
        %s245 = smul.addr %s244, 2
        %s246 = scalar_lea.vmem [#allocation4], %s245
        %p247 = pneg %p105
        %p248 = pneg %p102
        %p249 = pneg %p133
        %p250 = pneg %p130
        %s251 = sand.u32 %s120, 1
        %s252 = sand.u32 %s120, 1
        %s253 = smul.addr %s252, 56
        %s254 = scalar_lea.vmem [#allocation6], %s253
        %p255 = scmp.lt.s32.totalorder %s24, 1
        %s256 = scalar_select %p255, %s24, 1
        %s257 = smul.addr %s256, 18
        %s258 = smul.addr %s257, 4
        %s259 = scalar_lea.vmem %s0, %s258
        %s260 = smul.u32 2, %s25
        %s261 = smul.u32 2, %s25
        %s262 = smul.u32 2, %s25
        %v264 = vld [vmem:[%s212] sm:$0xf]
        %v265 = vld [vmem:[%s212 + $0x4] sm:$0xf]
        %v266 = vld [vmem:[%s212 + $0x8] sm:$0xf]
        %v267 = vld [vmem:[%s212 + $0xc] sm:$0xf]
        %v268 = vld [vmem:[%s212 + $0x10] sm:$0xf]
        %v269 = vld [vmem:[%s212 + $0x14] sm:$0xf]
        %v270 = vld [vmem:[%s212 + $0x18] sm:$0xf]
        %v271 = vld [vmem:[%s212 + $0x1c] sm:$0xf]
        %v272 = vld [vmem:[%s212 + $0x20] sm:$0xf]
        %v273 = vld [vmem:[%s259] sm:$0xf]
        %v274 = vld [vmem:[%s259 + $0x8] sm:$0xf]
        %v275 = vld [vmem:[%s259 + $0x10] sm:$0xf]
        %v276 = vld [vmem:[%s259 + $0x18] sm:$0xf]
        %v277 = vld [vmem:[%s259 + $0x20] sm:$0xf]
        %v278 = vld [vmem:[%s259 + $0x28] sm:$0xf]
        %v279 = vld [vmem:[%s259 + $0x30] sm:$0xf]
        %v287 = vrot.slane %v273, 3
        %v288 = vrot.slane %v274, 3
        %v289 = vrot.slane %v275, 3
        %v290 = vrot.slane %v276, 3
        %v291 = vrot.slane %v277, 3
        %v292 = vrot.slane %v278, 3
        %v293 = vrot.slane %v279, 3
        %vm294 = vcmask 1040384
        %v297 = vsel %vm294, %v273, %v287
        %vm299 = vcmask 1041409
        %v300 = vsel %vm299, %v273, %v287
        %v302 = vrot.slane %v300, 1
        %vm303 = vcmask 1042434
        %v304 = vsel %vm303, %v273, %v287
        %v306 = vrot.slane %v304, 2
        %vm307 = vcmask 1043459
        %v308 = vsel %vm307, %v273, %v287
        %v310 = vrot.slane %v308, 3
        %v313 = vsel %vm294, %v274, %v288
        %v315 = vsel %vm299, %v274, %v288
        %v317 = vrot.slane %v315, 1
        %v318 = vsel %vm303, %v274, %v288
        %v320 = vrot.slane %v318, 2
        %v321 = vsel %vm307, %v274, %v288
        %v323 = vrot.slane %v321, 3
        %v326 = vsel %vm294, %v275, %v289
        %v328 = vsel %vm299, %v275, %v289
        %v330 = vrot.slane %v328, 1
        %v331 = vsel %vm303, %v275, %v289
        %v333 = vrot.slane %v331, 2
        %v334 = vsel %vm307, %v275, %v289
        %v336 = vrot.slane %v334, 3
        %v339 = vsel %vm294, %v276, %v290
        %v341 = vsel %vm299, %v276, %v290
        %v343 = vrot.slane %v341, 1
        %v344 = vsel %vm303, %v276, %v290
        %v346 = vrot.slane %v344, 2
        %v347 = vsel %vm307, %v276, %v290
        %v349 = vrot.slane %v347, 3
        %v352 = vsel %vm294, %v277, %v291
        %v354 = vsel %vm299, %v277, %v291
        %v356 = vrot.slane %v354, 1
        %v357 = vsel %vm303, %v277, %v291
        %v359 = vrot.slane %v357, 2
        %v360 = vsel %vm307, %v277, %v291
        %v362 = vrot.slane %v360, 3
        %v365 = vsel %vm294, %v278, %v292
        %v367 = vsel %vm299, %v278, %v292
        %v369 = vrot.slane %v367, 1
        %v370 = vsel %vm303, %v278, %v292
        %v372 = vrot.slane %v370, 2
        %v373 = vsel %vm307, %v278, %v292
        %v375 = vrot.slane %v373, 3
        %v378 = vsel %vm294, %v279, %v293
        %v380 = vsel %vm299, %v279, %v293
        %v382 = vrot.slane %v380, 1
        %v383 = vsel %vm303, %v279, %v293
        %v385 = vrot.slane %v383, 2
        %v386 = vsel %vm307, %v279, %v293
        %v388 = vrot.slane %v386, 3
        %v389 = vunpack.i.l.s16 %v297
        %v390 = vunpack.i.h.s16 %v297
        %v391 = vunpack.i.l.s16 %v302
        %v392 = vunpack.i.h.s16 %v302
        %v393 = vunpack.i.l.s16 %v306
        %v394 = vunpack.i.h.s16 %v306
        %v395 = vunpack.i.l.s16 %v310
        %v396 = vunpack.i.l.s16 %v313
        %v397 = vunpack.i.h.s16 %v313
        %v398 = vunpack.i.l.s16 %v317
        %v399 = vunpack.i.h.s16 %v317
        %v400 = vunpack.i.l.s16 %v320
        %v401 = vunpack.i.h.s16 %v320
        %v402 = vunpack.i.l.s16 %v323
        %v403 = vunpack.i.l.s16 %v326
        %v404 = vunpack.i.h.s16 %v326
        %v405 = vunpack.i.l.s16 %v330
        %v406 = vunpack.i.h.s16 %v330
        %v407 = vunpack.i.l.s16 %v333
        %v408 = vunpack.i.h.s16 %v333
        %v409 = vunpack.i.l.s16 %v336
        %v410 = vunpack.i.l.s16 %v339
        %v411 = vunpack.i.h.s16 %v339
        %v412 = vunpack.i.l.s16 %v343
        %v413 = vunpack.i.h.s16 %v343
        %v414 = vunpack.i.l.s16 %v346
        %v415 = vunpack.i.h.s16 %v346
        %v416 = vunpack.i.l.s16 %v349
        %v417 = vunpack.i.l.s16 %v352
        %v418 = vunpack.i.h.s16 %v352
        %v419 = vunpack.i.l.s16 %v356
        %v420 = vunpack.i.h.s16 %v356
        %v421 = vunpack.i.l.s16 %v359
        %v422 = vunpack.i.h.s16 %v359
        %v423 = vunpack.i.l.s16 %v362
        %v424 = vunpack.i.l.s16 %v365
        %v425 = vunpack.i.h.s16 %v365
        %v426 = vunpack.i.l.s16 %v369
        %v427 = vunpack.i.h.s16 %v369
        %v428 = vunpack.i.l.s16 %v372
        %v429 = vunpack.i.h.s16 %v372
        %v430 = vunpack.i.l.s16 %v375
        %v431 = vunpack.i.l.s16 %v378
        %v432 = vunpack.i.h.s16 %v378
        %v433 = vunpack.i.l.s16 %v382
        %v434 = vunpack.i.h.s16 %v382
        %v435 = vunpack.i.l.s16 %v385
        %v436 = vunpack.i.h.s16 %v385
        %v437 = vunpack.i.l.s16 %v388
        %v438 = vunpack.i.h.s16 %v310
        %v439 = vunpack.i.h.s16 %v323
        %v440 = vunpack.i.h.s16 %v336
        %v441 = vunpack.i.h.s16 %v349
        %v442 = vunpack.i.h.s16 %v362
        %v443 = vunpack.i.h.s16 %v375
        %v444 = vunpack.i.h.s16 %v388
        %v445 = vpack.i.b16 %v391, %v390
        %v446 = vpack.i.b16 %v393, %v392
        %v447 = vpack.i.b16 %v395, %v394
        %v448 = vpack.i.b16 %v397, %v438
        %v449 = vpack.i.b16 %v399, %v398
        %v450 = vpack.i.b16 %v401, %v400
        %v451 = vpack.i.b16 %v439, %v402
        %v452 = vpack.i.b16 %v405, %v404
        %v453 = vpack.i.b16 %v407, %v406
        %v454 = vpack.i.b16 %v409, %v408
        %v455 = vpack.i.b16 %v411, %v440
        %v456 = vpack.i.b16 %v413, %v412
        %v457 = vpack.i.b16 %v415, %v414
        %v458 = vpack.i.b16 %v441, %v416
        %v459 = vpack.i.b16 %v419, %v418
        %v460 = vpack.i.b16 %v421, %v420
        %v461 = vpack.i.b16 %v423, %v422
        %v462 = vpack.i.b16 %v425, %v442
        %v463 = vpack.i.b16 %v427, %v426
        %v464 = vpack.i.b16 %v429, %v428
        %v465 = vpack.i.b16 %v443, %v430
        %v466 = vpack.i.b16 %v433, %v432
        %v467 = vpack.i.b16 %v435, %v434
        %v468 = vpack.i.b16 %v437, %v436
        %471 = vst [vmem:[#allocation1] ss:$9 sm:$0xff] %v445
        %s473 = scalar_lea.vmem [#allocation1], 1
        %474 = vst [vmem:[%s473] ss:$9 sm:$0xff] %v446
        %s476 = scalar_lea.vmem [#allocation1], 2
        %477 = vst [vmem:[%s476] ss:$9 sm:$0xff] %v447
        %s479 = scalar_lea.vmem [#allocation1], 3
        %480 = vst [vmem:[%s479] ss:$9 sm:$0xff] %v448
        %s482 = scalar_lea.vmem [#allocation1], 4
        %483 = vst [vmem:[%s482] ss:$9 sm:$0xff] %v449
        %s485 = scalar_lea.vmem [#allocation1], 5
        %486 = vst [vmem:[%s485] ss:$9 sm:$0xff] %v450
        %s488 = scalar_lea.vmem [#allocation1], 6
        %489 = vst [vmem:[%s488] ss:$9 sm:$0xff] %v451
        %s491 = scalar_lea.vmem [#allocation1], 7
        %492 = vst [vmem:[%s491] ss:$9 sm:$0xff] %v452
        %v493 = vld [vmem:[#allocation1] sm:$0xff]
        %495 = vst [vmem:[#allocation1] ss:$9 sm:$0xff] %v453
        %497 = vst [vmem:[%s473] ss:$9 sm:$0xff] %v454
        %499 = vst [vmem:[%s476] ss:$9 sm:$0xff] %v455
        %501 = vst [vmem:[%s479] ss:$9 sm:$0xff] %v456
        %503 = vst [vmem:[%s482] ss:$9 sm:$0xff] %v457
        %505 = vst [vmem:[%s485] ss:$9 sm:$0xff] %v458
        %507 = vst [vmem:[%s488] ss:$9 sm:$0xff] %v459
        %509 = vst [vmem:[%s491] ss:$9 sm:$0xff] %v460
        %v510 = vld [vmem:[#allocation1] sm:$0xff]
        %512 = vst [vmem:[#allocation1] ss:$9 sm:$0xff] %v461
        %514 = vst [vmem:[%s473] ss:$9 sm:$0xff] %v462
        %516 = vst [vmem:[%s476] ss:$9 sm:$0xff] %v463
        %518 = vst [vmem:[%s479] ss:$9 sm:$0xff] %v464
        %520 = vst [vmem:[%s482] ss:$9 sm:$0xff] %v465
        %522 = vst [vmem:[%s485] ss:$9 sm:$0xff] %v466
        %524 = vst [vmem:[%s488] ss:$9 sm:$0xff] %v467
        %526 = vst [vmem:[%s491] ss:$9 sm:$0xff] %v468
        %v527 = vld [vmem:[#allocation1] sm:$0xff]
        %529 = vst [vmem:[#allocation1] ss:$9 sm:$0xff] %v444
        %v530 = vld [vmem:[#allocation1] sm:$0xff]
        %532 = vst [vmem:[#allocation1] ss:$4 sm:$0xff] %v265
        %v533 = vld.sshfl [vmem:[#allocation1] sm:$0xff pattern:$0x73625140]
        %v534 = vld.sshfl [vmem:[#allocation1 + $0x8] sm:$0xff pattern:$0x73625140]
        %vm535 = vcmask 31744
        %v536 = vsel %vm535, %v493, 0
        %v538 = vsel %vm535, %v510, 0
        %v540 = vsel %vm535, %v527, 0
        %v542 = vsel %vm535, %v530, 0
        %vm544 = vcmask 1041408
        %v545 = vsel %vm544, %v533, 0
        %v547 = vsel %vm544, %v534, 0
        %549 = vmatpush.bf16.msra.mxu0 0
        %550 = vmatpush.bf16.msra.mxu0 0
        %551 = vmatpush.bf16.msra.mxu0 0
        %552 = vmatpush.bf16.msra.mxu0 0
        %553 = vmatpush.bf16.msra.mxu0 0
        %554 = vmatpush.bf16.msra.mxu0 0
        %555 = vmatpush.bf16.msra.mxu0 0
        %556 = vmatpush.bf16.msra.mxu0 %v545
        %557 = vmatmul.bf16.gmra.mxu0 %v536
        %v558 = vpop.f32.mrf.mxu0
        %v559 = vadd.f32 0.0, %v558
        %v560 = vpop.f32.mrf.mxu0
        %v561 = vadd.f32 0.0, %v560
        %562 = vmatmul.bf16.gmra.mxu0 %v538
        %v563 = vpop.f32.mrf.mxu0
        %v564 = vadd.f32 0.0, %v563
        %v565 = vpop.f32.mrf.mxu0
        %v566 = vadd.f32 0.0, %v565
        %567 = vmatmul.bf16.gmra.mxu0 %v540
        %v568 = vpop.f32.mrf.mxu0
        %v569 = vadd.f32 0.0, %v568
        %v570 = vpop.f32.mrf.mxu0
        %v571 = vadd.f32 0.0, %v570
        %572 = vmatmul.bf16.gmra.mxu0 %v542
        %v573 = vpop.f32.mrf.mxu0
        %v574 = vadd.f32 0.0, %v573
        %v575 = vpop.f32.mrf.mxu0
        %576 = vdwg.mxu0
        %577 = vmatpush.bf16.msra.mxu0 0
        %578 = vmatpush.bf16.msra.mxu0 0
        %579 = vmatpush.bf16.msra.mxu0 0
        %580 = vmatpush.bf16.msra.mxu0 0
        %581 = vmatpush.bf16.msra.mxu0 0
        %582 = vmatpush.bf16.msra.mxu0 0
        %583 = vmatpush.bf16.msra.mxu0 0
        %584 = vmatpush.bf16.msra.mxu0 %v547
        %585 = vmatmul.bf16.gmra.mxu0 %v536
        %v586 = vpop.f32.mrf.mxu0
        %v587 = vadd.f32 0.0, %v586
        %v588 = vpop.f32.mrf.mxu0
        %v589 = vadd.f32 0.0, %v588
        %590 = vmatmul.bf16.gmra.mxu0 %v538
        %v591 = vpop.f32.mrf.mxu0
        %v592 = vadd.f32 0.0, %v591
        %v593 = vpop.f32.mrf.mxu0
        %v594 = vadd.f32 0.0, %v593
        %595 = vmatmul.bf16.gmra.mxu0 %v540
        %v596 = vpop.f32.mrf.mxu0
        %v597 = vadd.f32 0.0, %v596
        %v598 = vpop.f32.mrf.mxu0
        %v599 = vadd.f32 0.0, %v598
        %600 = vmatmul.bf16.gmra.mxu0 %v542
        %v601 = vpop.f32.mrf.mxu0
        %v602 = vadd.f32 0.0, %v601
        %v603 = vpop.f32.mrf.mxu0
        %604 = vdwg.mxu0
        %v605 = vpack.i.b16 %v390, %v389
        %v606 = vpack.i.b16 %v392, %v391
        %v607 = vpack.i.b16 %v394, %v393
        %v608 = vpack.i.b16 %v396, %v395
        %v609 = vpack.i.b16 %v398, %v397
        %v610 = vpack.i.b16 %v400, %v399
        %v611 = vpack.i.b16 %v402, %v401
        %v612 = vpack.i.b16 %v404, %v403
        %v613 = vpack.i.b16 %v406, %v405
        %v614 = vpack.i.b16 %v408, %v407
        %v615 = vpack.i.b16 %v410, %v409
        %v616 = vpack.i.b16 %v412, %v411
        %v617 = vpack.i.b16 %v414, %v413
        %v618 = vpack.i.b16 %v416, %v415
        %v619 = vpack.i.b16 %v418, %v417
        %v620 = vpack.i.b16 %v420, %v419
        %v621 = vpack.i.b16 %v422, %v421
        %v622 = vpack.i.b16 %v424, %v423
        %v623 = vpack.i.b16 %v426, %v425
        %v624 = vpack.i.b16 %v428, %v427
        %v625 = vpack.i.b16 %v430, %v429
        %v626 = vpack.i.b16 %v432, %v431
        %v627 = vpack.i.b16 %v434, %v433
        %v628 = vpack.i.b16 %v436, %v435
        %631 = vst [vmem:[#allocation1] ss:$9 sm:$0xff] %v605
        %s633 = scalar_lea.vmem [#allocation1], 1
        %634 = vst [vmem:[%s633] ss:$9 sm:$0xff] %v606
        %s636 = scalar_lea.vmem [#allocation1], 2
        %637 = vst [vmem:[%s636] ss:$9 sm:$0xff] %v607
        %s639 = scalar_lea.vmem [#allocation1], 3
        %640 = vst [vmem:[%s639] ss:$9 sm:$0xff] %v608
        %s642 = scalar_lea.vmem [#allocation1], 4
        %643 = vst [vmem:[%s642] ss:$9 sm:$0xff] %v609
        %s645 = scalar_lea.vmem [#allocation1], 5
        %646 = vst [vmem:[%s645] ss:$9 sm:$0xff] %v610
        %s648 = scalar_lea.vmem [#allocation1], 6
        %649 = vst [vmem:[%s648] ss:$9 sm:$0xff] %v611
        %s651 = scalar_lea.vmem [#allocation1], 7
        %652 = vst [vmem:[%s651] ss:$9 sm:$0xff] %v612
        %v653 = vld [vmem:[#allocation1] sm:$0xff]
        %655 = vst [vmem:[#allocation1] ss:$9 sm:$0xff] %v613
        %657 = vst [vmem:[%s633] ss:$9 sm:$0xff] %v614
        %659 = vst [vmem:[%s636] ss:$9 sm:$0xff] %v615
        %661 = vst [vmem:[%s639] ss:$9 sm:$0xff] %v616
        %663 = vst [vmem:[%s642] ss:$9 sm:$0xff] %v617
        %665 = vst [vmem:[%s645] ss:$9 sm:$0xff] %v618
        %667 = vst [vmem:[%s648] ss:$9 sm:$0xff] %v619
        %669 = vst [vmem:[%s651] ss:$9 sm:$0xff] %v620
        %v670 = vld [vmem:[#allocation1] sm:$0xff]
        %672 = vst [vmem:[#allocation1] ss:$9 sm:$0xff] %v621
        %674 = vst [vmem:[%s633] ss:$9 sm:$0xff] %v622
        %676 = vst [vmem:[%s636] ss:$9 sm:$0xff] %v623
        %678 = vst [vmem:[%s639] ss:$9 sm:$0xff] %v624
        %680 = vst [vmem:[%s642] ss:$9 sm:$0xff] %v625
        %682 = vst [vmem:[%s645] ss:$9 sm:$0xff] %v626
        %684 = vst [vmem:[%s648] ss:$9 sm:$0xff] %v627
        %686 = vst [vmem:[%s651] ss:$9 sm:$0xff] %v628
        %v687 = vld [vmem:[#allocation1] sm:$0xff]
        %689 = vst [vmem:[#allocation1] ss:$9 sm:$0xff] %v437
        %v690 = vld [vmem:[#allocation1] sm:$0xff]
        %692 = vst [vmem:[#allocation1] ss:$4 sm:$0xff] %v264
        %v693 = vld.sshfl [vmem:[#allocation1] sm:$0xff pattern:$0x73625140]
        %v694 = vld.sshfl [vmem:[#allocation1 + $0x8] sm:$0xff pattern:$0x73625140]
        %v695 = vsel %vm535, %v653, 0
        %v697 = vsel %vm535, %v670, 0
        %v699 = vsel %vm535, %v687, 0
        %v701 = vsel %vm535, %v690, 0
        %v703 = vsel %vm544, %v693, 0
        %v705 = vsel %vm544, %v694, 0
        %707 = vmatpush.bf16.msra.mxu0 0
        %708 = vmatpush.bf16.msra.mxu0 0
        %709 = vmatpush.bf16.msra.mxu0 0
        %710 = vmatpush.bf16.msra.mxu0 0
        %711 = vmatpush.bf16.msra.mxu0 0
        %712 = vmatpush.bf16.msra.mxu0 0
        %713 = vmatpush.bf16.msra.mxu0 0
        %714 = vmatpush.bf16.msra.mxu0 %v703
        %715 = vmatmul.bf16.gmra.mxu0 %v695
        %v716 = vpop.f32.mrf.mxu0
        %v717 = vadd.f32 %v559, %v716
        %v718 = vpop.f32.mrf.mxu0
        %v719 = vadd.f32 %v561, %v718
        %720 = vmatmul.bf16.gmra.mxu0 %v697
        %v721 = vpop.f32.mrf.mxu0
        %v722 = vadd.f32 %v564, %v721
        %v723 = vpop.f32.mrf.mxu0
        %v724 = vadd.f32 %v566, %v723
        %725 = vmatmul.bf16.gmra.mxu0 %v699
        %v726 = vpop.f32.mrf.mxu0
        %v727 = vadd.f32 %v569, %v726
        %v728 = vpop.f32.mrf.mxu0
        %v729 = vadd.f32 %v571, %v728
        %730 = vmatmul.bf16.gmra.mxu0 %v701
        %v731 = vpop.f32.mrf.mxu0
        %v732 = vadd.f32 %v574, %v731
        %v733 = vpop.f32.mrf.mxu0
        %734 = vdwg.mxu0
        %735 = vmatpush.bf16.msra.mxu0 0
        %736 = vmatpush.bf16.msra.mxu0 0
        %737 = vmatpush.bf16.msra.mxu0 0
        %738 = vmatpush.bf16.msra.mxu0 0
        %739 = vmatpush.bf16.msra.mxu0 0
        %740 = vmatpush.bf16.msra.mxu0 0
        %741 = vmatpush.bf16.msra.mxu0 0
        %742 = vmatpush.bf16.msra.mxu0 %v705
        %743 = vmatmul.bf16.gmra.mxu0 %v695
        %v744 = vpop.f32.mrf.mxu0
        %v745 = vadd.f32 %v587, %v744
        %v746 = vpop.f32.mrf.mxu0
        %v747 = vadd.f32 %v589, %v746
        %748 = vmatmul.bf16.gmra.mxu0 %v697
        %v749 = vpop.f32.mrf.mxu0
        %v750 = vadd.f32 %v592, %v749
        %v751 = vpop.f32.mrf.mxu0
        %v752 = vadd.f32 %v594, %v751
        %753 = vmatmul.bf16.gmra.mxu0 %v699
        %v754 = vpop.f32.mrf.mxu0
        %v755 = vadd.f32 %v597, %v754
        %v756 = vpop.f32.mrf.mxu0
        %v757 = vadd.f32 %v599, %v756
        %758 = vmatmul.bf16.gmra.mxu0 %v701
        %v759 = vpop.f32.mrf.mxu0
        %v760 = vadd.f32 %v602, %v759
        %v761 = vpop.f32.mrf.mxu0
        %762 = vdwg.mxu0
        %v763 = vld [vmem:[%s259] sm:$0xe]
        %v764 = vld [vmem:[%s259 + $0x4] sm:$0x1]
        %v765 = vld [vmem:[%s259 + $0x8] sm:$0xe]
        %v766 = vld [vmem:[%s259 + $0xc] sm:$0x1]
        %v767 = vld [vmem:[%s259 + $0x10] sm:$0xe]
        %v768 = vld [vmem:[%s259 + $0x14] sm:$0x1]
        %v769 = vld [vmem:[%s259 + $0x18] sm:$0xe]
        %v770 = vld [vmem:[%s259 + $0x1c] sm:$0x1]
        %v771 = vld [vmem:[%s259 + $0x20] sm:$0xe]
        %v772 = vld [vmem:[%s259 + $0x24] sm:$0x1]
        %v773 = vld [vmem:[%s259 + $0x28] sm:$0xe]
        %v774 = vld [vmem:[%s259 + $0x2c] sm:$0x1]
        %v775 = vld [vmem:[%s259 + $0x30] sm:$0xe]
        %v776 = vld [vmem:[%s259 + $0x34] sm:$0x1]
        %778 = vst [vmem:[#allocation1] sm:$0xff] %v763
        %780 = vst [vmem:[#allocation1 + $0x20] sm:$0xff] %v764
        %s781 = scalar_lea.vmem [#allocation1], 1
        %v782 = vld [vmem:[%s781] ss:$4 sm:$0xff]
        %s784 = scalar_lea.vmem [#allocation1], 2
        %v785 = vld [vmem:[%s784] ss:$4 sm:$0xff]
        %s787 = scalar_lea.vmem [#allocation1], 3
        %v788 = vld [vmem:[%s787] ss:$4 sm:$0xff]
        %s790 = scalar_lea.vmem [#allocation1], 32
        %v791 = vld [vmem:[%s790] ss:$4 sm:$0xff]
        %794 = vst [vmem:[#allocation1] sm:$0xff] %v765
        %796 = vst [vmem:[#allocation1 + $0x20] sm:$0xff] %v766
        %v797 = vld [vmem:[%s781] ss:$4 sm:$0xff]
        %v799 = vld [vmem:[%s784] ss:$4 sm:$0xff]
        %v801 = vld [vmem:[%s787] ss:$4 sm:$0xff]
        %v803 = vld [vmem:[%s790] ss:$4 sm:$0xff]
        %806 = vst [vmem:[#allocation1] sm:$0xff] %v767
        %808 = vst [vmem:[#allocation1 + $0x20] sm:$0xff] %v768
        %v809 = vld [vmem:[%s781] ss:$4 sm:$0xff]
        %v811 = vld [vmem:[%s784] ss:$4 sm:$0xff]
        %v813 = vld [vmem:[%s787] ss:$4 sm:$0xff]
        %v815 = vld [vmem:[%s790] ss:$4 sm:$0xff]
        %818 = vst [vmem:[#allocation1] sm:$0xff] %v769
        %820 = vst [vmem:[#allocation1 + $0x20] sm:$0xff] %v770
        %v821 = vld [vmem:[%s781] ss:$4 sm:$0xff]
        %v823 = vld [vmem:[%s784] ss:$4 sm:$0xff]
        %v825 = vld [vmem:[%s787] ss:$4 sm:$0xff]
        %v827 = vld [vmem:[%s790] ss:$4 sm:$0xff]
        %830 = vst [vmem:[#allocation1] sm:$0xff] %v771
        %832 = vst [vmem:[#allocation1 + $0x20] sm:$0xff] %v772
        %v833 = vld [vmem:[%s781] ss:$4 sm:$0xff]
        %v835 = vld [vmem:[%s784] ss:$4 sm:$0xff]
        %v837 = vld [vmem:[%s787] ss:$4 sm:$0xff]
        %v839 = vld [vmem:[%s790] ss:$4 sm:$0xff]
        %842 = vst [vmem:[#allocation1] sm:$0xff] %v773
        %844 = vst [vmem:[#allocation1 + $0x20] sm:$0xff] %v774
        %v845 = vld [vmem:[%s781] ss:$4 sm:$0xff]
        %v847 = vld [vmem:[%s784] ss:$4 sm:$0xff]
        %v849 = vld [vmem:[%s787] ss:$4 sm:$0xff]
        %v851 = vld [vmem:[%s790] ss:$4 sm:$0xff]
        %854 = vst [vmem:[#allocation1] sm:$0xff] %v775
        %856 = vst [vmem:[#allocation1 + $0x20] sm:$0xff] %v776
        %v857 = vld [vmem:[%s781] ss:$4 sm:$0xff]
        %v859 = vld [vmem:[%s784] ss:$4 sm:$0xff]
        %v861 = vld [vmem:[%s787] ss:$4 sm:$0xff]
        %v863 = vld [vmem:[%s790] ss:$4 sm:$0xff]
        %v865 = vunpack.i.l.s16 %v782
        %v866 = vunpack.i.h.s16 %v782
        %v867 = vunpack.i.l.s16 %v785
        %v868 = vunpack.i.h.s16 %v785
        %v869 = vunpack.i.l.s16 %v788
        %v870 = vunpack.i.h.s16 %v788
        %v871 = vunpack.i.l.s16 %v791
        %v872 = vunpack.i.l.s16 %v797
        %v873 = vunpack.i.h.s16 %v797
        %v874 = vunpack.i.l.s16 %v799
        %v875 = vunpack.i.h.s16 %v799
        %v876 = vunpack.i.l.s16 %v801
        %v877 = vunpack.i.h.s16 %v801
        %v878 = vunpack.i.l.s16 %v803
        %v879 = vunpack.i.l.s16 %v809
        %v880 = vunpack.i.h.s16 %v809
        %v881 = vunpack.i.l.s16 %v811
        %v882 = vunpack.i.h.s16 %v811
        %v883 = vunpack.i.l.s16 %v813
        %v884 = vunpack.i.h.s16 %v813
        %v885 = vunpack.i.l.s16 %v815
        %v886 = vunpack.i.l.s16 %v821
        %v887 = vunpack.i.h.s16 %v821
        %v888 = vunpack.i.l.s16 %v823
        %v889 = vunpack.i.h.s16 %v823
        %v890 = vunpack.i.l.s16 %v825
        %v891 = vunpack.i.h.s16 %v825
        %v892 = vunpack.i.l.s16 %v827
        %v893 = vunpack.i.l.s16 %v833
        %v894 = vunpack.i.h.s16 %v833
        %v895 = vunpack.i.l.s16 %v835
        %v896 = vunpack.i.h.s16 %v835
        %v897 = vunpack.i.l.s16 %v837
        %v898 = vunpack.i.h.s16 %v837
        %v899 = vunpack.i.l.s16 %v839
        %v900 = vunpack.i.l.s16 %v845
        %v901 = vunpack.i.h.s16 %v845
        %v902 = vunpack.i.l.s16 %v847
        %v903 = vunpack.i.h.s16 %v847
        %v904 = vunpack.i.l.s16 %v849
        %v905 = vunpack.i.h.s16 %v849
        %v906 = vunpack.i.l.s16 %v851
        %v907 = vunpack.i.l.s16 %v857
        %v908 = vunpack.i.h.s16 %v857
        %v909 = vunpack.i.l.s16 %v859
        %v910 = vunpack.i.h.s16 %v859
        %v911 = vunpack.i.l.s16 %v861
        %v912 = vunpack.i.h.s16 %v861
        %v913 = vunpack.i.l.s16 %v863
        %v914 = vpack.i.b16 %v866, %v865
        %v915 = vpack.i.b16 %v868, %v867
        %v916 = vpack.i.b16 %v870, %v869
        %v917 = vpack.i.b16 %v872, %v871
        %v918 = vpack.i.b16 %v874, %v873
        %v919 = vpack.i.b16 %v876, %v875
        %v920 = vpack.i.b16 %v878, %v877
        %v921 = vpack.i.b16 %v880, %v879
        %v922 = vpack.i.b16 %v882, %v881
        %v923 = vpack.i.b16 %v884, %v883
        %v924 = vpack.i.b16 %v886, %v885
        %v925 = vpack.i.b16 %v888, %v887
        %v926 = vpack.i.b16 %v890, %v889
        %v927 = vpack.i.b16 %v892, %v891
        %v928 = vpack.i.b16 %v894, %v893
        %v929 = vpack.i.b16 %v896, %v895
        %v930 = vpack.i.b16 %v898, %v897
        %v931 = vpack.i.b16 %v900, %v899
        %v932 = vpack.i.b16 %v902, %v901
        %v933 = vpack.i.b16 %v904, %v903
        %v934 = vpack.i.b16 %v906, %v905
        %v935 = vpack.i.b16 %v908, %v907
        %v936 = vpack.i.b16 %v910, %v909
        %v937 = vpack.i.b16 %v912, %v911
        %940 = vst [vmem:[#allocation1] ss:$9 sm:$0xff] %v914
        %s942 = scalar_lea.vmem [#allocation1], 1
        %943 = vst [vmem:[%s942] ss:$9 sm:$0xff] %v915
        %s945 = scalar_lea.vmem [#allocation1], 2
        %946 = vst [vmem:[%s945] ss:$9 sm:$0xff] %v916
        %s948 = scalar_lea.vmem [#allocation1], 3
        %949 = vst [vmem:[%s948] ss:$9 sm:$0xff] %v917
        %s951 = scalar_lea.vmem [#allocation1], 4
        %952 = vst [vmem:[%s951] ss:$9 sm:$0xff] %v918
        %s954 = scalar_lea.vmem [#allocation1], 5
        %955 = vst [vmem:[%s954] ss:$9 sm:$0xff] %v919
        %s957 = scalar_lea.vmem [#allocation1], 6
        %958 = vst [vmem:[%s957] ss:$9 sm:$0xff] %v920
        %s960 = scalar_lea.vmem [#allocation1], 7
        %961 = vst [vmem:[%s960] ss:$9 sm:$0xff] %v921
        %v962 = vld [vmem:[#allocation1] sm:$0xff]
        %964 = vst [vmem:[#allocation1] ss:$9 sm:$0xff] %v922
        %966 = vst [vmem:[%s942] ss:$9 sm:$0xff] %v923
        %968 = vst [vmem:[%s945] ss:$9 sm:$0xff] %v924
        %970 = vst [vmem:[%s948] ss:$9 sm:$0xff] %v925
        %972 = vst [vmem:[%s951] ss:$9 sm:$0xff] %v926
        %974 = vst [vmem:[%s954] ss:$9 sm:$0xff] %v927
        %976 = vst [vmem:[%s957] ss:$9 sm:$0xff] %v928
        %978 = vst [vmem:[%s960] ss:$9 sm:$0xff] %v929
        %v979 = vld [vmem:[#allocation1] sm:$0xff]
        %981 = vst [vmem:[#allocation1] ss:$9 sm:$0xff] %v930
        %983 = vst [vmem:[%s942] ss:$9 sm:$0xff] %v931
        %985 = vst [vmem:[%s945] ss:$9 sm:$0xff] %v932
        %987 = vst [vmem:[%s948] ss:$9 sm:$0xff] %v933
        %989 = vst [vmem:[%s951] ss:$9 sm:$0xff] %v934
        %991 = vst [vmem:[%s954] ss:$9 sm:$0xff] %v935
        %993 = vst [vmem:[%s957] ss:$9 sm:$0xff] %v936
        %995 = vst [vmem:[%s960] ss:$9 sm:$0xff] %v937
        %v996 = vld [vmem:[#allocation1] sm:$0xff]
        %998 = vst [vmem:[#allocation1] ss:$9 sm:$0xff] %v913
        %v999 = vld [vmem:[#allocation1] sm:$0xff]
        %1001 = vst [vmem:[#allocation1] ss:$4 sm:$0xff] %v266
        %v1002 = vld.sshfl [vmem:[#allocation1] sm:$0xff pattern:$0x73625140]
        %v1003 = vld.sshfl [vmem:[#allocation1 + $0x8] sm:$0xff pattern:$0x73625140]
        %v1004 = vsel %vm535, %v962, 0
        %v1006 = vsel %vm535, %v979, 0
        %v1008 = vsel %vm535, %v996, 0
        %v1010 = vsel %vm535, %v999, 0
        %v1012 = vsel %vm544, %v1002, 0
        %v1014 = vsel %vm544, %v1003, 0
        %1016 = vmatpush.bf16.msra.mxu0 0
        %1017 = vmatpush.bf16.msra.mxu0 0
        %1018 = vmatpush.bf16.msra.mxu0 0
        %1019 = vmatpush.bf16.msra.mxu0 0
        %1020 = vmatpush.bf16.msra.mxu0 0
        %1021 = vmatpush.bf16.msra.mxu0 0
        %1022 = vmatpush.bf16.msra.mxu0 0
        %1023 = vmatpush.bf16.msra.mxu0 %v1012
        %1024 = vmatmul.bf16.gmra.mxu0 %v1004
        %v1025 = vpop.f32.mrf.mxu0
        %v1026 = vadd.f32 0.0, %v1025
        %v1027 = vpop.f32.mrf.mxu0
        %v1028 = vadd.f32 0.0, %v1027
        %1029 = vmatmul.bf16.gmra.mxu0 %v1006
        %v1030 = vpop.f32.mrf.mxu0
        %v1031 = vadd.f32 0.0, %v1030
        %v1032 = vpop.f32.mrf.mxu0
        %v1033 = vadd.f32 0.0, %v1032
        %1034 = vmatmul.bf16.gmra.mxu0 %v1008
        %v1035 = vpop.f32.mrf.mxu0
        %v1036 = vadd.f32 0.0, %v1035
        %v1037 = vpop.f32.mrf.mxu0
        %v1038 = vadd.f32 0.0, %v1037
        %1039 = vmatmul.bf16.gmra.mxu0 %v1010
        %v1040 = vpop.f32.mrf.mxu0
        %v1041 = vadd.f32 0.0, %v1040
        %v1042 = vpop.f32.mrf.mxu0
        %1043 = vdwg.mxu0
        %1044 = vmatpush.bf16.msra.mxu0 0
        %1045 = vmatpush.bf16.msra.mxu0 0
        %1046 = vmatpush.bf16.msra.mxu0 0
        %1047 = vmatpush.bf16.msra.mxu0 0
        %1048 = vmatpush.bf16.msra.mxu0 0
        %1049 = vmatpush.bf16.msra.mxu0 0
        %1050 = vmatpush.bf16.msra.mxu0 0
        %1051 = vmatpush.bf16.msra.mxu0 %v1014
        %1052 = vmatmul.bf16.gmra.mxu0 %v1004
        %v1053 = vpop.f32.mrf.mxu0
        %v1054 = vadd.f32 0.0, %v1053
        %v1055 = vpop.f32.mrf.mxu0
        %v1056 = vadd.f32 0.0, %v1055
        %1057 = vmatmul.bf16.gmra.mxu0 %v1006
        %v1058 = vpop.f32.mrf.mxu0
        %v1059 = vadd.f32 0.0, %v1058
        %v1060 = vpop.f32.mrf.mxu0
        %v1061 = vadd.f32 0.0, %v1060
        %1062 = vmatmul.bf16.gmra.mxu0 %v1008
        %v1063 = vpop.f32.mrf.mxu0
        %v1064 = vadd.f32 0.0, %v1063
        %v1065 = vpop.f32.mrf.mxu0
        %v1066 = vadd.f32 0.0, %v1065
        %1067 = vmatmul.bf16.gmra.mxu0 %v1010
        %v1068 = vpop.f32.mrf.mxu0
        %v1069 = vadd.f32 0.0, %v1068
        %v1070 = vpop.f32.mrf.mxu0
        %1071 = vdwg.mxu0
        %v1072 = vadd.f32 %v717, %v1026
        %v1073 = vadd.f32 %v745, %v1054
        %v1074 = vadd.f32 %v719, %v1028
        %v1075 = vadd.f32 %v747, %v1056
        %v1076 = vadd.f32 %v722, %v1031
        %v1077 = vadd.f32 %v750, %v1059
        %v1078 = vadd.f32 %v724, %v1033
        %v1079 = vadd.f32 %v752, %v1061
        %v1080 = vadd.f32 %v727, %v1036
        %v1081 = vadd.f32 %v755, %v1064
        %v1082 = vadd.f32 %v729, %v1038
        %v1083 = vadd.f32 %v757, %v1066
        %v1084 = vadd.f32 %v732, %v1041
        %v1085 = vadd.f32 %v760, %v1069
        %s1086 = scalar_lea.vmem %s259, 8
        %v1087 = vld [vmem:[%s1086] sm:$0xf]
        %v1088 = vld [vmem:[%s1086 + $0x8] sm:$0xf]
        %v1089 = vld [vmem:[%s1086 + $0x10] sm:$0xf]
        %v1090 = vld [vmem:[%s1086 + $0x18] sm:$0xf]
        %v1091 = vld [vmem:[%s1086 + $0x20] sm:$0xf]
        %v1092 = vld [vmem:[%s1086 + $0x28] sm:$0xf]
        %v1093 = vld [vmem:[%s1086 + $0x30] sm:$0xf]
        %v1101 = vrot.slane %v1087, 3
        %v1102 = vrot.slane %v1088, 3
        %v1103 = vrot.slane %v1089, 3
        %v1104 = vrot.slane %v1090, 3
        %v1105 = vrot.slane %v1091, 3
        %v1106 = vrot.slane %v1092, 3
        %v1107 = vrot.slane %v1093, 3
        %v1110 = vsel %vm294, %v1087, %v1101
        %v1112 = vsel %vm299, %v1087, %v1101
        %v1114 = vrot.slane %v1112, 1
        %v1115 = vsel %vm303, %v1087, %v1101
        %v1117 = vrot.slane %v1115, 2
        %v1118 = vsel %vm307, %v1087, %v1101
        %v1120 = vrot.slane %v1118, 3
        %v1123 = vsel %vm294, %v1088, %v1102
        %v1125 = vsel %vm299, %v1088, %v1102
        %v1127 = vrot.slane %v1125, 1
        %v1128 = vsel %vm303, %v1088, %v1102
        %v1130 = vrot.slane %v1128, 2
        %v1131 = vsel %vm307, %v1088, %v1102
        %v1133 = vrot.slane %v1131, 3
        %v1136 = vsel %vm294, %v1089, %v1103
        %v1138 = vsel %vm299, %v1089, %v1103
        %v1140 = vrot.slane %v1138, 1
        %v1141 = vsel %vm303, %v1089, %v1103
        %v1143 = vrot.slane %v1141, 2
        %v1144 = vsel %vm307, %v1089, %v1103
        %v1146 = vrot.slane %v1144, 3
        %v1149 = vsel %vm294, %v1090, %v1104
        %v1151 = vsel %vm299, %v1090, %v1104
        %v1153 = vrot.slane %v1151, 1
        %v1154 = vsel %vm303, %v1090, %v1104
        %v1156 = vrot.slane %v1154, 2
        %v1157 = vsel %vm307, %v1090, %v1104
        %v1159 = vrot.slane %v1157, 3
        %v1162 = vsel %vm294, %v1091, %v1105
        %v1164 = vsel %vm299, %v1091, %v1105
        %v1166 = vrot.slane %v1164, 1
        %v1167 = vsel %vm303, %v1091, %v1105
        %v1169 = vrot.slane %v1167, 2
        %v1170 = vsel %vm307, %v1091, %v1105
        %v1172 = vrot.slane %v1170, 3
        %v1175 = vsel %vm294, %v1092, %v1106
        %v1177 = vsel %vm299, %v1092, %v1106
        %v1179 = vrot.slane %v1177, 1
        %v1180 = vsel %vm303, %v1092, %v1106
        %v1182 = vrot.slane %v1180, 2
        %v1183 = vsel %vm307, %v1092, %v1106
        %v1185 = vrot.slane %v1183, 3
        %v1188 = vsel %vm294, %v1093, %v1107
        %v1190 = vsel %vm299, %v1093, %v1107
        %v1192 = vrot.slane %v1190, 1
        %v1193 = vsel %vm303, %v1093, %v1107
        %v1195 = vrot.slane %v1193, 2
        %v1196 = vsel %vm307, %v1093, %v1107
        %v1198 = vrot.slane %v1196, 3
        %v1199 = vunpack.i.l.s16 %v1110
        %v1200 = vunpack.i.h.s16 %v1110
        %v1201 = vunpack.i.l.s16 %v1114
        %v1202 = vunpack.i.h.s16 %v1114
        %v1203 = vunpack.i.l.s16 %v1117
        %v1204 = vunpack.i.h.s16 %v1117
        %v1205 = vunpack.i.l.s16 %v1120
        %v1206 = vunpack.i.l.s16 %v1123
        %v1207 = vunpack.i.h.s16 %v1123
        %v1208 = vunpack.i.l.s16 %v1127
        %v1209 = vunpack.i.h.s16 %v1127
        %v1210 = vunpack.i.l.s16 %v1130
        %v1211 = vunpack.i.h.s16 %v1130
        %v1212 = vunpack.i.l.s16 %v1133
        %v1213 = vunpack.i.l.s16 %v1136
        %v1214 = vunpack.i.h.s16 %v1136
        %v1215 = vunpack.i.l.s16 %v1140
        %v1216 = vunpack.i.h.s16 %v1140
        %v1217 = vunpack.i.l.s16 %v1143
        %v1218 = vunpack.i.h.s16 %v1143
        %v1219 = vunpack.i.l.s16 %v1146
        %v1220 = vunpack.i.l.s16 %v1149
        %v1221 = vunpack.i.h.s16 %v1149
        %v1222 = vunpack.i.l.s16 %v1153
        %v1223 = vunpack.i.h.s16 %v1153
        %v1224 = vunpack.i.l.s16 %v1156
        %v1225 = vunpack.i.h.s16 %v1156
        %v1226 = vunpack.i.l.s16 %v1159
        %v1227 = vunpack.i.l.s16 %v1162
        %v1228 = vunpack.i.h.s16 %v1162
        %v1229 = vunpack.i.l.s16 %v1166
        %v1230 = vunpack.i.h.s16 %v1166
        %v1231 = vunpack.i.l.s16 %v1169
        %v1232 = vunpack.i.h.s16 %v1169
        %v1233 = vunpack.i.l.s16 %v1172
        %v1234 = vunpack.i.l.s16 %v1175
        %v1235 = vunpack.i.h.s16 %v1175
        %v1236 = vunpack.i.l.s16 %v1179
        %v1237 = vunpack.i.h.s16 %v1179
        %v1238 = vunpack.i.l.s16 %v1182
        %v1239 = vunpack.i.h.s16 %v1182
        %v1240 = vunpack.i.l.s16 %v1185
        %v1241 = vunpack.i.l.s16 %v1188
        %v1242 = vunpack.i.h.s16 %v1188
        %v1243 = vunpack.i.l.s16 %v1192
        %v1244 = vunpack.i.h.s16 %v1192
        %v1245 = vunpack.i.l.s16 %v1195
        %v1246 = vunpack.i.h.s16 %v1195
        %v1247 = vunpack.i.l.s16 %v1198
        %v1248 = vpack.i.b16 %v1200, %v1199
        %v1249 = vpack.i.b16 %v1202, %v1201
        %v1250 = vpack.i.b16 %v1204, %v1203
        %v1251 = vpack.i.b16 %v1206, %v1205
        %v1252 = vpack.i.b16 %v1208, %v1207
        %v1253 = vpack.i.b16 %v1210, %v1209
        %v1254 = vpack.i.b16 %v1212, %v1211
        %v1255 = vpack.i.b16 %v1214, %v1213
        %v1256 = vpack.i.b16 %v1216, %v1215
        %v1257 = vpack.i.b16 %v1218, %v1217
        %v1258 = vpack.i.b16 %v1220, %v1219
        %v1259 = vpack.i.b16 %v1222, %v1221
        %v1260 = vpack.i.b16 %v1224, %v1223
        %v1261 = vpack.i.b16 %v1226, %v1225
        %v1262 = vpack.i.b16 %v1228, %v1227
        %v1263 = vpack.i.b16 %v1230, %v1229
        %v1264 = vpack.i.b16 %v1232, %v1231
        %v1265 = vpack.i.b16 %v1234, %v1233
        %v1266 = vpack.i.b16 %v1236, %v1235
        %v1267 = vpack.i.b16 %v1238, %v1237
        %v1268 = vpack.i.b16 %v1240, %v1239
        %v1269 = vpack.i.b16 %v1242, %v1241
        %v1270 = vpack.i.b16 %v1244, %v1243
        %v1271 = vpack.i.b16 %v1246, %v1245
        %1274 = vst [vmem:[#allocation1] ss:$9 sm:$0xff] %v1248
        %s1276 = scalar_lea.vmem [#allocation1], 1
        %1277 = vst [vmem:[%s1276] ss:$9 sm:$0xff] %v1249
        %s1279 = scalar_lea.vmem [#allocation1], 2
        %1280 = vst [vmem:[%s1279] ss:$9 sm:$0xff] %v1250
        %s1282 = scalar_lea.vmem [#allocation1], 3
        %1283 = vst [vmem:[%s1282] ss:$9 sm:$0xff] %v1251
        %s1285 = scalar_lea.vmem [#allocation1], 4
        %1286 = vst [vmem:[%s1285] ss:$9 sm:$0xff] %v1252
        %s1288 = scalar_lea.vmem [#allocation1], 5
        %1289 = vst [vmem:[%s1288] ss:$9 sm:$0xff] %v1253
        %s1291 = scalar_lea.vmem [#allocation1], 6
        %1292 = vst [vmem:[%s1291] ss:$9 sm:$0xff] %v1254
        %s1294 = scalar_lea.vmem [#allocation1], 7
        %1295 = vst [vmem:[%s1294] ss:$9 sm:$0xff] %v1255
        %v1296 = vld [vmem:[#allocation1] sm:$0xff]
        %1298 = vst [vmem:[#allocation1] ss:$9 sm:$0xff] %v1256
        %1300 = vst [vmem:[%s1276] ss:$9 sm:$0xff] %v1257
        %1302 = vst [vmem:[%s1279] ss:$9 sm:$0xff] %v1258
        %1304 = vst [vmem:[%s1282] ss:$9 sm:$0xff] %v1259
        %1306 = vst [vmem:[%s1285] ss:$9 sm:$0xff] %v1260
        %1308 = vst [vmem:[%s1288] ss:$9 sm:$0xff] %v1261
        %1310 = vst [vmem:[%s1291] ss:$9 sm:$0xff] %v1262
        %1312 = vst [vmem:[%s1294] ss:$9 sm:$0xff] %v1263
        %v1313 = vld [vmem:[#allocation1] sm:$0xff]
        %1315 = vst [vmem:[#allocation1] ss:$9 sm:$0xff] %v1264
        %1317 = vst [vmem:[%s1276] ss:$9 sm:$0xff] %v1265
        %1319 = vst [vmem:[%s1279] ss:$9 sm:$0xff] %v1266
        %1321 = vst [vmem:[%s1282] ss:$9 sm:$0xff] %v1267
        %1323 = vst [vmem:[%s1285] ss:$9 sm:$0xff] %v1268
        %1325 = vst [vmem:[%s1288] ss:$9 sm:$0xff] %v1269
        %1327 = vst [vmem:[%s1291] ss:$9 sm:$0xff] %v1270
        %1329 = vst [vmem:[%s1294] ss:$9 sm:$0xff] %v1271
        %v1330 = vld [vmem:[#allocation1] sm:$0xff]
        %1332 = vst [vmem:[#allocation1] ss:$9 sm:$0xff] %v1247
        %v1333 = vld [vmem:[#allocation1] sm:$0xff]
        %1335 = vst [vmem:[#allocation1] ss:$4 sm:$0xff] %v267
        %v1336 = vld.sshfl [vmem:[#allocation1] sm:$0xff pattern:$0x73625140]
        %v1337 = vld.sshfl [vmem:[#allocation1 + $0x8] sm:$0xff pattern:$0x73625140]
        %v1338 = vsel %vm535, %v1296, 0
        %v1340 = vsel %vm535, %v1313, 0
        %v1342 = vsel %vm535, %v1330, 0
        %v1344 = vsel %vm535, %v1333, 0
        %v1346 = vsel %vm544, %v1336, 0
        %v1348 = vsel %vm544, %v1337, 0
        %1350 = vmatpush.bf16.msra.mxu0 0
        %1351 = vmatpush.bf16.msra.mxu0 0
        %1352 = vmatpush.bf16.msra.mxu0 0
        %1353 = vmatpush.bf16.msra.mxu0 0
        %1354 = vmatpush.bf16.msra.mxu0 0
        %1355 = vmatpush.bf16.msra.mxu0 0
        %1356 = vmatpush.bf16.msra.mxu0 0
        %1357 = vmatpush.bf16.msra.mxu0 %v1346
        %1358 = vmatmul.bf16.gmra.mxu0 %v1338
        %v1359 = vpop.f32.mrf.mxu0
        %v1360 = vadd.f32 0.0, %v1359
        %v1361 = vpop.f32.mrf.mxu0
        %v1362 = vadd.f32 0.0, %v1361
        %1363 = vmatmul.bf16.gmra.mxu0 %v1340
        %v1364 = vpop.f32.mrf.mxu0
        %v1365 = vadd.f32 0.0, %v1364
        %v1366 = vpop.f32.mrf.mxu0
        %v1367 = vadd.f32 0.0, %v1366
        %1368 = vmatmul.bf16.gmra.mxu0 %v1342
        %v1369 = vpop.f32.mrf.mxu0
        %v1370 = vadd.f32 0.0, %v1369
        %v1371 = vpop.f32.mrf.mxu0
        %v1372 = vadd.f32 0.0, %v1371
        %1373 = vmatmul.bf16.gmra.mxu0 %v1344
        %v1374 = vpop.f32.mrf.mxu0
        %v1375 = vadd.f32 0.0, %v1374
        %v1376 = vpop.f32.mrf.mxu0
        %1377 = vdwg.mxu0
        %1378 = vmatpush.bf16.msra.mxu0 0
        %1379 = vmatpush.bf16.msra.mxu0 0
        %1380 = vmatpush.bf16.msra.mxu0 0
        %1381 = vmatpush.bf16.msra.mxu0 0
        %1382 = vmatpush.bf16.msra.mxu0 0
        %1383 = vmatpush.bf16.msra.mxu0 0
        %1384 = vmatpush.bf16.msra.mxu0 0
        %1385 = vmatpush.bf16.msra.mxu0 %v1348
        %1386 = vmatmul.bf16.gmra.mxu0 %v1338
        %v1387 = vpop.f32.mrf.mxu0
        %v1388 = vadd.f32 0.0, %v1387
        %v1389 = vpop.f32.mrf.mxu0
        %v1390 = vadd.f32 0.0, %v1389
        %1391 = vmatmul.bf16.gmra.mxu0 %v1340
        %v1392 = vpop.f32.mrf.mxu0
        %v1393 = vadd.f32 0.0, %v1392
        %v1394 = vpop.f32.mrf.mxu0
        %v1395 = vadd.f32 0.0, %v1394
        %1396 = vmatmul.bf16.gmra.mxu0 %v1342
        %v1397 = vpop.f32.mrf.mxu0
        %v1398 = vadd.f32 0.0, %v1397
        %v1399 = vpop.f32.mrf.mxu0
        %v1400 = vadd.f32 0.0, %v1399
        %1401 = vmatmul.bf16.gmra.mxu0 %v1344
        %v1402 = vpop.f32.mrf.mxu0
        %v1403 = vadd.f32 0.0, %v1402
        %v1404 = vpop.f32.mrf.mxu0
        %1405 = vdwg.mxu0
        %v1406 = vadd.f32 %v1072, %v1360
        %v1407 = vadd.f32 %v1073, %v1388
        %v1408 = vadd.f32 %v1074, %v1362
        %v1409 = vadd.f32 %v1075, %v1390
        %v1410 = vadd.f32 %v1076, %v1365
        %v1411 = vadd.f32 %v1077, %v1393
        %v1412 = vadd.f32 %v1078, %v1367
        %v1413 = vadd.f32 %v1079, %v1395
        %v1414 = vadd.f32 %v1080, %v1370
        %v1415 = vadd.f32 %v1081, %v1398
        %v1416 = vadd.f32 %v1082, %v1372
        %v1417 = vadd.f32 %v1083, %v1400
        %v1418 = vadd.f32 %v1084, %v1375
        %v1419 = vadd.f32 %v1085, %v1403
        %v1420 = vld [vmem:[%s1086] sm:$0xf]
        %v1421 = vld [vmem:[%s1086 + $0x8] sm:$0xf]
        %v1422 = vld [vmem:[%s1086 + $0x10] sm:$0xf]
        %v1423 = vld [vmem:[%s1086 + $0x18] sm:$0xf]
        %v1424 = vld [vmem:[%s1086 + $0x20] sm:$0xf]
        %v1425 = vld [vmem:[%s1086 + $0x28] sm:$0xf]
        %v1426 = vld [vmem:[%s1086 + $0x30] sm:$0xf]
        %v1434 = vrot.slane %v1420, 3
        %v1435 = vrot.slane %v1421, 3
        %v1436 = vrot.slane %v1422, 3
        %v1437 = vrot.slane %v1423, 3
        %v1438 = vrot.slane %v1424, 3
        %v1439 = vrot.slane %v1425, 3
        %v1440 = vrot.slane %v1426, 3
        %v1443 = vsel %vm294, %v1420, %v1434
        %v1445 = vsel %vm299, %v1420, %v1434
        %v1447 = vrot.slane %v1445, 1
        %v1448 = vsel %vm303, %v1420, %v1434
        %v1450 = vrot.slane %v1448, 2
        %v1451 = vsel %vm307, %v1420, %v1434
        %v1453 = vrot.slane %v1451, 3
        %v1456 = vsel %vm294, %v1421, %v1435
        %v1458 = vsel %vm299, %v1421, %v1435
        %v1460 = vrot.slane %v1458, 1
        %v1461 = vsel %vm303, %v1421, %v1435
        %v1463 = vrot.slane %v1461, 2
        %v1464 = vsel %vm307, %v1421, %v1435
        %v1466 = vrot.slane %v1464, 3
        %v1469 = vsel %vm294, %v1422, %v1436
        %v1471 = vsel %vm299, %v1422, %v1436
        %v1473 = vrot.slane %v1471, 1
        %v1474 = vsel %vm303, %v1422, %v1436
        %v1476 = vrot.slane %v1474, 2
        %v1477 = vsel %vm307, %v1422, %v1436
        %v1479 = vrot.slane %v1477, 3
        %v1482 = vsel %vm294, %v1423, %v1437
        %v1484 = vsel %vm299, %v1423, %v1437
        %v1486 = vrot.slane %v1484, 1
        %v1487 = vsel %vm303, %v1423, %v1437
        %v1489 = vrot.slane %v1487, 2
        %v1490 = vsel %vm307, %v1423, %v1437
        %v1492 = vrot.slane %v1490, 3
        %v1495 = vsel %vm294, %v1424, %v1438
        %v1497 = vsel %vm299, %v1424, %v1438
        %v1499 = vrot.slane %v1497, 1
        %v1500 = vsel %vm303, %v1424, %v1438
        %v1502 = vrot.slane %v1500, 2
        %v1503 = vsel %vm307, %v1424, %v1438
        %v1505 = vrot.slane %v1503, 3
        %v1508 = vsel %vm294, %v1425, %v1439
        %v1510 = vsel %vm299, %v1425, %v1439
        %v1512 = vrot.slane %v1510, 1
        %v1513 = vsel %vm303, %v1425, %v1439
        %v1515 = vrot.slane %v1513, 2
        %v1516 = vsel %vm307, %v1425, %v1439
        %v1518 = vrot.slane %v1516, 3
        %v1521 = vsel %vm294, %v1426, %v1440
        %v1523 = vsel %vm299, %v1426, %v1440
        %v1525 = vrot.slane %v1523, 1
        %v1526 = vsel %vm303, %v1426, %v1440
        %v1528 = vrot.slane %v1526, 2
        %v1529 = vsel %vm307, %v1426, %v1440
        %v1531 = vrot.slane %v1529, 3
        %v1532 = vunpack.i.h.s16 %v1443
        %v1533 = vunpack.i.l.s16 %v1447
        %v1534 = vunpack.i.h.s16 %v1447
        %v1535 = vunpack.i.l.s16 %v1450
        %v1536 = vunpack.i.h.s16 %v1450
        %v1537 = vunpack.i.l.s16 %v1453
        %v1538 = vunpack.i.h.s16 %v1453
        %v1539 = vunpack.i.h.s16 %v1456
        %v1540 = vunpack.i.l.s16 %v1460
        %v1541 = vunpack.i.h.s16 %v1460
        %v1542 = vunpack.i.l.s16 %v1463
        %v1543 = vunpack.i.h.s16 %v1463
        %v1544 = vunpack.i.l.s16 %v1466
        %v1545 = vunpack.i.h.s16 %v1466
        %v1546 = vunpack.i.h.s16 %v1469
        %v1547 = vunpack.i.l.s16 %v1473
        %v1548 = vunpack.i.h.s16 %v1473
        %v1549 = vunpack.i.l.s16 %v1476
        %v1550 = vunpack.i.h.s16 %v1476
        %v1551 = vunpack.i.l.s16 %v1479
        %v1552 = vunpack.i.h.s16 %v1479
        %v1553 = vunpack.i.h.s16 %v1482
        %v1554 = vunpack.i.l.s16 %v1486
        %v1555 = vunpack.i.h.s16 %v1486
        %v1556 = vunpack.i.l.s16 %v1489
        %v1557 = vunpack.i.h.s16 %v1489
        %v1558 = vunpack.i.l.s16 %v1492
        %v1559 = vunpack.i.h.s16 %v1492
        %v1560 = vunpack.i.h.s16 %v1495
        %v1561 = vunpack.i.l.s16 %v1499
        %v1562 = vunpack.i.h.s16 %v1499
        %v1563 = vunpack.i.l.s16 %v1502
        %v1564 = vunpack.i.h.s16 %v1502
        %v1565 = vunpack.i.l.s16 %v1505
        %v1566 = vunpack.i.h.s16 %v1505
        %v1567 = vunpack.i.h.s16 %v1508
        %v1568 = vunpack.i.l.s16 %v1512
        %v1569 = vunpack.i.h.s16 %v1512
        %v1570 = vunpack.i.l.s16 %v1515
        %v1571 = vunpack.i.h.s16 %v1515
        %v1572 = vunpack.i.l.s16 %v1518
        %v1573 = vunpack.i.h.s16 %v1518
        %v1574 = vunpack.i.h.s16 %v1521
        %v1575 = vunpack.i.l.s16 %v1525
        %v1576 = vunpack.i.h.s16 %v1525
        %v1577 = vunpack.i.l.s16 %v1528
        %v1578 = vunpack.i.h.s16 %v1528
        %v1579 = vunpack.i.l.s16 %v1531
        %v1580 = vunpack.i.h.s16 %v1531
        %v1581 = vpack.i.b16 %v1533, %v1532
        %v1582 = vpack.i.b16 %v1535, %v1534
        %v1583 = vpack.i.b16 %v1537, %v1536
        %v1584 = vpack.i.b16 %v1539, %v1538
        %v1585 = vpack.i.b16 %v1541, %v1540
        %v1586 = vpack.i.b16 %v1543, %v1542
        %v1587 = vpack.i.b16 %v1545, %v1544
        %v1588 = vpack.i.b16 %v1547, %v1546
        %v1589 = vpack.i.b16 %v1549, %v1548
        %v1590 = vpack.i.b16 %v1551, %v1550
        %v1591 = vpack.i.b16 %v1553, %v1552
        %v1592 = vpack.i.b16 %v1555, %v1554
        %v1593 = vpack.i.b16 %v1557, %v1556
        %v1594 = vpack.i.b16 %v1559, %v1558
        %v1595 = vpack.i.b16 %v1561, %v1560
        %v1596 = vpack.i.b16 %v1563, %v1562
        %v1597 = vpack.i.b16 %v1565, %v1564
        %v1598 = vpack.i.b16 %v1567, %v1566
        %v1599 = vpack.i.b16 %v1569, %v1568
        %v1600 = vpack.i.b16 %v1571, %v1570
        %v1601 = vpack.i.b16 %v1573, %v1572
        %v1602 = vpack.i.b16 %v1575, %v1574
        %v1603 = vpack.i.b16 %v1577, %v1576
        %v1604 = vpack.i.b16 %v1579, %v1578
        %1607 = vst [vmem:[#allocation1] ss:$9 sm:$0xff] %v1581
        %s1609 = scalar_lea.vmem [#allocation1], 1
        %1610 = vst [vmem:[%s1609] ss:$9 sm:$0xff] %v1582
        %s1612 = scalar_lea.vmem [#allocation1], 2
        %1613 = vst [vmem:[%s1612] ss:$9 sm:$0xff] %v1583
        %s1615 = scalar_lea.vmem [#allocation1], 3
        %1616 = vst [vmem:[%s1615] ss:$9 sm:$0xff] %v1584
        %s1618 = scalar_lea.vmem [#allocation1], 4
        %1619 = vst [vmem:[%s1618] ss:$9 sm:$0xff] %v1585
        %s1621 = scalar_lea.vmem [#allocation1], 5
        %1622 = vst [vmem:[%s1621] ss:$9 sm:$0xff] %v1586
        %s1624 = scalar_lea.vmem [#allocation1], 6
        %1625 = vst [vmem:[%s1624] ss:$9 sm:$0xff] %v1587
        %s1627 = scalar_lea.vmem [#allocation1], 7
        %1628 = vst [vmem:[%s1627] ss:$9 sm:$0xff] %v1588
        %v1629 = vld [vmem:[#allocation1] sm:$0xff]
        %1631 = vst [vmem:[#allocation1] ss:$9 sm:$0xff] %v1589
        %1633 = vst [vmem:[%s1609] ss:$9 sm:$0xff] %v1590
        %1635 = vst [vmem:[%s1612] ss:$9 sm:$0xff] %v1591
        %1637 = vst [vmem:[%s1615] ss:$9 sm:$0xff] %v1592
        %1639 = vst [vmem:[%s1618] ss:$9 sm:$0xff] %v1593
        %1641 = vst [vmem:[%s1621] ss:$9 sm:$0xff] %v1594
        %1643 = vst [vmem:[%s1624] ss:$9 sm:$0xff] %v1595
        %1645 = vst [vmem:[%s1627] ss:$9 sm:$0xff] %v1596
        %v1646 = vld [vmem:[#allocation1] sm:$0xff]
        %1648 = vst [vmem:[#allocation1] ss:$9 sm:$0xff] %v1597
        %1650 = vst [vmem:[%s1609] ss:$9 sm:$0xff] %v1598
        %1652 = vst [vmem:[%s1612] ss:$9 sm:$0xff] %v1599
        %1654 = vst [vmem:[%s1615] ss:$9 sm:$0xff] %v1600
        %1656 = vst [vmem:[%s1618] ss:$9 sm:$0xff] %v1601
        %1658 = vst [vmem:[%s1621] ss:$9 sm:$0xff] %v1602
        %1660 = vst [vmem:[%s1624] ss:$9 sm:$0xff] %v1603
        %1662 = vst [vmem:[%s1627] ss:$9 sm:$0xff] %v1604
        %v1663 = vld [vmem:[#allocation1] sm:$0xff]
        %1665 = vst [vmem:[#allocation1] ss:$9 sm:$0xff] %v1580
        %v1666 = vld [vmem:[#allocation1] sm:$0xff]
        %1668 = vst [vmem:[#allocation1] ss:$4 sm:$0xff] %v268
        %v1669 = vld.sshfl [vmem:[#allocation1] sm:$0xff pattern:$0x73625140]
        %v1670 = vld.sshfl [vmem:[#allocation1 + $0x8] sm:$0xff pattern:$0x73625140]
        %v1671 = vsel %vm535, %v1629, 0
        %v1673 = vsel %vm535, %v1646, 0
        %v1675 = vsel %vm535, %v1663, 0
        %v1677 = vsel %vm535, %v1666, 0
        %v1679 = vsel %vm544, %v1669, 0
        %v1681 = vsel %vm544, %v1670, 0
        %1683 = vmatpush.bf16.msra.mxu0 0
        %1684 = vmatpush.bf16.msra.mxu0 0
        %1685 = vmatpush.bf16.msra.mxu0 0
        %1686 = vmatpush.bf16.msra.mxu0 0
        %1687 = vmatpush.bf16.msra.mxu0 0
        %1688 = vmatpush.bf16.msra.mxu0 0
        %1689 = vmatpush.bf16.msra.mxu0 0
        %1690 = vmatpush.bf16.msra.mxu0 %v1679
        %1691 = vmatmul.bf16.gmra.mxu0 %v1671
        %v1692 = vpop.f32.mrf.mxu0
        %v1693 = vadd.f32 0.0, %v1692
        %v1694 = vpop.f32.mrf.mxu0
        %v1695 = vadd.f32 0.0, %v1694
        %1696 = vmatmul.bf16.gmra.mxu0 %v1673
        %v1697 = vpop.f32.mrf.mxu0
        %v1698 = vadd.f32 0.0, %v1697
        %v1699 = vpop.f32.mrf.mxu0
        %v1700 = vadd.f32 0.0, %v1699
        %1701 = vmatmul.bf16.gmra.mxu0 %v1675
        %v1702 = vpop.f32.mrf.mxu0
        %v1703 = vadd.f32 0.0, %v1702
        %v1704 = vpop.f32.mrf.mxu0
        %v1705 = vadd.f32 0.0, %v1704
        %1706 = vmatmul.bf16.gmra.mxu0 %v1677
        %v1707 = vpop.f32.mrf.mxu0
        %v1708 = vadd.f32 0.0, %v1707
        %v1709 = vpop.f32.mrf.mxu0
        %1710 = vdwg.mxu0
        %1711 = vmatpush.bf16.msra.mxu0 0
        %1712 = vmatpush.bf16.msra.mxu0 0
        %1713 = vmatpush.bf16.msra.mxu0 0
        %1714 = vmatpush.bf16.msra.mxu0 0
        %1715 = vmatpush.bf16.msra.mxu0 0
        %1716 = vmatpush.bf16.msra.mxu0 0
        %1717 = vmatpush.bf16.msra.mxu0 0
        %1718 = vmatpush.bf16.msra.mxu0 %v1681
        %1719 = vmatmul.bf16.gmra.mxu0 %v1671
        %v1720 = vpop.f32.mrf.mxu0
        %v1721 = vadd.f32 0.0, %v1720
        %v1722 = vpop.f32.mrf.mxu0
        %v1723 = vadd.f32 0.0, %v1722
        %1724 = vmatmul.bf16.gmra.mxu0 %v1673
        %v1725 = vpop.f32.mrf.mxu0
        %v1726 = vadd.f32 0.0, %v1725
        %v1727 = vpop.f32.mrf.mxu0
        %v1728 = vadd.f32 0.0, %v1727
        %1729 = vmatmul.bf16.gmra.mxu0 %v1675
        %v1730 = vpop.f32.mrf.mxu0
        %v1731 = vadd.f32 0.0, %v1730
        %v1732 = vpop.f32.mrf.mxu0
        %v1733 = vadd.f32 0.0, %v1732
        %1734 = vmatmul.bf16.gmra.mxu0 %v1677
        %v1735 = vpop.f32.mrf.mxu0
        %v1736 = vadd.f32 0.0, %v1735
        %v1737 = vpop.f32.mrf.mxu0
        %1738 = vdwg.mxu0
        %v1739 = vadd.f32 %v1406, %v1693
        %v1740 = vadd.f32 %v1407, %v1721
        %v1741 = vadd.f32 %v1408, %v1695
        %v1742 = vadd.f32 %v1409, %v1723
        %v1743 = vadd.f32 %v1410, %v1698
        %v1744 = vadd.f32 %v1411, %v1726
        %v1745 = vadd.f32 %v1412, %v1700
        %v1746 = vadd.f32 %v1413, %v1728
        %v1747 = vadd.f32 %v1414, %v1703
        %v1748 = vadd.f32 %v1415, %v1731
        %v1749 = vadd.f32 %v1416, %v1705
        %v1750 = vadd.f32 %v1417, %v1733
        %v1751 = vadd.f32 %v1418, %v1708
        %v1752 = vadd.f32 %v1419, %v1736
        %v1753 = vld [vmem:[%s1086] sm:$0xe]
        %v1754 = vld [vmem:[%s1086 + $0x4] sm:$0x1]
        %v1755 = vld [vmem:[%s1086 + $0x8] sm:$0xe]
        %v1756 = vld [vmem:[%s1086 + $0xc] sm:$0x1]
        %v1757 = vld [vmem:[%s1086 + $0x10] sm:$0xe]
        %v1758 = vld [vmem:[%s1086 + $0x14] sm:$0x1]
        %v1759 = vld [vmem:[%s1086 + $0x18] sm:$0xe]
        %v1760 = vld [vmem:[%s1086 + $0x1c] sm:$0x1]
        %v1761 = vld [vmem:[%s1086 + $0x20] sm:$0xe]
        %v1762 = vld [vmem:[%s1086 + $0x24] sm:$0x1]
        %v1763 = vld [vmem:[%s1086 + $0x28] sm:$0xe]
        %v1764 = vld [vmem:[%s1086 + $0x2c] sm:$0x1]
        %v1765 = vld [vmem:[%s1086 + $0x30] sm:$0xe]
        %v1766 = vld [vmem:[%s1086 + $0x34] sm:$0x1]
        %1768 = vst [vmem:[#allocation1] sm:$0xff] %v1753
        %1770 = vst [vmem:[#allocation1 + $0x20] sm:$0xff] %v1754
        %s1771 = scalar_lea.vmem [#allocation1], 1
        %v1772 = vld [vmem:[%s1771] ss:$4 sm:$0xff]
        %s1774 = scalar_lea.vmem [#allocation1], 2
        %v1775 = vld [vmem:[%s1774] ss:$4 sm:$0xff]
        %s1777 = scalar_lea.vmem [#allocation1], 3
        %v1778 = vld [vmem:[%s1777] ss:$4 sm:$0xff]
        %s1780 = scalar_lea.vmem [#allocation1], 32
        %v1781 = vld [vmem:[%s1780] ss:$4 sm:$0xff]
        %1784 = vst [vmem:[#allocation1] sm:$0xff] %v1755
        %1786 = vst [vmem:[#allocation1 + $0x20] sm:$0xff] %v1756
        %v1787 = vld [vmem:[%s1771] ss:$4 sm:$0xff]
        %v1789 = vld [vmem:[%s1774] ss:$4 sm:$0xff]
        %v1791 = vld [vmem:[%s1777] ss:$4 sm:$0xff]
        %v1793 = vld [vmem:[%s1780] ss:$4 sm:$0xff]
        %1796 = vst [vmem:[#allocation1] sm:$0xff] %v1757
        %1798 = vst [vmem:[#allocation1 + $0x20] sm:$0xff] %v1758
        %v1799 = vld [vmem:[%s1771] ss:$4 sm:$0xff]
        %v1801 = vld [vmem:[%s1774] ss:$4 sm:$0xff]
        %v1803 = vld [vmem:[%s1777] ss:$4 sm:$0xff]
        %v1805 = vld [vmem:[%s1780] ss:$4 sm:$0xff]
        %1808 = vst [vmem:[#allocation1] sm:$0xff] %v1759
        %1810 = vst [vmem:[#allocation1 + $0x20] sm:$0xff] %v1760
        %v1811 = vld [vmem:[%s1771] ss:$4 sm:$0xff]
        %v1813 = vld [vmem:[%s1774] ss:$4 sm:$0xff]
        %v1815 = vld [vmem:[%s1777] ss:$4 sm:$0xff]
        %v1817 = vld [vmem:[%s1780] ss:$4 sm:$0xff]
        %1820 = vst [vmem:[#allocation1] sm:$0xff] %v1761
        %1822 = vst [vmem:[#allocation1 + $0x20] sm:$0xff] %v1762
        %v1823 = vld [vmem:[%s1771] ss:$4 sm:$0xff]
        %v1825 = vld [vmem:[%s1774] ss:$4 sm:$0xff]
        %v1827 = vld [vmem:[%s1777] ss:$4 sm:$0xff]
        %v1829 = vld [vmem:[%s1780] ss:$4 sm:$0xff]
        %1832 = vst [vmem:[#allocation1] sm:$0xff] %v1763
        %1834 = vst [vmem:[#allocation1 + $0x20] sm:$0xff] %v1764
        %v1835 = vld [vmem:[%s1771] ss:$4 sm:$0xff]
        %v1837 = vld [vmem:[%s1774] ss:$4 sm:$0xff]
        %v1839 = vld [vmem:[%s1777] ss:$4 sm:$0xff]
        %v1841 = vld [vmem:[%s1780] ss:$4 sm:$0xff]
        %1844 = vst [vmem:[#allocation1] sm:$0xff] %v1765
        %1846 = vst [vmem:[#allocation1 + $0x20] sm:$0xff] %v1766
        %v1847 = vld [vmem:[%s1771] ss:$4 sm:$0xff]
        %v1849 = vld [vmem:[%s1774] ss:$4 sm:$0xff]
        %v1851 = vld [vmem:[%s1777] ss:$4 sm:$0xff]
        %v1853 = vld [vmem:[%s1780] ss:$4 sm:$0xff]
        %v1855 = vunpack.i.l.s16 %v1772
        %v1856 = vunpack.i.h.s16 %v1772
        %v1857 = vunpack.i.l.s16 %v1775
        %v1858 = vunpack.i.h.s16 %v1775
        %v1859 = vunpack.i.l.s16 %v1778
        %v1860 = vunpack.i.h.s16 %v1778
        %v1861 = vunpack.i.l.s16 %v1781
        %v1862 = vunpack.i.l.s16 %v1787
        %v1863 = vunpack.i.h.s16 %v1787
        %v1864 = vunpack.i.l.s16 %v1789
        %v1865 = vunpack.i.h.s16 %v1789
        %v1866 = vunpack.i.l.s16 %v1791
        %v1867 = vunpack.i.h.s16 %v1791
        %v1868 = vunpack.i.l.s16 %v1793
        %v1869 = vunpack.i.l.s16 %v1799
        %v1870 = vunpack.i.h.s16 %v1799
        %v1871 = vunpack.i.l.s16 %v1801
        %v1872 = vunpack.i.h.s16 %v1801
        %v1873 = vunpack.i.l.s16 %v1803
        %v1874 = vunpack.i.h.s16 %v1803
        %v1875 = vunpack.i.l.s16 %v1805
        %v1876 = vunpack.i.l.s16 %v1811
        %v1877 = vunpack.i.h.s16 %v1811
        %v1878 = vunpack.i.l.s16 %v1813
        %v1879 = vunpack.i.h.s16 %v1813
        %v1880 = vunpack.i.l.s16 %v1815
        %v1881 = vunpack.i.h.s16 %v1815
        %v1882 = vunpack.i.l.s16 %v1817
        %v1883 = vunpack.i.l.s16 %v1823
        %v1884 = vunpack.i.h.s16 %v1823
        %v1885 = vunpack.i.l.s16 %v1825
        %v1886 = vunpack.i.h.s16 %v1825
        %v1887 = vunpack.i.l.s16 %v1827
        %v1888 = vunpack.i.h.s16 %v1827
        %v1889 = vunpack.i.l.s16 %v1829
        %v1890 = vunpack.i.l.s16 %v1835
        %v1891 = vunpack.i.h.s16 %v1835
        %v1892 = vunpack.i.l.s16 %v1837
        %v1893 = vunpack.i.h.s16 %v1837
        %v1894 = vunpack.i.l.s16 %v1839
        %v1895 = vunpack.i.h.s16 %v1839
        %v1896 = vunpack.i.l.s16 %v1841
        %v1897 = vunpack.i.l.s16 %v1847
        %v1898 = vunpack.i.h.s16 %v1847
        %v1899 = vunpack.i.l.s16 %v1849
        %v1900 = vunpack.i.h.s16 %v1849
        %v1901 = vunpack.i.l.s16 %v1851
        %v1902 = vunpack.i.h.s16 %v1851
        %v1903 = vunpack.i.l.s16 %v1853
        %v1904 = vpack.i.b16 %v1856, %v1855
        %v1905 = vpack.i.b16 %v1858, %v1857
        %v1906 = vpack.i.b16 %v1860, %v1859
        %v1907 = vpack.i.b16 %v1862, %v1861
        %v1908 = vpack.i.b16 %v1864, %v1863
        %v1909 = vpack.i.b16 %v1866, %v1865
        %v1910 = vpack.i.b16 %v1868, %v1867
        %v1911 = vpack.i.b16 %v1870, %v1869
        %v1912 = vpack.i.b16 %v1872, %v1871
        %v1913 = vpack.i.b16 %v1874, %v1873
        %v1914 = vpack.i.b16 %v1876, %v1875
        %v1915 = vpack.i.b16 %v1878, %v1877
        %v1916 = vpack.i.b16 %v1880, %v1879
        %v1917 = vpack.i.b16 %v1882, %v1881
        %v1918 = vpack.i.b16 %v1884, %v1883
        %v1919 = vpack.i.b16 %v1886, %v1885
        %v1920 = vpack.i.b16 %v1888, %v1887
        %v1921 = vpack.i.b16 %v1890, %v1889
        %v1922 = vpack.i.b16 %v1892, %v1891
        %v1923 = vpack.i.b16 %v1894, %v1893
        %v1924 = vpack.i.b16 %v1896, %v1895
        %v1925 = vpack.i.b16 %v1898, %v1897
        %v1926 = vpack.i.b16 %v1900, %v1899
        %v1927 = vpack.i.b16 %v1902, %v1901
        %1930 = vst [vmem:[#allocation1] ss:$9 sm:$0xff] %v1904
        %s1932 = scalar_lea.vmem [#allocation1], 1
        %1933 = vst [vmem:[%s1932] ss:$9 sm:$0xff] %v1905
        %s1935 = scalar_lea.vmem [#allocation1], 2
        %1936 = vst [vmem:[%s1935] ss:$9 sm:$0xff] %v1906
        %s1938 = scalar_lea.vmem [#allocation1], 3
        %1939 = vst [vmem:[%s1938] ss:$9 sm:$0xff] %v1907
        %s1941 = scalar_lea.vmem [#allocation1], 4
        %1942 = vst [vmem:[%s1941] ss:$9 sm:$0xff] %v1908
        %s1944 = scalar_lea.vmem [#allocation1], 5
        %1945 = vst [vmem:[%s1944] ss:$9 sm:$0xff] %v1909
        %s1947 = scalar_lea.vmem [#allocation1], 6
        %1948 = vst [vmem:[%s1947] ss:$9 sm:$0xff] %v1910
        %s1950 = scalar_lea.vmem [#allocation1], 7
        %1951 = vst [vmem:[%s1950] ss:$9 sm:$0xff] %v1911
        %v1952 = vld [vmem:[#allocation1] sm:$0xff]
        %1954 = vst [vmem:[#allocation1] ss:$9 sm:$0xff] %v1912
        %1956 = vst [vmem:[%s1932] ss:$9 sm:$0xff] %v1913
        %1958 = vst [vmem:[%s1935] ss:$9 sm:$0xff] %v1914
        %1960 = vst [vmem:[%s1938] ss:$9 sm:$0xff] %v1915
        %1962 = vst [vmem:[%s1941] ss:$9 sm:$0xff] %v1916
        %1964 = vst [vmem:[%s1944] ss:$9 sm:$0xff] %v1917
        %1966 = vst [vmem:[%s1947] ss:$9 sm:$0xff] %v1918
        %1968 = vst [vmem:[%s1950] ss:$9 sm:$0xff] %v1919
        %v1969 = vld [vmem:[#allocation1] sm:$0xff]
        %1971 = vst [vmem:[#allocation1] ss:$9 sm:$0xff] %v1920
        %1973 = vst [vmem:[%s1932] ss:$9 sm:$0xff] %v1921
        %1975 = vst [vmem:[%s1935] ss:$9 sm:$0xff] %v1922
        %1977 = vst [vmem:[%s1938] ss:$9 sm:$0xff] %v1923
        %1979 = vst [vmem:[%s1941] ss:$9 sm:$0xff] %v1924
        %1981 = vst [vmem:[%s1944] ss:$9 sm:$0xff] %v1925
        %1983 = vst [vmem:[%s1947] ss:$9 sm:$0xff] %v1926
        %1985 = vst [vmem:[%s1950] ss:$9 sm:$0xff] %v1927
        %v1986 = vld [vmem:[#allocation1] sm:$0xff]
        %1988 = vst [vmem:[#allocation1] ss:$9 sm:$0xff] %v1903
        %v1989 = vld [vmem:[#allocation1] sm:$0xff]
        %1991 = vst [vmem:[#allocation1] ss:$4 sm:$0xff] %v269
        %v1992 = vld.sshfl [vmem:[#allocation1] sm:$0xff pattern:$0x73625140]
        %v1993 = vld.sshfl [vmem:[#allocation1 + $0x8] sm:$0xff pattern:$0x73625140]
        %v1994 = vsel %vm535, %v1952, 0
        %v1996 = vsel %vm535, %v1969, 0
        %v1998 = vsel %vm535, %v1986, 0
        %v2000 = vsel %vm535, %v1989, 0
        %v2002 = vsel %vm544, %v1992, 0
        %v2004 = vsel %vm544, %v1993, 0
        %2006 = vmatpush.bf16.msra.mxu0 0
        %2007 = vmatpush.bf16.msra.mxu0 0
        %2008 = vmatpush.bf16.msra.mxu0 0
        %2009 = vmatpush.bf16.msra.mxu0 0
        %2010 = vmatpush.bf16.msra.mxu0 0
        %2011 = vmatpush.bf16.msra.mxu0 0
        %2012 = vmatpush.bf16.msra.mxu0 0
        %2013 = vmatpush.bf16.msra.mxu0 %v2002
        %2014 = vmatmul.bf16.gmra.mxu0 %v1994
        %v2015 = vpop.f32.mrf.mxu0
        %v2016 = vadd.f32 0.0, %v2015
        %v2017 = vpop.f32.mrf.mxu0
        %v2018 = vadd.f32 0.0, %v2017
        %2019 = vmatmul.bf16.gmra.mxu0 %v1996
        %v2020 = vpop.f32.mrf.mxu0
        %v2021 = vadd.f32 0.0, %v2020
        %v2022 = vpop.f32.mrf.mxu0
        %v2023 = vadd.f32 0.0, %v2022
        %2024 = vmatmul.bf16.gmra.mxu0 %v1998
        %v2025 = vpop.f32.mrf.mxu0
        %v2026 = vadd.f32 0.0, %v2025
        %v2027 = vpop.f32.mrf.mxu0
        %v2028 = vadd.f32 0.0, %v2027
        %2029 = vmatmul.bf16.gmra.mxu0 %v2000
        %v2030 = vpop.f32.mrf.mxu0
        %v2031 = vadd.f32 0.0, %v2030
        %v2032 = vpop.f32.mrf.mxu0
        %2033 = vdwg.mxu0
        %2034 = vmatpush.bf16.msra.mxu0 0
        %2035 = vmatpush.bf16.msra.mxu0 0
        %2036 = vmatpush.bf16.msra.mxu0 0
        %2037 = vmatpush.bf16.msra.mxu0 0
        %2038 = vmatpush.bf16.msra.mxu0 0
        %2039 = vmatpush.bf16.msra.mxu0 0
        %2040 = vmatpush.bf16.msra.mxu0 0
        %2041 = vmatpush.bf16.msra.mxu0 %v2004
        %2042 = vmatmul.bf16.gmra.mxu0 %v1994
        %v2043 = vpop.f32.mrf.mxu0
        %v2044 = vadd.f32 0.0, %v2043
        %v2045 = vpop.f32.mrf.mxu0
        %v2046 = vadd.f32 0.0, %v2045
        %2047 = vmatmul.bf16.gmra.mxu0 %v1996
        %v2048 = vpop.f32.mrf.mxu0
        %v2049 = vadd.f32 0.0, %v2048
        %v2050 = vpop.f32.mrf.mxu0
        %v2051 = vadd.f32 0.0, %v2050
        %2052 = vmatmul.bf16.gmra.mxu0 %v1998
        %v2053 = vpop.f32.mrf.mxu0
        %v2054 = vadd.f32 0.0, %v2053
        %v2055 = vpop.f32.mrf.mxu0
        %v2056 = vadd.f32 0.0, %v2055
        %2057 = vmatmul.bf16.gmra.mxu0 %v2000
        %v2058 = vpop.f32.mrf.mxu0
        %v2059 = vadd.f32 0.0, %v2058
        %v2060 = vpop.f32.mrf.mxu0
        %2061 = vdwg.mxu0
        %v2062 = vadd.f32 %v1739, %v2016
        %v2063 = vadd.f32 %v1740, %v2044
        %v2064 = vadd.f32 %v1741, %v2018
        %v2065 = vadd.f32 %v1742, %v2046
        %v2066 = vadd.f32 %v1743, %v2021
        %v2067 = vadd.f32 %v1744, %v2049
        %v2068 = vadd.f32 %v1745, %v2023
        %v2069 = vadd.f32 %v1746, %v2051
        %v2070 = vadd.f32 %v1747, %v2026
        %v2071 = vadd.f32 %v1748, %v2054
        %v2072 = vadd.f32 %v1749, %v2028
        %v2073 = vadd.f32 %v1750, %v2056
        %v2074 = vadd.f32 %v1751, %v2031
        %v2075 = vadd.f32 %v1752, %v2059
        %s2076 = scalar_lea.vmem %s259, 16
        %v2077 = vld [vmem:[%s2076] sm:$0xf]
        %v2078 = vld [vmem:[%s2076 + $0x8] sm:$0xf]
        %v2079 = vld [vmem:[%s2076 + $0x10] sm:$0xf]
        %v2080 = vld [vmem:[%s2076 + $0x18] sm:$0xf]
        %v2081 = vld [vmem:[%s2076 + $0x20] sm:$0xf]
        %v2082 = vld [vmem:[%s2076 + $0x28] sm:$0xf]
        %v2083 = vld [vmem:[%s2076 + $0x30] sm:$0xf]
        %v2091 = vrot.slane %v2077, 3
        %v2092 = vrot.slane %v2078, 3
        %v2093 = vrot.slane %v2079, 3
        %v2094 = vrot.slane %v2080, 3
        %v2095 = vrot.slane %v2081, 3
        %v2096 = vrot.slane %v2082, 3
        %v2097 = vrot.slane %v2083, 3
        %v2100 = vsel %vm294, %v2077, %v2091
        %v2102 = vsel %vm299, %v2077, %v2091
        %v2104 = vrot.slane %v2102, 1
        %v2105 = vsel %vm303, %v2077, %v2091
        %v2107 = vrot.slane %v2105, 2
        %v2108 = vsel %vm307, %v2077, %v2091
        %v2110 = vrot.slane %v2108, 3
        %v2113 = vsel %vm294, %v2078, %v2092
        %v2115 = vsel %vm299, %v2078, %v2092
        %v2117 = vrot.slane %v2115, 1
        %v2118 = vsel %vm303, %v2078, %v2092
        %v2120 = vrot.slane %v2118, 2
        %v2121 = vsel %vm307, %v2078, %v2092
        %v2123 = vrot.slane %v2121, 3
        %v2126 = vsel %vm294, %v2079, %v2093
        %v2128 = vsel %vm299, %v2079, %v2093
        %v2130 = vrot.slane %v2128, 1
        %v2131 = vsel %vm303, %v2079, %v2093
        %v2133 = vrot.slane %v2131, 2
        %v2134 = vsel %vm307, %v2079, %v2093
        %v2136 = vrot.slane %v2134, 3
        %v2139 = vsel %vm294, %v2080, %v2094
        %v2141 = vsel %vm299, %v2080, %v2094
        %v2143 = vrot.slane %v2141, 1
        %v2144 = vsel %vm303, %v2080, %v2094
        %v2146 = vrot.slane %v2144, 2
        %v2147 = vsel %vm307, %v2080, %v2094
        %v2149 = vrot.slane %v2147, 3
        %v2152 = vsel %vm294, %v2081, %v2095
        %v2154 = vsel %vm299, %v2081, %v2095
        %v2156 = vrot.slane %v2154, 1
        %v2157 = vsel %vm303, %v2081, %v2095
        %v2159 = vrot.slane %v2157, 2
        %v2160 = vsel %vm307, %v2081, %v2095
        %v2162 = vrot.slane %v2160, 3
        %v2165 = vsel %vm294, %v2082, %v2096
        %v2167 = vsel %vm299, %v2082, %v2096
        %v2169 = vrot.slane %v2167, 1
        %v2170 = vsel %vm303, %v2082, %v2096
        %v2172 = vrot.slane %v2170, 2
        %v2173 = vsel %vm307, %v2082, %v2096
        %v2175 = vrot.slane %v2173, 3
        %v2178 = vsel %vm294, %v2083, %v2097
        %v2180 = vsel %vm299, %v2083, %v2097
        %v2182 = vrot.slane %v2180, 1
        %v2183 = vsel %vm303, %v2083, %v2097
        %v2185 = vrot.slane %v2183, 2
        %v2186 = vsel %vm307, %v2083, %v2097
        %v2188 = vrot.slane %v2186, 3
        %v2189 = vunpack.i.l.s16 %v2100
        %v2190 = vunpack.i.h.s16 %v2100
        %v2191 = vunpack.i.l.s16 %v2104
        %v2192 = vunpack.i.h.s16 %v2104
        %v2193 = vunpack.i.l.s16 %v2107
        %v2194 = vunpack.i.h.s16 %v2107
        %v2195 = vunpack.i.l.s16 %v2110
        %v2196 = vunpack.i.l.s16 %v2113
        %v2197 = vunpack.i.h.s16 %v2113
        %v2198 = vunpack.i.l.s16 %v2117
        %v2199 = vunpack.i.h.s16 %v2117
        %v2200 = vunpack.i.l.s16 %v2120
        %v2201 = vunpack.i.h.s16 %v2120
        %v2202 = vunpack.i.l.s16 %v2123
        %v2203 = vunpack.i.l.s16 %v2126
        %v2204 = vunpack.i.h.s16 %v2126
        %v2205 = vunpack.i.l.s16 %v2130
        %v2206 = vunpack.i.h.s16 %v2130
        %v2207 = vunpack.i.l.s16 %v2133
        %v2208 = vunpack.i.h.s16 %v2133
        %v2209 = vunpack.i.l.s16 %v2136
        %v2210 = vunpack.i.l.s16 %v2139
        %v2211 = vunpack.i.h.s16 %v2139
        %v2212 = vunpack.i.l.s16 %v2143
        %v2213 = vunpack.i.h.s16 %v2143
        %v2214 = vunpack.i.l.s16 %v2146
        %v2215 = vunpack.i.h.s16 %v2146
        %v2216 = vunpack.i.l.s16 %v2149
        %v2217 = vunpack.i.l.s16 %v2152
        %v2218 = vunpack.i.h.s16 %v2152
        %v2219 = vunpack.i.l.s16 %v2156
        %v2220 = vunpack.i.h.s16 %v2156
        %v2221 = vunpack.i.l.s16 %v2159
        %v2222 = vunpack.i.h.s16 %v2159
        %v2223 = vunpack.i.l.s16 %v2162
        %v2224 = vunpack.i.l.s16 %v2165
        %v2225 = vunpack.i.h.s16 %v2165
        %v2226 = vunpack.i.l.s16 %v2169
        %v2227 = vunpack.i.h.s16 %v2169
        %v2228 = vunpack.i.l.s16 %v2172
        %v2229 = vunpack.i.h.s16 %v2172
        %v2230 = vunpack.i.l.s16 %v2175
        %v2231 = vunpack.i.l.s16 %v2178
        %v2232 = vunpack.i.h.s16 %v2178
        %v2233 = vunpack.i.l.s16 %v2182
        %v2234 = vunpack.i.h.s16 %v2182
        %v2235 = vunpack.i.l.s16 %v2185
        %v2236 = vunpack.i.h.s16 %v2185
        %v2237 = vunpack.i.l.s16 %v2188
        %v2238 = vpack.i.b16 %v2190, %v2189
        %v2239 = vpack.i.b16 %v2192, %v2191
        %v2240 = vpack.i.b16 %v2194, %v2193
        %v2241 = vpack.i.b16 %v2196, %v2195
        %v2242 = vpack.i.b16 %v2198, %v2197
        %v2243 = vpack.i.b16 %v2200, %v2199
        %v2244 = vpack.i.b16 %v2202, %v2201
        %v2245 = vpack.i.b16 %v2204, %v2203
        %v2246 = vpack.i.b16 %v2206, %v2205
        %v2247 = vpack.i.b16 %v2208, %v2207
        %v2248 = vpack.i.b16 %v2210, %v2209
        %v2249 = vpack.i.b16 %v2212, %v2211
        %v2250 = vpack.i.b16 %v2214, %v2213
        %v2251 = vpack.i.b16 %v2216, %v2215
        %v2252 = vpack.i.b16 %v2218, %v2217
        %v2253 = vpack.i.b16 %v2220, %v2219
        %v2254 = vpack.i.b16 %v2222, %v2221
        %v2255 = vpack.i.b16 %v2224, %v2223
        %v2256 = vpack.i.b16 %v2226, %v2225
        %v2257 = vpack.i.b16 %v2228, %v2227
        %v2258 = vpack.i.b16 %v2230, %v2229
        %v2259 = vpack.i.b16 %v2232, %v2231
        %v2260 = vpack.i.b16 %v2234, %v2233
        %v2261 = vpack.i.b16 %v2236, %v2235
        %2264 = vst [vmem:[#allocation1] ss:$9 sm:$0xff] %v2238
        %s2266 = scalar_lea.vmem [#allocation1], 1
        %2267 = vst [vmem:[%s2266] ss:$9 sm:$0xff] %v2239
        %s2269 = scalar_lea.vmem [#allocation1], 2
        %2270 = vst [vmem:[%s2269] ss:$9 sm:$0xff] %v2240
        %s2272 = scalar_lea.vmem [#allocation1], 3
        %2273 = vst [vmem:[%s2272] ss:$9 sm:$0xff] %v2241
        %s2275 = scalar_lea.vmem [#allocation1], 4
        %2276 = vst [vmem:[%s2275] ss:$9 sm:$0xff] %v2242
        %s2278 = scalar_lea.vmem [#allocation1], 5
        %2279 = vst [vmem:[%s2278] ss:$9 sm:$0xff] %v2243
        %s2281 = scalar_lea.vmem [#allocation1], 6
        %2282 = vst [vmem:[%s2281] ss:$9 sm:$0xff] %v2244
        %s2284 = scalar_lea.vmem [#allocation1], 7
        %2285 = vst [vmem:[%s2284] ss:$9 sm:$0xff] %v2245
        %v2286 = vld [vmem:[#allocation1] sm:$0xff]
        %2288 = vst [vmem:[#allocation1] ss:$9 sm:$0xff] %v2246
        %2290 = vst [vmem:[%s2266] ss:$9 sm:$0xff] %v2247
        %2292 = vst [vmem:[%s2269] ss:$9 sm:$0xff] %v2248
        %2294 = vst [vmem:[%s2272] ss:$9 sm:$0xff] %v2249
        %2296 = vst [vmem:[%s2275] ss:$9 sm:$0xff] %v2250
        %2298 = vst [vmem:[%s2278] ss:$9 sm:$0xff] %v2251
        %2300 = vst [vmem:[%s2281] ss:$9 sm:$0xff] %v2252
        %2302 = vst [vmem:[%s2284] ss:$9 sm:$0xff] %v2253
        %v2303 = vld [vmem:[#allocation1] sm:$0xff]
        %2305 = vst [vmem:[#allocation1] ss:$9 sm:$0xff] %v2254
        %2307 = vst [vmem:[%s2266] ss:$9 sm:$0xff] %v2255
        %2309 = vst [vmem:[%s2269] ss:$9 sm:$0xff] %v2256
        %2311 = vst [vmem:[%s2272] ss:$9 sm:$0xff] %v2257
        %2313 = vst [vmem:[%s2275] ss:$9 sm:$0xff] %v2258
        %2315 = vst [vmem:[%s2278] ss:$9 sm:$0xff] %v2259
        %2317 = vst [vmem:[%s2281] ss:$9 sm:$0xff] %v2260
        %2319 = vst [vmem:[%s2284] ss:$9 sm:$0xff] %v2261
        %v2320 = vld [vmem:[#allocation1] sm:$0xff]
        %2322 = vst [vmem:[#allocation1] ss:$9 sm:$0xff] %v2237
        %v2323 = vld [vmem:[#allocation1] sm:$0xff]
        %2325 = vst [vmem:[#allocation1] ss:$4 sm:$0xff] %v270
        %v2326 = vld.sshfl [vmem:[#allocation1] sm:$0xff pattern:$0x73625140]
        %v2327 = vld.sshfl [vmem:[#allocation1 + $0x8] sm:$0xff pattern:$0x73625140]
        %v2328 = vsel %vm535, %v2286, 0
        %v2330 = vsel %vm535, %v2303, 0
        %v2332 = vsel %vm535, %v2320, 0
        %v2334 = vsel %vm535, %v2323, 0
        %v2336 = vsel %vm544, %v2326, 0
        %v2338 = vsel %vm544, %v2327, 0
        %2340 = vmatpush.bf16.msra.mxu0 0
        %2341 = vmatpush.bf16.msra.mxu0 0
        %2342 = vmatpush.bf16.msra.mxu0 0
        %2343 = vmatpush.bf16.msra.mxu0 0
        %2344 = vmatpush.bf16.msra.mxu0 0
        %2345 = vmatpush.bf16.msra.mxu0 0
        %2346 = vmatpush.bf16.msra.mxu0 0
        %2347 = vmatpush.bf16.msra.mxu0 %v2336
        %2348 = vmatmul.bf16.gmra.mxu0 %v2328
        %v2349 = vpop.f32.mrf.mxu0
        %v2350 = vadd.f32 0.0, %v2349
        %v2351 = vpop.f32.mrf.mxu0
        %v2352 = vadd.f32 0.0, %v2351
        %2353 = vmatmul.bf16.gmra.mxu0 %v2330
        %v2354 = vpop.f32.mrf.mxu0
        %v2355 = vadd.f32 0.0, %v2354
        %v2356 = vpop.f32.mrf.mxu0
        %v2357 = vadd.f32 0.0, %v2356
        %2358 = vmatmul.bf16.gmra.mxu0 %v2332
        %v2359 = vpop.f32.mrf.mxu0
        %v2360 = vadd.f32 0.0, %v2359
        %v2361 = vpop.f32.mrf.mxu0
        %v2362 = vadd.f32 0.0, %v2361
        %2363 = vmatmul.bf16.gmra.mxu0 %v2334
        %v2364 = vpop.f32.mrf.mxu0
        %v2365 = vadd.f32 0.0, %v2364
        %v2366 = vpop.f32.mrf.mxu0
        %2367 = vdwg.mxu0
        %2368 = vmatpush.bf16.msra.mxu0 0
        %2369 = vmatpush.bf16.msra.mxu0 0
        %2370 = vmatpush.bf16.msra.mxu0 0
        %2371 = vmatpush.bf16.msra.mxu0 0
        %2372 = vmatpush.bf16.msra.mxu0 0
        %2373 = vmatpush.bf16.msra.mxu0 0
        %2374 = vmatpush.bf16.msra.mxu0 0
        %2375 = vmatpush.bf16.msra.mxu0 %v2338
        %2376 = vmatmul.bf16.gmra.mxu0 %v2328
        %v2377 = vpop.f32.mrf.mxu0
        %v2378 = vadd.f32 0.0, %v2377
        %v2379 = vpop.f32.mrf.mxu0
        %v2380 = vadd.f32 0.0, %v2379
        %2381 = vmatmul.bf16.gmra.mxu0 %v2330
        %v2382 = vpop.f32.mrf.mxu0
        %v2383 = vadd.f32 0.0, %v2382
        %v2384 = vpop.f32.mrf.mxu0
        %v2385 = vadd.f32 0.0, %v2384
        %2386 = vmatmul.bf16.gmra.mxu0 %v2332
        %v2387 = vpop.f32.mrf.mxu0
        %v2388 = vadd.f32 0.0, %v2387
        %v2389 = vpop.f32.mrf.mxu0
        %v2390 = vadd.f32 0.0, %v2389
        %2391 = vmatmul.bf16.gmra.mxu0 %v2334
        %v2392 = vpop.f32.mrf.mxu0
        %v2393 = vadd.f32 0.0, %v2392
        %v2394 = vpop.f32.mrf.mxu0
        %2395 = vdwg.mxu0
        %v2396 = vadd.f32 %v2062, %v2350
        %v2397 = vadd.f32 %v2063, %v2378
        %v2398 = vadd.f32 %v2064, %v2352
        %v2399 = vadd.f32 %v2065, %v2380
        %v2400 = vadd.f32 %v2066, %v2355
        %v2401 = vadd.f32 %v2067, %v2383
        %v2402 = vadd.f32 %v2068, %v2357
        %v2403 = vadd.f32 %v2069, %v2385
        %v2404 = vadd.f32 %v2070, %v2360
        %v2405 = vadd.f32 %v2071, %v2388
        %v2406 = vadd.f32 %v2072, %v2362
        %v2407 = vadd.f32 %v2073, %v2390
        %v2408 = vadd.f32 %v2074, %v2365
        %v2409 = vadd.f32 %v2075, %v2393
        %v2410 = vld [vmem:[%s2076] sm:$0xf]
        %v2411 = vld [vmem:[%s2076 + $0x8] sm:$0xf]
        %v2412 = vld [vmem:[%s2076 + $0x10] sm:$0xf]
        %v2413 = vld [vmem:[%s2076 + $0x18] sm:$0xf]
        %v2414 = vld [vmem:[%s2076 + $0x20] sm:$0xf]
        %v2415 = vld [vmem:[%s2076 + $0x28] sm:$0xf]
        %v2416 = vld [vmem:[%s2076 + $0x30] sm:$0xf]
        %v2424 = vrot.slane %v2410, 3
        %v2425 = vrot.slane %v2411, 3
        %v2426 = vrot.slane %v2412, 3
        %v2427 = vrot.slane %v2413, 3
        %v2428 = vrot.slane %v2414, 3
        %v2429 = vrot.slane %v2415, 3
        %v2430 = vrot.slane %v2416, 3
        %v2433 = vsel %vm294, %v2410, %v2424
        %v2435 = vsel %vm299, %v2410, %v2424
        %v2437 = vrot.slane %v2435, 1
        %v2438 = vsel %vm303, %v2410, %v2424
        %v2440 = vrot.slane %v2438, 2
        %v2441 = vsel %vm307, %v2410, %v2424
        %v2443 = vrot.slane %v2441, 3
        %v2446 = vsel %vm294, %v2411, %v2425
        %v2448 = vsel %vm299, %v2411, %v2425
        %v2450 = vrot.slane %v2448, 1
        %v2451 = vsel %vm303, %v2411, %v2425
        %v2453 = vrot.slane %v2451, 2
        %v2454 = vsel %vm307, %v2411, %v2425
        %v2456 = vrot.slane %v2454, 3
        %v2459 = vsel %vm294, %v2412, %v2426
        %v2461 = vsel %vm299, %v2412, %v2426
        %v2463 = vrot.slane %v2461, 1
        %v2464 = vsel %vm303, %v2412, %v2426
        %v2466 = vrot.slane %v2464, 2
        %v2467 = vsel %vm307, %v2412, %v2426
        %v2469 = vrot.slane %v2467, 3
        %v2472 = vsel %vm294, %v2413, %v2427
        %v2474 = vsel %vm299, %v2413, %v2427
        %v2476 = vrot.slane %v2474, 1
        %v2477 = vsel %vm303, %v2413, %v2427
        %v2479 = vrot.slane %v2477, 2
        %v2480 = vsel %vm307, %v2413, %v2427
        %v2482 = vrot.slane %v2480, 3
        %v2485 = vsel %vm294, %v2414, %v2428
        %v2487 = vsel %vm299, %v2414, %v2428
        %v2489 = vrot.slane %v2487, 1
        %v2490 = vsel %vm303, %v2414, %v2428
        %v2492 = vrot.slane %v2490, 2
        %v2493 = vsel %vm307, %v2414, %v2428
        %v2495 = vrot.slane %v2493, 3
        %v2498 = vsel %vm294, %v2415, %v2429
        %v2500 = vsel %vm299, %v2415, %v2429
        %v2502 = vrot.slane %v2500, 1
        %v2503 = vsel %vm303, %v2415, %v2429
        %v2505 = vrot.slane %v2503, 2
        %v2506 = vsel %vm307, %v2415, %v2429
        %v2508 = vrot.slane %v2506, 3
        %v2511 = vsel %vm294, %v2416, %v2430
        %v2513 = vsel %vm299, %v2416, %v2430
        %v2515 = vrot.slane %v2513, 1
        %v2516 = vsel %vm303, %v2416, %v2430
        %v2518 = vrot.slane %v2516, 2
        %v2519 = vsel %vm307, %v2416, %v2430
        %v2521 = vrot.slane %v2519, 3
        %v2522 = vunpack.i.h.s16 %v2433
        %v2523 = vunpack.i.l.s16 %v2437
        %v2524 = vunpack.i.h.s16 %v2437
        %v2525 = vunpack.i.l.s16 %v2440
        %v2526 = vunpack.i.h.s16 %v2440
        %v2527 = vunpack.i.l.s16 %v2443
        %v2528 = vunpack.i.h.s16 %v2443
        %v2529 = vunpack.i.h.s16 %v2446
        %v2530 = vunpack.i.l.s16 %v2450
        %v2531 = vunpack.i.h.s16 %v2450
        %v2532 = vunpack.i.l.s16 %v2453
        %v2533 = vunpack.i.h.s16 %v2453
        %v2534 = vunpack.i.l.s16 %v2456
        %v2535 = vunpack.i.h.s16 %v2456
        %v2536 = vunpack.i.h.s16 %v2459
        %v2537 = vunpack.i.l.s16 %v2463
        %v2538 = vunpack.i.h.s16 %v2463
        %v2539 = vunpack.i.l.s16 %v2466
        %v2540 = vunpack.i.h.s16 %v2466
        %v2541 = vunpack.i.l.s16 %v2469
        %v2542 = vunpack.i.h.s16 %v2469
        %v2543 = vunpack.i.h.s16 %v2472
        %v2544 = vunpack.i.l.s16 %v2476
        %v2545 = vunpack.i.h.s16 %v2476
        %v2546 = vunpack.i.l.s16 %v2479
        %v2547 = vunpack.i.h.s16 %v2479
        %v2548 = vunpack.i.l.s16 %v2482
        %v2549 = vunpack.i.h.s16 %v2482
        %v2550 = vunpack.i.h.s16 %v2485
        %v2551 = vunpack.i.l.s16 %v2489
        %v2552 = vunpack.i.h.s16 %v2489
        %v2553 = vunpack.i.l.s16 %v2492
        %v2554 = vunpack.i.h.s16 %v2492
        %v2555 = vunpack.i.l.s16 %v2495
        %v2556 = vunpack.i.h.s16 %v2495
        %v2557 = vunpack.i.h.s16 %v2498
        %v2558 = vunpack.i.l.s16 %v2502
        %v2559 = vunpack.i.h.s16 %v2502
        %v2560 = vunpack.i.l.s16 %v2505
        %v2561 = vunpack.i.h.s16 %v2505
        %v2562 = vunpack.i.l.s16 %v2508
        %v2563 = vunpack.i.h.s16 %v2508
        %v2564 = vunpack.i.h.s16 %v2511
        %v2565 = vunpack.i.l.s16 %v2515
        %v2566 = vunpack.i.h.s16 %v2515
        %v2567 = vunpack.i.l.s16 %v2518
        %v2568 = vunpack.i.h.s16 %v2518
        %v2569 = vunpack.i.l.s16 %v2521
        %v2570 = vunpack.i.h.s16 %v2521
        %v2571 = vpack.i.b16 %v2523, %v2522
        %v2572 = vpack.i.b16 %v2525, %v2524
        %v2573 = vpack.i.b16 %v2527, %v2526
        %v2574 = vpack.i.b16 %v2529, %v2528
        %v2575 = vpack.i.b16 %v2531, %v2530
        %v2576 = vpack.i.b16 %v2533, %v2532
        %v2577 = vpack.i.b16 %v2535, %v2534
        %v2578 = vpack.i.b16 %v2537, %v2536
        %v2579 = vpack.i.b16 %v2539, %v2538
        %v2580 = vpack.i.b16 %v2541, %v2540
        %v2581 = vpack.i.b16 %v2543, %v2542
        %v2582 = vpack.i.b16 %v2545, %v2544
        %v2583 = vpack.i.b16 %v2547, %v2546
        %v2584 = vpack.i.b16 %v2549, %v2548
        %v2585 = vpack.i.b16 %v2551, %v2550
        %v2586 = vpack.i.b16 %v2553, %v2552
        %v2587 = vpack.i.b16 %v2555, %v2554
        %v2588 = vpack.i.b16 %v2557, %v2556
        %v2589 = vpack.i.b16 %v2559, %v2558
        %v2590 = vpack.i.b16 %v2561, %v2560
        %v2591 = vpack.i.b16 %v2563, %v2562
        %v2592 = vpack.i.b16 %v2565, %v2564
        %v2593 = vpack.i.b16 %v2567, %v2566
        %v2594 = vpack.i.b16 %v2569, %v2568
        %2597 = vst [vmem:[#allocation1] ss:$9 sm:$0xff] %v2571
        %s2599 = scalar_lea.vmem [#allocation1], 1
        %2600 = vst [vmem:[%s2599] ss:$9 sm:$0xff] %v2572
        %s2602 = scalar_lea.vmem [#allocation1], 2
        %2603 = vst [vmem:[%s2602] ss:$9 sm:$0xff] %v2573
        %s2605 = scalar_lea.vmem [#allocation1], 3
        %2606 = vst [vmem:[%s2605] ss:$9 sm:$0xff] %v2574
        %s2608 = scalar_lea.vmem [#allocation1], 4
        %2609 = vst [vmem:[%s2608] ss:$9 sm:$0xff] %v2575
        %s2611 = scalar_lea.vmem [#allocation1], 5
        %2612 = vst [vmem:[%s2611] ss:$9 sm:$0xff] %v2576
        %s2614 = scalar_lea.vmem [#allocation1], 6
        %2615 = vst [vmem:[%s2614] ss:$9 sm:$0xff] %v2577
        %s2617 = scalar_lea.vmem [#allocation1], 7
        %2618 = vst [vmem:[%s2617] ss:$9 sm:$0xff] %v2578
        %v2619 = vld [vmem:[#allocation1] sm:$0xff]
        %2621 = vst [vmem:[#allocation1] ss:$9 sm:$0xff] %v2579
        %2623 = vst [vmem:[%s2599] ss:$9 sm:$0xff] %v2580
        %2625 = vst [vmem:[%s2602] ss:$9 sm:$0xff] %v2581
        %2627 = vst [vmem:[%s2605] ss:$9 sm:$0xff] %v2582
        %2629 = vst [vmem:[%s2608] ss:$9 sm:$0xff] %v2583
        %2631 = vst [vmem:[%s2611] ss:$9 sm:$0xff] %v2584
        %2633 = vst [vmem:[%s2614] ss:$9 sm:$0xff] %v2585
        %2635 = vst [vmem:[%s2617] ss:$9 sm:$0xff] %v2586
        %v2636 = vld [vmem:[#allocation1] sm:$0xff]
        %2638 = vst [vmem:[#allocation1] ss:$9 sm:$0xff] %v2587
        %2640 = vst [vmem:[%s2599] ss:$9 sm:$0xff] %v2588
        %2642 = vst [vmem:[%s2602] ss:$9 sm:$0xff] %v2589
        %2644 = vst [vmem:[%s2605] ss:$9 sm:$0xff] %v2590
        %2646 = vst [vmem:[%s2608] ss:$9 sm:$0xff] %v2591
        %2648 = vst [vmem:[%s2611] ss:$9 sm:$0xff] %v2592
        %2650 = vst [vmem:[%s2614] ss:$9 sm:$0xff] %v2593
        %2652 = vst [vmem:[%s2617] ss:$9 sm:$0xff] %v2594
        %v2653 = vld [vmem:[#allocation1] sm:$0xff]
        %2655 = vst [vmem:[#allocation1] ss:$9 sm:$0xff] %v2570
        %v2656 = vld [vmem:[#allocation1] sm:$0xff]
        %2658 = vst [vmem:[#allocation1] ss:$4 sm:$0xff] %v271
        %v2659 = vld.sshfl [vmem:[#allocation1] sm:$0xff pattern:$0x73625140]
        %v2660 = vld.sshfl [vmem:[#allocation1 + $0x8] sm:$0xff pattern:$0x73625140]
        %v2661 = vsel %vm535, %v2619, 0
        %v2663 = vsel %vm535, %v2636, 0
        %v2665 = vsel %vm535, %v2653, 0
        %v2667 = vsel %vm535, %v2656, 0
        %v2669 = vsel %vm544, %v2659, 0
        %v2671 = vsel %vm544, %v2660, 0
        %2673 = vmatpush.bf16.msra.mxu0 0
        %2674 = vmatpush.bf16.msra.mxu0 0
        %2675 = vmatpush.bf16.msra.mxu0 0
        %2676 = vmatpush.bf16.msra.mxu0 0
        %2677 = vmatpush.bf16.msra.mxu0 0
        %2678 = vmatpush.bf16.msra.mxu0 0
        %2679 = vmatpush.bf16.msra.mxu0 0
        %2680 = vmatpush.bf16.msra.mxu0 %v2669
        %2681 = vmatmul.bf16.gmra.mxu0 %v2661
        %v2682 = vpop.f32.mrf.mxu0
        %v2683 = vadd.f32 0.0, %v2682
        %v2684 = vpop.f32.mrf.mxu0
        %v2685 = vadd.f32 0.0, %v2684
        %2686 = vmatmul.bf16.gmra.mxu0 %v2663
        %v2687 = vpop.f32.mrf.mxu0
        %v2688 = vadd.f32 0.0, %v2687
        %v2689 = vpop.f32.mrf.mxu0
        %v2690 = vadd.f32 0.0, %v2689
        %2691 = vmatmul.bf16.gmra.mxu0 %v2665
        %v2692 = vpop.f32.mrf.mxu0
        %v2693 = vadd.f32 0.0, %v2692
        %v2694 = vpop.f32.mrf.mxu0
        %v2695 = vadd.f32 0.0, %v2694
        %2696 = vmatmul.bf16.gmra.mxu0 %v2667
        %v2697 = vpop.f32.mrf.mxu0
        %v2698 = vadd.f32 0.0, %v2697
        %v2699 = vpop.f32.mrf.mxu0
        %2700 = vdwg.mxu0
        %2701 = vmatpush.bf16.msra.mxu0 0
        %2702 = vmatpush.bf16.msra.mxu0 0
        %2703 = vmatpush.bf16.msra.mxu0 0
        %2704 = vmatpush.bf16.msra.mxu0 0
        %2705 = vmatpush.bf16.msra.mxu0 0
        %2706 = vmatpush.bf16.msra.mxu0 0
        %2707 = vmatpush.bf16.msra.mxu0 0
        %2708 = vmatpush.bf16.msra.mxu0 %v2671
        %2709 = vmatmul.bf16.gmra.mxu0 %v2661
        %v2710 = vpop.f32.mrf.mxu0
        %v2711 = vadd.f32 0.0, %v2710
        %v2712 = vpop.f32.mrf.mxu0
        %v2713 = vadd.f32 0.0, %v2712
        %2714 = vmatmul.bf16.gmra.mxu0 %v2663
        %v2715 = vpop.f32.mrf.mxu0
        %v2716 = vadd.f32 0.0, %v2715
        %v2717 = vpop.f32.mrf.mxu0
        %v2718 = vadd.f32 0.0, %v2717
        %2719 = vmatmul.bf16.gmra.mxu0 %v2665
        %v2720 = vpop.f32.mrf.mxu0
        %v2721 = vadd.f32 0.0, %v2720
        %v2722 = vpop.f32.mrf.mxu0
        %v2723 = vadd.f32 0.0, %v2722
        %2724 = vmatmul.bf16.gmra.mxu0 %v2667
        %v2725 = vpop.f32.mrf.mxu0
        %v2726 = vadd.f32 0.0, %v2725
        %v2727 = vpop.f32.mrf.mxu0
        %2728 = vdwg.mxu0
        %v2729 = vadd.f32 %v2396, %v2683
        %v2730 = vadd.f32 %v2397, %v2711
        %v2731 = vadd.f32 %v2398, %v2685
        %v2732 = vadd.f32 %v2399, %v2713
        %v2733 = vadd.f32 %v2400, %v2688
        %v2734 = vadd.f32 %v2401, %v2716
        %v2735 = vadd.f32 %v2402, %v2690
        %v2736 = vadd.f32 %v2403, %v2718
        %v2737 = vadd.f32 %v2404, %v2693
        %v2738 = vadd.f32 %v2405, %v2721
        %v2739 = vadd.f32 %v2406, %v2695
        %v2740 = vadd.f32 %v2407, %v2723
        %v2741 = vadd.f32 %v2408, %v2698
        %v2742 = vadd.f32 %v2409, %v2726
        %v2743 = vld [vmem:[%s2076] sm:$0xe]
        %v2744 = vld [vmem:[%s2076 + $0x4] sm:$0x1]
        %v2745 = vld [vmem:[%s2076 + $0x8] sm:$0xe]
        %v2746 = vld [vmem:[%s2076 + $0xc] sm:$0x1]
        %v2747 = vld [vmem:[%s2076 + $0x10] sm:$0xe]
        %v2748 = vld [vmem:[%s2076 + $0x14] sm:$0x1]
        %v2749 = vld [vmem:[%s2076 + $0x18] sm:$0xe]
        %v2750 = vld [vmem:[%s2076 + $0x1c] sm:$0x1]
        %v2751 = vld [vmem:[%s2076 + $0x20] sm:$0xe]
        %v2752 = vld [vmem:[%s2076 + $0x24] sm:$0x1]
        %v2753 = vld [vmem:[%s2076 + $0x28] sm:$0xe]
        %v2754 = vld [vmem:[%s2076 + $0x2c] sm:$0x1]
        %v2755 = vld [vmem:[%s2076 + $0x30] sm:$0xe]
        %v2756 = vld [vmem:[%s2076 + $0x34] sm:$0x1]
        %2758 = vst [vmem:[#allocation1] sm:$0xff] %v2743
        %2760 = vst [vmem:[#allocation1 + $0x20] sm:$0xff] %v2744
        %s2761 = scalar_lea.vmem [#allocation1], 1
        %v2762 = vld [vmem:[%s2761] ss:$4 sm:$0xff]
        %s2764 = scalar_lea.vmem [#allocation1], 2
        %v2765 = vld [vmem:[%s2764] ss:$4 sm:$0xff]
        %s2767 = scalar_lea.vmem [#allocation1], 3
        %v2768 = vld [vmem:[%s2767] ss:$4 sm:$0xff]
        %s2770 = scalar_lea.vmem [#allocation1], 32
        %v2771 = vld [vmem:[%s2770] ss:$4 sm:$0xff]
        %2774 = vst [vmem:[#allocation1] sm:$0xff] %v2745
        %2776 = vst [vmem:[#allocation1 + $0x20] sm:$0xff] %v2746
        %v2777 = vld [vmem:[%s2761] ss:$4 sm:$0xff]
        %v2779 = vld [vmem:[%s2764] ss:$4 sm:$0xff]
        %v2781 = vld [vmem:[%s2767] ss:$4 sm:$0xff]
        %v2783 = vld [vmem:[%s2770] ss:$4 sm:$0xff]
        %2786 = vst [vmem:[#allocation1] sm:$0xff] %v2747
        %2788 = vst [vmem:[#allocation1 + $0x20] sm:$0xff] %v2748
        %v2789 = vld [vmem:[%s2761] ss:$4 sm:$0xff]
        %v2791 = vld [vmem:[%s2764] ss:$4 sm:$0xff]
        %v2793 = vld [vmem:[%s2767] ss:$4 sm:$0xff]
        %v2795 = vld [vmem:[%s2770] ss:$4 sm:$0xff]
        %2798 = vst [vmem:[#allocation1] sm:$0xff] %v2749
        %2800 = vst [vmem:[#allocation1 + $0x20] sm:$0xff] %v2750
        %v2801 = vld [vmem:[%s2761] ss:$4 sm:$0xff]
        %v2803 = vld [vmem:[%s2764] ss:$4 sm:$0xff]
        %v2805 = vld [vmem:[%s2767] ss:$4 sm:$0xff]
        %v2807 = vld [vmem:[%s2770] ss:$4 sm:$0xff]
        %2810 = vst [vmem:[#allocation1] sm:$0xff] %v2751
        %2812 = vst [vmem:[#allocation1 + $0x20] sm:$0xff] %v2752
        %v2813 = vld [vmem:[%s2761] ss:$4 sm:$0xff]
        %v2815 = vld [vmem:[%s2764] ss:$4 sm:$0xff]
        %v2817 = vld [vmem:[%s2767] ss:$4 sm:$0xff]
        %v2819 = vld [vmem:[%s2770] ss:$4 sm:$0xff]
        %2822 = vst [vmem:[#allocation1] sm:$0xff] %v2753
        %2824 = vst [vmem:[#allocation1 + $0x20] sm:$0xff] %v2754
        %v2825 = vld [vmem:[%s2761] ss:$4 sm:$0xff]
        %v2827 = vld [vmem:[%s2764] ss:$4 sm:$0xff]
        %v2829 = vld [vmem:[%s2767] ss:$4 sm:$0xff]
        %v2831 = vld [vmem:[%s2770] ss:$4 sm:$0xff]
        %2834 = vst [vmem:[#allocation1] sm:$0xff] %v2755
        %2836 = vst [vmem:[#allocation1 + $0x20] sm:$0xff] %v2756
        %v2837 = vld [vmem:[%s2761] ss:$4 sm:$0xff]
        %v2839 = vld [vmem:[%s2764] ss:$4 sm:$0xff]
        %v2841 = vld [vmem:[%s2767] ss:$4 sm:$0xff]
        %v2843 = vld [vmem:[%s2770] ss:$4 sm:$0xff]
        %v2845 = vunpack.i.l.s16 %v2762
        %v2846 = vunpack.i.h.s16 %v2762
        %v2847 = vunpack.i.l.s16 %v2765
        %v2848 = vunpack.i.h.s16 %v2765
        %v2849 = vunpack.i.l.s16 %v2768
        %v2850 = vunpack.i.h.s16 %v2768
        %v2851 = vunpack.i.l.s16 %v2771
        %v2852 = vunpack.i.l.s16 %v2777
        %v2853 = vunpack.i.h.s16 %v2777
        %v2854 = vunpack.i.l.s16 %v2779
        %v2855 = vunpack.i.h.s16 %v2779
        %v2856 = vunpack.i.l.s16 %v2781
        %v2857 = vunpack.i.h.s16 %v2781
        %v2858 = vunpack.i.l.s16 %v2783
        %v2859 = vunpack.i.l.s16 %v2789
        %v2860 = vunpack.i.h.s16 %v2789
        %v2861 = vunpack.i.l.s16 %v2791
        %v2862 = vunpack.i.h.s16 %v2791
        %v2863 = vunpack.i.l.s16 %v2793
        %v2864 = vunpack.i.h.s16 %v2793
        %v2865 = vunpack.i.l.s16 %v2795
        %v2866 = vunpack.i.l.s16 %v2801
        %v2867 = vunpack.i.h.s16 %v2801
        %v2868 = vunpack.i.l.s16 %v2803
        %v2869 = vunpack.i.h.s16 %v2803
        %v2870 = vunpack.i.l.s16 %v2805
        %v2871 = vunpack.i.h.s16 %v2805
        %v2872 = vunpack.i.l.s16 %v2807
        %v2873 = vunpack.i.l.s16 %v2813
        %v2874 = vunpack.i.h.s16 %v2813
        %v2875 = vunpack.i.l.s16 %v2815
        %v2876 = vunpack.i.h.s16 %v2815
        %v2877 = vunpack.i.l.s16 %v2817
        %v2878 = vunpack.i.h.s16 %v2817
        %v2879 = vunpack.i.l.s16 %v2819
        %v2880 = vunpack.i.l.s16 %v2825
        %v2881 = vunpack.i.h.s16 %v2825
        %v2882 = vunpack.i.l.s16 %v2827
        %v2883 = vunpack.i.h.s16 %v2827
        %v2884 = vunpack.i.l.s16 %v2829
        %v2885 = vunpack.i.h.s16 %v2829
        %v2886 = vunpack.i.l.s16 %v2831
        %v2887 = vunpack.i.l.s16 %v2837
        %v2888 = vunpack.i.h.s16 %v2837
        %v2889 = vunpack.i.l.s16 %v2839
        %v2890 = vunpack.i.h.s16 %v2839
        %v2891 = vunpack.i.l.s16 %v2841
        %v2892 = vunpack.i.h.s16 %v2841
        %v2893 = vunpack.i.l.s16 %v2843
        %v2894 = vpack.i.b16 %v2846, %v2845
        %v2895 = vpack.i.b16 %v2848, %v2847
        %v2896 = vpack.i.b16 %v2850, %v2849
        %v2897 = vpack.i.b16 %v2852, %v2851
        %v2898 = vpack.i.b16 %v2854, %v2853
        %v2899 = vpack.i.b16 %v2856, %v2855
        %v2900 = vpack.i.b16 %v2858, %v2857
        %v2901 = vpack.i.b16 %v2860, %v2859
        %v2902 = vpack.i.b16 %v2862, %v2861
        %v2903 = vpack.i.b16 %v2864, %v2863
        %v2904 = vpack.i.b16 %v2866, %v2865
        %v2905 = vpack.i.b16 %v2868, %v2867
        %v2906 = vpack.i.b16 %v2870, %v2869
        %v2907 = vpack.i.b16 %v2872, %v2871
        %v2908 = vpack.i.b16 %v2874, %v2873
        %v2909 = vpack.i.b16 %v2876, %v2875
        %v2910 = vpack.i.b16 %v2878, %v2877
        %v2911 = vpack.i.b16 %v2880, %v2879
        %v2912 = vpack.i.b16 %v2882, %v2881
        %v2913 = vpack.i.b16 %v2884, %v2883
        %v2914 = vpack.i.b16 %v2886, %v2885
        %v2915 = vpack.i.b16 %v2888, %v2887
        %v2916 = vpack.i.b16 %v2890, %v2889
        %v2917 = vpack.i.b16 %v2892, %v2891
        %2920 = vst [vmem:[#allocation1] ss:$9 sm:$0xff] %v2894
        %s2922 = scalar_lea.vmem [#allocation1], 1
        %2923 = vst [vmem:[%s2922] ss:$9 sm:$0xff] %v2895
        %s2925 = scalar_lea.vmem [#allocation1], 2
        %2926 = vst [vmem:[%s2925] ss:$9 sm:$0xff] %v2896
        %s2928 = scalar_lea.vmem [#allocation1], 3
        %2929 = vst [vmem:[%s2928] ss:$9 sm:$0xff] %v2897
        %s2931 = scalar_lea.vmem [#allocation1], 4
        %2932 = vst [vmem:[%s2931] ss:$9 sm:$0xff] %v2898
        %s2934 = scalar_lea.vmem [#allocation1], 5
        %2935 = vst [vmem:[%s2934] ss:$9 sm:$0xff] %v2899
        %s2937 = scalar_lea.vmem [#allocation1], 6
        %2938 = vst [vmem:[%s2937] ss:$9 sm:$0xff] %v2900
        %s2940 = scalar_lea.vmem [#allocation1], 7
        %2941 = vst [vmem:[%s2940] ss:$9 sm:$0xff] %v2901
        %v2942 = vld [vmem:[#allocation1] sm:$0xff]
        %2944 = vst [vmem:[#allocation1] ss:$9 sm:$0xff] %v2902
        %2946 = vst [vmem:[%s2922] ss:$9 sm:$0xff] %v2903
        %2948 = vst [vmem:[%s2925] ss:$9 sm:$0xff] %v2904
        %2950 = vst [vmem:[%s2928] ss:$9 sm:$0xff] %v2905
        %2952 = vst [vmem:[%s2931] ss:$9 sm:$0xff] %v2906
        %2954 = vst [vmem:[%s2934] ss:$9 sm:$0xff] %v2907
        %2956 = vst [vmem:[%s2937] ss:$9 sm:$0xff] %v2908
        %2958 = vst [vmem:[%s2940] ss:$9 sm:$0xff] %v2909
        %v2959 = vld [vmem:[#allocation1] sm:$0xff]
        %2961 = vst [vmem:[#allocation1] ss:$9 sm:$0xff] %v2910
        %2963 = vst [vmem:[%s2922] ss:$9 sm:$0xff] %v2911
        %2965 = vst [vmem:[%s2925] ss:$9 sm:$0xff] %v2912
        %2967 = vst [vmem:[%s2928] ss:$9 sm:$0xff] %v2913
        %2969 = vst [vmem:[%s2931] ss:$9 sm:$0xff] %v2914
        %2971 = vst [vmem:[%s2934] ss:$9 sm:$0xff] %v2915
        %2973 = vst [vmem:[%s2937] ss:$9 sm:$0xff] %v2916
        %2975 = vst [vmem:[%s2940] ss:$9 sm:$0xff] %v2917
        %v2976 = vld [vmem:[#allocation1] sm:$0xff]
        %2978 = vst [vmem:[#allocation1] ss:$9 sm:$0xff] %v2893
        %v2979 = vld [vmem:[#allocation1] sm:$0xff]
        %2981 = vst [vmem:[#allocation1] ss:$4 sm:$0xff] %v272
        %v2982 = vld.sshfl [vmem:[#allocation1] sm:$0xff pattern:$0x73625140]
        %v2983 = vld.sshfl [vmem:[#allocation1 + $0x8] sm:$0xff pattern:$0x73625140]
        %v2984 = vsel %vm535, %v2942, 0
        %v2986 = vsel %vm535, %v2959, 0
        %v2988 = vsel %vm535, %v2976, 0
        %v2990 = vsel %vm535, %v2979, 0
        %v2992 = vsel %vm544, %v2982, 0
        %v2994 = vsel %vm544, %v2983, 0
        %2996 = vmatpush.bf16.msra.mxu0 0
        %2997 = vmatpush.bf16.msra.mxu0 0
        %2998 = vmatpush.bf16.msra.mxu0 0
        %2999 = vmatpush.bf16.msra.mxu0 0
        %3000 = vmatpush.bf16.msra.mxu0 0
        %3001 = vmatpush.bf16.msra.mxu0 0
        %3002 = vmatpush.bf16.msra.mxu0 0
        %3003 = vmatpush.bf16.msra.mxu0 %v2992
        %3004 = vmatmul.bf16.gmra.mxu0 %v2984
        %v3005 = vpop.f32.mrf.mxu0
        %v3006 = vadd.f32 0.0, %v3005
        %v3007 = vpop.f32.mrf.mxu0
        %v3008 = vadd.f32 0.0, %v3007
        %3009 = vmatmul.bf16.gmra.mxu0 %v2986
        %v3010 = vpop.f32.mrf.mxu0
        %v3011 = vadd.f32 0.0, %v3010
        %v3012 = vpop.f32.mrf.mxu0
        %v3013 = vadd.f32 0.0, %v3012
        %3014 = vmatmul.bf16.gmra.mxu0 %v2988
        %v3015 = vpop.f32.mrf.mxu0
        %v3016 = vadd.f32 0.0, %v3015
        %v3017 = vpop.f32.mrf.mxu0
        %v3018 = vadd.f32 0.0, %v3017
        %3019 = vmatmul.bf16.gmra.mxu0 %v2990
        %v3020 = vpop.f32.mrf.mxu0
        %v3021 = vadd.f32 0.0, %v3020
        %v3022 = vpop.f32.mrf.mxu0
        %3023 = vdwg.mxu0
        %3024 = vmatpush.bf16.msra.mxu0 0
        %3025 = vmatpush.bf16.msra.mxu0 0
        %3026 = vmatpush.bf16.msra.mxu0 0
        %3027 = vmatpush.bf16.msra.mxu0 0
        %3028 = vmatpush.bf16.msra.mxu0 0
        %3029 = vmatpush.bf16.msra.mxu0 0
        %3030 = vmatpush.bf16.msra.mxu0 0
        %3031 = vmatpush.bf16.msra.mxu0 %v2994
        %3032 = vmatmul.bf16.gmra.mxu0 %v2984
        %v3033 = vpop.f32.mrf.mxu0
        %v3034 = vadd.f32 0.0, %v3033
        %v3035 = vpop.f32.mrf.mxu0
        %v3036 = vadd.f32 0.0, %v3035
        %3037 = vmatmul.bf16.gmra.mxu0 %v2986
        %v3038 = vpop.f32.mrf.mxu0
        %v3039 = vadd.f32 0.0, %v3038
        %v3040 = vpop.f32.mrf.mxu0
        %v3041 = vadd.f32 0.0, %v3040
        %3042 = vmatmul.bf16.gmra.mxu0 %v2988
        %v3043 = vpop.f32.mrf.mxu0
        %v3044 = vadd.f32 0.0, %v3043
        %v3045 = vpop.f32.mrf.mxu0
        %v3046 = vadd.f32 0.0, %v3045
        %3047 = vmatmul.bf16.gmra.mxu0 %v2990
        %v3048 = vpop.f32.mrf.mxu0
        %v3049 = vadd.f32 0.0, %v3048
        %v3050 = vpop.f32.mrf.mxu0
        %3051 = vdwg.mxu0
        %v3052 = vadd.f32 %v2729, %v3006
        %v3053 = vadd.f32 %v2730, %v3034
        %v3054 = vadd.f32 %v2731, %v3008
        %v3055 = vadd.f32 %v2732, %v3036
        %v3056 = vadd.f32 %v2733, %v3011
        %v3057 = vadd.f32 %v2734, %v3039
        %v3058 = vadd.f32 %v2735, %v3013
        %v3059 = vadd.f32 %v2736, %v3041
        %v3060 = vadd.f32 %v2737, %v3016
        %v3061 = vadd.f32 %v2738, %v3044
        %v3062 = vadd.f32 %v2739, %v3018
        %v3063 = vadd.f32 %v2740, %v3046
        %v3064 = vadd.f32 %v2741, %v3021
        %v3065 = vadd.f32 %v2742, %v3049
        %v3066 = vld [vmem:[%s222] sm:$0x3]
        %v3068 = vperm.slane %v3066, 0
        %v3069 = vperm.slane %v3066, 1
        %v3072 = vadd.f32 %v3052, %v3068
        %v3073 = vadd.f32 %v3053, %v3069
        %v3074 = vadd.f32 %v3054, %v3068
        %v3075 = vadd.f32 %v3055, %v3069
        %v3076 = vadd.f32 %v3056, %v3068
        %v3077 = vadd.f32 %v3057, %v3069
        %v3078 = vadd.f32 %v3058, %v3068
        %v3079 = vadd.f32 %v3059, %v3069
        %v3080 = vadd.f32 %v3060, %v3068
        %v3081 = vadd.f32 %v3061, %v3069
        %v3082 = vadd.f32 %v3062, %v3068
        %v3083 = vadd.f32 %v3063, %v3069
        %v3084 = vadd.f32 %v3064, %v3068
        %v3085 = vadd.f32 %v3065, %v3069
        %v3086 = vmax.f32 %v3072, 0.0
        %v3087 = vmax.f32 %v3073, 0.0
        %v3088 = vmax.f32 %v3074, 0.0
        %v3089 = vmax.f32 %v3075, 0.0
        %v3090 = vmax.f32 %v3076, 0.0
        %v3091 = vmax.f32 %v3077, 0.0
        %v3092 = vmax.f32 %v3078, 0.0
        %v3093 = vmax.f32 %v3079, 0.0
        %v3094 = vmax.f32 %v3080, 0.0
        %v3095 = vmax.f32 %v3081, 0.0
        %v3096 = vmax.f32 %v3082, 0.0
        %v3097 = vmax.f32 %v3083, 0.0
        %v3098 = vmax.f32 %v3084, 0.0
        %v3099 = vmax.f32 %v3085, 0.0
        %v3100 = vpack.c.bf16 %v3087, %v3086
        %v3101 = vpack.c.bf16 %v3089, %v3088
        %v3102 = vpack.c.bf16 %v3091, %v3090
        %v3103 = vpack.c.bf16 %v3093, %v3092
        %v3104 = vpack.c.bf16 %v3095, %v3094
        %v3105 = vpack.c.bf16 %v3097, %v3096
        %v3106 = vpack.c.bf16 %v3099, %v3098
        %3107 = vst [vmem:[%s254] sm:$0xff] %v3100
        %3108 = vst [vmem:[%s254 + $0x8] sm:$0xff] %v3101
        %3109 = vst [vmem:[%s254 + $0x10] sm:$0xff] %v3102
        %3110 = vst [vmem:[%s254 + $0x18] sm:$0xff] %v3103
        %3111 = vst [vmem:[%s254 + $0x20] sm:$0xff] %v3104
        %3112 = vst [vmem:[%s254 + $0x28] sm:$0xff] %v3105
        %vm3113 = vcmask 1040384
        %vm3114 = vsmask.f32 256
        %vm3115 = vmand %vm3113, %vm3114
        %vm3116 = vcmask 1044484
        %vm3117 = vsmask.f32 4352
        %vm3118 = vmand %vm3116, %vm3117
        %vm3119 = vmor %vm3118, %vm3115
        %v3120 = vld [vmem:[%s254 + $0x30] sm:$0x11]
        %v3121 = vsel %vm3119, %v3106, %v3120
        %3122 = vst [vmem:[%s254 + $0x30] sm:$0x11] %v3121
        %s3123 = sand.u32 %s120, 1
        %s3124 = sand.u32 %s120, 1
        %s3125 = smul.addr %s3124, 56
        %s3126 = scalar_lea.vmem [#allocation6], %s3125
        // Predicated region
        $region41: #{pool_layer_stu.5} parent=31 // pred_check
          %p3127 = pneg %p130
        $region42: #{pool_layer_stu.5} parent=31 // pred_check_branch
          %3129 = sbr.rel (%p3127) target = $region44
        $region43: #{pool_layer_stu.5} parent=31 // pred_region
          %s3130 = smul.u32 2, %s25
          %s3131 = smul.addr %s24, 28
          %s3132 = sadd.s32 %s3130, %s3131
          %s3133 = smul.addr %s3132, 4
          %s3134 = scalar_lea.vmem %s3, %s3133
          // Predicated region
          $region45: #{pool_layer_stu.5} parent=43 // pred_check
            _
          $region46: #{pool_layer_stu.5} parent=43 // pred_check_branch
            %3136 = sbr.rel (0) target = $region48
          $region47: #{pool_layer_stu.5} parent=43 // pred_region
            // Predicated region
            $region49: #{pool_layer_stu.5} parent=47 // pred_check
              _
            $region50: #{pool_layer_stu.5} parent=47 // pred_check_branch
              %3138 = sbr.rel (0) target = $region52
            $region51: #{pool_layer_stu.5} parent=47 // pred_region
              // Predicated region
              $region64: #{pool_layer_stu.5} parent=51 // pred_check
                _
              $region65: #{pool_layer_stu.5} parent=51 // pred_check_branch
                %3166 = sbr.rel (0) target = $region67
              $region66: #{pool_layer_stu.5} parent=51 // pred_region
                loop: start=0, step=1, limit=1
                $region68: #{pool_layer_stu.5} parent=66 // loop_pre_header
                  _
                $region69: #{pool_layer_stu.5} parent=66 // loop_header
                  %s3168 = sphi 0, %s3172
                  %p3169 = scmp.ge.s32.totalorder %s3168, 1
                  %s3173 = sphi %s3126, %s3126
                  %s3174 = sphi %s3134, %s3134
                $region70: #{pool_layer_stu.5} parent=66 // loop_header_branch
                  %3171 = sbr.rel (%p3169) target = $region74
                $region71: #{pool_layer_stu.5} parent=66 // loop_body
                  %v3175 = vld [vmem:[%s3173] sm:$0xff]
                  %3176 = vst [vmem:[%s3174] sm:$0xff] %v3175
                  %v3177 = vld [vmem:[%s3173 + $0x8] sm:$0xff]
                  %3178 = vst [vmem:[%s3174 + $0x10] sm:$0xff] %v3177
                  %v3179 = vld [vmem:[%s3173 + $0x10] sm:$0xff]
                  %3180 = vst [vmem:[%s3174 + $0x20] sm:$0xff] %v3179
                  %v3181 = vld [vmem:[%s3173 + $0x18] sm:$0xff]
                  %3182 = vst [vmem:[%s3174 + $0x30] sm:$0xff] %v3181
                  %v3183 = vld [vmem:[%s3173 + $0x20] sm:$0xff]
                  %3184 = vst [vmem:[%s3174 + $0x40] sm:$0xff] %v3183
                  %v3185 = vld [vmem:[%s3173 + $0x28] sm:$0xff]
                  %3186 = vst [vmem:[%s3174 + $0x50] sm:$0xff] %v3185
                  %v3187 = vld [vmem:[%s3173 + $0x30] sm:$0xff]
                  %3188 = vst [vmem:[%s3174 + $0x60] sm:$0xff] %v3187
                $region72: #{pool_layer_stu.5} parent=66 // loop_footer
                  %s3172 = sadd.s32 1, %s3168
                $region73: #{pool_layer_stu.5} parent=66 // loop_footer_branch
                  %3167 = sbr.rel target = $region69
                $region74: #{pool_layer_stu.5} parent=66 // loop_exit
                  _
              $region67: #{pool_layer_stu.5} parent=51 // pred_fallthru
                _
              // Predicated region
              $region75: #{pool_layer_stu.5} parent=51 // pred_check
                _
              $region76: #{pool_layer_stu.5} parent=51 // pred_check_branch
                %3190 = sbr.rel target = $region78
              $region77: #{pool_layer_stu.5} parent=51 // pred_region
                _
              $region78: #{pool_layer_stu.5} parent=51 // pred_fallthru
                _
            $region52: #{pool_layer_stu.5} parent=47 // pred_fallthru
              _
            // Predicated region
            $region53: #{pool_layer_stu.5} parent=47 // pred_check
              _
            $region54: #{pool_layer_stu.5} parent=47 // pred_check_branch
              %3140 = sbr.rel target = $region56
            $region55: #{pool_layer_stu.5} parent=47 // pred_region
              %s3142 = ssub.s32 256, 1
              loop: start=0, step=1, limit=1
              $region57: #{pool_layer_stu.5} parent=55 // loop_pre_header
                _
              $region58: #{pool_layer_stu.5} parent=55 // loop_header
                %s3144 = sphi 0, %s3148
                %p3145 = scmp.ge.s32.totalorder %s3144, 1
                %s3149 = sphi %s3126, %s3126
                %s3150 = sphi %s3134, %s3134
              $region59: #{pool_layer_stu.5} parent=55 // loop_header_branch
                %3147 = sbr.rel (%p3145) target = $region63
              $region60: #{pool_layer_stu.5} parent=55 // loop_body
                %v3151 = vld [vmem:[%s3149] sm:%s3142]
                %3152 = vst [vmem:[%s3150] sm:%s3142] %v3151
                %v3153 = vld [vmem:[%s3149 + $0x8] sm:%s3142]
                %3154 = vst [vmem:[%s3150 + $0x10] sm:%s3142] %v3153
                %v3155 = vld [vmem:[%s3149 + $0x10] sm:%s3142]
                %3156 = vst [vmem:[%s3150 + $0x20] sm:%s3142] %v3155
                %v3157 = vld [vmem:[%s3149 + $0x18] sm:%s3142]
                %3158 = vst [vmem:[%s3150 + $0x30] sm:%s3142] %v3157
                %v3159 = vld [vmem:[%s3149 + $0x20] sm:%s3142]
                %3160 = vst [vmem:[%s3150 + $0x40] sm:%s3142] %v3159
                %v3161 = vld [vmem:[%s3149 + $0x28] sm:%s3142]
                %3162 = vst [vmem:[%s3150 + $0x50] sm:%s3142] %v3161
                %v3163 = vld [vmem:[%s3149 + $0x30] sm:%s3142]
                %3164 = vst [vmem:[%s3150 + $0x60] sm:%s3142] %v3163
              $region61: #{pool_layer_stu.5} parent=55 // loop_footer
                %s3148 = sadd.s32 1, %s3144
              $region62: #{pool_layer_stu.5} parent=55 // loop_footer_branch
                %3143 = sbr.rel target = $region58
              $region63: #{pool_layer_stu.5} parent=55 // loop_exit
                _
            $region56: #{pool_layer_stu.5} parent=47 // pred_fallthru
              _
          $region48: #{pool_layer_stu.5} parent=43 // pred_fallthru
            _
          %3191 = vnop
        $region44: #{pool_layer_stu.5} parent=31 // pred_fallthru
          _
      $region32: #{pool_layer_stu.5} parent=5 // pred_fallthru
        _
      %p3192 = scmp.le.s32.totalorder 2, %s15
      // Predicated region
      $region79: #{pool_layer_stu.5} parent=5 // pred_check
        %p3193 = pneg %p3192
      $region80: #{pool_layer_stu.5} parent=5 // pred_check_branch
        %3195 = sbr.rel (%p3193) target = $region82
      $region81: #{pool_layer_stu.5} parent=5 // pred_region
        %s3196 = ssub.s32 %s15, 2
        // Predicated region
        $region83: #{pool_layer_stu.5} parent=81 // pred_check
          %p3197 = pneg %p136
        $region84: #{pool_layer_stu.5} parent=81 // pred_check_branch
          %3199 = sbr.rel (%p3197) target = $region86
        $region85: #{pool_layer_stu.5} parent=81 // pred_region
          %s3200 = sand.u32 %s121, 1
          %s3201 = sand.u32 %s121, 1
          %s3202 = smul.addr %s3201, 56
          %s3203 = scalar_lea.vmem [#allocation6], %s3202
        $region86: #{pool_layer_stu.5} parent=81 // pred_fallthru
          _
      $region82: #{pool_layer_stu.5} parent=5 // pred_fallthru
        _
    $region6: #{pool_layer_stu.5} parent=1 // loop_footer
      %s19 = sadd.s32 1, %s15
    $region7: #{pool_layer_stu.5} parent=1 // loop_footer_branch
      %14 = sbr.rel target = $region3
    $region8: #{pool_layer_stu.5} parent=1 // loop_exit
      _
    %3204 = vsyncpa [#allocation3], 1
    %s3205 = scalar_lea.sflag [#allocation3], 1
    %3206 = vsyncpa %s3205, 1
    %3207 = vsyncpa [#allocation5], 1
    %s3208 = scalar_lea.sflag [#allocation5], 1
    %3209 = vsyncpa %s3208, 1

// kernel: pool_layer_stu.6
$region0: #{pool_layer_stu.6}
  #allocation0 [shape = 'u32[]', space=smem, size = 0x4, offset = 0x4, fixed_abs, tag = 'smem constant byte address 0x4 - core index']
  #allocation1 [shape = 'u32[72,128]{1,0:T(1,128)}', space=vmem, size = 0x9000, scoped, tag = 'internal scratch']
  %s0 = inlined_call_operand.vmem [shape: bf16[2,7,7,512], index: 0, kind: input, shape index: {}]
  %s1 = inlined_call_operand.vmem [shape: bf16[3,3,512,8], index: 1, kind: input, shape index: {}]
  %s2 = inlined_call_operand.vmem [shape: f32[1,8], index: 2, kind: input, shape index: {}]
  %s3 = inlined_call_operand.vmem [shape: f32[2,16,8], index: 3, kind: output, shape index: {}]
  %s4 = sld [smem:[#allocation0]]
  $region45: #{pool_layer_stu.6} parent=0
    _
  %s6 = ssub.s32 1, %s4
  %s7 = scalar_select 0, %s6, %s4
  loop: start=0, step=1, limit=4
  $region2: #{pool_layer_stu.6} parent=0 // loop_pre_header
    _
  $region3: #{pool_layer_stu.6} parent=0 // loop_header
    %s9 = sphi 0, %s13
    %p10 = scmp.ge.s32.totalorder %s9, 4
    %s19 = sphi 0, %s21
    %s22 = sphi 0, %s19
    %s23 = sphi 0, %s22
    %s39 = sphi 0, %s23
    %s43 = sphi 0, %s43
    %s45 = sphi 0, %s43
    %s46 = sphi 0, %s45
    %s60 = sphi 0, %s46
    %s64 = sphi 0, %s64
    %s66 = sphi 0, %s64
    %s67 = sphi 0, %s66
    %s81 = sphi 0, %s67
    %s87 = sphi 0, %s89
    %s90 = sphi 0, %s87
    %s91 = sphi 0, %s90
    %s107 = sphi 0, %s91
  $region4: #{pool_layer_stu.6} parent=0 // loop_header_branch
    %12 = sbr.rel (%p10) target = $region8
  $region5: #{pool_layer_stu.6} parent=0 // loop_body
    %s14 = ssub.s32 %s9, 1
    %s15 = ssub.s32 %s9, 2
    %s16 = sadd.s32 %s9, 1
    %s17 = ssub.s32 %s9, %s16
    %p18 = scmp.eq.s32.totalorder %s17, 0
    %s20 = sadd.s32 %s19, 1
    %s21 = scalar_select %p18, %s19, %s20
    %p24 = pneg %p18
    %p25 = scmp.eq.s32.totalorder %s9, 1
    %p26 = por %p24, %p25
    %p27 = scmp.ne.s32.totalorder %s19, %s22
    %p28 = scmp.eq.s32.totalorder %s9, 0
    %p29 = por %p27, %p28
    %p30 = scmp.ne.s32.totalorder %s19, %s22
    %p31 = scmp.eq.s32.totalorder %s14, 1
    %p32 = por %p30, %p31
    %p33 = scmp.ne.s32.totalorder %s22, %s23
    %p34 = scmp.eq.s32.totalorder %s14, 0
    %p35 = por %p33, %p34
    %p36 = scmp.ne.s32.totalorder %s22, %s23
    %p37 = scmp.eq.s32.totalorder %s15, 1
    %p38 = por %p36, %p37
    %p40 = scmp.ne.s32.totalorder %s23, %s39
    %p41 = scmp.eq.s32.totalorder %s15, 0
    %p42 = por %p40, %p41
    %s44 = sadd.s32 %s43, 1
    %p47 = scmp.eq.s32.totalorder %s9, 1
    %p48 = scmp.ne.s32.totalorder %s43, %s45
    %p49 = scmp.eq.s32.totalorder %s9, 0
    %p50 = por %p48, %p49
    %p51 = scmp.ne.s32.totalorder %s43, %s45
    %p52 = scmp.eq.s32.totalorder %s14, 1
    %p53 = por %p51, %p52
    %p54 = scmp.ne.s32.totalorder %s45, %s46
    %p55 = scmp.eq.s32.totalorder %s14, 0
    %p56 = por %p54, %p55
    %p57 = scmp.ne.s32.totalorder %s45, %s46
    %p58 = scmp.eq.s32.totalorder %s15, 1
    %p59 = por %p57, %p58
    %p61 = scmp.ne.s32.totalorder %s46, %s60
    %p62 = scmp.eq.s32.totalorder %s15, 0
    %p63 = por %p61, %p62
    %s65 = sadd.s32 %s64, 1
    %p68 = scmp.eq.s32.totalorder %s9, 1
    %p69 = scmp.ne.s32.totalorder %s64, %s66
    %p70 = scmp.eq.s32.totalorder %s9, 0
    %p71 = por %p69, %p70
    %p72 = scmp.ne.s32.totalorder %s64, %s66
    %p73 = scmp.eq.s32.totalorder %s14, 1
    %p74 = por %p72, %p73
    %p75 = scmp.ne.s32.totalorder %s66, %s67
    %p76 = scmp.eq.s32.totalorder %s14, 0
    %p77 = por %p75, %p76
    %p78 = scmp.ne.s32.totalorder %s66, %s67
    %p79 = scmp.eq.s32.totalorder %s15, 1
    %p80 = por %p78, %p79
    %p82 = scmp.ne.s32.totalorder %s67, %s81
    %p83 = scmp.eq.s32.totalorder %s15, 0
    %p84 = por %p82, %p83
    %s85 = ssub.s32 %s9, %s16
    %p86 = scmp.eq.s32.totalorder %s85, 0
    %s88 = sadd.s32 %s87, 1
    %s89 = scalar_select %p86, %s87, %s88
    %p92 = pneg %p86
    %p93 = scmp.eq.s32.totalorder %s9, 1
    %p94 = por %p92, %p93
    %p95 = scmp.ne.s32.totalorder %s87, %s90
    %p96 = scmp.eq.s32.totalorder %s9, 0
    %p97 = por %p95, %p96
    %p98 = scmp.ne.s32.totalorder %s87, %s90
    %p99 = scmp.eq.s32.totalorder %s14, 1
    %p100 = por %p98, %p99
    %p101 = scmp.ne.s32.totalorder %s90, %s91
    %p102 = scmp.eq.s32.totalorder %s14, 0
    %p103 = por %p101, %p102
    %p104 = scmp.ne.s32.totalorder %s90, %s91
    %p105 = scmp.eq.s32.totalorder %s15, 1
    %p106 = por %p104, %p105
    %p108 = scmp.ne.s32.totalorder %s91, %s107
    %p109 = scmp.eq.s32.totalorder %s15, 0
    %p110 = por %p108, %p109
    %p111 = scmp.le.s32.totalorder 1, %s9
    %p112 = scmp.lt.s32.totalorder %s9, 3
    %p113 = pnand %p111, %p112
    %p114 = pneg %p113
    // Predicated region
    $region9: #{pool_layer_stu.6} parent=5 // pred_check
      _
    $region10: #{pool_layer_stu.6} parent=5 // pred_check_branch
      %116 = sbr.rel (%p113) target = $region12
    $region11: #{pool_layer_stu.6} parent=5 // pred_region
      %s117 = ssub.s32 %s9, 1
      // Predicated region
      $region13: #{pool_layer_stu.6} parent=11 // pred_check
        %p118 = pneg %p56
      $region14: #{pool_layer_stu.6} parent=11 // pred_check_branch
        %120 = sbr.rel (%p118) target = $region16
      $region15: #{pool_layer_stu.6} parent=11 // pred_region
        _
      $region16: #{pool_layer_stu.6} parent=11 // pred_fallthru
        _
      // Predicated region
      $region17: #{pool_layer_stu.6} parent=11 // pred_check
        %p121 = pneg %p77
      $region18: #{pool_layer_stu.6} parent=11 // pred_check_branch
        %123 = sbr.rel (%p121) target = $region20
      $region19: #{pool_layer_stu.6} parent=11 // pred_region
        _
      $region20: #{pool_layer_stu.6} parent=11 // pred_fallthru
        _
    $region12: #{pool_layer_stu.6} parent=5 // pred_fallthru
      _
    %p124 = scmp.lt.s32.totalorder %s9, 2
    // Predicated region
    $region21: #{pool_layer_stu.6} parent=5 // pred_check
      %p125 = pneg %p124
    $region22: #{pool_layer_stu.6} parent=5 // pred_check_branch
      %127 = sbr.rel (%p125) target = $region24
    $region23: #{pool_layer_stu.6} parent=5 // pred_region
      // Predicated region
      $region25: #{pool_layer_stu.6} parent=23 // pred_check
        %p128 = pneg %p29
      $region26: #{pool_layer_stu.6} parent=23 // pred_check_branch
        %130 = sbr.rel (%p128) target = $region28
      $region27: #{pool_layer_stu.6} parent=23 // pred_region
        %p131 = scmp.lt.s32.totalorder %s9, 1
        %s132 = scalar_select %p131, %s9, 1
        %s133 = smul.addr %s132, 28
        %s134 = smul.addr %s133, 4
        %s135 = scalar_lea.vmem %s0, %s134
      $region28: #{pool_layer_stu.6} parent=23 // pred_fallthru
        _
    $region24: #{pool_layer_stu.6} parent=5 // pred_fallthru
      _
    %p136 = scmp.le.s32.totalorder 1, %s9
    %p137 = scmp.lt.s32.totalorder %s9, 3
    %p138 = pnand %p136, %p137
    %p139 = pneg %p138
    // Predicated region
    $region29: #{pool_layer_stu.6} parent=5 // pred_check
      _
    $region30: #{pool_layer_stu.6} parent=5 // pred_check_branch
      %141 = sbr.rel (%p138) target = $region32
    $region31: #{pool_layer_stu.6} parent=5 // pred_region
      %s142 = ssub.s32 %s9, 1
      %p143 = scmp.lt.s32.totalorder %s14, 1
      %s144 = scalar_select %p143, %s14, 1
      %s145 = smul.addr %s144, 28
      %s146 = smul.addr %s145, 4
      %s147 = scalar_lea.vmem %s0, %s146
      %p148 = pneg %p35
      %p149 = pneg %p32
      %p150 = pneg %p56
      %p151 = pneg %p53
      %p152 = pneg %p77
      %p153 = pneg %p74
      %p154 = pneg %p103
      %p155 = pneg %p100
      %p156 = scmp.lt.s32.totalorder %s14, 1
      %s157 = scalar_select %p156, %s14, 1
      %s158 = smul.addr %s157, 2
      %s159 = smul.addr %s158, 8
      %s160 = scalar_lea.vmem %s3, %s159
      %p161 = scmp.lt.s32.totalorder %s14, 1
      %s162 = scalar_select %p161, %s14, 1
      %s163 = smul.addr %s162, 28
      %s164 = smul.addr %s163, 4
      %s165 = scalar_lea.vmem %s0, %s164
      %p166 = scmp.lt.s32.totalorder %s14, 1
      %s167 = scalar_select %p166, %s14, 1
      %s168 = smul.addr %s167, 2
      %s169 = smul.addr %s168, 8
      %s170 = scalar_lea.vmem %s3, %s169
      %v171 = vld [vmem:[%s165] sm:$0xff]
      %v172 = vld [vmem:[%s165 + $0x8] sm:$0xff]
      %v173 = vld [vmem:[%s165 + $0x10] sm:$0xff]
      %v174 = vld [vmem:[%s165 + $0x18] sm:$0xff]
      %v175 = vld [vmem:[%s165 + $0x20] sm:$0xff]
      %v176 = vld [vmem:[%s165 + $0x28] sm:$0xff]
      %v177 = vld [vmem:[%s165 + $0x30] sm:$0xff]
      %v178 = vld [vmem:[%s165 + $0x38] sm:$0xff]
      %v179 = vld [vmem:[%s165 + $0x40] sm:$0xff]
      %v180 = vld [vmem:[%s165 + $0x48] sm:$0xff]
      %v181 = vld [vmem:[%s165 + $0x50] sm:$0xff]
      %v182 = vld [vmem:[%s165 + $0x58] sm:$0xff]
      %v183 = vld [vmem:[%s165 + $0x60] sm:$0xff]
      %v184 = vld [vmem:[%s165 + $0x68] sm:$0xff]
      %v185 = vunpack.c.l.bf16 %v171
      %v186 = vunpack.c.h.bf16 %v171
      %v187 = vunpack.c.l.bf16 %v172
      %v188 = vunpack.c.h.bf16 %v172
      %v189 = vunpack.c.l.bf16 %v173
      %v190 = vunpack.c.h.bf16 %v173
      %v191 = vunpack.c.l.bf16 %v174
      %v192 = vunpack.c.h.bf16 %v174
      %v193 = vunpack.c.l.bf16 %v175
      %v194 = vunpack.c.h.bf16 %v175
      %v195 = vunpack.c.l.bf16 %v176
      %v196 = vunpack.c.h.bf16 %v176
      %v197 = vunpack.c.l.bf16 %v177
      %v198 = vunpack.c.h.bf16 %v177
      %v199 = vunpack.c.l.bf16 %v178
      %v200 = vunpack.c.h.bf16 %v178
      %v201 = vunpack.c.l.bf16 %v179
      %v202 = vunpack.c.h.bf16 %v179
      %v203 = vunpack.c.l.bf16 %v180
      %v204 = vunpack.c.h.bf16 %v180
      %v205 = vunpack.c.l.bf16 %v181
      %v206 = vunpack.c.h.bf16 %v181
      %v207 = vunpack.c.l.bf16 %v182
      %v208 = vunpack.c.h.bf16 %v182
      %v209 = vunpack.c.l.bf16 %v183
      %v210 = vunpack.c.h.bf16 %v183
      %v211 = vunpack.c.l.bf16 %v184
      %v212 = vunpack.c.h.bf16 %v184
      %v213 = vmax.f32 %v185, %v189
      %v214 = vmax.f32 %v186, %v190
      %v215 = vmax.f32 %v187, %v191
      %v216 = vmax.f32 %v188, %v192
      %v217 = vmax.f32 %v189, %v193
      %v218 = vmax.f32 %v190, %v194
      %v219 = vmax.f32 %v191, %v195
      %v220 = vmax.f32 %v192, %v196
      %v221 = vmax.f32 %v193, %v197
      %v222 = vmax.f32 %v194, %v198
      %v223 = vmax.f32 %v195, %v199
      %v224 = vmax.f32 %v196, %v200
      %v225 = vmax.f32 %v197, %v201
      %v226 = vmax.f32 %v198, %v202
      %v227 = vmax.f32 %v199, %v203
      %v228 = vmax.f32 %v200, %v204
      %v229 = vmax.f32 %v201, %v205
      %v230 = vmax.f32 %v202, %v206
      %v231 = vmax.f32 %v203, %v207
      %v232 = vmax.f32 %v204, %v208
      %v233 = vmax.f32 %v205, %v209
      %v234 = vmax.f32 %v206, %v210
      %v235 = vmax.f32 %v207, %v211
      %v236 = vmax.f32 %v208, %v212
      %v237 = vpack.c.bf16 %v214, %v213
      %v238 = vpack.c.bf16 %v216, %v215
      %v239 = vpack.c.bf16 %v218, %v217
      %v240 = vpack.c.bf16 %v220, %v219
      %v241 = vpack.c.bf16 %v222, %v221
      %v242 = vpack.c.bf16 %v224, %v223
      %v243 = vpack.c.bf16 %v226, %v225
      %v244 = vpack.c.bf16 %v228, %v227
      %v245 = vpack.c.bf16 %v230, %v229
      %v246 = vpack.c.bf16 %v232, %v231
      %v247 = vpack.c.bf16 %v234, %v233
      %v248 = vpack.c.bf16 %v236, %v235
      %v249 = vunpack.c.l.bf16 %v237
      %v250 = vunpack.c.h.bf16 %v237
      %v251 = vunpack.c.l.bf16 %v238
      %v252 = vunpack.c.h.bf16 %v238
      %v253 = vunpack.c.l.bf16 %v239
      %v254 = vunpack.c.h.bf16 %v239
      %v255 = vunpack.c.l.bf16 %v240
      %v256 = vunpack.c.h.bf16 %v240
      %v257 = vunpack.c.l.bf16 %v241
      %v258 = vunpack.c.h.bf16 %v241
      %v259 = vunpack.c.l.bf16 %v242
      %v260 = vunpack.c.h.bf16 %v242
      %v261 = vunpack.c.l.bf16 %v243
      %v262 = vunpack.c.h.bf16 %v243
      %v263 = vunpack.c.l.bf16 %v244
      %v264 = vunpack.c.h.bf16 %v244
      %v265 = vunpack.c.l.bf16 %v245
      %v266 = vunpack.c.h.bf16 %v245
      %v267 = vunpack.c.l.bf16 %v246
      %v268 = vunpack.c.h.bf16 %v246
      %v269 = vunpack.c.l.bf16 %v247
      %v270 = vunpack.c.h.bf16 %v247
      %v271 = vunpack.c.l.bf16 %v248
      %v272 = vunpack.c.h.bf16 %v248
      %v297 = vrot.slane %v249, 1
      %v298 = vrot.slane %v250, 1
      %v299 = vrot.slane %v251, 1
      %v300 = vrot.slane %v252, 1
      %v301 = vrot.slane %v253, 1
      %v302 = vrot.slane %v254, 1
      %v303 = vrot.slane %v255, 1
      %v304 = vrot.slane %v256, 1
      %v305 = vrot.slane %v257, 1
      %v306 = vrot.slane %v258, 1
      %v307 = vrot.slane %v259, 1
      %v308 = vrot.slane %v260, 1
      %v309 = vrot.slane %v261, 1
      %v310 = vrot.slane %v262, 1
      %v311 = vrot.slane %v263, 1
      %v312 = vrot.slane %v264, 1
      %v313 = vrot.slane %v265, 1
      %v314 = vrot.slane %v266, 1
      %v315 = vrot.slane %v267, 1
      %v316 = vrot.slane %v268, 1
      %v317 = vrot.slane %v269, 1
      %v318 = vrot.slane %v270, 1
      %v319 = vrot.slane %v271, 1
      %v320 = vrot.slane %v272, 1
      %v345 = vmax.f32 %v249, %v297
      %v346 = vmax.f32 %v250, %v298
      %v347 = vmax.f32 %v251, %v299
      %v348 = vmax.f32 %v252, %v300
      %v349 = vmax.f32 %v253, %v301
      %v350 = vmax.f32 %v254, %v302
      %v351 = vmax.f32 %v255, %v303
      %v352 = vmax.f32 %v256, %v304
      %v353 = vmax.f32 %v257, %v305
      %v354 = vmax.f32 %v258, %v306
      %v355 = vmax.f32 %v259, %v307
      %v356 = vmax.f32 %v260, %v308
      %v357 = vmax.f32 %v261, %v309
      %v358 = vmax.f32 %v262, %v310
      %v359 = vmax.f32 %v263, %v311
      %v360 = vmax.f32 %v264, %v312
      %v361 = vmax.f32 %v265, %v313
      %v362 = vmax.f32 %v266, %v314
      %v363 = vmax.f32 %v267, %v315
      %v364 = vmax.f32 %v268, %v316
      %v365 = vmax.f32 %v269, %v317
      %v366 = vmax.f32 %v270, %v318
      %v367 = vmax.f32 %v271, %v319
      %v368 = vmax.f32 %v272, %v320
      %v369 = vpack.c.bf16 %v346, %v345
      %v370 = vpack.c.bf16 %v348, %v347
      %v371 = vpack.c.bf16 %v350, %v349
      %v372 = vpack.c.bf16 %v352, %v351
      %v373 = vpack.c.bf16 %v354, %v353
      %v374 = vpack.c.bf16 %v356, %v355
      %v375 = vpack.c.bf16 %v358, %v357
      %v376 = vpack.c.bf16 %v360, %v359
      %v377 = vpack.c.bf16 %v362, %v361
      %v378 = vpack.c.bf16 %v364, %v363
      %v379 = vpack.c.bf16 %v366, %v365
      %v380 = vpack.c.bf16 %v368, %v367
      %v381 = vld [vmem:[%s1] sm:$0xf]
      %v382 = vld [vmem:[%s1 + $0x4] sm:$0xf]
      %v383 = vld [vmem:[%s1 + $0x8] sm:$0xf]
      %v384 = vld [vmem:[%s1 + $0xc] sm:$0xf]
      %v385 = vld [vmem:[%s1 + $0x10] sm:$0xf]
      %v386 = vld [vmem:[%s1 + $0x14] sm:$0xf]
      %v387 = vld [vmem:[%s1 + $0x18] sm:$0xf]
      %v388 = vld [vmem:[%s1 + $0x1c] sm:$0xf]
      %v389 = vld [vmem:[%s1 + $0x20] sm:$0xf]
      %v390 = vld [vmem:[%s1 + $0x24] sm:$0xf]
      %v391 = vld [vmem:[%s1 + $0x28] sm:$0xf]
      %v392 = vld [vmem:[%s1 + $0x2c] sm:$0xf]
      %v393 = vld [vmem:[%s1 + $0x30] sm:$0xf]
      %v394 = vld [vmem:[%s1 + $0x34] sm:$0xf]
      %v395 = vld [vmem:[%s1 + $0x38] sm:$0xf]
      %v396 = vld [vmem:[%s1 + $0x3c] sm:$0xf]
      %v397 = vld [vmem:[%s1 + $0x40] sm:$0xf]
      %v398 = vld [vmem:[%s1 + $0x44] sm:$0xf]
      %v399 = vld [vmem:[%s1 + $0x48] sm:$0xf]
      %v400 = vld [vmem:[%s1 + $0x4c] sm:$0xf]
      %v401 = vld [vmem:[%s1 + $0x50] sm:$0xf]
      %v402 = vld [vmem:[%s1 + $0x54] sm:$0xf]
      %v403 = vld [vmem:[%s1 + $0x58] sm:$0xf]
      %v404 = vld [vmem:[%s1 + $0x5c] sm:$0xf]
      %v405 = vld [vmem:[%s1 + $0x60] sm:$0xf]
      %v406 = vld [vmem:[%s1 + $0x64] sm:$0xf]
      %v407 = vld [vmem:[%s1 + $0x68] sm:$0xf]
      %v408 = vld [vmem:[%s1 + $0x6c] sm:$0xf]
      %v409 = vld [vmem:[%s1 + $0x70] sm:$0xf]
      %v410 = vld [vmem:[%s1 + $0x74] sm:$0xf]
      %v411 = vld [vmem:[%s1 + $0x78] sm:$0xf]
      %v412 = vld [vmem:[%s1 + $0x7c] sm:$0xf]
      %v413 = vld [vmem:[%s1 + $0x80] sm:$0xf]
      %v414 = vld [vmem:[%s1 + $0x84] sm:$0xf]
      %v415 = vld [vmem:[%s1 + $0x88] sm:$0xf]
      %v416 = vld [vmem:[%s1 + $0x8c] sm:$0xf]
      %v417 = vld [vmem:[%s1 + $0x90] sm:$0xf]
      %v418 = vld [vmem:[%s1 + $0x94] sm:$0xf]
      %v419 = vld [vmem:[%s1 + $0x98] sm:$0xf]
      %v420 = vld [vmem:[%s1 + $0x9c] sm:$0xf]
      %v421 = vld [vmem:[%s1 + $0xa0] sm:$0xf]
      %v422 = vld [vmem:[%s1 + $0xa4] sm:$0xf]
      %v423 = vld [vmem:[%s1 + $0xa8] sm:$0xf]
      %v424 = vld [vmem:[%s1 + $0xac] sm:$0xf]
      %v425 = vld [vmem:[%s1 + $0xb0] sm:$0xf]
      %v426 = vld [vmem:[%s1 + $0xb4] sm:$0xf]
      %v427 = vld [vmem:[%s1 + $0xb8] sm:$0xf]
      %v428 = vld [vmem:[%s1 + $0xbc] sm:$0xf]
      %v429 = vld [vmem:[%s1 + $0xc0] sm:$0xf]
      %v430 = vld [vmem:[%s1 + $0xc4] sm:$0xf]
      %v431 = vld [vmem:[%s1 + $0xc8] sm:$0xf]
      %v432 = vld [vmem:[%s1 + $0xcc] sm:$0xf]
      %v433 = vld [vmem:[%s1 + $0xd0] sm:$0xf]
      %v434 = vld [vmem:[%s1 + $0xd4] sm:$0xf]
      %v435 = vld [vmem:[%s1 + $0xd8] sm:$0xf]
      %v436 = vld [vmem:[%s1 + $0xdc] sm:$0xf]
      %v437 = vld [vmem:[%s1 + $0xe0] sm:$0xf]
      %v438 = vld [vmem:[%s1 + $0xe4] sm:$0xf]
      %v439 = vld [vmem:[%s1 + $0xe8] sm:$0xf]
      %v440 = vld [vmem:[%s1 + $0xec] sm:$0xf]
      %v441 = vld [vmem:[%s1 + $0xf0] sm:$0xf]
      %v442 = vld [vmem:[%s1 + $0xf4] sm:$0xf]
      %v443 = vld [vmem:[%s1 + $0xf8] sm:$0xf]
      %v444 = vld [vmem:[%s1 + $0xfc] sm:$0xf]
      %v445 = vld [vmem:[%s1 + $0x100] sm:$0xf]
      %v446 = vld [vmem:[%s1 + $0x104] sm:$0xf]
      %v447 = vld [vmem:[%s1 + $0x108] sm:$0xf]
      %v448 = vld [vmem:[%s1 + $0x10c] sm:$0xf]
      %v449 = vld [vmem:[%s1 + $0x110] sm:$0xf]
      %v450 = vld [vmem:[%s1 + $0x114] sm:$0xf]
      %v451 = vld [vmem:[%s1 + $0x118] sm:$0xf]
      %v452 = vld [vmem:[%s1 + $0x11c] sm:$0xf]
      %v453 = vld [vmem:[%s1 + $0x120] sm:$0xf]
      %v454 = vld [vmem:[%s1 + $0x124] sm:$0xf]
      %v455 = vld [vmem:[%s1 + $0x128] sm:$0xf]
      %v456 = vld [vmem:[%s1 + $0x12c] sm:$0xf]
      %v457 = vld [vmem:[%s1 + $0x130] sm:$0xf]
      %v458 = vld [vmem:[%s1 + $0x134] sm:$0xf]
      %v459 = vld [vmem:[%s1 + $0x138] sm:$0xf]
      %v460 = vld [vmem:[%s1 + $0x13c] sm:$0xf]
      %v461 = vld [vmem:[%s1 + $0x140] sm:$0xf]
      %v462 = vld [vmem:[%s1 + $0x144] sm:$0xf]
      %v463 = vld [vmem:[%s1 + $0x148] sm:$0xf]
      %v464 = vld [vmem:[%s1 + $0x14c] sm:$0xf]
      %v465 = vld [vmem:[%s1 + $0x150] sm:$0xf]
      %v466 = vld [vmem:[%s1 + $0x154] sm:$0xf]
      %v467 = vld [vmem:[%s1 + $0x158] sm:$0xf]
      %v468 = vld [vmem:[%s1 + $0x15c] sm:$0xf]
      %v469 = vld [vmem:[%s1 + $0x160] sm:$0xf]
      %v470 = vld [vmem:[%s1 + $0x164] sm:$0xf]
      %v471 = vld [vmem:[%s1 + $0x168] sm:$0xf]
      %v472 = vld [vmem:[%s1 + $0x16c] sm:$0xf]
      %v473 = vld [vmem:[%s1 + $0x170] sm:$0xf]
      %v474 = vld [vmem:[%s1 + $0x174] sm:$0xf]
      %v475 = vld [vmem:[%s1 + $0x178] sm:$0xf]
      %v476 = vld [vmem:[%s1 + $0x17c] sm:$0xf]
      %v477 = vld [vmem:[%s1 + $0x180] sm:$0xf]
      %v478 = vld [vmem:[%s1 + $0x184] sm:$0xf]
      %v479 = vld [vmem:[%s1 + $0x188] sm:$0xf]
      %v480 = vld [vmem:[%s1 + $0x18c] sm:$0xf]
      %v481 = vld [vmem:[%s1 + $0x190] sm:$0xf]
      %v482 = vld [vmem:[%s1 + $0x194] sm:$0xf]
      %v483 = vld [vmem:[%s1 + $0x198] sm:$0xf]
      %v484 = vld [vmem:[%s1 + $0x19c] sm:$0xf]
      %v485 = vld [vmem:[%s1 + $0x1a0] sm:$0xf]
      %v486 = vld [vmem:[%s1 + $0x1a4] sm:$0xf]
      %v487 = vld [vmem:[%s1 + $0x1a8] sm:$0xf]
      %v488 = vld [vmem:[%s1 + $0x1ac] sm:$0xf]
      %v489 = vld [vmem:[%s1 + $0x1b0] sm:$0xf]
      %v490 = vld [vmem:[%s1 + $0x1b4] sm:$0xf]
      %v491 = vld [vmem:[%s1 + $0x1b8] sm:$0xf]
      %v492 = vld [vmem:[%s1 + $0x1bc] sm:$0xf]
      %v493 = vld [vmem:[%s1 + $0x1c0] sm:$0xf]
      %v494 = vld [vmem:[%s1 + $0x1c4] sm:$0xf]
      %v495 = vld [vmem:[%s1 + $0x1c8] sm:$0xf]
      %v496 = vld [vmem:[%s1 + $0x1cc] sm:$0xf]
      %v497 = vld [vmem:[%s1 + $0x1d0] sm:$0xf]
      %v498 = vld [vmem:[%s1 + $0x1d4] sm:$0xf]
      %v499 = vld [vmem:[%s1 + $0x1d8] sm:$0xf]
      %v500 = vld [vmem:[%s1 + $0x1dc] sm:$0xf]
      %v501 = vld [vmem:[%s1 + $0x1e0] sm:$0xf]
      %v502 = vld [vmem:[%s1 + $0x1e4] sm:$0xf]
      %v503 = vld [vmem:[%s1 + $0x1e8] sm:$0xf]
      %v504 = vld [vmem:[%s1 + $0x1ec] sm:$0xf]
      %v505 = vld [vmem:[%s1 + $0x1f0] sm:$0xf]
      %v506 = vld [vmem:[%s1 + $0x1f4] sm:$0xf]
      %v507 = vld [vmem:[%s1 + $0x1f8] sm:$0xf]
      %v508 = vld [vmem:[%s1 + $0x1fc] sm:$0xf]
      %v509 = vld [vmem:[%s1 + $0x200] sm:$0xf]
      %v510 = vld [vmem:[%s1 + $0x204] sm:$0xf]
      %v511 = vld [vmem:[%s1 + $0x208] sm:$0xf]
      %v512 = vld [vmem:[%s1 + $0x20c] sm:$0xf]
      %v513 = vld [vmem:[%s1 + $0x210] sm:$0xf]
      %v514 = vld [vmem:[%s1 + $0x214] sm:$0xf]
      %v515 = vld [vmem:[%s1 + $0x218] sm:$0xf]
      %v516 = vld [vmem:[%s1 + $0x21c] sm:$0xf]
      %v517 = vld [vmem:[%s1 + $0x220] sm:$0xf]
      %v518 = vld [vmem:[%s1 + $0x224] sm:$0xf]
      %v519 = vld [vmem:[%s1 + $0x228] sm:$0xf]
      %v520 = vld [vmem:[%s1 + $0x22c] sm:$0xf]
      %v521 = vld [vmem:[%s1 + $0x230] sm:$0xf]
      %v522 = vld [vmem:[%s1 + $0x234] sm:$0xf]
      %v523 = vld [vmem:[%s1 + $0x238] sm:$0xf]
      %v524 = vld [vmem:[%s1 + $0x23c] sm:$0xf]
      %v525 = vld [vmem:[%s1 + $0x240] sm:$0xf]
      %v526 = vld [vmem:[%s1 + $0x244] sm:$0xf]
      %v527 = vld [vmem:[%s1 + $0x248] sm:$0xf]
      %v528 = vld [vmem:[%s1 + $0x24c] sm:$0xf]
      %v529 = vld [vmem:[%s1 + $0x250] sm:$0xf]
      %v530 = vld [vmem:[%s1 + $0x254] sm:$0xf]
      %v531 = vld [vmem:[%s1 + $0x258] sm:$0xf]
      %v532 = vld [vmem:[%s1 + $0x25c] sm:$0xf]
      %v533 = vld [vmem:[%s1 + $0x260] sm:$0xf]
      %v534 = vld [vmem:[%s1 + $0x264] sm:$0xf]
      %v535 = vld [vmem:[%s1 + $0x268] sm:$0xf]
      %v536 = vld [vmem:[%s1 + $0x26c] sm:$0xf]
      %v537 = vld [vmem:[%s1 + $0x270] sm:$0xf]
      %v538 = vld [vmem:[%s1 + $0x274] sm:$0xf]
      %v539 = vld [vmem:[%s1 + $0x278] sm:$0xf]
      %v540 = vld [vmem:[%s1 + $0x27c] sm:$0xf]
      %v541 = vld [vmem:[%s1 + $0x280] sm:$0xf]
      %v542 = vld [vmem:[%s1 + $0x284] sm:$0xf]
      %v543 = vld [vmem:[%s1 + $0x288] sm:$0xf]
      %v544 = vld [vmem:[%s1 + $0x28c] sm:$0xf]
      %v545 = vld [vmem:[%s1 + $0x290] sm:$0xf]
      %v546 = vld [vmem:[%s1 + $0x294] sm:$0xf]
      %v547 = vld [vmem:[%s1 + $0x298] sm:$0xf]
      %v548 = vld [vmem:[%s1 + $0x29c] sm:$0xf]
      %v549 = vld [vmem:[%s1 + $0x2a0] sm:$0xf]
      %v550 = vld [vmem:[%s1 + $0x2a4] sm:$0xf]
      %v551 = vld [vmem:[%s1 + $0x2a8] sm:$0xf]
      %v552 = vld [vmem:[%s1 + $0x2ac] sm:$0xf]
      %v553 = vld [vmem:[%s1 + $0x2b0] sm:$0xf]
      %v554 = vld [vmem:[%s1 + $0x2b4] sm:$0xf]
      %v555 = vld [vmem:[%s1 + $0x2b8] sm:$0xf]
      %v556 = vld [vmem:[%s1 + $0x2bc] sm:$0xf]
      %v557 = vld [vmem:[%s1 + $0x2c0] sm:$0xf]
      %v558 = vld [vmem:[%s1 + $0x2c4] sm:$0xf]
      %v559 = vld [vmem:[%s1 + $0x2c8] sm:$0xf]
      %v560 = vld [vmem:[%s1 + $0x2cc] sm:$0xf]
      %v561 = vld [vmem:[%s1 + $0x2d0] sm:$0xf]
      %v562 = vld [vmem:[%s1 + $0x2d4] sm:$0xf]
      %v563 = vld [vmem:[%s1 + $0x2d8] sm:$0xf]
      %v564 = vld [vmem:[%s1 + $0x2dc] sm:$0xf]
      %v565 = vld [vmem:[%s1 + $0x2e0] sm:$0xf]
      %v566 = vld [vmem:[%s1 + $0x2e4] sm:$0xf]
      %v567 = vld [vmem:[%s1 + $0x2e8] sm:$0xf]
      %v568 = vld [vmem:[%s1 + $0x2ec] sm:$0xf]
      %v569 = vld [vmem:[%s1 + $0x2f0] sm:$0xf]
      %v570 = vld [vmem:[%s1 + $0x2f4] sm:$0xf]
      %v571 = vld [vmem:[%s1 + $0x2f8] sm:$0xf]
      %v572 = vld [vmem:[%s1 + $0x2fc] sm:$0xf]
      %v573 = vld [vmem:[%s1 + $0x300] sm:$0xf]
      %v574 = vld [vmem:[%s1 + $0x304] sm:$0xf]
      %v575 = vld [vmem:[%s1 + $0x308] sm:$0xf]
      %v576 = vld [vmem:[%s1 + $0x30c] sm:$0xf]
      %v577 = vld [vmem:[%s1 + $0x310] sm:$0xf]
      %v578 = vld [vmem:[%s1 + $0x314] sm:$0xf]
      %v579 = vld [vmem:[%s1 + $0x318] sm:$0xf]
      %v580 = vld [vmem:[%s1 + $0x31c] sm:$0xf]
      %v581 = vld [vmem:[%s1 + $0x320] sm:$0xf]
      %v582 = vld [vmem:[%s1 + $0x324] sm:$0xf]
      %v583 = vld [vmem:[%s1 + $0x328] sm:$0xf]
      %v584 = vld [vmem:[%s1 + $0x32c] sm:$0xf]
      %v585 = vld [vmem:[%s1 + $0x330] sm:$0xf]
      %v586 = vld [vmem:[%s1 + $0x334] sm:$0xf]
      %v587 = vld [vmem:[%s1 + $0x338] sm:$0xf]
      %v588 = vld [vmem:[%s1 + $0x33c] sm:$0xf]
      %v589 = vld [vmem:[%s1 + $0x340] sm:$0xf]
      %v590 = vld [vmem:[%s1 + $0x344] sm:$0xf]
      %v591 = vld [vmem:[%s1 + $0x348] sm:$0xf]
      %v592 = vld [vmem:[%s1 + $0x34c] sm:$0xf]
      %v593 = vld [vmem:[%s1 + $0x350] sm:$0xf]
      %v594 = vld [vmem:[%s1 + $0x354] sm:$0xf]
      %v595 = vld [vmem:[%s1 + $0x358] sm:$0xf]
      %v596 = vld [vmem:[%s1 + $0x35c] sm:$0xf]
      %v597 = vld [vmem:[%s1 + $0x360] sm:$0xf]
      %v598 = vld [vmem:[%s1 + $0x364] sm:$0xf]
      %v599 = vld [vmem:[%s1 + $0x368] sm:$0xf]
      %v600 = vld [vmem:[%s1 + $0x36c] sm:$0xf]
      %v601 = vld [vmem:[%s1 + $0x370] sm:$0xf]
      %v602 = vld [vmem:[%s1 + $0x374] sm:$0xf]
      %v603 = vld [vmem:[%s1 + $0x378] sm:$0xf]
      %v604 = vld [vmem:[%s1 + $0x37c] sm:$0xf]
      %v605 = vld [vmem:[%s1 + $0x380] sm:$0xf]
      %v606 = vld [vmem:[%s1 + $0x384] sm:$0xf]
      %v607 = vld [vmem:[%s1 + $0x388] sm:$0xf]
      %v608 = vld [vmem:[%s1 + $0x38c] sm:$0xf]
      %v609 = vld [vmem:[%s1 + $0x390] sm:$0xf]
      %v610 = vld [vmem:[%s1 + $0x394] sm:$0xf]
      %v611 = vld [vmem:[%s1 + $0x398] sm:$0xf]
      %v612 = vld [vmem:[%s1 + $0x39c] sm:$0xf]
      %v613 = vld [vmem:[%s1 + $0x3a0] sm:$0xf]
      %v614 = vld [vmem:[%s1 + $0x3a4] sm:$0xf]
      %v615 = vld [vmem:[%s1 + $0x3a8] sm:$0xf]
      %v616 = vld [vmem:[%s1 + $0x3ac] sm:$0xf]
      %v617 = vld [vmem:[%s1 + $0x3b0] sm:$0xf]
      %v618 = vld [vmem:[%s1 + $0x3b4] sm:$0xf]
      %v619 = vld [vmem:[%s1 + $0x3b8] sm:$0xf]
      %v620 = vld [vmem:[%s1 + $0x3bc] sm:$0xf]
      %v621 = vld [vmem:[%s1 + $0x3c0] sm:$0xf]
      %v622 = vld [vmem:[%s1 + $0x3c4] sm:$0xf]
      %v623 = vld [vmem:[%s1 + $0x3c8] sm:$0xf]
      %v624 = vld [vmem:[%s1 + $0x3cc] sm:$0xf]
      %v625 = vld [vmem:[%s1 + $0x3d0] sm:$0xf]
      %v626 = vld [vmem:[%s1 + $0x3d4] sm:$0xf]
      %v627 = vld [vmem:[%s1 + $0x3d8] sm:$0xf]
      %v628 = vld [vmem:[%s1 + $0x3dc] sm:$0xf]
      %v629 = vld [vmem:[%s1 + $0x3e0] sm:$0xf]
      %v630 = vld [vmem:[%s1 + $0x3e4] sm:$0xf]
      %v631 = vld [vmem:[%s1 + $0x3e8] sm:$0xf]
      %v632 = vld [vmem:[%s1 + $0x3ec] sm:$0xf]
      %v633 = vld [vmem:[%s1 + $0x3f0] sm:$0xf]
      %v634 = vld [vmem:[%s1 + $0x3f4] sm:$0xf]
      %v635 = vld [vmem:[%s1 + $0x3f8] sm:$0xf]
      %v636 = vld [vmem:[%s1 + $0x3fc] sm:$0xf]
      %v637 = vld [vmem:[%s1 + $0x400] sm:$0xf]
      %v638 = vld [vmem:[%s1 + $0x404] sm:$0xf]
      %v639 = vld [vmem:[%s1 + $0x408] sm:$0xf]
      %v640 = vld [vmem:[%s1 + $0x40c] sm:$0xf]
      %v641 = vld [vmem:[%s1 + $0x410] sm:$0xf]
      %v642 = vld [vmem:[%s1 + $0x414] sm:$0xf]
      %v643 = vld [vmem:[%s1 + $0x418] sm:$0xf]
      %v644 = vld [vmem:[%s1 + $0x41c] sm:$0xf]
      %v645 = vld [vmem:[%s1 + $0x420] sm:$0xf]
      %v646 = vld [vmem:[%s1 + $0x424] sm:$0xf]
      %v647 = vld [vmem:[%s1 + $0x428] sm:$0xf]
      %v648 = vld [vmem:[%s1 + $0x42c] sm:$0xf]
      %v649 = vld [vmem:[%s1 + $0x430] sm:$0xf]
      %v650 = vld [vmem:[%s1 + $0x434] sm:$0xf]
      %v651 = vld [vmem:[%s1 + $0x438] sm:$0xf]
      %v652 = vld [vmem:[%s1 + $0x43c] sm:$0xf]
      %v653 = vld [vmem:[%s1 + $0x440] sm:$0xf]
      %v654 = vld [vmem:[%s1 + $0x444] sm:$0xf]
      %v655 = vld [vmem:[%s1 + $0x448] sm:$0xf]
      %v656 = vld [vmem:[%s1 + $0x44c] sm:$0xf]
      %v657 = vld [vmem:[%s1 + $0x450] sm:$0xf]
      %v658 = vld [vmem:[%s1 + $0x454] sm:$0xf]
      %v659 = vld [vmem:[%s1 + $0x458] sm:$0xf]
      %v660 = vld [vmem:[%s1 + $0x45c] sm:$0xf]
      %v661 = vld [vmem:[%s1 + $0x460] sm:$0xf]
      %v662 = vld [vmem:[%s1 + $0x464] sm:$0xf]
      %v663 = vld [vmem:[%s1 + $0x468] sm:$0xf]
      %v664 = vld [vmem:[%s1 + $0x46c] sm:$0xf]
      %v665 = vld [vmem:[%s1 + $0x470] sm:$0xf]
      %v666 = vld [vmem:[%s1 + $0x474] sm:$0xf]
      %v667 = vld [vmem:[%s1 + $0x478] sm:$0xf]
      %v668 = vld [vmem:[%s1 + $0x47c] sm:$0xf]
      %v669 = vld [vmem:[%s1 + $0x480] sm:$0xf]
      %v670 = vld [vmem:[%s1 + $0x484] sm:$0xf]
      %v671 = vld [vmem:[%s1 + $0x488] sm:$0xf]
      %v672 = vld [vmem:[%s1 + $0x48c] sm:$0xf]
      %v673 = vld [vmem:[%s1 + $0x490] sm:$0xf]
      %v674 = vld [vmem:[%s1 + $0x494] sm:$0xf]
      %v675 = vld [vmem:[%s1 + $0x498] sm:$0xf]
      %v676 = vld [vmem:[%s1 + $0x49c] sm:$0xf]
      %v677 = vld [vmem:[%s1 + $0x4a0] sm:$0xf]
      %v678 = vld [vmem:[%s1 + $0x4a4] sm:$0xf]
      %v679 = vld [vmem:[%s1 + $0x4a8] sm:$0xf]
      %v680 = vld [vmem:[%s1 + $0x4ac] sm:$0xf]
      %v681 = vld [vmem:[%s1 + $0x4b0] sm:$0xf]
      %v682 = vld [vmem:[%s1 + $0x4b4] sm:$0xf]
      %v683 = vld [vmem:[%s1 + $0x4b8] sm:$0xf]
      %v684 = vld [vmem:[%s1 + $0x4bc] sm:$0xf]
      %v685 = vld [vmem:[%s1 + $0x4c0] sm:$0xf]
      %v686 = vld [vmem:[%s1 + $0x4c4] sm:$0xf]
      %v687 = vld [vmem:[%s1 + $0x4c8] sm:$0xf]
      %v688 = vld [vmem:[%s1 + $0x4cc] sm:$0xf]
      %v689 = vld [vmem:[%s1 + $0x4d0] sm:$0xf]
      %v690 = vld [vmem:[%s1 + $0x4d4] sm:$0xf]
      %v691 = vld [vmem:[%s1 + $0x4d8] sm:$0xf]
      %v692 = vld [vmem:[%s1 + $0x4dc] sm:$0xf]
      %v693 = vld [vmem:[%s1 + $0x4e0] sm:$0xf]
      %v694 = vld [vmem:[%s1 + $0x4e4] sm:$0xf]
      %v695 = vld [vmem:[%s1 + $0x4e8] sm:$0xf]
      %v696 = vld [vmem:[%s1 + $0x4ec] sm:$0xf]
      %v697 = vld [vmem:[%s1 + $0x4f0] sm:$0xf]
      %v698 = vld [vmem:[%s1 + $0x4f4] sm:$0xf]
      %v699 = vld [vmem:[%s1 + $0x4f8] sm:$0xf]
      %v700 = vld [vmem:[%s1 + $0x4fc] sm:$0xf]
      %v701 = vld [vmem:[%s1 + $0x500] sm:$0xf]
      %v702 = vld [vmem:[%s1 + $0x504] sm:$0xf]
      %v703 = vld [vmem:[%s1 + $0x508] sm:$0xf]
      %v704 = vld [vmem:[%s1 + $0x50c] sm:$0xf]
      %v705 = vld [vmem:[%s1 + $0x510] sm:$0xf]
      %v706 = vld [vmem:[%s1 + $0x514] sm:$0xf]
      %v707 = vld [vmem:[%s1 + $0x518] sm:$0xf]
      %v708 = vld [vmem:[%s1 + $0x51c] sm:$0xf]
      %v709 = vld [vmem:[%s1 + $0x520] sm:$0xf]
      %v710 = vld [vmem:[%s1 + $0x524] sm:$0xf]
      %v711 = vld [vmem:[%s1 + $0x528] sm:$0xf]
      %v712 = vld [vmem:[%s1 + $0x52c] sm:$0xf]
      %v713 = vld [vmem:[%s1 + $0x530] sm:$0xf]
      %v714 = vld [vmem:[%s1 + $0x534] sm:$0xf]
      %v715 = vld [vmem:[%s1 + $0x538] sm:$0xf]
      %v716 = vld [vmem:[%s1 + $0x53c] sm:$0xf]
      %v717 = vld [vmem:[%s1 + $0x540] sm:$0xf]
      %v718 = vld [vmem:[%s1 + $0x544] sm:$0xf]
      %v719 = vld [vmem:[%s1 + $0x548] sm:$0xf]
      %v720 = vld [vmem:[%s1 + $0x54c] sm:$0xf]
      %v721 = vld [vmem:[%s1 + $0x550] sm:$0xf]
      %v722 = vld [vmem:[%s1 + $0x554] sm:$0xf]
      %v723 = vld [vmem:[%s1 + $0x558] sm:$0xf]
      %v724 = vld [vmem:[%s1 + $0x55c] sm:$0xf]
      %v725 = vld [vmem:[%s1 + $0x560] sm:$0xf]
      %v726 = vld [vmem:[%s1 + $0x564] sm:$0xf]
      %v727 = vld [vmem:[%s1 + $0x568] sm:$0xf]
      %v728 = vld [vmem:[%s1 + $0x56c] sm:$0xf]
      %v729 = vld [vmem:[%s1 + $0x570] sm:$0xf]
      %v730 = vld [vmem:[%s1 + $0x574] sm:$0xf]
      %v731 = vld [vmem:[%s1 + $0x578] sm:$0xf]
      %v732 = vld [vmem:[%s1 + $0x57c] sm:$0xf]
      %v733 = vld [vmem:[%s1 + $0x580] sm:$0xf]
      %v734 = vld [vmem:[%s1 + $0x584] sm:$0xf]
      %v735 = vld [vmem:[%s1 + $0x588] sm:$0xf]
      %v736 = vld [vmem:[%s1 + $0x58c] sm:$0xf]
      %v737 = vld [vmem:[%s1 + $0x590] sm:$0xf]
      %v738 = vld [vmem:[%s1 + $0x594] sm:$0xf]
      %v739 = vld [vmem:[%s1 + $0x598] sm:$0xf]
      %v740 = vld [vmem:[%s1 + $0x59c] sm:$0xf]
      %v741 = vld [vmem:[%s1 + $0x5a0] sm:$0xf]
      %v742 = vld [vmem:[%s1 + $0x5a4] sm:$0xf]
      %v743 = vld [vmem:[%s1 + $0x5a8] sm:$0xf]
      %v744 = vld [vmem:[%s1 + $0x5ac] sm:$0xf]
      %v745 = vld [vmem:[%s1 + $0x5b0] sm:$0xf]
      %v746 = vld [vmem:[%s1 + $0x5b4] sm:$0xf]
      %v747 = vld [vmem:[%s1 + $0x5b8] sm:$0xf]
      %v748 = vld [vmem:[%s1 + $0x5bc] sm:$0xf]
      %v749 = vld [vmem:[%s1 + $0x5c0] sm:$0xf]
      %v750 = vld [vmem:[%s1 + $0x5c4] sm:$0xf]
      %v751 = vld [vmem:[%s1 + $0x5c8] sm:$0xf]
      %v752 = vld [vmem:[%s1 + $0x5cc] sm:$0xf]
      %v753 = vld [vmem:[%s1 + $0x5d0] sm:$0xf]
      %v754 = vld [vmem:[%s1 + $0x5d4] sm:$0xf]
      %v755 = vld [vmem:[%s1 + $0x5d8] sm:$0xf]
      %v756 = vld [vmem:[%s1 + $0x5dc] sm:$0xf]
      %v757 = vld [vmem:[%s1 + $0x5e0] sm:$0xf]
      %v758 = vld [vmem:[%s1 + $0x5e4] sm:$0xf]
      %v759 = vld [vmem:[%s1 + $0x5e8] sm:$0xf]
      %v760 = vld [vmem:[%s1 + $0x5ec] sm:$0xf]
      %v761 = vld [vmem:[%s1 + $0x5f0] sm:$0xf]
      %v762 = vld [vmem:[%s1 + $0x5f4] sm:$0xf]
      %v763 = vld [vmem:[%s1 + $0x5f8] sm:$0xf]
      %v764 = vld [vmem:[%s1 + $0x5fc] sm:$0xf]
      %v765 = vld [vmem:[%s1 + $0x600] sm:$0xf]
      %v766 = vld [vmem:[%s1 + $0x604] sm:$0xf]
      %v767 = vld [vmem:[%s1 + $0x608] sm:$0xf]
      %v768 = vld [vmem:[%s1 + $0x60c] sm:$0xf]
      %v769 = vld [vmem:[%s1 + $0x610] sm:$0xf]
      %v770 = vld [vmem:[%s1 + $0x614] sm:$0xf]
      %v771 = vld [vmem:[%s1 + $0x618] sm:$0xf]
      %v772 = vld [vmem:[%s1 + $0x61c] sm:$0xf]
      %v773 = vld [vmem:[%s1 + $0x620] sm:$0xf]
      %v774 = vld [vmem:[%s1 + $0x624] sm:$0xf]
      %v775 = vld [vmem:[%s1 + $0x628] sm:$0xf]
      %v776 = vld [vmem:[%s1 + $0x62c] sm:$0xf]
      %v777 = vld [vmem:[%s1 + $0x630] sm:$0xf]
      %v778 = vld [vmem:[%s1 + $0x634] sm:$0xf]
      %v779 = vld [vmem:[%s1 + $0x638] sm:$0xf]
      %v780 = vld [vmem:[%s1 + $0x63c] sm:$0xf]
      %v781 = vld [vmem:[%s1 + $0x640] sm:$0xf]
      %v782 = vld [vmem:[%s1 + $0x644] sm:$0xf]
      %v783 = vld [vmem:[%s1 + $0x648] sm:$0xf]
      %v784 = vld [vmem:[%s1 + $0x64c] sm:$0xf]
      %v785 = vld [vmem:[%s1 + $0x650] sm:$0xf]
      %v786 = vld [vmem:[%s1 + $0x654] sm:$0xf]
      %v787 = vld [vmem:[%s1 + $0x658] sm:$0xf]
      %v788 = vld [vmem:[%s1 + $0x65c] sm:$0xf]
      %v789 = vld [vmem:[%s1 + $0x660] sm:$0xf]
      %v790 = vld [vmem:[%s1 + $0x664] sm:$0xf]
      %v791 = vld [vmem:[%s1 + $0x668] sm:$0xf]
      %v792 = vld [vmem:[%s1 + $0x66c] sm:$0xf]
      %v793 = vld [vmem:[%s1 + $0x670] sm:$0xf]
      %v794 = vld [vmem:[%s1 + $0x674] sm:$0xf]
      %v795 = vld [vmem:[%s1 + $0x678] sm:$0xf]
      %v796 = vld [vmem:[%s1 + $0x67c] sm:$0xf]
      %v797 = vld [vmem:[%s1 + $0x680] sm:$0xf]
      %v798 = vld [vmem:[%s1 + $0x684] sm:$0xf]
      %v799 = vld [vmem:[%s1 + $0x688] sm:$0xf]
      %v800 = vld [vmem:[%s1 + $0x68c] sm:$0xf]
      %v801 = vld [vmem:[%s1 + $0x690] sm:$0xf]
      %v802 = vld [vmem:[%s1 + $0x694] sm:$0xf]
      %v803 = vld [vmem:[%s1 + $0x698] sm:$0xf]
      %v804 = vld [vmem:[%s1 + $0x69c] sm:$0xf]
      %v805 = vld [vmem:[%s1 + $0x6a0] sm:$0xf]
      %v806 = vld [vmem:[%s1 + $0x6a4] sm:$0xf]
      %v807 = vld [vmem:[%s1 + $0x6a8] sm:$0xf]
      %v808 = vld [vmem:[%s1 + $0x6ac] sm:$0xf]
      %v809 = vld [vmem:[%s1 + $0x6b0] sm:$0xf]
      %v810 = vld [vmem:[%s1 + $0x6b4] sm:$0xf]
      %v811 = vld [vmem:[%s1 + $0x6b8] sm:$0xf]
      %v812 = vld [vmem:[%s1 + $0x6bc] sm:$0xf]
      %v813 = vld [vmem:[%s1 + $0x6c0] sm:$0xf]
      %v814 = vld [vmem:[%s1 + $0x6c4] sm:$0xf]
      %v815 = vld [vmem:[%s1 + $0x6c8] sm:$0xf]
      %v816 = vld [vmem:[%s1 + $0x6cc] sm:$0xf]
      %v817 = vld [vmem:[%s1 + $0x6d0] sm:$0xf]
      %v818 = vld [vmem:[%s1 + $0x6d4] sm:$0xf]
      %v819 = vld [vmem:[%s1 + $0x6d8] sm:$0xf]
      %v820 = vld [vmem:[%s1 + $0x6dc] sm:$0xf]
      %v821 = vld [vmem:[%s1 + $0x6e0] sm:$0xf]
      %v822 = vld [vmem:[%s1 + $0x6e4] sm:$0xf]
      %v823 = vld [vmem:[%s1 + $0x6e8] sm:$0xf]
      %v824 = vld [vmem:[%s1 + $0x6ec] sm:$0xf]
      %v825 = vld [vmem:[%s1 + $0x6f0] sm:$0xf]
      %v826 = vld [vmem:[%s1 + $0x6f4] sm:$0xf]
      %v827 = vld [vmem:[%s1 + $0x6f8] sm:$0xf]
      %v828 = vld [vmem:[%s1 + $0x6fc] sm:$0xf]
      %v829 = vld [vmem:[%s1 + $0x700] sm:$0xf]
      %v830 = vld [vmem:[%s1 + $0x704] sm:$0xf]
      %v831 = vld [vmem:[%s1 + $0x708] sm:$0xf]
      %v832 = vld [vmem:[%s1 + $0x70c] sm:$0xf]
      %v833 = vld [vmem:[%s1 + $0x710] sm:$0xf]
      %v834 = vld [vmem:[%s1 + $0x714] sm:$0xf]
      %v835 = vld [vmem:[%s1 + $0x718] sm:$0xf]
      %v836 = vld [vmem:[%s1 + $0x71c] sm:$0xf]
      %v837 = vld [vmem:[%s1 + $0x720] sm:$0xf]
      %v838 = vld [vmem:[%s1 + $0x724] sm:$0xf]
      %v839 = vld [vmem:[%s1 + $0x728] sm:$0xf]
      %v840 = vld [vmem:[%s1 + $0x72c] sm:$0xf]
      %v841 = vld [vmem:[%s1 + $0x730] sm:$0xf]
      %v842 = vld [vmem:[%s1 + $0x734] sm:$0xf]
      %v843 = vld [vmem:[%s1 + $0x738] sm:$0xf]
      %v844 = vld [vmem:[%s1 + $0x73c] sm:$0xf]
      %v845 = vld [vmem:[%s1 + $0x740] sm:$0xf]
      %v846 = vld [vmem:[%s1 + $0x744] sm:$0xf]
      %v847 = vld [vmem:[%s1 + $0x748] sm:$0xf]
      %v848 = vld [vmem:[%s1 + $0x74c] sm:$0xf]
      %v849 = vld [vmem:[%s1 + $0x750] sm:$0xf]
      %v850 = vld [vmem:[%s1 + $0x754] sm:$0xf]
      %v851 = vld [vmem:[%s1 + $0x758] sm:$0xf]
      %v852 = vld [vmem:[%s1 + $0x75c] sm:$0xf]
      %v853 = vld [vmem:[%s1 + $0x760] sm:$0xf]
      %v854 = vld [vmem:[%s1 + $0x764] sm:$0xf]
      %v855 = vld [vmem:[%s1 + $0x768] sm:$0xf]
      %v856 = vld [vmem:[%s1 + $0x76c] sm:$0xf]
      %v857 = vld [vmem:[%s1 + $0x770] sm:$0xf]
      %v858 = vld [vmem:[%s1 + $0x774] sm:$0xf]
      %v859 = vld [vmem:[%s1 + $0x778] sm:$0xf]
      %v860 = vld [vmem:[%s1 + $0x77c] sm:$0xf]
      %v861 = vld [vmem:[%s1 + $0x780] sm:$0xf]
      %v862 = vld [vmem:[%s1 + $0x784] sm:$0xf]
      %v863 = vld [vmem:[%s1 + $0x788] sm:$0xf]
      %v864 = vld [vmem:[%s1 + $0x78c] sm:$0xf]
      %v865 = vld [vmem:[%s1 + $0x790] sm:$0xf]
      %v866 = vld [vmem:[%s1 + $0x794] sm:$0xf]
      %v867 = vld [vmem:[%s1 + $0x798] sm:$0xf]
      %v868 = vld [vmem:[%s1 + $0x79c] sm:$0xf]
      %v869 = vld [vmem:[%s1 + $0x7a0] sm:$0xf]
      %v870 = vld [vmem:[%s1 + $0x7a4] sm:$0xf]
      %v871 = vld [vmem:[%s1 + $0x7a8] sm:$0xf]
      %v872 = vld [vmem:[%s1 + $0x7ac] sm:$0xf]
      %v873 = vld [vmem:[%s1 + $0x7b0] sm:$0xf]
      %v874 = vld [vmem:[%s1 + $0x7b4] sm:$0xf]
      %v875 = vld [vmem:[%s1 + $0x7b8] sm:$0xf]
      %v876 = vld [vmem:[%s1 + $0x7bc] sm:$0xf]
      %v877 = vld [vmem:[%s1 + $0x7c0] sm:$0xf]
      %v878 = vld [vmem:[%s1 + $0x7c4] sm:$0xf]
      %v879 = vld [vmem:[%s1 + $0x7c8] sm:$0xf]
      %v880 = vld [vmem:[%s1 + $0x7cc] sm:$0xf]
      %v881 = vld [vmem:[%s1 + $0x7d0] sm:$0xf]
      %v882 = vld [vmem:[%s1 + $0x7d4] sm:$0xf]
      %v883 = vld [vmem:[%s1 + $0x7d8] sm:$0xf]
      %v884 = vld [vmem:[%s1 + $0x7dc] sm:$0xf]
      %v885 = vld [vmem:[%s1 + $0x7e0] sm:$0xf]
      %v886 = vld [vmem:[%s1 + $0x7e4] sm:$0xf]
      %v887 = vld [vmem:[%s1 + $0x7e8] sm:$0xf]
      %v888 = vld [vmem:[%s1 + $0x7ec] sm:$0xf]
      %v889 = vld [vmem:[%s1 + $0x7f0] sm:$0xf]
      %v890 = vld [vmem:[%s1 + $0x7f4] sm:$0xf]
      %v891 = vld [vmem:[%s1 + $0x7f8] sm:$0xf]
      %v892 = vld [vmem:[%s1 + $0x7fc] sm:$0xf]
      %v893 = vld [vmem:[%s1 + $0x800] sm:$0xf]
      %v894 = vld [vmem:[%s1 + $0x804] sm:$0xf]
      %v895 = vld [vmem:[%s1 + $0x808] sm:$0xf]
      %v896 = vld [vmem:[%s1 + $0x80c] sm:$0xf]
      %v897 = vld [vmem:[%s1 + $0x810] sm:$0xf]
      %v898 = vld [vmem:[%s1 + $0x814] sm:$0xf]
      %v899 = vld [vmem:[%s1 + $0x818] sm:$0xf]
      %v900 = vld [vmem:[%s1 + $0x81c] sm:$0xf]
      %v901 = vld [vmem:[%s1 + $0x820] sm:$0xf]
      %v902 = vld [vmem:[%s1 + $0x824] sm:$0xf]
      %v903 = vld [vmem:[%s1 + $0x828] sm:$0xf]
      %v904 = vld [vmem:[%s1 + $0x82c] sm:$0xf]
      %v905 = vld [vmem:[%s1 + $0x830] sm:$0xf]
      %v906 = vld [vmem:[%s1 + $0x834] sm:$0xf]
      %v907 = vld [vmem:[%s1 + $0x838] sm:$0xf]
      %v908 = vld [vmem:[%s1 + $0x83c] sm:$0xf]
      %v909 = vld [vmem:[%s1 + $0x840] sm:$0xf]
      %v910 = vld [vmem:[%s1 + $0x844] sm:$0xf]
      %v911 = vld [vmem:[%s1 + $0x848] sm:$0xf]
      %v912 = vld [vmem:[%s1 + $0x84c] sm:$0xf]
      %v913 = vld [vmem:[%s1 + $0x850] sm:$0xf]
      %v914 = vld [vmem:[%s1 + $0x854] sm:$0xf]
      %v915 = vld [vmem:[%s1 + $0x858] sm:$0xf]
      %v916 = vld [vmem:[%s1 + $0x85c] sm:$0xf]
      %v917 = vld [vmem:[%s1 + $0x860] sm:$0xf]
      %v918 = vld [vmem:[%s1 + $0x864] sm:$0xf]
      %v919 = vld [vmem:[%s1 + $0x868] sm:$0xf]
      %v920 = vld [vmem:[%s1 + $0x86c] sm:$0xf]
      %v921 = vld [vmem:[%s1 + $0x870] sm:$0xf]
      %v922 = vld [vmem:[%s1 + $0x874] sm:$0xf]
      %v923 = vld [vmem:[%s1 + $0x878] sm:$0xf]
      %v924 = vld [vmem:[%s1 + $0x87c] sm:$0xf]
      %v925 = vld [vmem:[%s1 + $0x880] sm:$0xf]
      %v926 = vld [vmem:[%s1 + $0x884] sm:$0xf]
      %v927 = vld [vmem:[%s1 + $0x888] sm:$0xf]
      %v928 = vld [vmem:[%s1 + $0x88c] sm:$0xf]
      %v929 = vld [vmem:[%s1 + $0x890] sm:$0xf]
      %v930 = vld [vmem:[%s1 + $0x894] sm:$0xf]
      %v931 = vld [vmem:[%s1 + $0x898] sm:$0xf]
      %v932 = vld [vmem:[%s1 + $0x89c] sm:$0xf]
      %v933 = vld [vmem:[%s1 + $0x8a0] sm:$0xf]
      %v934 = vld [vmem:[%s1 + $0x8a4] sm:$0xf]
      %v935 = vld [vmem:[%s1 + $0x8a8] sm:$0xf]
      %v936 = vld [vmem:[%s1 + $0x8ac] sm:$0xf]
      %v937 = vld [vmem:[%s1 + $0x8b0] sm:$0xf]
      %v938 = vld [vmem:[%s1 + $0x8b4] sm:$0xf]
      %v939 = vld [vmem:[%s1 + $0x8b8] sm:$0xf]
      %v940 = vld [vmem:[%s1 + $0x8bc] sm:$0xf]
      %v941 = vld [vmem:[%s1 + $0x8c0] sm:$0xf]
      %v942 = vld [vmem:[%s1 + $0x8c4] sm:$0xf]
      %v943 = vld [vmem:[%s1 + $0x8c8] sm:$0xf]
      %v944 = vld [vmem:[%s1 + $0x8cc] sm:$0xf]
      %v945 = vld [vmem:[%s1 + $0x8d0] sm:$0xf]
      %v946 = vld [vmem:[%s1 + $0x8d4] sm:$0xf]
      %v947 = vld [vmem:[%s1 + $0x8d8] sm:$0xf]
      %v948 = vld [vmem:[%s1 + $0x8dc] sm:$0xf]
      %v949 = vld [vmem:[%s1 + $0x8e0] sm:$0xf]
      %v950 = vld [vmem:[%s1 + $0x8e4] sm:$0xf]
      %v951 = vld [vmem:[%s1 + $0x8e8] sm:$0xf]
      %v952 = vld [vmem:[%s1 + $0x8ec] sm:$0xf]
      %v953 = vld [vmem:[%s1 + $0x8f0] sm:$0xf]
      %v954 = vld [vmem:[%s1 + $0x8f4] sm:$0xf]
      %v955 = vld [vmem:[%s1 + $0x8f8] sm:$0xf]
      %v956 = vld [vmem:[%s1 + $0x8fc] sm:$0xf]
      %v965 = vrot.slane %v369, 2
      %v966 = vrot.slane %v370, 4
      %v967 = vrot.slane %v370, 6
      %v968 = vrot.slane %v371, 2
      %v969 = vrot.slane %v372, 4
      %v970 = vrot.slane %v372, 6
      %v971 = vrot.slane %v373, 2
      %v972 = vrot.slane %v374, 4
      %v973 = vrot.slane %v374, 6
      %v974 = vrot.slane %v375, 2
      %v975 = vrot.slane %v376, 4
      %v976 = vrot.slane %v376, 6
      %vm977 = vcmask 1041408
      %v980 = vsel %vm977, %v369, %v965
      %vm981 = vcmask 1045508
      %v984 = vsel %vm981, %v966, %v967
      %vm985 = vcmask 1043456
      %v986 = vsel %vm985, %v980, %v984
      %v989 = vsel %vm977, %v371, %v968
      %v992 = vsel %vm981, %v969, %v970
      %v993 = vsel %vm985, %v989, %v992
      %v996 = vsel %vm977, %v373, %v971
      %v999 = vsel %vm981, %v972, %v973
      %v1000 = vsel %vm985, %v996, %v999
      %v1003 = vsel %vm977, %v375, %v974
      %v1006 = vsel %vm981, %v975, %v976
      %v1007 = vsel %vm985, %v1003, %v1006
      %vm1008 = vcmask 1043458
      %v1009 = vsel %vm1008, %v369, %v965
      %vm1010 = vcmask 1045504
      %v1011 = vsel %vm1010, %v967, %v966
      %vm1012 = vcmask 1045506
      %v1013 = vsel %vm1012, %v1009, %v1011
      %v1015 = vrot.slane %v1013, 2
      %v1016 = vsel %vm1008, %v371, %v968
      %v1017 = vsel %vm1010, %v970, %v969
      %v1018 = vsel %vm1012, %v1016, %v1017
      %v1020 = vrot.slane %v1018, 2
      %v1021 = vsel %vm1008, %v373, %v971
      %v1022 = vsel %vm1010, %v973, %v972
      %v1023 = vsel %vm1012, %v1021, %v1022
      %v1025 = vrot.slane %v1023, 2
      %v1026 = vsel %vm1008, %v375, %v974
      %v1027 = vsel %vm1010, %v976, %v975
      %v1028 = vsel %vm1012, %v1026, %v1027
      %v1030 = vrot.slane %v1028, 2
      %vm1031 = vsmask.f32 1280
      %vm1032 = vsmask.f32 3336
      %vm1033 = vmor %vm1031, %vm1032
      %vm1034 = vsmask.f32 5392
      %vm1035 = vmor %vm1033, %vm1034
      %vm1036 = vsmask.f32 7448
      %vm1037 = vmor %vm1035, %vm1036
      %v1038 = vshrl.u32 %v986, 16
      %v1040 = vrot.slane %v1038, 6
      %v1041 = vshll.u32 %v986, 16
      %v1043 = vrot.slane %v1041, 7
      %v1044 = vor.u32 %v1040, %v1043
      %v1045 = vrot.slane %v1044, 2
      %v1047 = vshll.u32 %v1015, 16
      %v1049 = vrot.slane %v1047, 7
      %v1050 = vsel %vm1037, %v1045, %v1049
      %v1051 = vshrl.u32 %v993, 16
      %v1053 = vrot.slane %v1051, 6
      %v1054 = vshll.u32 %v993, 16
      %v1056 = vrot.slane %v1054, 7
      %v1057 = vor.u32 %v1053, %v1056
      %v1058 = vrot.slane %v1057, 2
      %v1060 = vshll.u32 %v1020, 16
      %v1062 = vrot.slane %v1060, 7
      %v1063 = vsel %vm1037, %v1058, %v1062
      %v1064 = vshrl.u32 %v1000, 16
      %v1066 = vrot.slane %v1064, 6
      %v1067 = vshll.u32 %v1000, 16
      %v1069 = vrot.slane %v1067, 7
      %v1070 = vor.u32 %v1066, %v1069
      %v1071 = vrot.slane %v1070, 2
      %v1073 = vshll.u32 %v1025, 16
      %v1075 = vrot.slane %v1073, 7
      %v1076 = vsel %vm1037, %v1071, %v1075
      %v1077 = vshrl.u32 %v1007, 16
      %v1079 = vrot.slane %v1077, 6
      %v1080 = vshll.u32 %v1007, 16
      %v1082 = vrot.slane %v1080, 7
      %v1083 = vor.u32 %v1079, %v1082
      %v1084 = vrot.slane %v1083, 2
      %v1086 = vshll.u32 %v1030, 16
      %v1088 = vrot.slane %v1086, 7
      %v1089 = vsel %vm1037, %v1084, %v1088
      %1091 = vst [vmem:[#allocation1] ss:$4 sm:$0xff] %v1050
      %s1093 = scalar_lea.vmem [#allocation1], 1
      %1094 = vst [vmem:[%s1093] ss:$4 sm:$0xff] %v1063
      %s1096 = scalar_lea.vmem [#allocation1], 2
      %1097 = vst [vmem:[%s1096] ss:$4 sm:$0xff] %v1076
      %s1099 = scalar_lea.vmem [#allocation1], 3
      %1100 = vst [vmem:[%s1099] ss:$4 sm:$0xff] %v1089
      %v1101 = vld.sshfl [vmem:[#allocation1] sm:$0xff pattern:$0x73625140]
      %v1102 = vld.sshfl [vmem:[#allocation1 + $0x8] sm:$0xff pattern:$0x73625140]
      %v1103 = vld.sshfl [vmem:[#allocation1 + $0x10] sm:$0xff pattern:$0x73625140]
      %v1104 = vld.sshfl [vmem:[#allocation1 + $0x18] sm:$0xff pattern:$0x73625140]
      %v1173 = vunpack.c.l.b16 %v445
      %v1174 = vunpack.c.l.b16 %v446
      %v1175 = vunpack.c.l.b16 %v447
      %v1176 = vunpack.c.l.b16 %v448
      %v1177 = vunpack.c.l.b16 %v449
      %v1178 = vunpack.c.l.b16 %v450
      %v1179 = vunpack.c.l.b16 %v451
      %v1180 = vunpack.c.l.b16 %v452
      %v1181 = vunpack.c.l.b16 %v453
      %v1182 = vunpack.c.l.b16 %v454
      %v1183 = vunpack.c.l.b16 %v455
      %v1184 = vunpack.c.l.b16 %v456
      %v1185 = vunpack.c.l.b16 %v457
      %v1186 = vunpack.c.l.b16 %v458
      %v1187 = vunpack.c.l.b16 %v459
      %v1188 = vunpack.c.l.b16 %v460
      %v1189 = vunpack.c.l.b16 %v461
      %v1190 = vunpack.c.l.b16 %v462
      %v1191 = vunpack.c.l.b16 %v463
      %v1192 = vunpack.c.l.b16 %v464
      %v1193 = vunpack.c.l.b16 %v465
      %v1194 = vunpack.c.l.b16 %v466
      %v1195 = vunpack.c.l.b16 %v467
      %v1196 = vunpack.c.l.b16 %v468
      %v1197 = vunpack.c.l.b16 %v469
      %v1198 = vunpack.c.l.b16 %v470
      %v1199 = vunpack.c.l.b16 %v471
      %v1200 = vunpack.c.l.b16 %v472
      %v1201 = vunpack.c.l.b16 %v473
      %v1202 = vunpack.c.l.b16 %v474
      %v1203 = vunpack.c.l.b16 %v475
      %v1204 = vunpack.c.l.b16 %v476
      %v1205 = vunpack.c.l.b16 %v477
      %v1206 = vunpack.c.l.b16 %v478
      %v1207 = vunpack.c.l.b16 %v479
      %v1208 = vunpack.c.l.b16 %v480
      %v1209 = vunpack.c.l.b16 %v481
      %v1210 = vunpack.c.l.b16 %v482
      %v1211 = vunpack.c.l.b16 %v483
      %v1212 = vunpack.c.l.b16 %v484
      %v1213 = vunpack.c.l.b16 %v485
      %v1214 = vunpack.c.l.b16 %v486
      %v1215 = vunpack.c.l.b16 %v487
      %v1216 = vunpack.c.l.b16 %v488
      %v1217 = vunpack.c.l.b16 %v489
      %v1218 = vunpack.c.l.b16 %v490
      %v1219 = vunpack.c.l.b16 %v491
      %v1220 = vunpack.c.l.b16 %v492
      %v1221 = vunpack.c.l.b16 %v493
      %v1222 = vunpack.c.l.b16 %v494
      %v1223 = vunpack.c.l.b16 %v495
      %v1224 = vunpack.c.l.b16 %v496
      %v1225 = vunpack.c.l.b16 %v497
      %v1226 = vunpack.c.l.b16 %v498
      %v1227 = vunpack.c.l.b16 %v499
      %v1228 = vunpack.c.l.b16 %v500
      %v1229 = vunpack.c.l.b16 %v501
      %v1230 = vunpack.c.l.b16 %v502
      %v1231 = vunpack.c.l.b16 %v503
      %v1232 = vunpack.c.l.b16 %v504
      %v1233 = vunpack.c.l.b16 %v505
      %v1234 = vunpack.c.l.b16 %v506
      %v1235 = vunpack.c.l.b16 %v507
      %v1236 = vunpack.c.l.b16 %v508
      %v1237 = vpack.c.b16 %v1174, %v1173
      %v1238 = vpack.c.b16 %v1176, %v1175
      %v1239 = vpack.c.b16 %v1178, %v1177
      %v1240 = vpack.c.b16 %v1180, %v1179
      %v1241 = vpack.c.b16 %v1182, %v1181
      %v1242 = vpack.c.b16 %v1184, %v1183
      %v1243 = vpack.c.b16 %v1186, %v1185
      %v1244 = vpack.c.b16 %v1188, %v1187
      %v1245 = vpack.c.b16 %v1190, %v1189
      %v1246 = vpack.c.b16 %v1192, %v1191
      %v1247 = vpack.c.b16 %v1194, %v1193
      %v1248 = vpack.c.b16 %v1196, %v1195
      %v1249 = vpack.c.b16 %v1198, %v1197
      %v1250 = vpack.c.b16 %v1200, %v1199
      %v1251 = vpack.c.b16 %v1202, %v1201
      %v1252 = vpack.c.b16 %v1204, %v1203
      %v1253 = vpack.c.b16 %v1206, %v1205
      %v1254 = vpack.c.b16 %v1208, %v1207
      %v1255 = vpack.c.b16 %v1210, %v1209
      %v1256 = vpack.c.b16 %v1212, %v1211
      %v1257 = vpack.c.b16 %v1214, %v1213
      %v1258 = vpack.c.b16 %v1216, %v1215
      %v1259 = vpack.c.b16 %v1218, %v1217
      %v1260 = vpack.c.b16 %v1220, %v1219
      %v1261 = vpack.c.b16 %v1222, %v1221
      %v1262 = vpack.c.b16 %v1224, %v1223
      %v1263 = vpack.c.b16 %v1226, %v1225
      %v1264 = vpack.c.b16 %v1228, %v1227
      %v1265 = vpack.c.b16 %v1230, %v1229
      %v1266 = vpack.c.b16 %v1232, %v1231
      %v1267 = vpack.c.b16 %v1234, %v1233
      %v1268 = vpack.c.b16 %v1236, %v1235
      %1301 = vmatpush.bf16.msra.mxu0 %v1244
      %1302 = vmatpush.bf16.msra.mxu0 %v1243
      %1303 = vmatpush.bf16.msra.mxu0 %v1242
      %1304 = vmatpush.bf16.msra.mxu0 %v1241
      %1305 = vmatpush.bf16.msra.mxu0 %v1240
      %1306 = vmatpush.bf16.msra.mxu0 %v1239
      %1307 = vmatpush.bf16.msra.mxu0 %v1238
      %1308 = vmatpush.bf16.msra.mxu0 %v1237
      %1309 = vmatmul.bf16.gmra.mxu0 %v1101
      %v1310 = vpop.f32.mrf.mxu0
      %v1311 = vadd.f32 0.0, %v1310
      %v1312 = vpop.f32.mrf.mxu0
      %v1313 = vadd.f32 0.0, %v1312
      %1314 = vdwg.mxu0
      %1315 = vmatpush.bf16.msra.mxu0 %v1252
      %1316 = vmatpush.bf16.msra.mxu0 %v1251
      %1317 = vmatpush.bf16.msra.mxu0 %v1250
      %1318 = vmatpush.bf16.msra.mxu0 %v1249
      %1319 = vmatpush.bf16.msra.mxu0 %v1248
      %1320 = vmatpush.bf16.msra.mxu0 %v1247
      %1321 = vmatpush.bf16.msra.mxu0 %v1246
      %1322 = vmatpush.bf16.msra.mxu0 %v1245
      %1323 = vmatmul.bf16.gmra.mxu0 %v1102
      %v1324 = vpop.f32.mrf.mxu0
      %v1325 = vadd.f32 %v1311, %v1324
      %v1326 = vpop.f32.mrf.mxu0
      %v1327 = vadd.f32 %v1313, %v1326
      %1328 = vdwg.mxu0
      %1329 = vmatpush.bf16.msra.mxu0 %v1260
      %1330 = vmatpush.bf16.msra.mxu0 %v1259
      %1331 = vmatpush.bf16.msra.mxu0 %v1258
      %1332 = vmatpush.bf16.msra.mxu0 %v1257
      %1333 = vmatpush.bf16.msra.mxu0 %v1256
      %1334 = vmatpush.bf16.msra.mxu0 %v1255
      %1335 = vmatpush.bf16.msra.mxu0 %v1254
      %1336 = vmatpush.bf16.msra.mxu0 %v1253
      %1337 = vmatmul.bf16.gmra.mxu0 %v1103
      %v1338 = vpop.f32.mrf.mxu0
      %v1339 = vadd.f32 %v1325, %v1338
      %v1340 = vpop.f32.mrf.mxu0
      %v1341 = vadd.f32 %v1327, %v1340
      %1342 = vdwg.mxu0
      %1343 = vmatpush.bf16.msra.mxu0 %v1268
      %1344 = vmatpush.bf16.msra.mxu0 %v1267
      %1345 = vmatpush.bf16.msra.mxu0 %v1266
      %1346 = vmatpush.bf16.msra.mxu0 %v1265
      %1347 = vmatpush.bf16.msra.mxu0 %v1264
      %1348 = vmatpush.bf16.msra.mxu0 %v1263
      %1349 = vmatpush.bf16.msra.mxu0 %v1262
      %1350 = vmatpush.bf16.msra.mxu0 %v1261
      %1351 = vmatmul.bf16.gmra.mxu0 %v1104
      %v1352 = vpop.f32.mrf.mxu0
      %v1353 = vadd.f32 %v1339, %v1352
      %v1354 = vpop.f32.mrf.mxu0
      %v1355 = vadd.f32 %v1341, %v1354
      %1356 = vdwg.mxu0
      %1357 = vst [vmem:[#allocation1] ss:$4 sm:$0xff] %v986
      %s1358 = scalar_lea.vmem [#allocation1], 1
      %1359 = vst [vmem:[%s1358] ss:$4 sm:$0xff] %v993
      %s1360 = scalar_lea.vmem [#allocation1], 2
      %1361 = vst [vmem:[%s1360] ss:$4 sm:$0xff] %v1000
      %s1362 = scalar_lea.vmem [#allocation1], 3
      %1363 = vst [vmem:[%s1362] ss:$4 sm:$0xff] %v1007
      %v1364 = vld.sshfl [vmem:[#allocation1] sm:$0xff pattern:$0x73625140]
      %v1365 = vld.sshfl [vmem:[#allocation1 + $0x8] sm:$0xff pattern:$0x73625140]
      %v1366 = vld.sshfl [vmem:[#allocation1 + $0x10] sm:$0xff pattern:$0x73625140]
      %v1367 = vld.sshfl [vmem:[#allocation1 + $0x18] sm:$0xff pattern:$0x73625140]
      %v1436 = vunpack.c.l.b16 %v381
      %v1437 = vunpack.c.l.b16 %v382
      %v1438 = vunpack.c.l.b16 %v383
      %v1439 = vunpack.c.l.b16 %v384
      %v1440 = vunpack.c.l.b16 %v385
      %v1441 = vunpack.c.l.b16 %v386
      %v1442 = vunpack.c.l.b16 %v387
      %v1443 = vunpack.c.l.b16 %v388
      %v1444 = vunpack.c.l.b16 %v389
      %v1445 = vunpack.c.l.b16 %v390
      %v1446 = vunpack.c.l.b16 %v391
      %v1447 = vunpack.c.l.b16 %v392
      %v1448 = vunpack.c.l.b16 %v393
      %v1449 = vunpack.c.l.b16 %v394
      %v1450 = vunpack.c.l.b16 %v395
      %v1451 = vunpack.c.l.b16 %v396
      %v1452 = vunpack.c.l.b16 %v397
      %v1453 = vunpack.c.l.b16 %v398
      %v1454 = vunpack.c.l.b16 %v399
      %v1455 = vunpack.c.l.b16 %v400
      %v1456 = vunpack.c.l.b16 %v401
      %v1457 = vunpack.c.l.b16 %v402
      %v1458 = vunpack.c.l.b16 %v403
      %v1459 = vunpack.c.l.b16 %v404
      %v1460 = vunpack.c.l.b16 %v405
      %v1461 = vunpack.c.l.b16 %v406
      %v1462 = vunpack.c.l.b16 %v407
      %v1463 = vunpack.c.l.b16 %v408
      %v1464 = vunpack.c.l.b16 %v409
      %v1465 = vunpack.c.l.b16 %v410
      %v1466 = vunpack.c.l.b16 %v411
      %v1467 = vunpack.c.l.b16 %v412
      %v1468 = vunpack.c.l.b16 %v413
      %v1469 = vunpack.c.l.b16 %v414
      %v1470 = vunpack.c.l.b16 %v415
      %v1471 = vunpack.c.l.b16 %v416
      %v1472 = vunpack.c.l.b16 %v417
      %v1473 = vunpack.c.l.b16 %v418
      %v1474 = vunpack.c.l.b16 %v419
      %v1475 = vunpack.c.l.b16 %v420
      %v1476 = vunpack.c.l.b16 %v421
      %v1477 = vunpack.c.l.b16 %v422
      %v1478 = vunpack.c.l.b16 %v423
      %v1479 = vunpack.c.l.b16 %v424
      %v1480 = vunpack.c.l.b16 %v425
      %v1481 = vunpack.c.l.b16 %v426
      %v1482 = vunpack.c.l.b16 %v427
      %v1483 = vunpack.c.l.b16 %v428
      %v1484 = vunpack.c.l.b16 %v429
      %v1485 = vunpack.c.l.b16 %v430
      %v1486 = vunpack.c.l.b16 %v431
      %v1487 = vunpack.c.l.b16 %v432
      %v1488 = vunpack.c.l.b16 %v433
      %v1489 = vunpack.c.l.b16 %v434
      %v1490 = vunpack.c.l.b16 %v435
      %v1491 = vunpack.c.l.b16 %v436
      %v1492 = vunpack.c.l.b16 %v437
      %v1493 = vunpack.c.l.b16 %v438
      %v1494 = vunpack.c.l.b16 %v439
      %v1495 = vunpack.c.l.b16 %v440
      %v1496 = vunpack.c.l.b16 %v441
      %v1497 = vunpack.c.l.b16 %v442
      %v1498 = vunpack.c.l.b16 %v443
      %v1499 = vunpack.c.l.b16 %v444
      %v1500 = vpack.c.b16 %v1437, %v1436
      %v1501 = vpack.c.b16 %v1439, %v1438
      %v1502 = vpack.c.b16 %v1441, %v1440
      %v1503 = vpack.c.b16 %v1443, %v1442
      %v1504 = vpack.c.b16 %v1445, %v1444
      %v1505 = vpack.c.b16 %v1447, %v1446
      %v1506 = vpack.c.b16 %v1449, %v1448
      %v1507 = vpack.c.b16 %v1451, %v1450
      %v1508 = vpack.c.b16 %v1453, %v1452
      %v1509 = vpack.c.b16 %v1455, %v1454
      %v1510 = vpack.c.b16 %v1457, %v1456
      %v1511 = vpack.c.b16 %v1459, %v1458
      %v1512 = vpack.c.b16 %v1461, %v1460
      %v1513 = vpack.c.b16 %v1463, %v1462
      %v1514 = vpack.c.b16 %v1465, %v1464
      %v1515 = vpack.c.b16 %v1467, %v1466
      %v1516 = vpack.c.b16 %v1469, %v1468
      %v1517 = vpack.c.b16 %v1471, %v1470
      %v1518 = vpack.c.b16 %v1473, %v1472
      %v1519 = vpack.c.b16 %v1475, %v1474
      %v1520 = vpack.c.b16 %v1477, %v1476
      %v1521 = vpack.c.b16 %v1479, %v1478
      %v1522 = vpack.c.b16 %v1481, %v1480
      %v1523 = vpack.c.b16 %v1483, %v1482
      %v1524 = vpack.c.b16 %v1485, %v1484
      %v1525 = vpack.c.b16 %v1487, %v1486
      %v1526 = vpack.c.b16 %v1489, %v1488
      %v1527 = vpack.c.b16 %v1491, %v1490
      %v1528 = vpack.c.b16 %v1493, %v1492
      %v1529 = vpack.c.b16 %v1495, %v1494
      %v1530 = vpack.c.b16 %v1497, %v1496
      %v1531 = vpack.c.b16 %v1499, %v1498
      %1564 = vmatpush.bf16.msra.mxu0 %v1507
      %1565 = vmatpush.bf16.msra.mxu0 %v1506
      %1566 = vmatpush.bf16.msra.mxu0 %v1505
      %1567 = vmatpush.bf16.msra.mxu0 %v1504
      %1568 = vmatpush.bf16.msra.mxu0 %v1503
      %1569 = vmatpush.bf16.msra.mxu0 %v1502
      %1570 = vmatpush.bf16.msra.mxu0 %v1501
      %1571 = vmatpush.bf16.msra.mxu0 %v1500
      %1572 = vmatmul.bf16.gmra.mxu0 %v1364
      %v1573 = vpop.f32.mrf.mxu0
      %v1574 = vadd.f32 %v1353, %v1573
      %v1575 = vpop.f32.mrf.mxu0
      %v1576 = vadd.f32 %v1355, %v1575
      %1577 = vdwg.mxu0
      %1578 = vmatpush.bf16.msra.mxu0 %v1515
      %1579 = vmatpush.bf16.msra.mxu0 %v1514
      %1580 = vmatpush.bf16.msra.mxu0 %v1513
      %1581 = vmatpush.bf16.msra.mxu0 %v1512
      %1582 = vmatpush.bf16.msra.mxu0 %v1511
      %1583 = vmatpush.bf16.msra.mxu0 %v1510
      %1584 = vmatpush.bf16.msra.mxu0 %v1509
      %1585 = vmatpush.bf16.msra.mxu0 %v1508
      %1586 = vmatmul.bf16.gmra.mxu0 %v1365
      %v1587 = vpop.f32.mrf.mxu0
      %v1588 = vadd.f32 %v1574, %v1587
      %v1589 = vpop.f32.mrf.mxu0
      %v1590 = vadd.f32 %v1576, %v1589
      %1591 = vdwg.mxu0
      %1592 = vmatpush.bf16.msra.mxu0 %v1523
      %1593 = vmatpush.bf16.msra.mxu0 %v1522
      %1594 = vmatpush.bf16.msra.mxu0 %v1521
      %1595 = vmatpush.bf16.msra.mxu0 %v1520
      %1596 = vmatpush.bf16.msra.mxu0 %v1519
      %1597 = vmatpush.bf16.msra.mxu0 %v1518
      %1598 = vmatpush.bf16.msra.mxu0 %v1517
      %1599 = vmatpush.bf16.msra.mxu0 %v1516
      %1600 = vmatmul.bf16.gmra.mxu0 %v1366
      %v1601 = vpop.f32.mrf.mxu0
      %v1602 = vadd.f32 %v1588, %v1601
      %v1603 = vpop.f32.mrf.mxu0
      %v1604 = vadd.f32 %v1590, %v1603
      %1605 = vdwg.mxu0
      %1606 = vmatpush.bf16.msra.mxu0 %v1531
      %1607 = vmatpush.bf16.msra.mxu0 %v1530
      %1608 = vmatpush.bf16.msra.mxu0 %v1529
      %1609 = vmatpush.bf16.msra.mxu0 %v1528
      %1610 = vmatpush.bf16.msra.mxu0 %v1527
      %1611 = vmatpush.bf16.msra.mxu0 %v1526
      %1612 = vmatpush.bf16.msra.mxu0 %v1525
      %1613 = vmatpush.bf16.msra.mxu0 %v1524
      %1614 = vmatmul.bf16.gmra.mxu0 %v1367
      %v1615 = vpop.f32.mrf.mxu0
      %v1616 = vadd.f32 %v1602, %v1615
      %v1617 = vpop.f32.mrf.mxu0
      %v1618 = vadd.f32 %v1604, %v1617
      %1619 = vdwg.mxu0
      %vm1624 = vcmask 1040384
      %vm1625 = vcmask 1042434
      %vm1626 = vmor %vm1624, %vm1625
      %vm1627 = vcmask 1044484
      %vm1628 = vmor %vm1626, %vm1627
      %vm1629 = vcmask 1046534
      %vm1630 = vmor %vm1628, %vm1629
      %v1631 = vrot.slane %v986, 7
      %v1632 = vrot.slane %v1631, 2
      %v1633 = vrot.slane %v1015, 7
      %v1634 = vsel %vm1630, %v1632, %v1633
      %v1635 = vrot.slane %v993, 7
      %v1636 = vrot.slane %v1635, 2
      %v1637 = vrot.slane %v1020, 7
      %v1638 = vsel %vm1630, %v1636, %v1637
      %v1639 = vrot.slane %v1000, 7
      %v1640 = vrot.slane %v1639, 2
      %v1641 = vrot.slane %v1025, 7
      %v1642 = vsel %vm1630, %v1640, %v1641
      %v1643 = vrot.slane %v1007, 7
      %v1644 = vrot.slane %v1643, 2
      %v1645 = vrot.slane %v1030, 7
      %v1646 = vsel %vm1630, %v1644, %v1645
      %1648 = vst [vmem:[#allocation1] ss:$4 sm:$0xff] %v1634
      %s1650 = scalar_lea.vmem [#allocation1], 1
      %1651 = vst [vmem:[%s1650] ss:$4 sm:$0xff] %v1638
      %s1653 = scalar_lea.vmem [#allocation1], 2
      %1654 = vst [vmem:[%s1653] ss:$4 sm:$0xff] %v1642
      %s1656 = scalar_lea.vmem [#allocation1], 3
      %1657 = vst [vmem:[%s1656] ss:$4 sm:$0xff] %v1646
      %v1658 = vld.sshfl [vmem:[#allocation1] sm:$0xff pattern:$0x73625140]
      %v1659 = vld.sshfl [vmem:[#allocation1 + $0x8] sm:$0xff pattern:$0x73625140]
      %v1660 = vld.sshfl [vmem:[#allocation1 + $0x10] sm:$0xff pattern:$0x73625140]
      %v1661 = vld.sshfl [vmem:[#allocation1 + $0x18] sm:$0xff pattern:$0x73625140]
      %v1730 = vunpack.c.l.b16 %v509
      %v1731 = vunpack.c.l.b16 %v510
      %v1732 = vunpack.c.l.b16 %v511
      %v1733 = vunpack.c.l.b16 %v512
      %v1734 = vunpack.c.l.b16 %v513
      %v1735 = vunpack.c.l.b16 %v514
      %v1736 = vunpack.c.l.b16 %v515
      %v1737 = vunpack.c.l.b16 %v516
      %v1738 = vunpack.c.l.b16 %v517
      %v1739 = vunpack.c.l.b16 %v518
      %v1740 = vunpack.c.l.b16 %v519
      %v1741 = vunpack.c.l.b16 %v520
      %v1742 = vunpack.c.l.b16 %v521
      %v1743 = vunpack.c.l.b16 %v522
      %v1744 = vunpack.c.l.b16 %v523
      %v1745 = vunpack.c.l.b16 %v524
      %v1746 = vunpack.c.l.b16 %v525
      %v1747 = vunpack.c.l.b16 %v526
      %v1748 = vunpack.c.l.b16 %v527
      %v1749 = vunpack.c.l.b16 %v528
      %v1750 = vunpack.c.l.b16 %v529
      %v1751 = vunpack.c.l.b16 %v530
      %v1752 = vunpack.c.l.b16 %v531
      %v1753 = vunpack.c.l.b16 %v532
      %v1754 = vunpack.c.l.b16 %v533
      %v1755 = vunpack.c.l.b16 %v534
      %v1756 = vunpack.c.l.b16 %v535
      %v1757 = vunpack.c.l.b16 %v536
      %v1758 = vunpack.c.l.b16 %v537
      %v1759 = vunpack.c.l.b16 %v538
      %v1760 = vunpack.c.l.b16 %v539
      %v1761 = vunpack.c.l.b16 %v540
      %v1762 = vunpack.c.l.b16 %v541
      %v1763 = vunpack.c.l.b16 %v542
      %v1764 = vunpack.c.l.b16 %v543
      %v1765 = vunpack.c.l.b16 %v544
      %v1766 = vunpack.c.l.b16 %v545
      %v1767 = vunpack.c.l.b16 %v546
      %v1768 = vunpack.c.l.b16 %v547
      %v1769 = vunpack.c.l.b16 %v548
      %v1770 = vunpack.c.l.b16 %v549
      %v1771 = vunpack.c.l.b16 %v550
      %v1772 = vunpack.c.l.b16 %v551
      %v1773 = vunpack.c.l.b16 %v552
      %v1774 = vunpack.c.l.b16 %v553
      %v1775 = vunpack.c.l.b16 %v554
      %v1776 = vunpack.c.l.b16 %v555
      %v1777 = vunpack.c.l.b16 %v556
      %v1778 = vunpack.c.l.b16 %v557
      %v1779 = vunpack.c.l.b16 %v558
      %v1780 = vunpack.c.l.b16 %v559
      %v1781 = vunpack.c.l.b16 %v560
      %v1782 = vunpack.c.l.b16 %v561
      %v1783 = vunpack.c.l.b16 %v562
      %v1784 = vunpack.c.l.b16 %v563
      %v1785 = vunpack.c.l.b16 %v564
      %v1786 = vunpack.c.l.b16 %v565
      %v1787 = vunpack.c.l.b16 %v566
      %v1788 = vunpack.c.l.b16 %v567
      %v1789 = vunpack.c.l.b16 %v568
      %v1790 = vunpack.c.l.b16 %v569
      %v1791 = vunpack.c.l.b16 %v570
      %v1792 = vunpack.c.l.b16 %v571
      %v1793 = vunpack.c.l.b16 %v572
      %v1794 = vpack.c.b16 %v1731, %v1730
      %v1795 = vpack.c.b16 %v1733, %v1732
      %v1796 = vpack.c.b16 %v1735, %v1734
      %v1797 = vpack.c.b16 %v1737, %v1736
      %v1798 = vpack.c.b16 %v1739, %v1738
      %v1799 = vpack.c.b16 %v1741, %v1740
      %v1800 = vpack.c.b16 %v1743, %v1742
      %v1801 = vpack.c.b16 %v1745, %v1744
      %v1802 = vpack.c.b16 %v1747, %v1746
      %v1803 = vpack.c.b16 %v1749, %v1748
      %v1804 = vpack.c.b16 %v1751, %v1750
      %v1805 = vpack.c.b16 %v1753, %v1752
      %v1806 = vpack.c.b16 %v1755, %v1754
      %v1807 = vpack.c.b16 %v1757, %v1756
      %v1808 = vpack.c.b16 %v1759, %v1758
      %v1809 = vpack.c.b16 %v1761, %v1760
      %v1810 = vpack.c.b16 %v1763, %v1762
      %v1811 = vpack.c.b16 %v1765, %v1764
      %v1812 = vpack.c.b16 %v1767, %v1766
      %v1813 = vpack.c.b16 %v1769, %v1768
      %v1814 = vpack.c.b16 %v1771, %v1770
      %v1815 = vpack.c.b16 %v1773, %v1772
      %v1816 = vpack.c.b16 %v1775, %v1774
      %v1817 = vpack.c.b16 %v1777, %v1776
      %v1818 = vpack.c.b16 %v1779, %v1778
      %v1819 = vpack.c.b16 %v1781, %v1780
      %v1820 = vpack.c.b16 %v1783, %v1782
      %v1821 = vpack.c.b16 %v1785, %v1784
      %v1822 = vpack.c.b16 %v1787, %v1786
      %v1823 = vpack.c.b16 %v1789, %v1788
      %v1824 = vpack.c.b16 %v1791, %v1790
      %v1825 = vpack.c.b16 %v1793, %v1792
      %1858 = vmatpush.bf16.msra.mxu0 %v1801
      %1859 = vmatpush.bf16.msra.mxu0 %v1800
      %1860 = vmatpush.bf16.msra.mxu0 %v1799
      %1861 = vmatpush.bf16.msra.mxu0 %v1798
      %1862 = vmatpush.bf16.msra.mxu0 %v1797
      %1863 = vmatpush.bf16.msra.mxu0 %v1796
      %1864 = vmatpush.bf16.msra.mxu0 %v1795
      %1865 = vmatpush.bf16.msra.mxu0 %v1794
      %1866 = vmatmul.bf16.gmra.mxu0 %v1658
      %v1867 = vpop.f32.mrf.mxu0
      %v1868 = vadd.f32 0.0, %v1867
      %v1869 = vpop.f32.mrf.mxu0
      %v1870 = vadd.f32 0.0, %v1869
      %1871 = vdwg.mxu0
      %1872 = vmatpush.bf16.msra.mxu0 %v1809
      %1873 = vmatpush.bf16.msra.mxu0 %v1808
      %1874 = vmatpush.bf16.msra.mxu0 %v1807
      %1875 = vmatpush.bf16.msra.mxu0 %v1806
      %1876 = vmatpush.bf16.msra.mxu0 %v1805
      %1877 = vmatpush.bf16.msra.mxu0 %v1804
      %1878 = vmatpush.bf16.msra.mxu0 %v1803
      %1879 = vmatpush.bf16.msra.mxu0 %v1802
      %1880 = vmatmul.bf16.gmra.mxu0 %v1659
      %v1881 = vpop.f32.mrf.mxu0
      %v1882 = vadd.f32 %v1868, %v1881
      %v1883 = vpop.f32.mrf.mxu0
      %v1884 = vadd.f32 %v1870, %v1883
      %1885 = vdwg.mxu0
      %1886 = vmatpush.bf16.msra.mxu0 %v1817
      %1887 = vmatpush.bf16.msra.mxu0 %v1816
      %1888 = vmatpush.bf16.msra.mxu0 %v1815
      %1889 = vmatpush.bf16.msra.mxu0 %v1814
      %1890 = vmatpush.bf16.msra.mxu0 %v1813
      %1891 = vmatpush.bf16.msra.mxu0 %v1812
      %1892 = vmatpush.bf16.msra.mxu0 %v1811
      %1893 = vmatpush.bf16.msra.mxu0 %v1810
      %1894 = vmatmul.bf16.gmra.mxu0 %v1660
      %v1895 = vpop.f32.mrf.mxu0
      %v1896 = vadd.f32 %v1882, %v1895
      %v1897 = vpop.f32.mrf.mxu0
      %v1898 = vadd.f32 %v1884, %v1897
      %1899 = vdwg.mxu0
      %1900 = vmatpush.bf16.msra.mxu0 %v1825
      %1901 = vmatpush.bf16.msra.mxu0 %v1824
      %1902 = vmatpush.bf16.msra.mxu0 %v1823
      %1903 = vmatpush.bf16.msra.mxu0 %v1822
      %1904 = vmatpush.bf16.msra.mxu0 %v1821
      %1905 = vmatpush.bf16.msra.mxu0 %v1820
      %1906 = vmatpush.bf16.msra.mxu0 %v1819
      %1907 = vmatpush.bf16.msra.mxu0 %v1818
      %1908 = vmatmul.bf16.gmra.mxu0 %v1661
      %v1909 = vpop.f32.mrf.mxu0
      %v1910 = vadd.f32 %v1896, %v1909
      %v1911 = vpop.f32.mrf.mxu0
      %v1912 = vadd.f32 %v1898, %v1911
      %1913 = vdwg.mxu0
      %v1914 = vadd.f32 %v1616, %v1910
      %v1915 = vadd.f32 %v1618, %v1912
      %v1918 = vrot.slane %v377, 2
      %v1919 = vrot.slane %v378, 4
      %v1920 = vrot.slane %v378, 6
      %v1923 = vsel %vm977, %v377, %v1918
      %v1926 = vsel %vm981, %v1919, %v1920
      %v1927 = vsel %vm985, %v1923, %v1926
      %1928 = vst [vmem:[#allocation1] ss:$4 sm:$0xff] %v993
      %s1929 = scalar_lea.vmem [#allocation1], 1
      %1930 = vst [vmem:[%s1929] ss:$4 sm:$0xff] %v1000
      %s1931 = scalar_lea.vmem [#allocation1], 2
      %1932 = vst [vmem:[%s1931] ss:$4 sm:$0xff] %v1007
      %s1933 = scalar_lea.vmem [#allocation1], 3
      %1934 = vst [vmem:[%s1933] ss:$4 sm:$0xff] %v1927
      %v1935 = vld.sshfl [vmem:[#allocation1] sm:$0xff pattern:$0x73625140]
      %v1936 = vld.sshfl [vmem:[#allocation1 + $0x8] sm:$0xff pattern:$0x73625140]
      %v1937 = vld.sshfl [vmem:[#allocation1 + $0x10] sm:$0xff pattern:$0x73625140]
      %v1938 = vld.sshfl [vmem:[#allocation1 + $0x18] sm:$0xff pattern:$0x73625140]
      %v2007 = vunpack.c.l.b16 %v573
      %v2008 = vunpack.c.l.b16 %v574
      %v2009 = vunpack.c.l.b16 %v575
      %v2010 = vunpack.c.l.b16 %v576
      %v2011 = vunpack.c.l.b16 %v577
      %v2012 = vunpack.c.l.b16 %v578
      %v2013 = vunpack.c.l.b16 %v579
      %v2014 = vunpack.c.l.b16 %v580
      %v2015 = vunpack.c.l.b16 %v581
      %v2016 = vunpack.c.l.b16 %v582
      %v2017 = vunpack.c.l.b16 %v583
      %v2018 = vunpack.c.l.b16 %v584
      %v2019 = vunpack.c.l.b16 %v585
      %v2020 = vunpack.c.l.b16 %v586
      %v2021 = vunpack.c.l.b16 %v587
      %v2022 = vunpack.c.l.b16 %v588
      %v2023 = vunpack.c.l.b16 %v589
      %v2024 = vunpack.c.l.b16 %v590
      %v2025 = vunpack.c.l.b16 %v591
      %v2026 = vunpack.c.l.b16 %v592
      %v2027 = vunpack.c.l.b16 %v593
      %v2028 = vunpack.c.l.b16 %v594
      %v2029 = vunpack.c.l.b16 %v595
      %v2030 = vunpack.c.l.b16 %v596
      %v2031 = vunpack.c.l.b16 %v597
      %v2032 = vunpack.c.l.b16 %v598
      %v2033 = vunpack.c.l.b16 %v599
      %v2034 = vunpack.c.l.b16 %v600
      %v2035 = vunpack.c.l.b16 %v601
      %v2036 = vunpack.c.l.b16 %v602
      %v2037 = vunpack.c.l.b16 %v603
      %v2038 = vunpack.c.l.b16 %v604
      %v2039 = vunpack.c.l.b16 %v605
      %v2040 = vunpack.c.l.b16 %v606
      %v2041 = vunpack.c.l.b16 %v607
      %v2042 = vunpack.c.l.b16 %v608
      %v2043 = vunpack.c.l.b16 %v609
      %v2044 = vunpack.c.l.b16 %v610
      %v2045 = vunpack.c.l.b16 %v611
      %v2046 = vunpack.c.l.b16 %v612
      %v2047 = vunpack.c.l.b16 %v613
      %v2048 = vunpack.c.l.b16 %v614
      %v2049 = vunpack.c.l.b16 %v615
      %v2050 = vunpack.c.l.b16 %v616
      %v2051 = vunpack.c.l.b16 %v617
      %v2052 = vunpack.c.l.b16 %v618
      %v2053 = vunpack.c.l.b16 %v619
      %v2054 = vunpack.c.l.b16 %v620
      %v2055 = vunpack.c.l.b16 %v621
      %v2056 = vunpack.c.l.b16 %v622
      %v2057 = vunpack.c.l.b16 %v623
      %v2058 = vunpack.c.l.b16 %v624
      %v2059 = vunpack.c.l.b16 %v625
      %v2060 = vunpack.c.l.b16 %v626
      %v2061 = vunpack.c.l.b16 %v627
      %v2062 = vunpack.c.l.b16 %v628
      %v2063 = vunpack.c.l.b16 %v629
      %v2064 = vunpack.c.l.b16 %v630
      %v2065 = vunpack.c.l.b16 %v631
      %v2066 = vunpack.c.l.b16 %v632
      %v2067 = vunpack.c.l.b16 %v633
      %v2068 = vunpack.c.l.b16 %v634
      %v2069 = vunpack.c.l.b16 %v635
      %v2070 = vunpack.c.l.b16 %v636
      %v2071 = vpack.c.b16 %v2008, %v2007
      %v2072 = vpack.c.b16 %v2010, %v2009
      %v2073 = vpack.c.b16 %v2012, %v2011
      %v2074 = vpack.c.b16 %v2014, %v2013
      %v2075 = vpack.c.b16 %v2016, %v2015
      %v2076 = vpack.c.b16 %v2018, %v2017
      %v2077 = vpack.c.b16 %v2020, %v2019
      %v2078 = vpack.c.b16 %v2022, %v2021
      %v2079 = vpack.c.b16 %v2024, %v2023
      %v2080 = vpack.c.b16 %v2026, %v2025
      %v2081 = vpack.c.b16 %v2028, %v2027
      %v2082 = vpack.c.b16 %v2030, %v2029
      %v2083 = vpack.c.b16 %v2032, %v2031
      %v2084 = vpack.c.b16 %v2034, %v2033
      %v2085 = vpack.c.b16 %v2036, %v2035
      %v2086 = vpack.c.b16 %v2038, %v2037
      %v2087 = vpack.c.b16 %v2040, %v2039
      %v2088 = vpack.c.b16 %v2042, %v2041
      %v2089 = vpack.c.b16 %v2044, %v2043
      %v2090 = vpack.c.b16 %v2046, %v2045
      %v2091 = vpack.c.b16 %v2048, %v2047
      %v2092 = vpack.c.b16 %v2050, %v2049
      %v2093 = vpack.c.b16 %v2052, %v2051
      %v2094 = vpack.c.b16 %v2054, %v2053
      %v2095 = vpack.c.b16 %v2056, %v2055
      %v2096 = vpack.c.b16 %v2058, %v2057
      %v2097 = vpack.c.b16 %v2060, %v2059
      %v2098 = vpack.c.b16 %v2062, %v2061
      %v2099 = vpack.c.b16 %v2064, %v2063
      %v2100 = vpack.c.b16 %v2066, %v2065
      %v2101 = vpack.c.b16 %v2068, %v2067
      %v2102 = vpack.c.b16 %v2070, %v2069
      %2135 = vmatpush.bf16.msra.mxu0 %v2078
      %2136 = vmatpush.bf16.msra.mxu0 %v2077
      %2137 = vmatpush.bf16.msra.mxu0 %v2076
      %2138 = vmatpush.bf16.msra.mxu0 %v2075
      %2139 = vmatpush.bf16.msra.mxu0 %v2074
      %2140 = vmatpush.bf16.msra.mxu0 %v2073
      %2141 = vmatpush.bf16.msra.mxu0 %v2072
      %2142 = vmatpush.bf16.msra.mxu0 %v2071
      %2143 = vmatmul.bf16.gmra.mxu0 %v1935
      %v2144 = vpop.f32.mrf.mxu0
      %v2145 = vadd.f32 0.0, %v2144
      %v2146 = vpop.f32.mrf.mxu0
      %v2147 = vadd.f32 0.0, %v2146
      %2148 = vdwg.mxu0
      %2149 = vmatpush.bf16.msra.mxu0 %v2086
      %2150 = vmatpush.bf16.msra.mxu0 %v2085
      %2151 = vmatpush.bf16.msra.mxu0 %v2084
      %2152 = vmatpush.bf16.msra.mxu0 %v2083
      %2153 = vmatpush.bf16.msra.mxu0 %v2082
      %2154 = vmatpush.bf16.msra.mxu0 %v2081
      %2155 = vmatpush.bf16.msra.mxu0 %v2080
      %2156 = vmatpush.bf16.msra.mxu0 %v2079
      %2157 = vmatmul.bf16.gmra.mxu0 %v1936
      %v2158 = vpop.f32.mrf.mxu0
      %v2159 = vadd.f32 %v2145, %v2158
      %v2160 = vpop.f32.mrf.mxu0
      %v2161 = vadd.f32 %v2147, %v2160
      %2162 = vdwg.mxu0
      %2163 = vmatpush.bf16.msra.mxu0 %v2094
      %2164 = vmatpush.bf16.msra.mxu0 %v2093
      %2165 = vmatpush.bf16.msra.mxu0 %v2092
      %2166 = vmatpush.bf16.msra.mxu0 %v2091
      %2167 = vmatpush.bf16.msra.mxu0 %v2090
      %2168 = vmatpush.bf16.msra.mxu0 %v2089
      %2169 = vmatpush.bf16.msra.mxu0 %v2088
      %2170 = vmatpush.bf16.msra.mxu0 %v2087
      %2171 = vmatmul.bf16.gmra.mxu0 %v1937
      %v2172 = vpop.f32.mrf.mxu0
      %v2173 = vadd.f32 %v2159, %v2172
      %v2174 = vpop.f32.mrf.mxu0
      %v2175 = vadd.f32 %v2161, %v2174
      %2176 = vdwg.mxu0
      %2177 = vmatpush.bf16.msra.mxu0 %v2102
      %2178 = vmatpush.bf16.msra.mxu0 %v2101
      %2179 = vmatpush.bf16.msra.mxu0 %v2100
      %2180 = vmatpush.bf16.msra.mxu0 %v2099
      %2181 = vmatpush.bf16.msra.mxu0 %v2098
      %2182 = vmatpush.bf16.msra.mxu0 %v2097
      %2183 = vmatpush.bf16.msra.mxu0 %v2096
      %2184 = vmatpush.bf16.msra.mxu0 %v2095
      %2185 = vmatmul.bf16.gmra.mxu0 %v1938
      %v2186 = vpop.f32.mrf.mxu0
      %v2187 = vadd.f32 %v2173, %v2186
      %v2188 = vpop.f32.mrf.mxu0
      %v2189 = vadd.f32 %v2175, %v2188
      %2190 = vdwg.mxu0
      %v2191 = vadd.f32 %v1914, %v2187
      %v2192 = vadd.f32 %v1915, %v2189
      %v2193 = vsel %vm1008, %v377, %v1918
      %v2194 = vsel %vm1010, %v1920, %v1919
      %v2195 = vsel %vm1012, %v2193, %v2194
      %v2197 = vrot.slane %v2195, 2
      %v2198 = vshrl.u32 %v1927, 16
      %v2200 = vrot.slane %v2198, 6
      %v2201 = vshll.u32 %v1927, 16
      %v2203 = vrot.slane %v2201, 7
      %v2204 = vor.u32 %v2200, %v2203
      %v2205 = vrot.slane %v2204, 2
      %v2207 = vshll.u32 %v2197, 16
      %v2209 = vrot.slane %v2207, 7
      %v2210 = vsel %vm1037, %v2205, %v2209
      %2211 = vst [vmem:[#allocation1] ss:$4 sm:$0xff] %v1063
      %s2212 = scalar_lea.vmem [#allocation1], 1
      %2213 = vst [vmem:[%s2212] ss:$4 sm:$0xff] %v1076
      %s2214 = scalar_lea.vmem [#allocation1], 2
      %2215 = vst [vmem:[%s2214] ss:$4 sm:$0xff] %v1089
      %s2217 = scalar_lea.vmem [#allocation1], 3
      %2218 = vst [vmem:[%s2217] ss:$4 sm:$0xff] %v2210
      %v2219 = vld.sshfl [vmem:[#allocation1] sm:$0xff pattern:$0x73625140]
      %v2220 = vld.sshfl [vmem:[#allocation1 + $0x8] sm:$0xff pattern:$0x73625140]
      %v2221 = vld.sshfl [vmem:[#allocation1 + $0x10] sm:$0xff pattern:$0x73625140]
      %v2222 = vld.sshfl [vmem:[#allocation1 + $0x18] sm:$0xff pattern:$0x73625140]
      %v2291 = vunpack.c.l.b16 %v637
      %v2292 = vunpack.c.l.b16 %v638
      %v2293 = vunpack.c.l.b16 %v639
      %v2294 = vunpack.c.l.b16 %v640
      %v2295 = vunpack.c.l.b16 %v641
      %v2296 = vunpack.c.l.b16 %v642
      %v2297 = vunpack.c.l.b16 %v643
      %v2298 = vunpack.c.l.b16 %v644
      %v2299 = vunpack.c.l.b16 %v645
      %v2300 = vunpack.c.l.b16 %v646
      %v2301 = vunpack.c.l.b16 %v647
      %v2302 = vunpack.c.l.b16 %v648
      %v2303 = vunpack.c.l.b16 %v649
      %v2304 = vunpack.c.l.b16 %v650
      %v2305 = vunpack.c.l.b16 %v651
      %v2306 = vunpack.c.l.b16 %v652
      %v2307 = vunpack.c.l.b16 %v653
      %v2308 = vunpack.c.l.b16 %v654
      %v2309 = vunpack.c.l.b16 %v655
      %v2310 = vunpack.c.l.b16 %v656
      %v2311 = vunpack.c.l.b16 %v657
      %v2312 = vunpack.c.l.b16 %v658
      %v2313 = vunpack.c.l.b16 %v659
      %v2314 = vunpack.c.l.b16 %v660
      %v2315 = vunpack.c.l.b16 %v661
      %v2316 = vunpack.c.l.b16 %v662
      %v2317 = vunpack.c.l.b16 %v663
      %v2318 = vunpack.c.l.b16 %v664
      %v2319 = vunpack.c.l.b16 %v665
      %v2320 = vunpack.c.l.b16 %v666
      %v2321 = vunpack.c.l.b16 %v667
      %v2322 = vunpack.c.l.b16 %v668
      %v2323 = vunpack.c.l.b16 %v669
      %v2324 = vunpack.c.l.b16 %v670
      %v2325 = vunpack.c.l.b16 %v671
      %v2326 = vunpack.c.l.b16 %v672
      %v2327 = vunpack.c.l.b16 %v673
      %v2328 = vunpack.c.l.b16 %v674
      %v2329 = vunpack.c.l.b16 %v675
      %v2330 = vunpack.c.l.b16 %v676
      %v2331 = vunpack.c.l.b16 %v677
      %v2332 = vunpack.c.l.b16 %v678
      %v2333 = vunpack.c.l.b16 %v679
      %v2334 = vunpack.c.l.b16 %v680
      %v2335 = vunpack.c.l.b16 %v681
      %v2336 = vunpack.c.l.b16 %v682
      %v2337 = vunpack.c.l.b16 %v683
      %v2338 = vunpack.c.l.b16 %v684
      %v2339 = vunpack.c.l.b16 %v685
      %v2340 = vunpack.c.l.b16 %v686
      %v2341 = vunpack.c.l.b16 %v687
      %v2342 = vunpack.c.l.b16 %v688
      %v2343 = vunpack.c.l.b16 %v689
      %v2344 = vunpack.c.l.b16 %v690
      %v2345 = vunpack.c.l.b16 %v691
      %v2346 = vunpack.c.l.b16 %v692
      %v2347 = vunpack.c.l.b16 %v693
      %v2348 = vunpack.c.l.b16 %v694
      %v2349 = vunpack.c.l.b16 %v695
      %v2350 = vunpack.c.l.b16 %v696
      %v2351 = vunpack.c.l.b16 %v697
      %v2352 = vunpack.c.l.b16 %v698
      %v2353 = vunpack.c.l.b16 %v699
      %v2354 = vunpack.c.l.b16 %v700
      %v2355 = vpack.c.b16 %v2292, %v2291
      %v2356 = vpack.c.b16 %v2294, %v2293
      %v2357 = vpack.c.b16 %v2296, %v2295
      %v2358 = vpack.c.b16 %v2298, %v2297
      %v2359 = vpack.c.b16 %v2300, %v2299
      %v2360 = vpack.c.b16 %v2302, %v2301
      %v2361 = vpack.c.b16 %v2304, %v2303
      %v2362 = vpack.c.b16 %v2306, %v2305
      %v2363 = vpack.c.b16 %v2308, %v2307
      %v2364 = vpack.c.b16 %v2310, %v2309
      %v2365 = vpack.c.b16 %v2312, %v2311
      %v2366 = vpack.c.b16 %v2314, %v2313
      %v2367 = vpack.c.b16 %v2316, %v2315
      %v2368 = vpack.c.b16 %v2318, %v2317
      %v2369 = vpack.c.b16 %v2320, %v2319
      %v2370 = vpack.c.b16 %v2322, %v2321
      %v2371 = vpack.c.b16 %v2324, %v2323
      %v2372 = vpack.c.b16 %v2326, %v2325
      %v2373 = vpack.c.b16 %v2328, %v2327
      %v2374 = vpack.c.b16 %v2330, %v2329
      %v2375 = vpack.c.b16 %v2332, %v2331
      %v2376 = vpack.c.b16 %v2334, %v2333
      %v2377 = vpack.c.b16 %v2336, %v2335
      %v2378 = vpack.c.b16 %v2338, %v2337
      %v2379 = vpack.c.b16 %v2340, %v2339
      %v2380 = vpack.c.b16 %v2342, %v2341
      %v2381 = vpack.c.b16 %v2344, %v2343
      %v2382 = vpack.c.b16 %v2346, %v2345
      %v2383 = vpack.c.b16 %v2348, %v2347
      %v2384 = vpack.c.b16 %v2350, %v2349
      %v2385 = vpack.c.b16 %v2352, %v2351
      %v2386 = vpack.c.b16 %v2354, %v2353
      %2419 = vmatpush.bf16.msra.mxu0 %v2362
      %2420 = vmatpush.bf16.msra.mxu0 %v2361
      %2421 = vmatpush.bf16.msra.mxu0 %v2360
      %2422 = vmatpush.bf16.msra.mxu0 %v2359
      %2423 = vmatpush.bf16.msra.mxu0 %v2358
      %2424 = vmatpush.bf16.msra.mxu0 %v2357
      %2425 = vmatpush.bf16.msra.mxu0 %v2356
      %2426 = vmatpush.bf16.msra.mxu0 %v2355
      %2427 = vmatmul.bf16.gmra.mxu0 %v2219
      %v2428 = vpop.f32.mrf.mxu0
      %v2429 = vadd.f32 0.0, %v2428
      %v2430 = vpop.f32.mrf.mxu0
      %v2431 = vadd.f32 0.0, %v2430
      %2432 = vdwg.mxu0
      %2433 = vmatpush.bf16.msra.mxu0 %v2370
      %2434 = vmatpush.bf16.msra.mxu0 %v2369
      %2435 = vmatpush.bf16.msra.mxu0 %v2368
      %2436 = vmatpush.bf16.msra.mxu0 %v2367
      %2437 = vmatpush.bf16.msra.mxu0 %v2366
      %2438 = vmatpush.bf16.msra.mxu0 %v2365
      %2439 = vmatpush.bf16.msra.mxu0 %v2364
      %2440 = vmatpush.bf16.msra.mxu0 %v2363
      %2441 = vmatmul.bf16.gmra.mxu0 %v2220
      %v2442 = vpop.f32.mrf.mxu0
      %v2443 = vadd.f32 %v2429, %v2442
      %v2444 = vpop.f32.mrf.mxu0
      %v2445 = vadd.f32 %v2431, %v2444
      %2446 = vdwg.mxu0
      %2447 = vmatpush.bf16.msra.mxu0 %v2378
      %2448 = vmatpush.bf16.msra.mxu0 %v2377
      %2449 = vmatpush.bf16.msra.mxu0 %v2376
      %2450 = vmatpush.bf16.msra.mxu0 %v2375
      %2451 = vmatpush.bf16.msra.mxu0 %v2374
      %2452 = vmatpush.bf16.msra.mxu0 %v2373
      %2453 = vmatpush.bf16.msra.mxu0 %v2372
      %2454 = vmatpush.bf16.msra.mxu0 %v2371
      %2455 = vmatmul.bf16.gmra.mxu0 %v2221
      %v2456 = vpop.f32.mrf.mxu0
      %v2457 = vadd.f32 %v2443, %v2456
      %v2458 = vpop.f32.mrf.mxu0
      %v2459 = vadd.f32 %v2445, %v2458
      %2460 = vdwg.mxu0
      %2461 = vmatpush.bf16.msra.mxu0 %v2386
      %2462 = vmatpush.bf16.msra.mxu0 %v2385
      %2463 = vmatpush.bf16.msra.mxu0 %v2384
      %2464 = vmatpush.bf16.msra.mxu0 %v2383
      %2465 = vmatpush.bf16.msra.mxu0 %v2382
      %2466 = vmatpush.bf16.msra.mxu0 %v2381
      %2467 = vmatpush.bf16.msra.mxu0 %v2380
      %2468 = vmatpush.bf16.msra.mxu0 %v2379
      %2469 = vmatmul.bf16.gmra.mxu0 %v2222
      %v2470 = vpop.f32.mrf.mxu0
      %v2471 = vadd.f32 %v2457, %v2470
      %v2472 = vpop.f32.mrf.mxu0
      %v2473 = vadd.f32 %v2459, %v2472
      %2474 = vdwg.mxu0
      %v2475 = vadd.f32 %v2191, %v2471
      %v2476 = vadd.f32 %v2192, %v2473
      %v2478 = vrot.slane %v1927, 7
      %v2479 = vrot.slane %v2478, 2
      %v2480 = vrot.slane %v2197, 7
      %v2481 = vsel %vm1630, %v2479, %v2480
      %2482 = vst [vmem:[#allocation1] ss:$4 sm:$0xff] %v1638
      %s2483 = scalar_lea.vmem [#allocation1], 1
      %2484 = vst [vmem:[%s2483] ss:$4 sm:$0xff] %v1642
      %s2485 = scalar_lea.vmem [#allocation1], 2
      %2486 = vst [vmem:[%s2485] ss:$4 sm:$0xff] %v1646
      %s2488 = scalar_lea.vmem [#allocation1], 3
      %2489 = vst [vmem:[%s2488] ss:$4 sm:$0xff] %v2481
      %v2490 = vld.sshfl [vmem:[#allocation1] sm:$0xff pattern:$0x73625140]
      %v2491 = vld.sshfl [vmem:[#allocation1 + $0x8] sm:$0xff pattern:$0x73625140]
      %v2492 = vld.sshfl [vmem:[#allocation1 + $0x10] sm:$0xff pattern:$0x73625140]
      %v2493 = vld.sshfl [vmem:[#allocation1 + $0x18] sm:$0xff pattern:$0x73625140]
      %v2562 = vunpack.c.l.b16 %v701
      %v2563 = vunpack.c.l.b16 %v702
      %v2564 = vunpack.c.l.b16 %v703
      %v2565 = vunpack.c.l.b16 %v704
      %v2566 = vunpack.c.l.b16 %v705
      %v2567 = vunpack.c.l.b16 %v706
      %v2568 = vunpack.c.l.b16 %v707
      %v2569 = vunpack.c.l.b16 %v708
      %v2570 = vunpack.c.l.b16 %v709
      %v2571 = vunpack.c.l.b16 %v710
      %v2572 = vunpack.c.l.b16 %v711
      %v2573 = vunpack.c.l.b16 %v712
      %v2574 = vunpack.c.l.b16 %v713
      %v2575 = vunpack.c.l.b16 %v714
      %v2576 = vunpack.c.l.b16 %v715
      %v2577 = vunpack.c.l.b16 %v716
      %v2578 = vunpack.c.l.b16 %v717
      %v2579 = vunpack.c.l.b16 %v718
      %v2580 = vunpack.c.l.b16 %v719
      %v2581 = vunpack.c.l.b16 %v720
      %v2582 = vunpack.c.l.b16 %v721
      %v2583 = vunpack.c.l.b16 %v722
      %v2584 = vunpack.c.l.b16 %v723
      %v2585 = vunpack.c.l.b16 %v724
      %v2586 = vunpack.c.l.b16 %v725
      %v2587 = vunpack.c.l.b16 %v726
      %v2588 = vunpack.c.l.b16 %v727
      %v2589 = vunpack.c.l.b16 %v728
      %v2590 = vunpack.c.l.b16 %v729
      %v2591 = vunpack.c.l.b16 %v730
      %v2592 = vunpack.c.l.b16 %v731
      %v2593 = vunpack.c.l.b16 %v732
      %v2594 = vunpack.c.l.b16 %v733
      %v2595 = vunpack.c.l.b16 %v734
      %v2596 = vunpack.c.l.b16 %v735
      %v2597 = vunpack.c.l.b16 %v736
      %v2598 = vunpack.c.l.b16 %v737
      %v2599 = vunpack.c.l.b16 %v738
      %v2600 = vunpack.c.l.b16 %v739
      %v2601 = vunpack.c.l.b16 %v740
      %v2602 = vunpack.c.l.b16 %v741
      %v2603 = vunpack.c.l.b16 %v742
      %v2604 = vunpack.c.l.b16 %v743
      %v2605 = vunpack.c.l.b16 %v744
      %v2606 = vunpack.c.l.b16 %v745
      %v2607 = vunpack.c.l.b16 %v746
      %v2608 = vunpack.c.l.b16 %v747
      %v2609 = vunpack.c.l.b16 %v748
      %v2610 = vunpack.c.l.b16 %v749
      %v2611 = vunpack.c.l.b16 %v750
      %v2612 = vunpack.c.l.b16 %v751
      %v2613 = vunpack.c.l.b16 %v752
      %v2614 = vunpack.c.l.b16 %v753
      %v2615 = vunpack.c.l.b16 %v754
      %v2616 = vunpack.c.l.b16 %v755
      %v2617 = vunpack.c.l.b16 %v756
      %v2618 = vunpack.c.l.b16 %v757
      %v2619 = vunpack.c.l.b16 %v758
      %v2620 = vunpack.c.l.b16 %v759
      %v2621 = vunpack.c.l.b16 %v760
      %v2622 = vunpack.c.l.b16 %v761
      %v2623 = vunpack.c.l.b16 %v762
      %v2624 = vunpack.c.l.b16 %v763
      %v2625 = vunpack.c.l.b16 %v764
      %v2626 = vpack.c.b16 %v2563, %v2562
      %v2627 = vpack.c.b16 %v2565, %v2564
      %v2628 = vpack.c.b16 %v2567, %v2566
      %v2629 = vpack.c.b16 %v2569, %v2568
      %v2630 = vpack.c.b16 %v2571, %v2570
      %v2631 = vpack.c.b16 %v2573, %v2572
      %v2632 = vpack.c.b16 %v2575, %v2574
      %v2633 = vpack.c.b16 %v2577, %v2576
      %v2634 = vpack.c.b16 %v2579, %v2578
      %v2635 = vpack.c.b16 %v2581, %v2580
      %v2636 = vpack.c.b16 %v2583, %v2582
      %v2637 = vpack.c.b16 %v2585, %v2584
      %v2638 = vpack.c.b16 %v2587, %v2586
      %v2639 = vpack.c.b16 %v2589, %v2588
      %v2640 = vpack.c.b16 %v2591, %v2590
      %v2641 = vpack.c.b16 %v2593, %v2592
      %v2642 = vpack.c.b16 %v2595, %v2594
      %v2643 = vpack.c.b16 %v2597, %v2596
      %v2644 = vpack.c.b16 %v2599, %v2598
      %v2645 = vpack.c.b16 %v2601, %v2600
      %v2646 = vpack.c.b16 %v2603, %v2602
      %v2647 = vpack.c.b16 %v2605, %v2604
      %v2648 = vpack.c.b16 %v2607, %v2606
      %v2649 = vpack.c.b16 %v2609, %v2608
      %v2650 = vpack.c.b16 %v2611, %v2610
      %v2651 = vpack.c.b16 %v2613, %v2612
      %v2652 = vpack.c.b16 %v2615, %v2614
      %v2653 = vpack.c.b16 %v2617, %v2616
      %v2654 = vpack.c.b16 %v2619, %v2618
      %v2655 = vpack.c.b16 %v2621, %v2620
      %v2656 = vpack.c.b16 %v2623, %v2622
      %v2657 = vpack.c.b16 %v2625, %v2624
      %2690 = vmatpush.bf16.msra.mxu0 %v2633
      %2691 = vmatpush.bf16.msra.mxu0 %v2632
      %2692 = vmatpush.bf16.msra.mxu0 %v2631
      %2693 = vmatpush.bf16.msra.mxu0 %v2630
      %2694 = vmatpush.bf16.msra.mxu0 %v2629
      %2695 = vmatpush.bf16.msra.mxu0 %v2628
      %2696 = vmatpush.bf16.msra.mxu0 %v2627
      %2697 = vmatpush.bf16.msra.mxu0 %v2626
      %2698 = vmatmul.bf16.gmra.mxu0 %v2490
      %v2699 = vpop.f32.mrf.mxu0
      %v2700 = vadd.f32 0.0, %v2699
      %v2701 = vpop.f32.mrf.mxu0
      %v2702 = vadd.f32 0.0, %v2701
      %2703 = vdwg.mxu0
      %2704 = vmatpush.bf16.msra.mxu0 %v2641
      %2705 = vmatpush.bf16.msra.mxu0 %v2640
      %2706 = vmatpush.bf16.msra.mxu0 %v2639
      %2707 = vmatpush.bf16.msra.mxu0 %v2638
      %2708 = vmatpush.bf16.msra.mxu0 %v2637
      %2709 = vmatpush.bf16.msra.mxu0 %v2636
      %2710 = vmatpush.bf16.msra.mxu0 %v2635
      %2711 = vmatpush.bf16.msra.mxu0 %v2634
      %2712 = vmatmul.bf16.gmra.mxu0 %v2491
      %v2713 = vpop.f32.mrf.mxu0
      %v2714 = vadd.f32 %v2700, %v2713
      %v2715 = vpop.f32.mrf.mxu0
      %v2716 = vadd.f32 %v2702, %v2715
      %2717 = vdwg.mxu0
      %2718 = vmatpush.bf16.msra.mxu0 %v2649
      %2719 = vmatpush.bf16.msra.mxu0 %v2648
      %2720 = vmatpush.bf16.msra.mxu0 %v2647
      %2721 = vmatpush.bf16.msra.mxu0 %v2646
      %2722 = vmatpush.bf16.msra.mxu0 %v2645
      %2723 = vmatpush.bf16.msra.mxu0 %v2644
      %2724 = vmatpush.bf16.msra.mxu0 %v2643
      %2725 = vmatpush.bf16.msra.mxu0 %v2642
      %2726 = vmatmul.bf16.gmra.mxu0 %v2492
      %v2727 = vpop.f32.mrf.mxu0
      %v2728 = vadd.f32 %v2714, %v2727
      %v2729 = vpop.f32.mrf.mxu0
      %v2730 = vadd.f32 %v2716, %v2729
      %2731 = vdwg.mxu0
      %2732 = vmatpush.bf16.msra.mxu0 %v2657
      %2733 = vmatpush.bf16.msra.mxu0 %v2656
      %2734 = vmatpush.bf16.msra.mxu0 %v2655
      %2735 = vmatpush.bf16.msra.mxu0 %v2654
      %2736 = vmatpush.bf16.msra.mxu0 %v2653
      %2737 = vmatpush.bf16.msra.mxu0 %v2652
      %2738 = vmatpush.bf16.msra.mxu0 %v2651
      %2739 = vmatpush.bf16.msra.mxu0 %v2650
      %2740 = vmatmul.bf16.gmra.mxu0 %v2493
      %v2741 = vpop.f32.mrf.mxu0
      %v2742 = vadd.f32 %v2728, %v2741
      %v2743 = vpop.f32.mrf.mxu0
      %v2744 = vadd.f32 %v2730, %v2743
      %2745 = vdwg.mxu0
      %v2746 = vadd.f32 %v2475, %v2742
      %v2747 = vadd.f32 %v2476, %v2744
      %v2750 = vrot.slane %v379, 2
      %v2751 = vrot.slane %v380, 4
      %v2752 = vrot.slane %v380, 6
      %v2755 = vsel %vm977, %v379, %v2750
      %v2758 = vsel %vm981, %v2751, %v2752
      %v2759 = vsel %vm985, %v2755, %v2758
      %2760 = vst [vmem:[#allocation1] ss:$4 sm:$0xff] %v1000
      %s2761 = scalar_lea.vmem [#allocation1], 1
      %2762 = vst [vmem:[%s2761] ss:$4 sm:$0xff] %v1007
      %s2763 = scalar_lea.vmem [#allocation1], 2
      %2764 = vst [vmem:[%s2763] ss:$4 sm:$0xff] %v1927
      %s2765 = scalar_lea.vmem [#allocation1], 3
      %2766 = vst [vmem:[%s2765] ss:$4 sm:$0xff] %v2759
      %v2767 = vld.sshfl [vmem:[#allocation1] sm:$0xff pattern:$0x73625140]
      %v2768 = vld.sshfl [vmem:[#allocation1 + $0x8] sm:$0xff pattern:$0x73625140]
      %v2769 = vld.sshfl [vmem:[#allocation1 + $0x10] sm:$0xff pattern:$0x73625140]
      %v2770 = vld.sshfl [vmem:[#allocation1 + $0x18] sm:$0xff pattern:$0x73625140]
      %v2839 = vunpack.c.l.b16 %v765
      %v2840 = vunpack.c.l.b16 %v766
      %v2841 = vunpack.c.l.b16 %v767
      %v2842 = vunpack.c.l.b16 %v768
      %v2843 = vunpack.c.l.b16 %v769
      %v2844 = vunpack.c.l.b16 %v770
      %v2845 = vunpack.c.l.b16 %v771
      %v2846 = vunpack.c.l.b16 %v772
      %v2847 = vunpack.c.l.b16 %v773
      %v2848 = vunpack.c.l.b16 %v774
      %v2849 = vunpack.c.l.b16 %v775
      %v2850 = vunpack.c.l.b16 %v776
      %v2851 = vunpack.c.l.b16 %v777
      %v2852 = vunpack.c.l.b16 %v778
      %v2853 = vunpack.c.l.b16 %v779
      %v2854 = vunpack.c.l.b16 %v780
      %v2855 = vunpack.c.l.b16 %v781
      %v2856 = vunpack.c.l.b16 %v782
      %v2857 = vunpack.c.l.b16 %v783
      %v2858 = vunpack.c.l.b16 %v784
      %v2859 = vunpack.c.l.b16 %v785
      %v2860 = vunpack.c.l.b16 %v786
      %v2861 = vunpack.c.l.b16 %v787
      %v2862 = vunpack.c.l.b16 %v788
      %v2863 = vunpack.c.l.b16 %v789
      %v2864 = vunpack.c.l.b16 %v790
      %v2865 = vunpack.c.l.b16 %v791
      %v2866 = vunpack.c.l.b16 %v792
      %v2867 = vunpack.c.l.b16 %v793
      %v2868 = vunpack.c.l.b16 %v794
      %v2869 = vunpack.c.l.b16 %v795
      %v2870 = vunpack.c.l.b16 %v796
      %v2871 = vunpack.c.l.b16 %v797
      %v2872 = vunpack.c.l.b16 %v798
      %v2873 = vunpack.c.l.b16 %v799
      %v2874 = vunpack.c.l.b16 %v800
      %v2875 = vunpack.c.l.b16 %v801
      %v2876 = vunpack.c.l.b16 %v802
      %v2877 = vunpack.c.l.b16 %v803
      %v2878 = vunpack.c.l.b16 %v804
      %v2879 = vunpack.c.l.b16 %v805
      %v2880 = vunpack.c.l.b16 %v806
      %v2881 = vunpack.c.l.b16 %v807
      %v2882 = vunpack.c.l.b16 %v808
      %v2883 = vunpack.c.l.b16 %v809
      %v2884 = vunpack.c.l.b16 %v810
      %v2885 = vunpack.c.l.b16 %v811
      %v2886 = vunpack.c.l.b16 %v812
      %v2887 = vunpack.c.l.b16 %v813
      %v2888 = vunpack.c.l.b16 %v814
      %v2889 = vunpack.c.l.b16 %v815
      %v2890 = vunpack.c.l.b16 %v816
      %v2891 = vunpack.c.l.b16 %v817
      %v2892 = vunpack.c.l.b16 %v818
      %v2893 = vunpack.c.l.b16 %v819
      %v2894 = vunpack.c.l.b16 %v820
      %v2895 = vunpack.c.l.b16 %v821
      %v2896 = vunpack.c.l.b16 %v822
      %v2897 = vunpack.c.l.b16 %v823
      %v2898 = vunpack.c.l.b16 %v824
      %v2899 = vunpack.c.l.b16 %v825
      %v2900 = vunpack.c.l.b16 %v826
      %v2901 = vunpack.c.l.b16 %v827
      %v2902 = vunpack.c.l.b16 %v828
      %v2903 = vpack.c.b16 %v2840, %v2839
      %v2904 = vpack.c.b16 %v2842, %v2841
      %v2905 = vpack.c.b16 %v2844, %v2843
      %v2906 = vpack.c.b16 %v2846, %v2845
      %v2907 = vpack.c.b16 %v2848, %v2847
      %v2908 = vpack.c.b16 %v2850, %v2849
      %v2909 = vpack.c.b16 %v2852, %v2851
      %v2910 = vpack.c.b16 %v2854, %v2853
      %v2911 = vpack.c.b16 %v2856, %v2855
      %v2912 = vpack.c.b16 %v2858, %v2857
      %v2913 = vpack.c.b16 %v2860, %v2859
      %v2914 = vpack.c.b16 %v2862, %v2861
      %v2915 = vpack.c.b16 %v2864, %v2863
      %v2916 = vpack.c.b16 %v2866, %v2865
      %v2917 = vpack.c.b16 %v2868, %v2867
      %v2918 = vpack.c.b16 %v2870, %v2869
      %v2919 = vpack.c.b16 %v2872, %v2871
      %v2920 = vpack.c.b16 %v2874, %v2873
      %v2921 = vpack.c.b16 %v2876, %v2875
      %v2922 = vpack.c.b16 %v2878, %v2877
      %v2923 = vpack.c.b16 %v2880, %v2879
      %v2924 = vpack.c.b16 %v2882, %v2881
      %v2925 = vpack.c.b16 %v2884, %v2883
      %v2926 = vpack.c.b16 %v2886, %v2885
      %v2927 = vpack.c.b16 %v2888, %v2887
      %v2928 = vpack.c.b16 %v2890, %v2889
      %v2929 = vpack.c.b16 %v2892, %v2891
      %v2930 = vpack.c.b16 %v2894, %v2893
      %v2931 = vpack.c.b16 %v2896, %v2895
      %v2932 = vpack.c.b16 %v2898, %v2897
      %v2933 = vpack.c.b16 %v2900, %v2899
      %v2934 = vpack.c.b16 %v2902, %v2901
      %2967 = vmatpush.bf16.msra.mxu0 %v2910
      %2968 = vmatpush.bf16.msra.mxu0 %v2909
      %2969 = vmatpush.bf16.msra.mxu0 %v2908
      %2970 = vmatpush.bf16.msra.mxu0 %v2907
      %2971 = vmatpush.bf16.msra.mxu0 %v2906
      %2972 = vmatpush.bf16.msra.mxu0 %v2905
      %2973 = vmatpush.bf16.msra.mxu0 %v2904
      %2974 = vmatpush.bf16.msra.mxu0 %v2903
      %2975 = vmatmul.bf16.gmra.mxu0 %v2767
      %v2976 = vpop.f32.mrf.mxu0
      %v2977 = vadd.f32 0.0, %v2976
      %v2978 = vpop.f32.mrf.mxu0
      %v2979 = vadd.f32 0.0, %v2978
      %2980 = vdwg.mxu0
      %2981 = vmatpush.bf16.msra.mxu0 %v2918
      %2982 = vmatpush.bf16.msra.mxu0 %v2917
      %2983 = vmatpush.bf16.msra.mxu0 %v2916
      %2984 = vmatpush.bf16.msra.mxu0 %v2915
      %2985 = vmatpush.bf16.msra.mxu0 %v2914
      %2986 = vmatpush.bf16.msra.mxu0 %v2913
      %2987 = vmatpush.bf16.msra.mxu0 %v2912
      %2988 = vmatpush.bf16.msra.mxu0 %v2911
      %2989 = vmatmul.bf16.gmra.mxu0 %v2768
      %v2990 = vpop.f32.mrf.mxu0
      %v2991 = vadd.f32 %v2977, %v2990
      %v2992 = vpop.f32.mrf.mxu0
      %v2993 = vadd.f32 %v2979, %v2992
      %2994 = vdwg.mxu0
      %2995 = vmatpush.bf16.msra.mxu0 %v2926
      %2996 = vmatpush.bf16.msra.mxu0 %v2925
      %2997 = vmatpush.bf16.msra.mxu0 %v2924
      %2998 = vmatpush.bf16.msra.mxu0 %v2923
      %2999 = vmatpush.bf16.msra.mxu0 %v2922
      %3000 = vmatpush.bf16.msra.mxu0 %v2921
      %3001 = vmatpush.bf16.msra.mxu0 %v2920
      %3002 = vmatpush.bf16.msra.mxu0 %v2919
      %3003 = vmatmul.bf16.gmra.mxu0 %v2769
      %v3004 = vpop.f32.mrf.mxu0
      %v3005 = vadd.f32 %v2991, %v3004
      %v3006 = vpop.f32.mrf.mxu0
      %v3007 = vadd.f32 %v2993, %v3006
      %3008 = vdwg.mxu0
      %3009 = vmatpush.bf16.msra.mxu0 %v2934
      %3010 = vmatpush.bf16.msra.mxu0 %v2933
      %3011 = vmatpush.bf16.msra.mxu0 %v2932
      %3012 = vmatpush.bf16.msra.mxu0 %v2931
      %3013 = vmatpush.bf16.msra.mxu0 %v2930
      %3014 = vmatpush.bf16.msra.mxu0 %v2929
      %3015 = vmatpush.bf16.msra.mxu0 %v2928
      %3016 = vmatpush.bf16.msra.mxu0 %v2927
      %3017 = vmatmul.bf16.gmra.mxu0 %v2770
      %v3018 = vpop.f32.mrf.mxu0
      %v3019 = vadd.f32 %v3005, %v3018
      %v3020 = vpop.f32.mrf.mxu0
      %v3021 = vadd.f32 %v3007, %v3020
      %3022 = vdwg.mxu0
      %v3023 = vadd.f32 %v2746, %v3019
      %v3024 = vadd.f32 %v2747, %v3021
      %v3025 = vsel %vm1008, %v379, %v2750
      %v3026 = vsel %vm1010, %v2752, %v2751
      %v3027 = vsel %vm1012, %v3025, %v3026
      %v3029 = vrot.slane %v3027, 2
      %v3030 = vshrl.u32 %v2759, 16
      %v3032 = vrot.slane %v3030, 6
      %v3033 = vshll.u32 %v2759, 16
      %v3035 = vrot.slane %v3033, 7
      %v3036 = vor.u32 %v3032, %v3035
      %v3037 = vrot.slane %v3036, 2
      %v3039 = vshll.u32 %v3029, 16
      %v3041 = vrot.slane %v3039, 7
      %v3042 = vsel %vm1037, %v3037, %v3041
      %3043 = vst [vmem:[#allocation1] ss:$4 sm:$0xff] %v1076
      %s3044 = scalar_lea.vmem [#allocation1], 1
      %3045 = vst [vmem:[%s3044] ss:$4 sm:$0xff] %v1089
      %s3046 = scalar_lea.vmem [#allocation1], 2
      %3047 = vst [vmem:[%s3046] ss:$4 sm:$0xff] %v2210
      %s3049 = scalar_lea.vmem [#allocation1], 3
      %3050 = vst [vmem:[%s3049] ss:$4 sm:$0xff] %v3042
      %v3051 = vld.sshfl [vmem:[#allocation1] sm:$0xff pattern:$0x73625140]
      %v3052 = vld.sshfl [vmem:[#allocation1 + $0x8] sm:$0xff pattern:$0x73625140]
      %v3053 = vld.sshfl [vmem:[#allocation1 + $0x10] sm:$0xff pattern:$0x73625140]
      %v3054 = vld.sshfl [vmem:[#allocation1 + $0x18] sm:$0xff pattern:$0x73625140]
      %v3123 = vunpack.c.l.b16 %v829
      %v3124 = vunpack.c.l.b16 %v830
      %v3125 = vunpack.c.l.b16 %v831
      %v3126 = vunpack.c.l.b16 %v832
      %v3127 = vunpack.c.l.b16 %v833
      %v3128 = vunpack.c.l.b16 %v834
      %v3129 = vunpack.c.l.b16 %v835
      %v3130 = vunpack.c.l.b16 %v836
      %v3131 = vunpack.c.l.b16 %v837
      %v3132 = vunpack.c.l.b16 %v838
      %v3133 = vunpack.c.l.b16 %v839
      %v3134 = vunpack.c.l.b16 %v840
      %v3135 = vunpack.c.l.b16 %v841
      %v3136 = vunpack.c.l.b16 %v842
      %v3137 = vunpack.c.l.b16 %v843
      %v3138 = vunpack.c.l.b16 %v844
      %v3139 = vunpack.c.l.b16 %v845
      %v3140 = vunpack.c.l.b16 %v846
      %v3141 = vunpack.c.l.b16 %v847
      %v3142 = vunpack.c.l.b16 %v848
      %v3143 = vunpack.c.l.b16 %v849
      %v3144 = vunpack.c.l.b16 %v850
      %v3145 = vunpack.c.l.b16 %v851
      %v3146 = vunpack.c.l.b16 %v852
      %v3147 = vunpack.c.l.b16 %v853
      %v3148 = vunpack.c.l.b16 %v854
      %v3149 = vunpack.c.l.b16 %v855
      %v3150 = vunpack.c.l.b16 %v856
      %v3151 = vunpack.c.l.b16 %v857
      %v3152 = vunpack.c.l.b16 %v858
      %v3153 = vunpack.c.l.b16 %v859
      %v3154 = vunpack.c.l.b16 %v860
      %v3155 = vunpack.c.l.b16 %v861
      %v3156 = vunpack.c.l.b16 %v862
      %v3157 = vunpack.c.l.b16 %v863
      %v3158 = vunpack.c.l.b16 %v864
      %v3159 = vunpack.c.l.b16 %v865
      %v3160 = vunpack.c.l.b16 %v866
      %v3161 = vunpack.c.l.b16 %v867
      %v3162 = vunpack.c.l.b16 %v868
      %v3163 = vunpack.c.l.b16 %v869
      %v3164 = vunpack.c.l.b16 %v870
      %v3165 = vunpack.c.l.b16 %v871
      %v3166 = vunpack.c.l.b16 %v872
      %v3167 = vunpack.c.l.b16 %v873
      %v3168 = vunpack.c.l.b16 %v874
      %v3169 = vunpack.c.l.b16 %v875
      %v3170 = vunpack.c.l.b16 %v876
      %v3171 = vunpack.c.l.b16 %v877
      %v3172 = vunpack.c.l.b16 %v878
      %v3173 = vunpack.c.l.b16 %v879
      %v3174 = vunpack.c.l.b16 %v880
      %v3175 = vunpack.c.l.b16 %v881
      %v3176 = vunpack.c.l.b16 %v882
      %v3177 = vunpack.c.l.b16 %v883
      %v3178 = vunpack.c.l.b16 %v884
      %v3179 = vunpack.c.l.b16 %v885
      %v3180 = vunpack.c.l.b16 %v886
      %v3181 = vunpack.c.l.b16 %v887
      %v3182 = vunpack.c.l.b16 %v888
      %v3183 = vunpack.c.l.b16 %v889
      %v3184 = vunpack.c.l.b16 %v890
      %v3185 = vunpack.c.l.b16 %v891
      %v3186 = vunpack.c.l.b16 %v892
      %v3187 = vpack.c.b16 %v3124, %v3123
      %v3188 = vpack.c.b16 %v3126, %v3125
      %v3189 = vpack.c.b16 %v3128, %v3127
      %v3190 = vpack.c.b16 %v3130, %v3129
      %v3191 = vpack.c.b16 %v3132, %v3131
      %v3192 = vpack.c.b16 %v3134, %v3133
      %v3193 = vpack.c.b16 %v3136, %v3135
      %v3194 = vpack.c.b16 %v3138, %v3137
      %v3195 = vpack.c.b16 %v3140, %v3139
      %v3196 = vpack.c.b16 %v3142, %v3141
      %v3197 = vpack.c.b16 %v3144, %v3143
      %v3198 = vpack.c.b16 %v3146, %v3145
      %v3199 = vpack.c.b16 %v3148, %v3147
      %v3200 = vpack.c.b16 %v3150, %v3149
      %v3201 = vpack.c.b16 %v3152, %v3151
      %v3202 = vpack.c.b16 %v3154, %v3153
      %v3203 = vpack.c.b16 %v3156, %v3155
      %v3204 = vpack.c.b16 %v3158, %v3157
      %v3205 = vpack.c.b16 %v3160, %v3159
      %v3206 = vpack.c.b16 %v3162, %v3161
      %v3207 = vpack.c.b16 %v3164, %v3163
      %v3208 = vpack.c.b16 %v3166, %v3165
      %v3209 = vpack.c.b16 %v3168, %v3167
      %v3210 = vpack.c.b16 %v3170, %v3169
      %v3211 = vpack.c.b16 %v3172, %v3171
      %v3212 = vpack.c.b16 %v3174, %v3173
      %v3213 = vpack.c.b16 %v3176, %v3175
      %v3214 = vpack.c.b16 %v3178, %v3177
      %v3215 = vpack.c.b16 %v3180, %v3179
      %v3216 = vpack.c.b16 %v3182, %v3181
      %v3217 = vpack.c.b16 %v3184, %v3183
      %v3218 = vpack.c.b16 %v3186, %v3185
      %3251 = vmatpush.bf16.msra.mxu0 %v3194
      %3252 = vmatpush.bf16.msra.mxu0 %v3193
      %3253 = vmatpush.bf16.msra.mxu0 %v3192
      %3254 = vmatpush.bf16.msra.mxu0 %v3191
      %3255 = vmatpush.bf16.msra.mxu0 %v3190
      %3256 = vmatpush.bf16.msra.mxu0 %v3189
      %3257 = vmatpush.bf16.msra.mxu0 %v3188
      %3258 = vmatpush.bf16.msra.mxu0 %v3187
      %3259 = vmatmul.bf16.gmra.mxu0 %v3051
      %v3260 = vpop.f32.mrf.mxu0
      %v3261 = vadd.f32 0.0, %v3260
      %v3262 = vpop.f32.mrf.mxu0
      %v3263 = vadd.f32 0.0, %v3262
      %3264 = vdwg.mxu0
      %3265 = vmatpush.bf16.msra.mxu0 %v3202
      %3266 = vmatpush.bf16.msra.mxu0 %v3201
      %3267 = vmatpush.bf16.msra.mxu0 %v3200
      %3268 = vmatpush.bf16.msra.mxu0 %v3199
      %3269 = vmatpush.bf16.msra.mxu0 %v3198
      %3270 = vmatpush.bf16.msra.mxu0 %v3197
      %3271 = vmatpush.bf16.msra.mxu0 %v3196
      %3272 = vmatpush.bf16.msra.mxu0 %v3195
      %3273 = vmatmul.bf16.gmra.mxu0 %v3052
      %v3274 = vpop.f32.mrf.mxu0
      %v3275 = vadd.f32 %v3261, %v3274
      %v3276 = vpop.f32.mrf.mxu0
      %v3277 = vadd.f32 %v3263, %v3276
      %3278 = vdwg.mxu0
      %3279 = vmatpush.bf16.msra.mxu0 %v3210
      %3280 = vmatpush.bf16.msra.mxu0 %v3209
      %3281 = vmatpush.bf16.msra.mxu0 %v3208
      %3282 = vmatpush.bf16.msra.mxu0 %v3207
      %3283 = vmatpush.bf16.msra.mxu0 %v3206
      %3284 = vmatpush.bf16.msra.mxu0 %v3205
      %3285 = vmatpush.bf16.msra.mxu0 %v3204
      %3286 = vmatpush.bf16.msra.mxu0 %v3203
      %3287 = vmatmul.bf16.gmra.mxu0 %v3053
      %v3288 = vpop.f32.mrf.mxu0
      %v3289 = vadd.f32 %v3275, %v3288
      %v3290 = vpop.f32.mrf.mxu0
      %v3291 = vadd.f32 %v3277, %v3290
      %3292 = vdwg.mxu0
      %3293 = vmatpush.bf16.msra.mxu0 %v3218
      %3294 = vmatpush.bf16.msra.mxu0 %v3217
      %3295 = vmatpush.bf16.msra.mxu0 %v3216
      %3296 = vmatpush.bf16.msra.mxu0 %v3215
      %3297 = vmatpush.bf16.msra.mxu0 %v3214
      %3298 = vmatpush.bf16.msra.mxu0 %v3213
      %3299 = vmatpush.bf16.msra.mxu0 %v3212
      %3300 = vmatpush.bf16.msra.mxu0 %v3211
      %3301 = vmatmul.bf16.gmra.mxu0 %v3054
      %v3302 = vpop.f32.mrf.mxu0
      %v3303 = vadd.f32 %v3289, %v3302
      %v3304 = vpop.f32.mrf.mxu0
      %v3305 = vadd.f32 %v3291, %v3304
      %3306 = vdwg.mxu0
      %v3307 = vadd.f32 %v3023, %v3303
      %v3308 = vadd.f32 %v3024, %v3305
      %v3310 = vrot.slane %v2759, 7
      %v3311 = vrot.slane %v3310, 2
      %v3312 = vrot.slane %v3029, 7
      %v3313 = vsel %vm1630, %v3311, %v3312
      %3314 = vst [vmem:[#allocation1] ss:$4 sm:$0xff] %v1642
      %s3315 = scalar_lea.vmem [#allocation1], 1
      %3316 = vst [vmem:[%s3315] ss:$4 sm:$0xff] %v1646
      %s3317 = scalar_lea.vmem [#allocation1], 2
      %3318 = vst [vmem:[%s3317] ss:$4 sm:$0xff] %v2481
      %s3320 = scalar_lea.vmem [#allocation1], 3
      %3321 = vst [vmem:[%s3320] ss:$4 sm:$0xff] %v3313
      %v3322 = vld.sshfl [vmem:[#allocation1] sm:$0xff pattern:$0x73625140]
      %v3323 = vld.sshfl [vmem:[#allocation1 + $0x8] sm:$0xff pattern:$0x73625140]
      %v3324 = vld.sshfl [vmem:[#allocation1 + $0x10] sm:$0xff pattern:$0x73625140]
      %v3325 = vld.sshfl [vmem:[#allocation1 + $0x18] sm:$0xff pattern:$0x73625140]
      %v3394 = vunpack.c.l.b16 %v893
      %v3395 = vunpack.c.l.b16 %v894
      %v3396 = vunpack.c.l.b16 %v895
      %v3397 = vunpack.c.l.b16 %v896
      %v3398 = vunpack.c.l.b16 %v897
      %v3399 = vunpack.c.l.b16 %v898
      %v3400 = vunpack.c.l.b16 %v899
      %v3401 = vunpack.c.l.b16 %v900
      %v3402 = vunpack.c.l.b16 %v901
      %v3403 = vunpack.c.l.b16 %v902
      %v3404 = vunpack.c.l.b16 %v903
      %v3405 = vunpack.c.l.b16 %v904
      %v3406 = vunpack.c.l.b16 %v905
      %v3407 = vunpack.c.l.b16 %v906
      %v3408 = vunpack.c.l.b16 %v907
      %v3409 = vunpack.c.l.b16 %v908
      %v3410 = vunpack.c.l.b16 %v909
      %v3411 = vunpack.c.l.b16 %v910
      %v3412 = vunpack.c.l.b16 %v911
      %v3413 = vunpack.c.l.b16 %v912
      %v3414 = vunpack.c.l.b16 %v913
      %v3415 = vunpack.c.l.b16 %v914
      %v3416 = vunpack.c.l.b16 %v915
      %v3417 = vunpack.c.l.b16 %v916
      %v3418 = vunpack.c.l.b16 %v917
      %v3419 = vunpack.c.l.b16 %v918
      %v3420 = vunpack.c.l.b16 %v919
      %v3421 = vunpack.c.l.b16 %v920
      %v3422 = vunpack.c.l.b16 %v921
      %v3423 = vunpack.c.l.b16 %v922
      %v3424 = vunpack.c.l.b16 %v923
      %v3425 = vunpack.c.l.b16 %v924
      %v3426 = vunpack.c.l.b16 %v925
      %v3427 = vunpack.c.l.b16 %v926
      %v3428 = vunpack.c.l.b16 %v927
      %v3429 = vunpack.c.l.b16 %v928
      %v3430 = vunpack.c.l.b16 %v929
      %v3431 = vunpack.c.l.b16 %v930
      %v3432 = vunpack.c.l.b16 %v931
      %v3433 = vunpack.c.l.b16 %v932
      %v3434 = vunpack.c.l.b16 %v933
      %v3435 = vunpack.c.l.b16 %v934
      %v3436 = vunpack.c.l.b16 %v935
      %v3437 = vunpack.c.l.b16 %v936
      %v3438 = vunpack.c.l.b16 %v937
      %v3439 = vunpack.c.l.b16 %v938
      %v3440 = vunpack.c.l.b16 %v939
      %v3441 = vunpack.c.l.b16 %v940
      %v3442 = vunpack.c.l.b16 %v941
      %v3443 = vunpack.c.l.b16 %v942
      %v3444 = vunpack.c.l.b16 %v943
      %v3445 = vunpack.c.l.b16 %v944
      %v3446 = vunpack.c.l.b16 %v945
      %v3447 = vunpack.c.l.b16 %v946
      %v3448 = vunpack.c.l.b16 %v947
      %v3449 = vunpack.c.l.b16 %v948
      %v3450 = vunpack.c.l.b16 %v949
      %v3451 = vunpack.c.l.b16 %v950
      %v3452 = vunpack.c.l.b16 %v951
      %v3453 = vunpack.c.l.b16 %v952
      %v3454 = vunpack.c.l.b16 %v953
      %v3455 = vunpack.c.l.b16 %v954
      %v3456 = vunpack.c.l.b16 %v955
      %v3457 = vunpack.c.l.b16 %v956
      %v3458 = vpack.c.b16 %v3395, %v3394
      %v3459 = vpack.c.b16 %v3397, %v3396
      %v3460 = vpack.c.b16 %v3399, %v3398
      %v3461 = vpack.c.b16 %v3401, %v3400
      %v3462 = vpack.c.b16 %v3403, %v3402
      %v3463 = vpack.c.b16 %v3405, %v3404
      %v3464 = vpack.c.b16 %v3407, %v3406
      %v3465 = vpack.c.b16 %v3409, %v3408
      %v3466 = vpack.c.b16 %v3411, %v3410
      %v3467 = vpack.c.b16 %v3413, %v3412
      %v3468 = vpack.c.b16 %v3415, %v3414
      %v3469 = vpack.c.b16 %v3417, %v3416
      %v3470 = vpack.c.b16 %v3419, %v3418
      %v3471 = vpack.c.b16 %v3421, %v3420
      %v3472 = vpack.c.b16 %v3423, %v3422
      %v3473 = vpack.c.b16 %v3425, %v3424
      %v3474 = vpack.c.b16 %v3427, %v3426
      %v3475 = vpack.c.b16 %v3429, %v3428
      %v3476 = vpack.c.b16 %v3431, %v3430
      %v3477 = vpack.c.b16 %v3433, %v3432
      %v3478 = vpack.c.b16 %v3435, %v3434
      %v3479 = vpack.c.b16 %v3437, %v3436
      %v3480 = vpack.c.b16 %v3439, %v3438
      %v3481 = vpack.c.b16 %v3441, %v3440
      %v3482 = vpack.c.b16 %v3443, %v3442
      %v3483 = vpack.c.b16 %v3445, %v3444
      %v3484 = vpack.c.b16 %v3447, %v3446
      %v3485 = vpack.c.b16 %v3449, %v3448
      %v3486 = vpack.c.b16 %v3451, %v3450
      %v3487 = vpack.c.b16 %v3453, %v3452
      %v3488 = vpack.c.b16 %v3455, %v3454
      %v3489 = vpack.c.b16 %v3457, %v3456
      %3522 = vmatpush.bf16.msra.mxu0 %v3465
      %3523 = vmatpush.bf16.msra.mxu0 %v3464
      %3524 = vmatpush.bf16.msra.mxu0 %v3463
      %3525 = vmatpush.bf16.msra.mxu0 %v3462
      %3526 = vmatpush.bf16.msra.mxu0 %v3461
      %3527 = vmatpush.bf16.msra.mxu0 %v3460
      %3528 = vmatpush.bf16.msra.mxu0 %v3459
      %3529 = vmatpush.bf16.msra.mxu0 %v3458
      %3530 = vmatmul.bf16.gmra.mxu0 %v3322
      %v3531 = vpop.f32.mrf.mxu0
      %v3532 = vadd.f32 0.0, %v3531
      %v3533 = vpop.f32.mrf.mxu0
      %v3534 = vadd.f32 0.0, %v3533
      %3535 = vdwg.mxu0
      %3536 = vmatpush.bf16.msra.mxu0 %v3473
      %3537 = vmatpush.bf16.msra.mxu0 %v3472
      %3538 = vmatpush.bf16.msra.mxu0 %v3471
      %3539 = vmatpush.bf16.msra.mxu0 %v3470
      %3540 = vmatpush.bf16.msra.mxu0 %v3469
      %3541 = vmatpush.bf16.msra.mxu0 %v3468
      %3542 = vmatpush.bf16.msra.mxu0 %v3467
      %3543 = vmatpush.bf16.msra.mxu0 %v3466
      %3544 = vmatmul.bf16.gmra.mxu0 %v3323
      %v3545 = vpop.f32.mrf.mxu0
      %v3546 = vadd.f32 %v3532, %v3545
      %v3547 = vpop.f32.mrf.mxu0
      %v3548 = vadd.f32 %v3534, %v3547
      %3549 = vdwg.mxu0
      %3550 = vmatpush.bf16.msra.mxu0 %v3481
      %3551 = vmatpush.bf16.msra.mxu0 %v3480
      %3552 = vmatpush.bf16.msra.mxu0 %v3479
      %3553 = vmatpush.bf16.msra.mxu0 %v3478
      %3554 = vmatpush.bf16.msra.mxu0 %v3477
      %3555 = vmatpush.bf16.msra.mxu0 %v3476
      %3556 = vmatpush.bf16.msra.mxu0 %v3475
      %3557 = vmatpush.bf16.msra.mxu0 %v3474
      %3558 = vmatmul.bf16.gmra.mxu0 %v3324
      %v3559 = vpop.f32.mrf.mxu0
      %v3560 = vadd.f32 %v3546, %v3559
      %v3561 = vpop.f32.mrf.mxu0
      %v3562 = vadd.f32 %v3548, %v3561
      %3563 = vdwg.mxu0
      %3564 = vmatpush.bf16.msra.mxu0 %v3489
      %3565 = vmatpush.bf16.msra.mxu0 %v3488
      %3566 = vmatpush.bf16.msra.mxu0 %v3487
      %3567 = vmatpush.bf16.msra.mxu0 %v3486
      %3568 = vmatpush.bf16.msra.mxu0 %v3485
      %3569 = vmatpush.bf16.msra.mxu0 %v3484
      %3570 = vmatpush.bf16.msra.mxu0 %v3483
      %3571 = vmatpush.bf16.msra.mxu0 %v3482
      %3572 = vmatmul.bf16.gmra.mxu0 %v3325
      %v3573 = vpop.f32.mrf.mxu0
      %v3574 = vadd.f32 %v3560, %v3573
      %v3575 = vpop.f32.mrf.mxu0
      %v3576 = vadd.f32 %v3562, %v3575
      %3577 = vdwg.mxu0
      %v3578 = vadd.f32 %v3307, %v3574
      %v3579 = vadd.f32 %v3308, %v3576
      %v3580 = vld [vmem:[%s2] sm:$0x1]
      %v3582 = vperm.slane %v3580, 0
      %v3584 = vadd.f32 %v3578, %v3582
      %v3585 = vadd.f32 %v3579, %v3582
      %v3586 = vmax.f32 %v3584, 0.0
      %v3587 = vmax.f32 %v3585, 0.0
      %vm3588 = vcmask 64512
      %3589 = vst.msk [vmem:[%s170] sm:$0xff] %vm3588, %v3586
      %3590 = vst.msk [vmem:[%s170 + $0x8] sm:$0xff] %vm3588, %v3587
      %p3591 = scmp.lt.s32.totalorder %s14, 1
      %s3592 = scalar_select %p3591, %s14, 1
      %s3593 = smul.addr %s3592, 2
      %s3594 = smul.addr %s3593, 8
      %s3595 = scalar_lea.vmem %s3, %s3594
      // Predicated region
      $region33: #{pool_layer_stu.6} parent=31 // pred_check
        %p3596 = pneg %p100
      $region34: #{pool_layer_stu.6} parent=31 // pred_check_branch
        %3598 = sbr.rel (%p3596) target = $region36
      $region35: #{pool_layer_stu.6} parent=31 // pred_region
        _
      $region36: #{pool_layer_stu.6} parent=31 // pred_fallthru
        _
    $region32: #{pool_layer_stu.6} parent=5 // pred_fallthru
      _
    %p3599 = scmp.le.s32.totalorder 2, %s9
    // Predicated region
    $region37: #{pool_layer_stu.6} parent=5 // pred_check
      %p3600 = pneg %p3599
    $region38: #{pool_layer_stu.6} parent=5 // pred_check_branch
      %3602 = sbr.rel (%p3600) target = $region40
    $region39: #{pool_layer_stu.6} parent=5 // pred_region
      %s3603 = ssub.s32 %s9, 2
      // Predicated region
      $region41: #{pool_layer_stu.6} parent=39 // pred_check
        %p3604 = pneg %p106
      $region42: #{pool_layer_stu.6} parent=39 // pred_check_branch
        %3606 = sbr.rel (%p3604) target = $region44
      $region43: #{pool_layer_stu.6} parent=39 // pred_region
        %p3607 = scmp.lt.s32.totalorder %s15, 1
        %s3608 = scalar_select %p3607, %s15, 1
        %s3609 = smul.addr %s3608, 2
        %s3610 = smul.addr %s3609, 8
        %s3611 = scalar_lea.vmem %s3, %s3610
      $region44: #{pool_layer_stu.6} parent=39 // pred_fallthru
        _
    $region40: #{pool_layer_stu.6} parent=5 // pred_fallthru
      _
  $region6: #{pool_layer_stu.6} parent=0 // loop_footer
    %s13 = sadd.s32 1, %s9
  $region7: #{pool_layer_stu.6} parent=0 // loop_footer_branch
    %8 = sbr.rel target = $region3
  $region8: #{pool_layer_stu.6} parent=0 // loop_exit
    _

// kernel: pool_layer_stu.7
$region0: #{pool_layer_stu.7}
  #allocation0 [shape = 'u32[]', space=smem, size = 0x4, offset = 0x4, fixed_abs, tag = 'smem constant byte address 0x4 - core index']
  #allocation1 [shape = 'u32[72,128]{1,0:T(1,128)}', space=vmem, size = 0x9000, scoped, tag = 'internal scratch']
  %s0 = inlined_call_operand.vmem [shape: bf16[32,20], index: 0, kind: input, shape index: {}]
  %s1 = inlined_call_operand.vmem [shape: bf16[20,256], index: 1, kind: input, shape index: {}]
  %s2 = inlined_call_operand.vmem [shape: f32[32,256], index: 2, kind: output, shape index: {}]
  %s3 = sld [smem:[#allocation0]]
  $region18: #{pool_layer_stu.7} parent=0
    _
  %s5 = ssub.s32 1, %s3
  %s6 = scalar_select 0, %s5, %s3
  // Predicated region
  $region2: #{pool_layer_stu.7} parent=0 // pred_check
    _
  $region3: #{pool_layer_stu.7} parent=0 // pred_check_branch
    %8 = sbr.rel (0) target = $region5
  $region4: #{pool_layer_stu.7} parent=0 // pred_region
    _
  $region5: #{pool_layer_stu.7} parent=0 // pred_fallthru
    _
  // Predicated region
  $region6: #{pool_layer_stu.7} parent=0 // pred_check
    _
  $region7: #{pool_layer_stu.7} parent=0 // pred_check_branch
    %10 = sbr.rel (0) target = $region9
  $region8: #{pool_layer_stu.7} parent=0 // pred_region
    _
  $region9: #{pool_layer_stu.7} parent=0 // pred_fallthru
    _
  %v12 = vld [vmem:[%s0] sm:$0xf]
  %v13 = vld [vmem:[%s0 + $0x4] sm:$0xf]
  %v14 = vld [vmem:[%s0 + $0x8] sm:$0xf]
  %v15 = vld [vmem:[%s0 + $0xc] sm:$0xf]
  %v16 = vld [vmem:[%s1] sm:$0xff]
  %v17 = vld [vmem:[%s1 + $0x8] sm:$0xff]
  %v18 = vld [vmem:[%s1 + $0x10] sm:$0x33]
  %v23 = vunpack.c.l.b16 %v12
  %v24 = vunpack.c.l.b16 %v13
  %v25 = vunpack.c.l.b16 %v14
  %v26 = vunpack.c.l.b16 %v15
  %v27 = vpack.c.b16 %v24, %v23
  %v28 = vpack.c.b16 %v26, %v25
  %v32 = vunpack.c.l.b16 %v16
  %v33 = vunpack.c.h.b16 %v16
  %v34 = vunpack.c.l.b16 %v17
  %v35 = vunpack.c.h.b16 %v17
  %v36 = vunpack.c.l.b16 %v18
  %v37 = vunpack.c.h.b16 %v18
  %v38 = vpack.c.b16 %v34, %v32
  %v39 = vpack.c.b16 %v35, %v33
  %v40 = vpack.c.b16 %v36, %v36
  %v41 = vpack.c.b16 %v37, %v37
  %vm44 = vcmask 162816
  %v46 = vsel %vm44, %v27, 0
  %v49 = vsel %vm44, %v28, 0
  %vm51 = vcmask 1041408
  %v53 = vsel %vm51, %v40, 0
  %v56 = vsel %vm51, %v41, 0
  %58 = vmatpush.bf16.msra.mxu0 0
  %59 = vmatpush.bf16.msra.mxu0 0
  %60 = vmatpush.bf16.msra.mxu0 0
  %61 = vmatpush.bf16.msra.mxu0 0
  %62 = vmatpush.bf16.msra.mxu0 0
  %63 = vmatpush.bf16.msra.mxu0 0
  %64 = vmatpush.bf16.msra.mxu0 %v53
  %65 = vmatpush.bf16.msra.mxu0 %v38
  %66 = vmatmul.bf16.gmra.mxu0 %v46
  %v67 = vpop.f32.mrf.mxu0
  %v68 = vadd.f32 0.0, %v67
  %v69 = vpop.f32.mrf.mxu0
  %v70 = vadd.f32 0.0, %v69
  %71 = vmatmul.bf16.gmra.mxu0 %v49
  %v72 = vpop.f32.mrf.mxu0
  %v73 = vadd.f32 0.0, %v72
  %v74 = vpop.f32.mrf.mxu0
  %v75 = vadd.f32 0.0, %v74
  %76 = vdwg.mxu0
  %77 = vmatpush.bf16.msra.mxu0 0
  %78 = vmatpush.bf16.msra.mxu0 0
  %79 = vmatpush.bf16.msra.mxu0 0
  %80 = vmatpush.bf16.msra.mxu0 0
  %81 = vmatpush.bf16.msra.mxu0 0
  %82 = vmatpush.bf16.msra.mxu0 0
  %83 = vmatpush.bf16.msra.mxu0 %v56
  %84 = vmatpush.bf16.msra.mxu0 %v39
  %85 = vmatmul.bf16.gmra.mxu0 %v46
  %v86 = vpop.f32.mrf.mxu0
  %v87 = vadd.f32 0.0, %v86
  %v88 = vpop.f32.mrf.mxu0
  %v89 = vadd.f32 0.0, %v88
  %90 = vmatmul.bf16.gmra.mxu0 %v49
  %v91 = vpop.f32.mrf.mxu0
  %v92 = vadd.f32 0.0, %v91
  %v93 = vpop.f32.mrf.mxu0
  %v94 = vadd.f32 0.0, %v93
  %95 = vdwg.mxu0
  %96 = vst [vmem:[%s2] sm:$0xff] %v68
  %97 = vst [vmem:[%s2 + $0x8] sm:$0xff] %v87
  %98 = vst [vmem:[%s2 + $0x10] sm:$0xff] %v70
  %99 = vst [vmem:[%s2 + $0x18] sm:$0xff] %v89
  %100 = vst [vmem:[%s2 + $0x20] sm:$0xff] %v73
  %101 = vst [vmem:[%s2 + $0x28] sm:$0xff] %v92
  %102 = vst [vmem:[%s2 + $0x30] sm:$0xff] %v75
  %103 = vst [vmem:[%s2 + $0x38] sm:$0xff] %v94
  // Predicated region
  $region10: #{pool_layer_stu.7} parent=0 // pred_check
    _
  $region11: #{pool_layer_stu.7} parent=0 // pred_check_branch
    %105 = sbr.rel (0) target = $region13
  $region12: #{pool_layer_stu.7} parent=0 // pred_region
    _
  $region13: #{pool_layer_stu.7} parent=0 // pred_fallthru
    _
  // Predicated region
  $region14: #{pool_layer_stu.7} parent=0 // pred_check
    _
  $region15: #{pool_layer_stu.7} parent=0 // pred_check_branch
    %107 = sbr.rel (0) target = $region17
  $region16: #{pool_layer_stu.7} parent=0 // pred_region
    _
  $region17: #{pool_layer_stu.7} parent=0 // pred_fallthru
    _

</llo_original>
